<compile_context>
chip_gen: v5e
topology: v5e:2x2
jax: 0.10.0
libtpu: 0.0.40
codegen_flags: <defaults>
</compile_context>

<pallas_src>
import functools
import math

import jax
import jax.numpy as jnp
from jax.experimental import pallas as pl
from jax.experimental.pallas import tpu as pltpu


# ------------------------------ in-kernel helpers ------------------------------

def _layernorm(x, g, b):
    # LayerNorm over last dim, eps=1e-5, biased variance (matches nn.LayerNorm). f32.
    mean = jnp.mean(x, axis=-1, keepdims=True)
    var = jnp.mean(jnp.square(x - mean), axis=-1, keepdims=True)
    return (x - mean) * jax.lax.rsqrt(var + 1e-5) * g + b


def _gelu_exact(x):
    # nn.GELU() default = exact erf formulation (f32 on the VPU/EUP).
    return 0.5 * x * (1.0 + jax.lax.erf(x * 0.7071067811865476))


def _mha_stacked(q, k, v, scale, num_heads, causal):
    """All heads in TWO MXU dots (block-diagonal attention, row-stacked form).

    q: (Sq, E), k/v: (Sk, E), all f32.  Row h*Sq + s_q of q_stack holds query s_q
    with every column outside head h zeroed, so a single contraction over E gives
    exactly the per-head scores; cross-head contributions are zero by construction.
    """
    Sq, E = q.shape
    Sk = k.shape[0]
    Dh = E // num_heads

    e_ids = jax.lax.broadcasted_iota(jnp.int32, (Sq, E), 1)
    head_masks = [(e_ids >= h * Dh) & (e_ids < (h + 1) * Dh) for h in range(num_heads)]

    qs = q * scale                                   # fold softmax scale into (Sq, E)
    q_stack = jnp.concatenate(
        [jnp.where(head_masks[h], qs, 0.0) for h in range(num_heads)], axis=0)  # (H*Sq, E)

    # one "NT" dot for all heads: contract the shared E axis
    s = jax.lax.dot_general(q_stack, k, (((1,), (1,)), ((), ())),
                            preferred_element_type=jnp.float32)                 # (H*Sq, Sk)

    if causal:
        qpos = jnp.concatenate(
            [jax.lax.broadcasted_iota(jnp.int32, (Sq, Sk), 0)] * num_heads, axis=0)
        kpos = jax.lax.broadcasted_iota(jnp.int32, (num_heads * Sq, Sk), 1)
        s = jnp.where(kpos <= qpos, s, -1e30)

    s_max = jnp.max(s, axis=-1, keepdims=True)
    p = jnp.exp(s - s_max)
    w = p / jnp.sum(p, axis=-1, keepdims=True)       # exact division (torch.softmax parity)
    # dropout(p=0.2) on w is identity in eval mode.

    # one P*V dot for all heads; head columns are selected during recombination
    out_stack = jax.lax.dot_general(w, v, (((1,), (0,)), ((), ())),
                                    preferred_element_type=jnp.float32)         # (H*Sq, E)

    out = jnp.where(head_masks[0], out_stack[0:Sq, :], 0.0)
    for h in range(1, num_heads):
        out = out + jnp.where(head_masks[h], out_stack[h * Sq:(h + 1) * Sq, :], 0.0)
    return out                                       # (Sq, E) f32


# --------------------------------- fused kernel ---------------------------------

def _vit_forward_kernel(
        x_ref, y_ref,
        pw_ref, pb_ref, pos_ref,
        e_ln1g, e_ln1b, e_wqkv, e_wo, e_bo, e_ln2g, e_ln2b,
        e_w1, e_b1, e_w2, e_b2,
        d_ln1g, d_ln1b, d_swqkv, d_swo, d_sbo, d_ln2g, d_ln2b,
        d_cwq, d_cwkv, d_cwo, d_cbo, d_ln3g, d_ln3b,
        d_w1, d_b1, d_w2, d_b2,
        ow_ref, ob_ref,
        o_ref,
        *, num_heads, num_layers, enc_scale, dec_scale):
    E = pw_ref.shape[1]

    # ---- encoder: patch embedding + positional embedding ----
    x = jnp.dot(x_ref[0], pw_ref[...], preferred_element_type=jnp.float32)
    x = x + pb_ref[...] + pos_ref[0]                                       # (P, E) f32

    # ---- encoder layers (static unrolled loop; everything stays in VMEM) ----
    for l in range(num_layers):
        xn = _layernorm(x, e_ln1g[l], e_ln1b[l])
        qkv = jnp.dot(xn, e_wqkv[l], preferred_element_type=jnp.float32)   # (P, 3E)
        attn = _mha_stacked(qkv[:, :E], qkv[:, E:2 * E], qkv[:, 2 * E:],
                            enc_scale, num_heads, causal=False)
        x = x + jnp.dot(attn, e_wo[l], preferred_element_type=jnp.float32) + e_bo[l]

        xn2 = _layernorm(x, e_ln2g[l], e_ln2b[l])
        h = _gelu_exact(jnp.dot(xn2, e_w1[l], preferred_element_type=jnp.float32) + e_b1[l])
        x = x + jnp.dot(h, e_w2[l], preferred_element_type=jnp.float32) + e_b2[l]
    enc_out = x                                                            # never leaves VMEM

    # ---- decoder layers ----
    y = y_ref[0]                                                           # (S, E) f32
    for l in range(num_layers):
        # masked self attention
        yn = _layernorm(y, d_ln1g[l], d_ln1b[l])
        qkv = jnp.dot(yn, d_swqkv[l], preferred_element_type=jnp.float32)  # (S, 3E)
        attn = _mha_stacked(qkv[:, :E], qkv[:, E:2 * E], qkv[:, 2 * E:],
                            dec_scale, num_heads, causal=True)
        y = y + jnp.dot(attn, d_swo[l], preferred_element_type=jnp.float32) + d_sbo[l]

        # cross attention; K/V from encoder output normalized by encoder ln2[l]
        yn2 = _layernorm(y, d_ln2g[l], d_ln2b[l])
        enc_n = _layernorm(enc_out, e_ln2g[l], e_ln2b[l])
        q = jnp.dot(yn2, d_cwq[l], preferred_element_type=jnp.float32)     # (S, E)
        kv = jnp.dot(enc_n, d_cwkv[l], preferred_element_type=jnp.float32) # (P, 2E)
        attn = _mha_stacked(q, kv[:, :E], kv[:, E:],
                            dec_scale, num_heads, causal=False)
        y = y + jnp.dot(attn, d_cwo[l], preferred_element_type=jnp.float32) + d_cbo[l]

        # FFN
        yn3 = _layernorm(y, d_ln3g[l], d_ln3b[l])
        h = _gelu_exact(jnp.dot(yn3, d_w1[l], preferred_element_type=jnp.float32) + d_b1[l])
        y = y + jnp.dot(h, d_w2[l], preferred_element_type=jnp.float32) + d_b2[l]

    # ---- vocab projection (vocab padded to 128 -> lane-dense store, only HBM write) ----
    o_ref[0] = jnp.dot(y, ow_ref[...], preferred_element_type=jnp.float32) + ob_ref[...]


# ----------------------------------- wrapper ------------------------------------

def vit_forward(params, src_patches, tgt_tokens, *, embed_dim, num_heads,
                num_layers, vocab_size):
    B, P = src_patches.shape[0], src_patches.shape[1]
    S = tgt_tokens.shape[1]
    E = embed_dim
    PD = src_patches.shape[2] * src_patches.shape[3]
    Hd = params["e_w1"].shape[2]
    Vp = params["out_w"].shape[1]
    Dh = E // num_heads
    L = num_layers

    # combined scales: QK^T / sqrt(dh) then softmax(scores / 2.0) resp. / 1.5
    enc_scale = 1.0 / (math.sqrt(Dh) * 2.0)
    dec_scale = 1.0 / (math.sqrt(Dh) * 1.5)

    x = src_patches.reshape(B, P, PD)                      # flatten(start_dim=2)
    # Token-embedding gather + decoder positional add kept as tiny plain-JAX glue.
    y0 = params["tok_emb"][tgt_tokens] + params["dec_pos"][:, :S, :]

    kern = functools.partial(_vit_forward_kernel, num_heads=num_heads,
                             num_layers=L, enc_scale=enc_scale, dec_scale=dec_scale)

    per_batch = lambda shape: pl.BlockSpec((1,) + shape, lambda b: (b, 0, 0))
    res2 = lambda shape: pl.BlockSpec(shape, lambda b: (0, 0))       # resident 2-D weight
    res3 = lambda shape: pl.BlockSpec(shape, lambda b: (0, 0, 0))    # resident 3-D stack

    in_specs = [
        per_batch((P, PD)),                                 # src patches
        per_batch((S, E)),                                  # token emb + dec pos
        res2((PD, E)), res2((1, E)), res3((1, P, E)),       # patch_w, patch_b, enc_pos
        # encoder stacks
        res3((L, 1, E)), res3((L, 1, E)),                   # ln1 g/b
        res3((L, E, 3 * E)),                                # fused Wq|Wk|Wv
        res3((L, E, E)), res3((L, 1, E)),                   # Wo, bo
        res3((L, 1, E)), res3((L, 1, E)),                   # ln2 g/b
        res3((L, E, Hd)), res3((L, 1, Hd)),                 # ffn w1, b1
        res3((L, Hd, E)), res3((L, 1, E)),                  # ffn w2, b2
        # decoder stacks
        res3((L, 1, E)), res3((L, 1, E)),                   # ln1 g/b
        res3((L, E, 3 * E)),                                # self fused Wq|Wk|Wv
        res3((L, E, E)), res3((L, 1, E)),                   # self Wo, bo
        res3((L, 1, E)), res3((L, 1, E)),                   # ln2 g/b
        res3((L, E, E)),                                    # cross Wq
        res3((L, E, 2 * E)),                                # cross fused Wk|Wv
        res3((L, E, E)), res3((L, 1, E)),                   # cross Wo, bo
        res3((L, 1, E)), res3((L, 1, E)),                   # ln3 g/b
        res3((L, E, Hd)), res3((L, 1, Hd)),                 # ffn w1, b1
        res3((L, Hd, E)), res3((L, 1, E)),                  # ffn w2, b2
        # output projection (padded to 128 lanes)
        res2((E, Vp)), res2((1, Vp)),
    ]

    logits_padded = pl.pallas_call(
        kern,
        out_shape=jax.ShapeDtypeStruct((B, S, Vp), jnp.float32),
        grid=(B,),
        in_specs=in_specs,
        out_specs=pl.BlockSpec((1, S, Vp), lambda b: (b, 0, 0)),
        compiler_params=pltpu.CompilerParams(dimension_semantics=("parallel",)),
    )(x, y0,
      params["patch_w"], params["patch_b"], params["enc_pos"],
      params["e_ln1g"], params["e_ln1b"], params["e_wqkv"], params["e_wo"], params["e_bo"],
      params["e_ln2g"], params["e_ln2b"], params["e_w1"], params["e_b1"],
      params["e_w2"], params["e_b2"],
      params["d_ln1g"], params["d_ln1b"], params["d_swqkv"], params["d_swo"], params["d_sbo"],
      params["d_ln2g"], params["d_ln2b"],
      params["d_cwq"], params["d_cwkv"], params["d_cwo"], params["d_cbo"],
      params["d_ln3g"], params["d_ln3b"], params["d_w1"], params["d_b1"],
      params["d_w2"], params["d_b2"],
      params["out_w"], params["out_b"])

    return logits_padded[:, :, :vocab_size]


# ---------------------------------- parameters ----------------------------------

def _round_up(x, m):
    return ((x + m - 1) // m) * m


def init_params(key, *, patch_dim, embed_dim, num_patches, num_heads,
                num_layers, ffn_ratio, vocab_size, max_seq_len):
    E, L = embed_dim, num_layers
    Hd = E * ffn_ratio
    Vp = _round_up(vocab_size, 128)                       # lane-dense vocab projection
    keys = iter(jax.random.split(key, 256))

    def w(shape, scale=0.05):
        return (scale * jax.random.normal(next(keys), shape)).astype(jnp.float32)

    ones = lambda shape: jnp.ones(shape, jnp.float32)
    zeros = lambda shape: jnp.zeros(shape, jnp.float32)

    return {
        "patch_w": w((patch_dim, E)), "patch_b": w((1, E)),
        "enc_pos": w((1, num_patches, E), scale=1.0),
        "tok_emb": w((vocab_size, E), scale=1.0),
        "dec_pos": w((1, max_seq_len, E), scale=1.0),
        # encoder stacks (layer-major)
        "e_ln1g": ones((L, 1, E)), "e_ln1b": zeros((L, 1, E)),
        "e_wqkv": w((L, E, 3 * E)),
        "e_wo": w((L, E, E)), "e_bo": w((L, 1, E)),
        "e_ln2g": ones((L, 1, E)), "e_ln2b": zeros((L, 1, E)),
        "e_w1": w((L, E, Hd)), "e_b1": w((L, 1, Hd)),
        "e_w2": w((L, Hd, E)), "e_b2": w((L, 1, E)),
        # decoder stacks
        "d_ln1g": ones((L, 1, E)), "d_ln1b": zeros((L, 1, E)),
        "d_swqkv": w((L, E, 3 * E)),
        "d_swo": w((L, E, E)), "d_sbo": w((L, 1, E)),
        "d_ln2g": ones((L, 1, E)), "d_ln2b": zeros((L, 1, E)),
        "d_cwq": w((L, E, E)),
        "d_cwkv": w((L, E, 2 * E)),
        "d_cwo": w((L, E, E)), "d_cbo": w((L, 1, E)),
        "d_ln3g": ones((L, 1, E)), "d_ln3b": zeros((L, 1, E)),
        "d_w1": w((L, E, Hd)), "d_b1": w((L, 1, Hd)),
        "d_w2": w((L, Hd, E)), "d_b2": w((L, 1, E)),
        # output projection, zero-padded 13 -> 128 along the lane dim
        "out_w": jnp.pad(w((E, vocab_size)), ((0, 0), (0, Vp - vocab_size))),
        "out_b": jnp.pad(w((1, vocab_size)), ((0, 0), (0, Vp - vocab_size))),
    }


# ------------------------------------- main --------------------------------------

if __name__ == "__main__":
    PATCH_DIM = 36          # 6 x 6 patches
    EMBED_DIM = 16
    NUM_PATCHES = 16
    NUM_HEADS = 4
    NUM_LAYERS = 3
    FFN_RATIO = 2
    VOCAB_SIZE = 13
    MAX_SEQ_LEN = 8
    BATCH = 2

    key = jax.random.PRNGKey(0)
    k_params, k_src, k_tgt = jax.random.split(key, 3)

    params = init_params(
        k_params,
        patch_dim=PATCH_DIM, embed_dim=EMBED_DIM, num_patches=NUM_PATCHES,
        num_heads=NUM_HEADS, num_layers=NUM_LAYERS, ffn_ratio=FFN_RATIO,
        vocab_size=VOCAB_SIZE, max_seq_len=MAX_SEQ_LEN,
    )

    src_patches = jax.random.normal(k_src, (BATCH, NUM_PATCHES, 6, 6), dtype=jnp.float32)
    tgt_tokens = jax.random.randint(k_tgt, (BATCH, MAX_SEQ_LEN), 0, VOCAB_SIZE)

    fwd = jax.jit(functools.partial(
        vit_forward, embed_dim=EMBED_DIM, num_heads=NUM_HEADS,
        num_layers=NUM_LAYERS, vocab_size=VOCAB_SIZE))
    logits = fwd(params, src_patches, tgt_tokens)
    jax.block_until_ready(logits)

    assert logits.shape == (BATCH, MAX_SEQ_LEN, VOCAB_SIZE)
    assert bool(jnp.all(jnp.isfinite(logits)))
    print("KERNEL_OK")
</pallas_src>

<mosaic_0001>
module attributes {stable_mosaic.version = 11 : i64} {
  func.func @_vit_forward_kernel(%arg0: i32, %arg1: memref<1x16x36xf32, #tpu.memory_space<vmem>>, %arg2: memref<1x8x16xf32, #tpu.memory_space<vmem>>, %arg3: memref<36x16xf32, #tpu.memory_space<vmem>>, %arg4: memref<1x16xf32, #tpu.memory_space<vmem>>, %arg5: memref<1x16x16xf32, #tpu.memory_space<vmem>>, %arg6: memref<3x1x16xf32, #tpu.memory_space<vmem>>, %arg7: memref<3x1x16xf32, #tpu.memory_space<vmem>>, %arg8: memref<3x16x48xf32, #tpu.memory_space<vmem>>, %arg9: memref<3x16x16xf32, #tpu.memory_space<vmem>>, %arg10: memref<3x1x16xf32, #tpu.memory_space<vmem>>, %arg11: memref<3x1x16xf32, #tpu.memory_space<vmem>>, %arg12: memref<3x1x16xf32, #tpu.memory_space<vmem>>, %arg13: memref<3x16x32xf32, #tpu.memory_space<vmem>>, %arg14: memref<3x1x32xf32, #tpu.memory_space<vmem>>, %arg15: memref<3x32x16xf32, #tpu.memory_space<vmem>>, %arg16: memref<3x1x16xf32, #tpu.memory_space<vmem>>, %arg17: memref<3x1x16xf32, #tpu.memory_space<vmem>>, %arg18: memref<3x1x16xf32, #tpu.memory_space<vmem>>, %arg19: memref<3x16x48xf32, #tpu.memory_space<vmem>>, %arg20: memref<3x16x16xf32, #tpu.memory_space<vmem>>, %arg21: memref<3x1x16xf32, #tpu.memory_space<vmem>>, %arg22: memref<3x1x16xf32, #tpu.memory_space<vmem>>, %arg23: memref<3x1x16xf32, #tpu.memory_space<vmem>>, %arg24: memref<3x16x16xf32, #tpu.memory_space<vmem>>, %arg25: memref<3x16x32xf32, #tpu.memory_space<vmem>>, %arg26: memref<3x16x16xf32, #tpu.memory_space<vmem>>, %arg27: memref<3x1x16xf32, #tpu.memory_space<vmem>>, %arg28: memref<3x1x16xf32, #tpu.memory_space<vmem>>, %arg29: memref<3x1x16xf32, #tpu.memory_space<vmem>>, %arg30: memref<3x16x32xf32, #tpu.memory_space<vmem>>, %arg31: memref<3x1x32xf32, #tpu.memory_space<vmem>>, %arg32: memref<3x32x16xf32, #tpu.memory_space<vmem>>, %arg33: memref<3x1x16xf32, #tpu.memory_space<vmem>>, %arg34: memref<16x128xf32, #tpu.memory_space<vmem>>, %arg35: memref<1x128xf32, #tpu.memory_space<vmem>>, %arg36: memref<1x8x128xf32, #tpu.memory_space<vmem>>) attributes {dimension_semantics = [#tpu.dimension_semantics<parallel>], iteration_bounds = array<i64: 2>, scalar_prefetch = 0 : i64, scratch_operands = 0 : i64, tpu.core_type = #tpu.core_type<tc>, window_params = [{transform_indices = @transform_0, window_bounds = array<i64: 1, 16, 36>}, {transform_indices = @transform_1, window_bounds = array<i64: 1, 8, 16>}, {pipeline_mode = #tpu.pipeline_mode<synchronous>, transform_indices = @transform_2, window_bounds = array<i64: 36, 16>}, {pipeline_mode = #tpu.pipeline_mode<synchronous>, transform_indices = @transform_3, window_bounds = array<i64: 1, 16>}, {pipeline_mode = #tpu.pipeline_mode<synchronous>, transform_indices = @transform_4, window_bounds = array<i64: 1, 16, 16>}, {pipeline_mode = #tpu.pipeline_mode<synchronous>, transform_indices = @transform_5, window_bounds = array<i64: 3, 1, 16>}, {pipeline_mode = #tpu.pipeline_mode<synchronous>, transform_indices = @transform_6, window_bounds = array<i64: 3, 1, 16>}, {pipeline_mode = #tpu.pipeline_mode<synchronous>, transform_indices = @transform_7, window_bounds = array<i64: 3, 16, 48>}, {pipeline_mode = #tpu.pipeline_mode<synchronous>, transform_indices = @transform_8, window_bounds = array<i64: 3, 16, 16>}, {pipeline_mode = #tpu.pipeline_mode<synchronous>, transform_indices = @transform_9, window_bounds = array<i64: 3, 1, 16>}, {pipeline_mode = #tpu.pipeline_mode<synchronous>, transform_indices = @transform_10, window_bounds = array<i64: 3, 1, 16>}, {pipeline_mode = #tpu.pipeline_mode<synchronous>, transform_indices = @transform_11, window_bounds = array<i64: 3, 1, 16>}, {pipeline_mode = #tpu.pipeline_mode<synchronous>, transform_indices = @transform_12, window_bounds = array<i64: 3, 16, 32>}, {pipeline_mode = #tpu.pipeline_mode<synchronous>, transform_indices = @transform_13, window_bounds = array<i64: 3, 1, 32>}, {pipeline_mode = #tpu.pipeline_mode<synchronous>, transform_indices = @transform_14, window_bounds = array<i64: 3, 32, 16>}, {pipeline_mode = #tpu.pipeline_mode<synchronous>, transform_indices = @transform_15, window_bounds = array<i64: 3, 1, 16>}, {pipeline_mode = #tpu.pipeline_mode<synchronous>, transform_indices = @transform_16, window_bounds = array<i64: 3, 1, 16>}, {pipeline_mode = #tpu.pipeline_mode<synchronous>, transform_indices = @transform_17, window_bounds = array<i64: 3, 1, 16>}, {pipeline_mode = #tpu.pipeline_mode<synchronous>, transform_indices = @transform_18, window_bounds = array<i64: 3, 16, 48>}, {pipeline_mode = #tpu.pipeline_mode<synchronous>, transform_indices = @transform_19, window_bounds = array<i64: 3, 16, 16>}, {pipeline_mode = #tpu.pipeline_mode<synchronous>, transform_indices = @transform_20, window_bounds = array<i64: 3, 1, 16>}, {pipeline_mode = #tpu.pipeline_mode<synchronous>, transform_indices = @transform_21, window_bounds = array<i64: 3, 1, 16>}, {pipeline_mode = #tpu.pipeline_mode<synchronous>, transform_indices = @transform_22, window_bounds = array<i64: 3, 1, 16>}, {pipeline_mode = #tpu.pipeline_mode<synchronous>, transform_indices = @transform_23, window_bounds = array<i64: 3, 16, 16>}, {pipeline_mode = #tpu.pipeline_mode<synchronous>, transform_indices = @transform_24, window_bounds = array<i64: 3, 16, 32>}, {pipeline_mode = #tpu.pipeline_mode<synchronous>, transform_indices = @transform_25, window_bounds = array<i64: 3, 16, 16>}, {pipeline_mode = #tpu.pipeline_mode<synchronous>, transform_indices = @transform_26, window_bounds = array<i64: 3, 1, 16>}, {pipeline_mode = #tpu.pipeline_mode<synchronous>, transform_indices = @transform_27, window_bounds = array<i64: 3, 1, 16>}, {pipeline_mode = #tpu.pipeline_mode<synchronous>, transform_indices = @transform_28, window_bounds = array<i64: 3, 1, 16>}, {pipeline_mode = #tpu.pipeline_mode<synchronous>, transform_indices = @transform_29, window_bounds = array<i64: 3, 16, 32>}, {pipeline_mode = #tpu.pipeline_mode<synchronous>, transform_indices = @transform_30, window_bounds = array<i64: 3, 1, 32>}, {pipeline_mode = #tpu.pipeline_mode<synchronous>, transform_indices = @transform_31, window_bounds = array<i64: 3, 32, 16>}, {pipeline_mode = #tpu.pipeline_mode<synchronous>, transform_indices = @transform_32, window_bounds = array<i64: 3, 1, 16>}, {pipeline_mode = #tpu.pipeline_mode<synchronous>, transform_indices = @transform_33, window_bounds = array<i64: 16, 128>}, {pipeline_mode = #tpu.pipeline_mode<synchronous>, transform_indices = @transform_34, window_bounds = array<i64: 1, 128>}, {transform_indices = @transform_35, window_bounds = array<i64: 1, 8, 128>}]} {
    %c0 = arith.constant 0 : index
    %c0_0 = arith.constant 0 : index
    %c0_1 = arith.constant 0 : index
    %0 = vector.load %arg1[%c0, %c0_0, %c0_1] : memref<1x16x36xf32, #tpu.memory_space<vmem>>, vector<1x16x36xf32>
    %1 = vector.shape_cast %0 : vector<1x16x36xf32> to vector<16x36xf32>
    %c0_2 = arith.constant 0 : index
    %c0_3 = arith.constant 0 : index
    %2 = vector.load %arg3[%c0_2, %c0_3] : memref<36x16xf32, #tpu.memory_space<vmem>>, vector<36x16xf32>
    %cst = arith.constant dense<0.000000e+00> : vector<16x16xf32>
    %3 = tpu.matmul %1, %2, %cst {dimension_numbers = #tpu.dot_dimension_numbers<[1], [0], [0], [1], [0, 0, 1, 1], [], []>} : vector<16x36xf32>, vector<36x16xf32>, vector<16x16xf32> -> vector<16x16xf32>
    %c0_4 = arith.constant 0 : index
    %c0_5 = arith.constant 0 : index
    %4 = vector.load %arg4[%c0_4, %c0_5] : memref<1x16xf32, #tpu.memory_space<vmem>>, vector<1x16xf32>
    %5 = vector.broadcast %4 : vector<1x16xf32> to vector<16x16xf32>
    %6 = arith.addf %3, %5 : vector<16x16xf32>
    %c0_6 = arith.constant 0 : index
    %c0_7 = arith.constant 0 : index
    %c0_8 = arith.constant 0 : index
    %7 = vector.load %arg5[%c0_6, %c0_7, %c0_8] : memref<1x16x16xf32, #tpu.memory_space<vmem>>, vector<1x16x16xf32>
    %8 = vector.shape_cast %7 : vector<1x16x16xf32> to vector<16x16xf32>
    %9 = arith.addf %6, %8 : vector<16x16xf32>
    %c0_9 = arith.constant 0 : index
    %c0_10 = arith.constant 0 : index
    %c0_11 = arith.constant 0 : index
    %10 = vector.load %arg6[%c0_9, %c0_10, %c0_11] : memref<3x1x16xf32, #tpu.memory_space<vmem>>, vector<1x1x16xf32>
    %11 = vector.shape_cast %10 : vector<1x1x16xf32> to vector<1x16xf32>
    %c0_12 = arith.constant 0 : index
    %c0_13 = arith.constant 0 : index
    %c0_14 = arith.constant 0 : index
    %12 = vector.load %arg7[%c0_12, %c0_13, %c0_14] : memref<3x1x16xf32, #tpu.memory_space<vmem>>, vector<1x1x16xf32>
    %13 = vector.shape_cast %12 : vector<1x1x16xf32> to vector<1x16xf32>
    %cst_15 = arith.constant dense<0.000000e+00> : vector<16xf32>
    %14 = vector.multi_reduction <add>, %9, %cst_15 [1] : vector<16x16xf32> to vector<16xf32>
    %15 = vector.shape_cast %14 : vector<16xf32> to vector<16x1xf32>
    %cst_16 = arith.constant 1.600000e+01 : f32
    %16 = vector.broadcast %cst_16 : f32 to vector<16x1xf32>
    %17 = arith.divf %15, %16 : vector<16x1xf32>
    %18 = vector.broadcast %17 : vector<16x1xf32> to vector<16x16xf32>
    %19 = arith.subf %9, %18 : vector<16x16xf32>
    %20 = arith.mulf %19, %19 : vector<16x16xf32>
    %cst_17 = arith.constant dense<0.000000e+00> : vector<16xf32>
    %21 = vector.multi_reduction <add>, %20, %cst_17 [1] : vector<16x16xf32> to vector<16xf32>
    %22 = vector.shape_cast %21 : vector<16xf32> to vector<16x1xf32>
    %cst_18 = arith.constant 1.600000e+01 : f32
    %23 = vector.broadcast %cst_18 : f32 to vector<16x1xf32>
    %24 = arith.divf %22, %23 : vector<16x1xf32>
    %25 = vector.broadcast %17 : vector<16x1xf32> to vector<16x16xf32>
    %26 = arith.subf %9, %25 : vector<16x16xf32>
    %cst_19 = arith.constant 9.99999974E-6 : f32
    %27 = vector.broadcast %cst_19 : f32 to vector<16x1xf32>
    %28 = arith.addf %24, %27 : vector<16x1xf32>
    %29 = math.rsqrt %28 : vector<16x1xf32>
    %30 = vector.broadcast %29 : vector<16x1xf32> to vector<16x16xf32>
    %31 = arith.mulf %26, %30 : vector<16x16xf32>
    %32 = vector.broadcast %11 : vector<1x16xf32> to vector<16x16xf32>
    %33 = arith.mulf %31, %32 : vector<16x16xf32>
    %34 = vector.broadcast %13 : vector<1x16xf32> to vector<16x16xf32>
    %35 = arith.addf %33, %34 : vector<16x16xf32>
    %c0_20 = arith.constant 0 : index
    %c0_21 = arith.constant 0 : index
    %c0_22 = arith.constant 0 : index
    %36 = vector.load %arg8[%c0_20, %c0_21, %c0_22] : memref<3x16x48xf32, #tpu.memory_space<vmem>>, vector<1x16x48xf32>
    %37 = vector.shape_cast %36 : vector<1x16x48xf32> to vector<16x48xf32>
    %cst_23 = arith.constant dense<0.000000e+00> : vector<16x48xf32>
    %38 = tpu.matmul %35, %37, %cst_23 {dimension_numbers = #tpu.dot_dimension_numbers<[1], [0], [0], [1], [0, 0, 1, 1], [], []>} : vector<16x16xf32>, vector<16x48xf32>, vector<16x48xf32> -> vector<16x48xf32>
    %39 = vector.extract_strided_slice %38 {offsets = [0, 0], sizes = [16, 16], strides = [1, 1]} : vector<16x48xf32> to vector<16x16xf32>
    %40 = vector.extract_strided_slice %38 {offsets = [0, 16], sizes = [16, 16], strides = [1, 1]} : vector<16x48xf32> to vector<16x16xf32>
    %41 = vector.extract_strided_slice %38 {offsets = [0, 32], sizes = [16, 16], strides = [1, 1]} : vector<16x48xf32> to vector<16x16xf32>
    %42 = tpu.iota {dimensions = array<i32: 1>} : vector<16x16xi32>
    %c0_i32 = arith.constant 0 : i32
    %43 = vector.broadcast %c0_i32 : i32 to vector<16x16xi32>
    %44 = arith.cmpi sge, %42, %43 : vector<16x16xi32>
    %c4_i32 = arith.constant 4 : i32
    %45 = vector.broadcast %c4_i32 : i32 to vector<16x16xi32>
    %46 = arith.cmpi slt, %42, %45 : vector<16x16xi32>
    %47 = arith.andi %44, %46 : vector<16x16xi1>
    %c4_i32_24 = arith.constant 4 : i32
    %48 = vector.broadcast %c4_i32_24 : i32 to vector<16x16xi32>
    %49 = arith.cmpi sge, %42, %48 : vector<16x16xi32>
    %c8_i32 = arith.constant 8 : i32
    %50 = vector.broadcast %c8_i32 : i32 to vector<16x16xi32>
    %51 = arith.cmpi slt, %42, %50 : vector<16x16xi32>
    %52 = arith.andi %49, %51 : vector<16x16xi1>
    %c8_i32_25 = arith.constant 8 : i32
    %53 = vector.broadcast %c8_i32_25 : i32 to vector<16x16xi32>
    %54 = arith.cmpi sge, %42, %53 : vector<16x16xi32>
    %c12_i32 = arith.constant 12 : i32
    %55 = vector.broadcast %c12_i32 : i32 to vector<16x16xi32>
    %56 = arith.cmpi slt, %42, %55 : vector<16x16xi32>
    %57 = arith.andi %54, %56 : vector<16x16xi1>
    %c12_i32_26 = arith.constant 12 : i32
    %58 = vector.broadcast %c12_i32_26 : i32 to vector<16x16xi32>
    %59 = arith.cmpi sge, %42, %58 : vector<16x16xi32>
    %c16_i32 = arith.constant 16 : i32
    %60 = vector.broadcast %c16_i32 : i32 to vector<16x16xi32>
    %61 = arith.cmpi slt, %42, %60 : vector<16x16xi32>
    %62 = arith.andi %59, %61 : vector<16x16xi1>
    %cst_27 = arith.constant 2.500000e-01 : f32
    %63 = vector.broadcast %cst_27 : f32 to vector<16x16xf32>
    %64 = arith.mulf %39, %63 : vector<16x16xf32>
    %cst_28 = arith.constant 0.000000e+00 : f32
    %65 = vector.broadcast %cst_28 : f32 to vector<16x16xf32>
    %66 = arith.select %47, %64, %65 : vector<16x16xi1>, vector<16x16xf32>
    %cst_29 = arith.constant 0.000000e+00 : f32
    %67 = vector.broadcast %cst_29 : f32 to vector<16x16xf32>
    %68 = arith.select %52, %64, %67 : vector<16x16xi1>, vector<16x16xf32>
    %cst_30 = arith.constant 0.000000e+00 : f32
    %69 = vector.broadcast %cst_30 : f32 to vector<16x16xf32>
    %70 = arith.select %57, %64, %69 : vector<16x16xi1>, vector<16x16xf32>
    %cst_31 = arith.constant 0.000000e+00 : f32
    %71 = vector.broadcast %cst_31 : f32 to vector<16x16xf32>
    %72 = arith.select %62, %64, %71 : vector<16x16xi1>, vector<16x16xf32>
    %73 = tpu.concatenate %66, %68, %70, %72 in 0 : vector<16x16xf32>, vector<16x16xf32>, vector<16x16xf32>, vector<16x16xf32> -> vector<64x16xf32>
    %cst_32 = arith.constant dense<0.000000e+00> : vector<64x16xf32>
    %74 = tpu.matmul %73, %40, %cst_32 {dimension_numbers = #tpu.dot_dimension_numbers<[1], [1], [0], [0], [0, 0, 1, 0], [], []>} : vector<64x16xf32>, vector<16x16xf32>, vector<64x16xf32> -> vector<64x16xf32>
    %cst_33 = arith.constant dense<0xFF800000> : vector<64xf32>
    %75 = vector.multi_reduction <maximumf>, %74, %cst_33 [1] : vector<64x16xf32> to vector<64xf32>
    %76 = vector.shape_cast %75 : vector<64xf32> to vector<64x1xf32>
    %77 = vector.broadcast %76 : vector<64x1xf32> to vector<64x16xf32>
    %78 = arith.subf %74, %77 : vector<64x16xf32>
    %79 = math.exp %78 : vector<64x16xf32>
    %cst_34 = arith.constant dense<0.000000e+00> : vector<64xf32>
    %80 = vector.multi_reduction <add>, %79, %cst_34 [1] : vector<64x16xf32> to vector<64xf32>
    %81 = vector.shape_cast %80 : vector<64xf32> to vector<64x1xf32>
    %82 = vector.broadcast %81 : vector<64x1xf32> to vector<64x16xf32>
    %83 = arith.divf %79, %82 : vector<64x16xf32>
    %cst_35 = arith.constant dense<0.000000e+00> : vector<64x16xf32>
    %84 = tpu.matmul %83, %41, %cst_35 {dimension_numbers = #tpu.dot_dimension_numbers<[1], [0], [0], [1], [0, 0, 1, 1], [], []>} : vector<64x16xf32>, vector<16x16xf32>, vector<64x16xf32> -> vector<64x16xf32>
    %85 = vector.extract_strided_slice %84 {offsets = [0, 0], sizes = [16, 16], strides = [1, 1]} : vector<64x16xf32> to vector<16x16xf32>
    %cst_36 = arith.constant 0.000000e+00 : f32
    %86 = vector.broadcast %cst_36 : f32 to vector<16x16xf32>
    %87 = arith.select %47, %85, %86 : vector<16x16xi1>, vector<16x16xf32>
    %88 = vector.extract_strided_slice %84 {offsets = [16, 0], sizes = [16, 16], strides = [1, 1]} : vector<64x16xf32> to vector<16x16xf32>
    %cst_37 = arith.constant 0.000000e+00 : f32
    %89 = vector.broadcast %cst_37 : f32 to vector<16x16xf32>
    %90 = arith.select %52, %88, %89 : vector<16x16xi1>, vector<16x16xf32>
    %91 = arith.addf %87, %90 : vector<16x16xf32>
    %92 = vector.extract_strided_slice %84 {offsets = [32, 0], sizes = [16, 16], strides = [1, 1]} : vector<64x16xf32> to vector<16x16xf32>
    %cst_38 = arith.constant 0.000000e+00 : f32
    %93 = vector.broadcast %cst_38 : f32 to vector<16x16xf32>
    %94 = arith.select %57, %92, %93 : vector<16x16xi1>, vector<16x16xf32>
    %95 = arith.addf %91, %94 : vector<16x16xf32>
    %96 = vector.extract_strided_slice %84 {offsets = [48, 0], sizes = [16, 16], strides = [1, 1]} : vector<64x16xf32> to vector<16x16xf32>
    %cst_39 = arith.constant 0.000000e+00 : f32
    %97 = vector.broadcast %cst_39 : f32 to vector<16x16xf32>
    %98 = arith.select %62, %96, %97 : vector<16x16xi1>, vector<16x16xf32>
    %99 = arith.addf %95, %98 : vector<16x16xf32>
    %c0_40 = arith.constant 0 : index
    %c0_41 = arith.constant 0 : index
    %c0_42 = arith.constant 0 : index
    %100 = vector.load %arg9[%c0_40, %c0_41, %c0_42] : memref<3x16x16xf32, #tpu.memory_space<vmem>>, vector<1x16x16xf32>
    %101 = vector.shape_cast %100 : vector<1x16x16xf32> to vector<16x16xf32>
    %cst_43 = arith.constant dense<0.000000e+00> : vector<16x16xf32>
    %102 = tpu.matmul %99, %101, %cst_43 {dimension_numbers = #tpu.dot_dimension_numbers<[1], [0], [0], [1], [0, 0, 1, 1], [], []>} : vector<16x16xf32>, vector<16x16xf32>, vector<16x16xf32> -> vector<16x16xf32>
    %103 = arith.addf %9, %102 : vector<16x16xf32>
    %c0_44 = arith.constant 0 : index
    %c0_45 = arith.constant 0 : index
    %c0_46 = arith.constant 0 : index
    %104 = vector.load %arg10[%c0_44, %c0_45, %c0_46] : memref<3x1x16xf32, #tpu.memory_space<vmem>>, vector<1x1x16xf32>
    %105 = vector.shape_cast %104 : vector<1x1x16xf32> to vector<1x16xf32>
    %106 = vector.broadcast %105 : vector<1x16xf32> to vector<16x16xf32>
    %107 = arith.addf %103, %106 : vector<16x16xf32>
    %c0_47 = arith.constant 0 : index
    %c0_48 = arith.constant 0 : index
    %c0_49 = arith.constant 0 : index
    %108 = vector.load %arg11[%c0_47, %c0_48, %c0_49] : memref<3x1x16xf32, #tpu.memory_space<vmem>>, vector<1x1x16xf32>
    %109 = vector.shape_cast %108 : vector<1x1x16xf32> to vector<1x16xf32>
    %c0_50 = arith.constant 0 : index
    %c0_51 = arith.constant 0 : index
    %c0_52 = arith.constant 0 : index
    %110 = vector.load %arg12[%c0_50, %c0_51, %c0_52] : memref<3x1x16xf32, #tpu.memory_space<vmem>>, vector<1x1x16xf32>
    %111 = vector.shape_cast %110 : vector<1x1x16xf32> to vector<1x16xf32>
    %cst_53 = arith.constant dense<0.000000e+00> : vector<16xf32>
    %112 = vector.multi_reduction <add>, %107, %cst_53 [1] : vector<16x16xf32> to vector<16xf32>
    %113 = vector.shape_cast %112 : vector<16xf32> to vector<16x1xf32>
    %cst_54 = arith.constant 1.600000e+01 : f32
    %114 = vector.broadcast %cst_54 : f32 to vector<16x1xf32>
    %115 = arith.divf %113, %114 : vector<16x1xf32>
    %116 = vector.broadcast %115 : vector<16x1xf32> to vector<16x16xf32>
    %117 = arith.subf %107, %116 : vector<16x16xf32>
    %118 = arith.mulf %117, %117 : vector<16x16xf32>
    %cst_55 = arith.constant dense<0.000000e+00> : vector<16xf32>
    %119 = vector.multi_reduction <add>, %118, %cst_55 [1] : vector<16x16xf32> to vector<16xf32>
    %120 = vector.shape_cast %119 : vector<16xf32> to vector<16x1xf32>
    %cst_56 = arith.constant 1.600000e+01 : f32
    %121 = vector.broadcast %cst_56 : f32 to vector<16x1xf32>
    %122 = arith.divf %120, %121 : vector<16x1xf32>
    %123 = vector.broadcast %115 : vector<16x1xf32> to vector<16x16xf32>
    %124 = arith.subf %107, %123 : vector<16x16xf32>
    %cst_57 = arith.constant 9.99999974E-6 : f32
    %125 = vector.broadcast %cst_57 : f32 to vector<16x1xf32>
    %126 = arith.addf %122, %125 : vector<16x1xf32>
    %127 = math.rsqrt %126 : vector<16x1xf32>
    %128 = vector.broadcast %127 : vector<16x1xf32> to vector<16x16xf32>
    %129 = arith.mulf %124, %128 : vector<16x16xf32>
    %130 = vector.broadcast %109 : vector<1x16xf32> to vector<16x16xf32>
    %131 = arith.mulf %129, %130 : vector<16x16xf32>
    %132 = vector.broadcast %111 : vector<1x16xf32> to vector<16x16xf32>
    %133 = arith.addf %131, %132 : vector<16x16xf32>
    %c0_58 = arith.constant 0 : index
    %c0_59 = arith.constant 0 : index
    %c0_60 = arith.constant 0 : index
    %134 = vector.load %arg13[%c0_58, %c0_59, %c0_60] : memref<3x16x32xf32, #tpu.memory_space<vmem>>, vector<1x16x32xf32>
    %135 = vector.shape_cast %134 : vector<1x16x32xf32> to vector<16x32xf32>
    %cst_61 = arith.constant dense<0.000000e+00> : vector<16x32xf32>
    %136 = tpu.matmul %133, %135, %cst_61 {dimension_numbers = #tpu.dot_dimension_numbers<[1], [0], [0], [1], [0, 0, 1, 1], [], []>} : vector<16x16xf32>, vector<16x32xf32>, vector<16x32xf32> -> vector<16x32xf32>
    %c0_62 = arith.constant 0 : index
    %c0_63 = arith.constant 0 : index
    %c0_64 = arith.constant 0 : index
    %137 = vector.load %arg14[%c0_62, %c0_63, %c0_64] : memref<3x1x32xf32, #tpu.memory_space<vmem>>, vector<1x1x32xf32>
    %138 = vector.shape_cast %137 : vector<1x1x32xf32> to vector<1x32xf32>
    %139 = vector.broadcast %138 : vector<1x32xf32> to vector<16x32xf32>
    %140 = arith.addf %136, %139 : vector<16x32xf32>
    %cst_65 = arith.constant 5.000000e-01 : f32
    %141 = vector.broadcast %cst_65 : f32 to vector<16x32xf32>
    %142 = arith.mulf %141, %140 : vector<16x32xf32>
    %cst_66 = arith.constant 0.707106769 : f32
    %143 = vector.broadcast %cst_66 : f32 to vector<16x32xf32>
    %144 = arith.mulf %140, %143 : vector<16x32xf32>
    %145 = math.erf %144 : vector<16x32xf32>
    %cst_67 = arith.constant 1.000000e+00 : f32
    %146 = vector.broadcast %cst_67 : f32 to vector<16x32xf32>
    %147 = arith.addf %146, %145 : vector<16x32xf32>
    %148 = arith.mulf %142, %147 : vector<16x32xf32>
    %c0_68 = arith.constant 0 : index
    %c0_69 = arith.constant 0 : index
    %c0_70 = arith.constant 0 : index
    %149 = vector.load %arg15[%c0_68, %c0_69, %c0_70] : memref<3x32x16xf32, #tpu.memory_space<vmem>>, vector<1x32x16xf32>
    %150 = vector.shape_cast %149 : vector<1x32x16xf32> to vector<32x16xf32>
    %cst_71 = arith.constant dense<0.000000e+00> : vector<16x16xf32>
    %151 = tpu.matmul %148, %150, %cst_71 {dimension_numbers = #tpu.dot_dimension_numbers<[1], [0], [0], [1], [0, 0, 1, 1], [], []>} : vector<16x32xf32>, vector<32x16xf32>, vector<16x16xf32> -> vector<16x16xf32>
    %152 = arith.addf %107, %151 : vector<16x16xf32>
    %c0_72 = arith.constant 0 : index
    %c0_73 = arith.constant 0 : index
    %c0_74 = arith.constant 0 : index
    %153 = vector.load %arg16[%c0_72, %c0_73, %c0_74] : memref<3x1x16xf32, #tpu.memory_space<vmem>>, vector<1x1x16xf32>
    %154 = vector.shape_cast %153 : vector<1x1x16xf32> to vector<1x16xf32>
    %155 = vector.broadcast %154 : vector<1x16xf32> to vector<16x16xf32>
    %156 = arith.addf %152, %155 : vector<16x16xf32>
    %c1 = arith.constant 1 : index
    %c0_75 = arith.constant 0 : index
    %c0_76 = arith.constant 0 : index
    %157 = vector.load %arg6[%c1, %c0_75, %c0_76] : memref<3x1x16xf32, #tpu.memory_space<vmem>>, vector<1x1x16xf32>
    %158 = vector.shape_cast %157 : vector<1x1x16xf32> to vector<1x16xf32>
    %c1_77 = arith.constant 1 : index
    %c0_78 = arith.constant 0 : index
    %c0_79 = arith.constant 0 : index
    %159 = vector.load %arg7[%c1_77, %c0_78, %c0_79] : memref<3x1x16xf32, #tpu.memory_space<vmem>>, vector<1x1x16xf32>
    %160 = vector.shape_cast %159 : vector<1x1x16xf32> to vector<1x16xf32>
    %cst_80 = arith.constant dense<0.000000e+00> : vector<16xf32>
    %161 = vector.multi_reduction <add>, %156, %cst_80 [1] : vector<16x16xf32> to vector<16xf32>
    %162 = vector.shape_cast %161 : vector<16xf32> to vector<16x1xf32>
    %cst_81 = arith.constant 1.600000e+01 : f32
    %163 = vector.broadcast %cst_81 : f32 to vector<16x1xf32>
    %164 = arith.divf %162, %163 : vector<16x1xf32>
    %165 = vector.broadcast %164 : vector<16x1xf32> to vector<16x16xf32>
    %166 = arith.subf %156, %165 : vector<16x16xf32>
    %167 = arith.mulf %166, %166 : vector<16x16xf32>
    %cst_82 = arith.constant dense<0.000000e+00> : vector<16xf32>
    %168 = vector.multi_reduction <add>, %167, %cst_82 [1] : vector<16x16xf32> to vector<16xf32>
    %169 = vector.shape_cast %168 : vector<16xf32> to vector<16x1xf32>
    %cst_83 = arith.constant 1.600000e+01 : f32
    %170 = vector.broadcast %cst_83 : f32 to vector<16x1xf32>
    %171 = arith.divf %169, %170 : vector<16x1xf32>
    %172 = vector.broadcast %164 : vector<16x1xf32> to vector<16x16xf32>
    %173 = arith.subf %156, %172 : vector<16x16xf32>
    %cst_84 = arith.constant 9.99999974E-6 : f32
    %174 = vector.broadcast %cst_84 : f32 to vector<16x1xf32>
    %175 = arith.addf %171, %174 : vector<16x1xf32>
    %176 = math.rsqrt %175 : vector<16x1xf32>
    %177 = vector.broadcast %176 : vector<16x1xf32> to vector<16x16xf32>
    %178 = arith.mulf %173, %177 : vector<16x16xf32>
    %179 = vector.broadcast %158 : vector<1x16xf32> to vector<16x16xf32>
    %180 = arith.mulf %178, %179 : vector<16x16xf32>
    %181 = vector.broadcast %160 : vector<1x16xf32> to vector<16x16xf32>
    %182 = arith.addf %180, %181 : vector<16x16xf32>
    %c1_85 = arith.constant 1 : index
    %c0_86 = arith.constant 0 : index
    %c0_87 = arith.constant 0 : index
    %183 = vector.load %arg8[%c1_85, %c0_86, %c0_87] : memref<3x16x48xf32, #tpu.memory_space<vmem>>, vector<1x16x48xf32>
    %184 = vector.shape_cast %183 : vector<1x16x48xf32> to vector<16x48xf32>
    %cst_88 = arith.constant dense<0.000000e+00> : vector<16x48xf32>
    %185 = tpu.matmul %182, %184, %cst_88 {dimension_numbers = #tpu.dot_dimension_numbers<[1], [0], [0], [1], [0, 0, 1, 1], [], []>} : vector<16x16xf32>, vector<16x48xf32>, vector<16x48xf32> -> vector<16x48xf32>
    %186 = vector.extract_strided_slice %185 {offsets = [0, 0], sizes = [16, 16], strides = [1, 1]} : vector<16x48xf32> to vector<16x16xf32>
    %187 = vector.extract_strided_slice %185 {offsets = [0, 16], sizes = [16, 16], strides = [1, 1]} : vector<16x48xf32> to vector<16x16xf32>
    %188 = vector.extract_strided_slice %185 {offsets = [0, 32], sizes = [16, 16], strides = [1, 1]} : vector<16x48xf32> to vector<16x16xf32>
    %189 = tpu.iota {dimensions = array<i32: 1>} : vector<16x16xi32>
    %c0_i32_89 = arith.constant 0 : i32
    %190 = vector.broadcast %c0_i32_89 : i32 to vector<16x16xi32>
    %191 = arith.cmpi sge, %189, %190 : vector<16x16xi32>
    %c4_i32_90 = arith.constant 4 : i32
    %192 = vector.broadcast %c4_i32_90 : i32 to vector<16x16xi32>
    %193 = arith.cmpi slt, %189, %192 : vector<16x16xi32>
    %194 = arith.andi %191, %193 : vector<16x16xi1>
    %c4_i32_91 = arith.constant 4 : i32
    %195 = vector.broadcast %c4_i32_91 : i32 to vector<16x16xi32>
    %196 = arith.cmpi sge, %189, %195 : vector<16x16xi32>
    %c8_i32_92 = arith.constant 8 : i32
    %197 = vector.broadcast %c8_i32_92 : i32 to vector<16x16xi32>
    %198 = arith.cmpi slt, %189, %197 : vector<16x16xi32>
    %199 = arith.andi %196, %198 : vector<16x16xi1>
    %c8_i32_93 = arith.constant 8 : i32
    %200 = vector.broadcast %c8_i32_93 : i32 to vector<16x16xi32>
    %201 = arith.cmpi sge, %189, %200 : vector<16x16xi32>
    %c12_i32_94 = arith.constant 12 : i32
    %202 = vector.broadcast %c12_i32_94 : i32 to vector<16x16xi32>
    %203 = arith.cmpi slt, %189, %202 : vector<16x16xi32>
    %204 = arith.andi %201, %203 : vector<16x16xi1>
    %c12_i32_95 = arith.constant 12 : i32
    %205 = vector.broadcast %c12_i32_95 : i32 to vector<16x16xi32>
    %206 = arith.cmpi sge, %189, %205 : vector<16x16xi32>
    %c16_i32_96 = arith.constant 16 : i32
    %207 = vector.broadcast %c16_i32_96 : i32 to vector<16x16xi32>
    %208 = arith.cmpi slt, %189, %207 : vector<16x16xi32>
    %209 = arith.andi %206, %208 : vector<16x16xi1>
    %cst_97 = arith.constant 2.500000e-01 : f32
    %210 = vector.broadcast %cst_97 : f32 to vector<16x16xf32>
    %211 = arith.mulf %186, %210 : vector<16x16xf32>
    %cst_98 = arith.constant 0.000000e+00 : f32
    %212 = vector.broadcast %cst_98 : f32 to vector<16x16xf32>
    %213 = arith.select %194, %211, %212 : vector<16x16xi1>, vector<16x16xf32>
    %cst_99 = arith.constant 0.000000e+00 : f32
    %214 = vector.broadcast %cst_99 : f32 to vector<16x16xf32>
    %215 = arith.select %199, %211, %214 : vector<16x16xi1>, vector<16x16xf32>
    %cst_100 = arith.constant 0.000000e+00 : f32
    %216 = vector.broadcast %cst_100 : f32 to vector<16x16xf32>
    %217 = arith.select %204, %211, %216 : vector<16x16xi1>, vector<16x16xf32>
    %cst_101 = arith.constant 0.000000e+00 : f32
    %218 = vector.broadcast %cst_101 : f32 to vector<16x16xf32>
    %219 = arith.select %209, %211, %218 : vector<16x16xi1>, vector<16x16xf32>
    %220 = tpu.concatenate %213, %215, %217, %219 in 0 : vector<16x16xf32>, vector<16x16xf32>, vector<16x16xf32>, vector<16x16xf32> -> vector<64x16xf32>
    %cst_102 = arith.constant dense<0.000000e+00> : vector<64x16xf32>
    %221 = tpu.matmul %220, %187, %cst_102 {dimension_numbers = #tpu.dot_dimension_numbers<[1], [1], [0], [0], [0, 0, 1, 0], [], []>} : vector<64x16xf32>, vector<16x16xf32>, vector<64x16xf32> -> vector<64x16xf32>
    %cst_103 = arith.constant dense<0xFF800000> : vector<64xf32>
    %222 = vector.multi_reduction <maximumf>, %221, %cst_103 [1] : vector<64x16xf32> to vector<64xf32>
    %223 = vector.shape_cast %222 : vector<64xf32> to vector<64x1xf32>
    %224 = vector.broadcast %223 : vector<64x1xf32> to vector<64x16xf32>
    %225 = arith.subf %221, %224 : vector<64x16xf32>
    %226 = math.exp %225 : vector<64x16xf32>
    %cst_104 = arith.constant dense<0.000000e+00> : vector<64xf32>
    %227 = vector.multi_reduction <add>, %226, %cst_104 [1] : vector<64x16xf32> to vector<64xf32>
    %228 = vector.shape_cast %227 : vector<64xf32> to vector<64x1xf32>
    %229 = vector.broadcast %228 : vector<64x1xf32> to vector<64x16xf32>
    %230 = arith.divf %226, %229 : vector<64x16xf32>
    %cst_105 = arith.constant dense<0.000000e+00> : vector<64x16xf32>
    %231 = tpu.matmul %230, %188, %cst_105 {dimension_numbers = #tpu.dot_dimension_numbers<[1], [0], [0], [1], [0, 0, 1, 1], [], []>} : vector<64x16xf32>, vector<16x16xf32>, vector<64x16xf32> -> vector<64x16xf32>
    %232 = vector.extract_strided_slice %231 {offsets = [0, 0], sizes = [16, 16], strides = [1, 1]} : vector<64x16xf32> to vector<16x16xf32>
    %cst_106 = arith.constant 0.000000e+00 : f32
    %233 = vector.broadcast %cst_106 : f32 to vector<16x16xf32>
    %234 = arith.select %194, %232, %233 : vector<16x16xi1>, vector<16x16xf32>
    %235 = vector.extract_strided_slice %231 {offsets = [16, 0], sizes = [16, 16], strides = [1, 1]} : vector<64x16xf32> to vector<16x16xf32>
    %cst_107 = arith.constant 0.000000e+00 : f32
    %236 = vector.broadcast %cst_107 : f32 to vector<16x16xf32>
    %237 = arith.select %199, %235, %236 : vector<16x16xi1>, vector<16x16xf32>
    %238 = arith.addf %234, %237 : vector<16x16xf32>
    %239 = vector.extract_strided_slice %231 {offsets = [32, 0], sizes = [16, 16], strides = [1, 1]} : vector<64x16xf32> to vector<16x16xf32>
    %cst_108 = arith.constant 0.000000e+00 : f32
    %240 = vector.broadcast %cst_108 : f32 to vector<16x16xf32>
    %241 = arith.select %204, %239, %240 : vector<16x16xi1>, vector<16x16xf32>
    %242 = arith.addf %238, %241 : vector<16x16xf32>
    %243 = vector.extract_strided_slice %231 {offsets = [48, 0], sizes = [16, 16], strides = [1, 1]} : vector<64x16xf32> to vector<16x16xf32>
    %cst_109 = arith.constant 0.000000e+00 : f32
    %244 = vector.broadcast %cst_109 : f32 to vector<16x16xf32>
    %245 = arith.select %209, %243, %244 : vector<16x16xi1>, vector<16x16xf32>
    %246 = arith.addf %242, %245 : vector<16x16xf32>
    %c1_110 = arith.constant 1 : index
    %c0_111 = arith.constant 0 : index
    %c0_112 = arith.constant 0 : index
    %247 = vector.load %arg9[%c1_110, %c0_111, %c0_112] : memref<3x16x16xf32, #tpu.memory_space<vmem>>, vector<1x16x16xf32>
    %248 = vector.shape_cast %247 : vector<1x16x16xf32> to vector<16x16xf32>
    %cst_113 = arith.constant dense<0.000000e+00> : vector<16x16xf32>
    %249 = tpu.matmul %246, %248, %cst_113 {dimension_numbers = #tpu.dot_dimension_numbers<[1], [0], [0], [1], [0, 0, 1, 1], [], []>} : vector<16x16xf32>, vector<16x16xf32>, vector<16x16xf32> -> vector<16x16xf32>
    %250 = arith.addf %156, %249 : vector<16x16xf32>
    %c1_114 = arith.constant 1 : index
    %c0_115 = arith.constant 0 : index
    %c0_116 = arith.constant 0 : index
    %251 = vector.load %arg10[%c1_114, %c0_115, %c0_116] : memref<3x1x16xf32, #tpu.memory_space<vmem>>, vector<1x1x16xf32>
    %252 = vector.shape_cast %251 : vector<1x1x16xf32> to vector<1x16xf32>
    %253 = vector.broadcast %252 : vector<1x16xf32> to vector<16x16xf32>
    %254 = arith.addf %250, %253 : vector<16x16xf32>
    %c1_117 = arith.constant 1 : index
    %c0_118 = arith.constant 0 : index
    %c0_119 = arith.constant 0 : index
    %255 = vector.load %arg11[%c1_117, %c0_118, %c0_119] : memref<3x1x16xf32, #tpu.memory_space<vmem>>, vector<1x1x16xf32>
    %256 = vector.shape_cast %255 : vector<1x1x16xf32> to vector<1x16xf32>
    %c1_120 = arith.constant 1 : index
    %c0_121 = arith.constant 0 : index
    %c0_122 = arith.constant 0 : index
    %257 = vector.load %arg12[%c1_120, %c0_121, %c0_122] : memref<3x1x16xf32, #tpu.memory_space<vmem>>, vector<1x1x16xf32>
    %258 = vector.shape_cast %257 : vector<1x1x16xf32> to vector<1x16xf32>
    %cst_123 = arith.constant dense<0.000000e+00> : vector<16xf32>
    %259 = vector.multi_reduction <add>, %254, %cst_123 [1] : vector<16x16xf32> to vector<16xf32>
    %260 = vector.shape_cast %259 : vector<16xf32> to vector<16x1xf32>
    %cst_124 = arith.constant 1.600000e+01 : f32
    %261 = vector.broadcast %cst_124 : f32 to vector<16x1xf32>
    %262 = arith.divf %260, %261 : vector<16x1xf32>
    %263 = vector.broadcast %262 : vector<16x1xf32> to vector<16x16xf32>
    %264 = arith.subf %254, %263 : vector<16x16xf32>
    %265 = arith.mulf %264, %264 : vector<16x16xf32>
    %cst_125 = arith.constant dense<0.000000e+00> : vector<16xf32>
    %266 = vector.multi_reduction <add>, %265, %cst_125 [1] : vector<16x16xf32> to vector<16xf32>
    %267 = vector.shape_cast %266 : vector<16xf32> to vector<16x1xf32>
    %cst_126 = arith.constant 1.600000e+01 : f32
    %268 = vector.broadcast %cst_126 : f32 to vector<16x1xf32>
    %269 = arith.divf %267, %268 : vector<16x1xf32>
    %270 = vector.broadcast %262 : vector<16x1xf32> to vector<16x16xf32>
    %271 = arith.subf %254, %270 : vector<16x16xf32>
    %cst_127 = arith.constant 9.99999974E-6 : f32
    %272 = vector.broadcast %cst_127 : f32 to vector<16x1xf32>
    %273 = arith.addf %269, %272 : vector<16x1xf32>
    %274 = math.rsqrt %273 : vector<16x1xf32>
    %275 = vector.broadcast %274 : vector<16x1xf32> to vector<16x16xf32>
    %276 = arith.mulf %271, %275 : vector<16x16xf32>
    %277 = vector.broadcast %256 : vector<1x16xf32> to vector<16x16xf32>
    %278 = arith.mulf %276, %277 : vector<16x16xf32>
    %279 = vector.broadcast %258 : vector<1x16xf32> to vector<16x16xf32>
    %280 = arith.addf %278, %279 : vector<16x16xf32>
    %c1_128 = arith.constant 1 : index
    %c0_129 = arith.constant 0 : index
    %c0_130 = arith.constant 0 : index
    %281 = vector.load %arg13[%c1_128, %c0_129, %c0_130] : memref<3x16x32xf32, #tpu.memory_space<vmem>>, vector<1x16x32xf32>
    %282 = vector.shape_cast %281 : vector<1x16x32xf32> to vector<16x32xf32>
    %cst_131 = arith.constant dense<0.000000e+00> : vector<16x32xf32>
    %283 = tpu.matmul %280, %282, %cst_131 {dimension_numbers = #tpu.dot_dimension_numbers<[1], [0], [0], [1], [0, 0, 1, 1], [], []>} : vector<16x16xf32>, vector<16x32xf32>, vector<16x32xf32> -> vector<16x32xf32>
    %c1_132 = arith.constant 1 : index
    %c0_133 = arith.constant 0 : index
    %c0_134 = arith.constant 0 : index
    %284 = vector.load %arg14[%c1_132, %c0_133, %c0_134] : memref<3x1x32xf32, #tpu.memory_space<vmem>>, vector<1x1x32xf32>
    %285 = vector.shape_cast %284 : vector<1x1x32xf32> to vector<1x32xf32>
    %286 = vector.broadcast %285 : vector<1x32xf32> to vector<16x32xf32>
    %287 = arith.addf %283, %286 : vector<16x32xf32>
    %cst_135 = arith.constant 5.000000e-01 : f32
    %288 = vector.broadcast %cst_135 : f32 to vector<16x32xf32>
    %289 = arith.mulf %288, %287 : vector<16x32xf32>
    %cst_136 = arith.constant 0.707106769 : f32
    %290 = vector.broadcast %cst_136 : f32 to vector<16x32xf32>
    %291 = arith.mulf %287, %290 : vector<16x32xf32>
    %292 = math.erf %291 : vector<16x32xf32>
    %cst_137 = arith.constant 1.000000e+00 : f32
    %293 = vector.broadcast %cst_137 : f32 to vector<16x32xf32>
    %294 = arith.addf %293, %292 : vector<16x32xf32>
    %295 = arith.mulf %289, %294 : vector<16x32xf32>
    %c1_138 = arith.constant 1 : index
    %c0_139 = arith.constant 0 : index
    %c0_140 = arith.constant 0 : index
    %296 = vector.load %arg15[%c1_138, %c0_139, %c0_140] : memref<3x32x16xf32, #tpu.memory_space<vmem>>, vector<1x32x16xf32>
    %297 = vector.shape_cast %296 : vector<1x32x16xf32> to vector<32x16xf32>
    %cst_141 = arith.constant dense<0.000000e+00> : vector<16x16xf32>
    %298 = tpu.matmul %295, %297, %cst_141 {dimension_numbers = #tpu.dot_dimension_numbers<[1], [0], [0], [1], [0, 0, 1, 1], [], []>} : vector<16x32xf32>, vector<32x16xf32>, vector<16x16xf32> -> vector<16x16xf32>
    %299 = arith.addf %254, %298 : vector<16x16xf32>
    %c1_142 = arith.constant 1 : index
    %c0_143 = arith.constant 0 : index
    %c0_144 = arith.constant 0 : index
    %300 = vector.load %arg16[%c1_142, %c0_143, %c0_144] : memref<3x1x16xf32, #tpu.memory_space<vmem>>, vector<1x1x16xf32>
    %301 = vector.shape_cast %300 : vector<1x1x16xf32> to vector<1x16xf32>
    %302 = vector.broadcast %301 : vector<1x16xf32> to vector<16x16xf32>
    %303 = arith.addf %299, %302 : vector<16x16xf32>
    %c2 = arith.constant 2 : index
    %c0_145 = arith.constant 0 : index
    %c0_146 = arith.constant 0 : index
    %304 = vector.load %arg6[%c2, %c0_145, %c0_146] : memref<3x1x16xf32, #tpu.memory_space<vmem>>, vector<1x1x16xf32>
    %305 = vector.shape_cast %304 : vector<1x1x16xf32> to vector<1x16xf32>
    %c2_147 = arith.constant 2 : index
    %c0_148 = arith.constant 0 : index
    %c0_149 = arith.constant 0 : index
    %306 = vector.load %arg7[%c2_147, %c0_148, %c0_149] : memref<3x1x16xf32, #tpu.memory_space<vmem>>, vector<1x1x16xf32>
    %307 = vector.shape_cast %306 : vector<1x1x16xf32> to vector<1x16xf32>
    %cst_150 = arith.constant dense<0.000000e+00> : vector<16xf32>
    %308 = vector.multi_reduction <add>, %303, %cst_150 [1] : vector<16x16xf32> to vector<16xf32>
    %309 = vector.shape_cast %308 : vector<16xf32> to vector<16x1xf32>
    %cst_151 = arith.constant 1.600000e+01 : f32
    %310 = vector.broadcast %cst_151 : f32 to vector<16x1xf32>
    %311 = arith.divf %309, %310 : vector<16x1xf32>
    %312 = vector.broadcast %311 : vector<16x1xf32> to vector<16x16xf32>
    %313 = arith.subf %303, %312 : vector<16x16xf32>
    %314 = arith.mulf %313, %313 : vector<16x16xf32>
    %cst_152 = arith.constant dense<0.000000e+00> : vector<16xf32>
    %315 = vector.multi_reduction <add>, %314, %cst_152 [1] : vector<16x16xf32> to vector<16xf32>
    %316 = vector.shape_cast %315 : vector<16xf32> to vector<16x1xf32>
    %cst_153 = arith.constant 1.600000e+01 : f32
    %317 = vector.broadcast %cst_153 : f32 to vector<16x1xf32>
    %318 = arith.divf %316, %317 : vector<16x1xf32>
    %319 = vector.broadcast %311 : vector<16x1xf32> to vector<16x16xf32>
    %320 = arith.subf %303, %319 : vector<16x16xf32>
    %cst_154 = arith.constant 9.99999974E-6 : f32
    %321 = vector.broadcast %cst_154 : f32 to vector<16x1xf32>
    %322 = arith.addf %318, %321 : vector<16x1xf32>
    %323 = math.rsqrt %322 : vector<16x1xf32>
    %324 = vector.broadcast %323 : vector<16x1xf32> to vector<16x16xf32>
    %325 = arith.mulf %320, %324 : vector<16x16xf32>
    %326 = vector.broadcast %305 : vector<1x16xf32> to vector<16x16xf32>
    %327 = arith.mulf %325, %326 : vector<16x16xf32>
    %328 = vector.broadcast %307 : vector<1x16xf32> to vector<16x16xf32>
    %329 = arith.addf %327, %328 : vector<16x16xf32>
    %c2_155 = arith.constant 2 : index
    %c0_156 = arith.constant 0 : index
    %c0_157 = arith.constant 0 : index
    %330 = vector.load %arg8[%c2_155, %c0_156, %c0_157] : memref<3x16x48xf32, #tpu.memory_space<vmem>>, vector<1x16x48xf32>
    %331 = vector.shape_cast %330 : vector<1x16x48xf32> to vector<16x48xf32>
    %cst_158 = arith.constant dense<0.000000e+00> : vector<16x48xf32>
    %332 = tpu.matmul %329, %331, %cst_158 {dimension_numbers = #tpu.dot_dimension_numbers<[1], [0], [0], [1], [0, 0, 1, 1], [], []>} : vector<16x16xf32>, vector<16x48xf32>, vector<16x48xf32> -> vector<16x48xf32>
    %333 = vector.extract_strided_slice %332 {offsets = [0, 0], sizes = [16, 16], strides = [1, 1]} : vector<16x48xf32> to vector<16x16xf32>
    %334 = vector.extract_strided_slice %332 {offsets = [0, 16], sizes = [16, 16], strides = [1, 1]} : vector<16x48xf32> to vector<16x16xf32>
    %335 = vector.extract_strided_slice %332 {offsets = [0, 32], sizes = [16, 16], strides = [1, 1]} : vector<16x48xf32> to vector<16x16xf32>
    %336 = tpu.iota {dimensions = array<i32: 1>} : vector<16x16xi32>
    %c0_i32_159 = arith.constant 0 : i32
    %337 = vector.broadcast %c0_i32_159 : i32 to vector<16x16xi32>
    %338 = arith.cmpi sge, %336, %337 : vector<16x16xi32>
    %c4_i32_160 = arith.constant 4 : i32
    %339 = vector.broadcast %c4_i32_160 : i32 to vector<16x16xi32>
    %340 = arith.cmpi slt, %336, %339 : vector<16x16xi32>
    %341 = arith.andi %338, %340 : vector<16x16xi1>
    %c4_i32_161 = arith.constant 4 : i32
    %342 = vector.broadcast %c4_i32_161 : i32 to vector<16x16xi32>
    %343 = arith.cmpi sge, %336, %342 : vector<16x16xi32>
    %c8_i32_162 = arith.constant 8 : i32
    %344 = vector.broadcast %c8_i32_162 : i32 to vector<16x16xi32>
    %345 = arith.cmpi slt, %336, %344 : vector<16x16xi32>
    %346 = arith.andi %343, %345 : vector<16x16xi1>
    %c8_i32_163 = arith.constant 8 : i32
    %347 = vector.broadcast %c8_i32_163 : i32 to vector<16x16xi32>
    %348 = arith.cmpi sge, %336, %347 : vector<16x16xi32>
    %c12_i32_164 = arith.constant 12 : i32
    %349 = vector.broadcast %c12_i32_164 : i32 to vector<16x16xi32>
    %350 = arith.cmpi slt, %336, %349 : vector<16x16xi32>
    %351 = arith.andi %348, %350 : vector<16x16xi1>
    %c12_i32_165 = arith.constant 12 : i32
    %352 = vector.broadcast %c12_i32_165 : i32 to vector<16x16xi32>
    %353 = arith.cmpi sge, %336, %352 : vector<16x16xi32>
    %c16_i32_166 = arith.constant 16 : i32
    %354 = vector.broadcast %c16_i32_166 : i32 to vector<16x16xi32>
    %355 = arith.cmpi slt, %336, %354 : vector<16x16xi32>
    %356 = arith.andi %353, %355 : vector<16x16xi1>
    %cst_167 = arith.constant 2.500000e-01 : f32
    %357 = vector.broadcast %cst_167 : f32 to vector<16x16xf32>
    %358 = arith.mulf %333, %357 : vector<16x16xf32>
    %cst_168 = arith.constant 0.000000e+00 : f32
    %359 = vector.broadcast %cst_168 : f32 to vector<16x16xf32>
    %360 = arith.select %341, %358, %359 : vector<16x16xi1>, vector<16x16xf32>
    %cst_169 = arith.constant 0.000000e+00 : f32
    %361 = vector.broadcast %cst_169 : f32 to vector<16x16xf32>
    %362 = arith.select %346, %358, %361 : vector<16x16xi1>, vector<16x16xf32>
    %cst_170 = arith.constant 0.000000e+00 : f32
    %363 = vector.broadcast %cst_170 : f32 to vector<16x16xf32>
    %364 = arith.select %351, %358, %363 : vector<16x16xi1>, vector<16x16xf32>
    %cst_171 = arith.constant 0.000000e+00 : f32
    %365 = vector.broadcast %cst_171 : f32 to vector<16x16xf32>
    %366 = arith.select %356, %358, %365 : vector<16x16xi1>, vector<16x16xf32>
    %367 = tpu.concatenate %360, %362, %364, %366 in 0 : vector<16x16xf32>, vector<16x16xf32>, vector<16x16xf32>, vector<16x16xf32> -> vector<64x16xf32>
    %cst_172 = arith.constant dense<0.000000e+00> : vector<64x16xf32>
    %368 = tpu.matmul %367, %334, %cst_172 {dimension_numbers = #tpu.dot_dimension_numbers<[1], [1], [0], [0], [0, 0, 1, 0], [], []>} : vector<64x16xf32>, vector<16x16xf32>, vector<64x16xf32> -> vector<64x16xf32>
    %cst_173 = arith.constant dense<0xFF800000> : vector<64xf32>
    %369 = vector.multi_reduction <maximumf>, %368, %cst_173 [1] : vector<64x16xf32> to vector<64xf32>
    %370 = vector.shape_cast %369 : vector<64xf32> to vector<64x1xf32>
    %371 = vector.broadcast %370 : vector<64x1xf32> to vector<64x16xf32>
    %372 = arith.subf %368, %371 : vector<64x16xf32>
    %373 = math.exp %372 : vector<64x16xf32>
    %cst_174 = arith.constant dense<0.000000e+00> : vector<64xf32>
    %374 = vector.multi_reduction <add>, %373, %cst_174 [1] : vector<64x16xf32> to vector<64xf32>
    %375 = vector.shape_cast %374 : vector<64xf32> to vector<64x1xf32>
    %376 = vector.broadcast %375 : vector<64x1xf32> to vector<64x16xf32>
    %377 = arith.divf %373, %376 : vector<64x16xf32>
    %cst_175 = arith.constant dense<0.000000e+00> : vector<64x16xf32>
    %378 = tpu.matmul %377, %335, %cst_175 {dimension_numbers = #tpu.dot_dimension_numbers<[1], [0], [0], [1], [0, 0, 1, 1], [], []>} : vector<64x16xf32>, vector<16x16xf32>, vector<64x16xf32> -> vector<64x16xf32>
    %379 = vector.extract_strided_slice %378 {offsets = [0, 0], sizes = [16, 16], strides = [1, 1]} : vector<64x16xf32> to vector<16x16xf32>
    %cst_176 = arith.constant 0.000000e+00 : f32
    %380 = vector.broadcast %cst_176 : f32 to vector<16x16xf32>
    %381 = arith.select %341, %379, %380 : vector<16x16xi1>, vector<16x16xf32>
    %382 = vector.extract_strided_slice %378 {offsets = [16, 0], sizes = [16, 16], strides = [1, 1]} : vector<64x16xf32> to vector<16x16xf32>
    %cst_177 = arith.constant 0.000000e+00 : f32
    %383 = vector.broadcast %cst_177 : f32 to vector<16x16xf32>
    %384 = arith.select %346, %382, %383 : vector<16x16xi1>, vector<16x16xf32>
    %385 = arith.addf %381, %384 : vector<16x16xf32>
    %386 = vector.extract_strided_slice %378 {offsets = [32, 0], sizes = [16, 16], strides = [1, 1]} : vector<64x16xf32> to vector<16x16xf32>
    %cst_178 = arith.constant 0.000000e+00 : f32
    %387 = vector.broadcast %cst_178 : f32 to vector<16x16xf32>
    %388 = arith.select %351, %386, %387 : vector<16x16xi1>, vector<16x16xf32>
    %389 = arith.addf %385, %388 : vector<16x16xf32>
    %390 = vector.extract_strided_slice %378 {offsets = [48, 0], sizes = [16, 16], strides = [1, 1]} : vector<64x16xf32> to vector<16x16xf32>
    %cst_179 = arith.constant 0.000000e+00 : f32
    %391 = vector.broadcast %cst_179 : f32 to vector<16x16xf32>
    %392 = arith.select %356, %390, %391 : vector<16x16xi1>, vector<16x16xf32>
    %393 = arith.addf %389, %392 : vector<16x16xf32>
    %c2_180 = arith.constant 2 : index
    %c0_181 = arith.constant 0 : index
    %c0_182 = arith.constant 0 : index
    %394 = vector.load %arg9[%c2_180, %c0_181, %c0_182] : memref<3x16x16xf32, #tpu.memory_space<vmem>>, vector<1x16x16xf32>
    %395 = vector.shape_cast %394 : vector<1x16x16xf32> to vector<16x16xf32>
    %cst_183 = arith.constant dense<0.000000e+00> : vector<16x16xf32>
    %396 = tpu.matmul %393, %395, %cst_183 {dimension_numbers = #tpu.dot_dimension_numbers<[1], [0], [0], [1], [0, 0, 1, 1], [], []>} : vector<16x16xf32>, vector<16x16xf32>, vector<16x16xf32> -> vector<16x16xf32>
    %397 = arith.addf %303, %396 : vector<16x16xf32>
    %c2_184 = arith.constant 2 : index
    %c0_185 = arith.constant 0 : index
    %c0_186 = arith.constant 0 : index
    %398 = vector.load %arg10[%c2_184, %c0_185, %c0_186] : memref<3x1x16xf32, #tpu.memory_space<vmem>>, vector<1x1x16xf32>
    %399 = vector.shape_cast %398 : vector<1x1x16xf32> to vector<1x16xf32>
    %400 = vector.broadcast %399 : vector<1x16xf32> to vector<16x16xf32>
    %401 = arith.addf %397, %400 : vector<16x16xf32>
    %c2_187 = arith.constant 2 : index
    %c0_188 = arith.constant 0 : index
    %c0_189 = arith.constant 0 : index
    %402 = vector.load %arg11[%c2_187, %c0_188, %c0_189] : memref<3x1x16xf32, #tpu.memory_space<vmem>>, vector<1x1x16xf32>
    %403 = vector.shape_cast %402 : vector<1x1x16xf32> to vector<1x16xf32>
    %c2_190 = arith.constant 2 : index
    %c0_191 = arith.constant 0 : index
    %c0_192 = arith.constant 0 : index
    %404 = vector.load %arg12[%c2_190, %c0_191, %c0_192] : memref<3x1x16xf32, #tpu.memory_space<vmem>>, vector<1x1x16xf32>
    %405 = vector.shape_cast %404 : vector<1x1x16xf32> to vector<1x16xf32>
    %cst_193 = arith.constant dense<0.000000e+00> : vector<16xf32>
    %406 = vector.multi_reduction <add>, %401, %cst_193 [1] : vector<16x16xf32> to vector<16xf32>
    %407 = vector.shape_cast %406 : vector<16xf32> to vector<16x1xf32>
    %cst_194 = arith.constant 1.600000e+01 : f32
    %408 = vector.broadcast %cst_194 : f32 to vector<16x1xf32>
    %409 = arith.divf %407, %408 : vector<16x1xf32>
    %410 = vector.broadcast %409 : vector<16x1xf32> to vector<16x16xf32>
    %411 = arith.subf %401, %410 : vector<16x16xf32>
    %412 = arith.mulf %411, %411 : vector<16x16xf32>
    %cst_195 = arith.constant dense<0.000000e+00> : vector<16xf32>
    %413 = vector.multi_reduction <add>, %412, %cst_195 [1] : vector<16x16xf32> to vector<16xf32>
    %414 = vector.shape_cast %413 : vector<16xf32> to vector<16x1xf32>
    %cst_196 = arith.constant 1.600000e+01 : f32
    %415 = vector.broadcast %cst_196 : f32 to vector<16x1xf32>
    %416 = arith.divf %414, %415 : vector<16x1xf32>
    %417 = vector.broadcast %409 : vector<16x1xf32> to vector<16x16xf32>
    %418 = arith.subf %401, %417 : vector<16x16xf32>
    %cst_197 = arith.constant 9.99999974E-6 : f32
    %419 = vector.broadcast %cst_197 : f32 to vector<16x1xf32>
    %420 = arith.addf %416, %419 : vector<16x1xf32>
    %421 = math.rsqrt %420 : vector<16x1xf32>
    %422 = vector.broadcast %421 : vector<16x1xf32> to vector<16x16xf32>
    %423 = arith.mulf %418, %422 : vector<16x16xf32>
    %424 = vector.broadcast %403 : vector<1x16xf32> to vector<16x16xf32>
    %425 = arith.mulf %423, %424 : vector<16x16xf32>
    %426 = vector.broadcast %405 : vector<1x16xf32> to vector<16x16xf32>
    %427 = arith.addf %425, %426 : vector<16x16xf32>
    %c2_198 = arith.constant 2 : index
    %c0_199 = arith.constant 0 : index
    %c0_200 = arith.constant 0 : index
    %428 = vector.load %arg13[%c2_198, %c0_199, %c0_200] : memref<3x16x32xf32, #tpu.memory_space<vmem>>, vector<1x16x32xf32>
    %429 = vector.shape_cast %428 : vector<1x16x32xf32> to vector<16x32xf32>
    %cst_201 = arith.constant dense<0.000000e+00> : vector<16x32xf32>
    %430 = tpu.matmul %427, %429, %cst_201 {dimension_numbers = #tpu.dot_dimension_numbers<[1], [0], [0], [1], [0, 0, 1, 1], [], []>} : vector<16x16xf32>, vector<16x32xf32>, vector<16x32xf32> -> vector<16x32xf32>
    %c2_202 = arith.constant 2 : index
    %c0_203 = arith.constant 0 : index
    %c0_204 = arith.constant 0 : index
    %431 = vector.load %arg14[%c2_202, %c0_203, %c0_204] : memref<3x1x32xf32, #tpu.memory_space<vmem>>, vector<1x1x32xf32>
    %432 = vector.shape_cast %431 : vector<1x1x32xf32> to vector<1x32xf32>
    %433 = vector.broadcast %432 : vector<1x32xf32> to vector<16x32xf32>
    %434 = arith.addf %430, %433 : vector<16x32xf32>
    %cst_205 = arith.constant 5.000000e-01 : f32
    %435 = vector.broadcast %cst_205 : f32 to vector<16x32xf32>
    %436 = arith.mulf %435, %434 : vector<16x32xf32>
    %cst_206 = arith.constant 0.707106769 : f32
    %437 = vector.broadcast %cst_206 : f32 to vector<16x32xf32>
    %438 = arith.mulf %434, %437 : vector<16x32xf32>
    %439 = math.erf %438 : vector<16x32xf32>
    %cst_207 = arith.constant 1.000000e+00 : f32
    %440 = vector.broadcast %cst_207 : f32 to vector<16x32xf32>
    %441 = arith.addf %440, %439 : vector<16x32xf32>
    %442 = arith.mulf %436, %441 : vector<16x32xf32>
    %c2_208 = arith.constant 2 : index
    %c0_209 = arith.constant 0 : index
    %c0_210 = arith.constant 0 : index
    %443 = vector.load %arg15[%c2_208, %c0_209, %c0_210] : memref<3x32x16xf32, #tpu.memory_space<vmem>>, vector<1x32x16xf32>
    %444 = vector.shape_cast %443 : vector<1x32x16xf32> to vector<32x16xf32>
    %cst_211 = arith.constant dense<0.000000e+00> : vector<16x16xf32>
    %445 = tpu.matmul %442, %444, %cst_211 {dimension_numbers = #tpu.dot_dimension_numbers<[1], [0], [0], [1], [0, 0, 1, 1], [], []>} : vector<16x32xf32>, vector<32x16xf32>, vector<16x16xf32> -> vector<16x16xf32>
    %446 = arith.addf %401, %445 : vector<16x16xf32>
    %c2_212 = arith.constant 2 : index
    %c0_213 = arith.constant 0 : index
    %c0_214 = arith.constant 0 : index
    %447 = vector.load %arg16[%c2_212, %c0_213, %c0_214] : memref<3x1x16xf32, #tpu.memory_space<vmem>>, vector<1x1x16xf32>
    %448 = vector.shape_cast %447 : vector<1x1x16xf32> to vector<1x16xf32>
    %449 = vector.broadcast %448 : vector<1x16xf32> to vector<16x16xf32>
    %450 = arith.addf %446, %449 : vector<16x16xf32>
    %c0_215 = arith.constant 0 : index
    %c0_216 = arith.constant 0 : index
    %c0_217 = arith.constant 0 : index
    %451 = vector.load %arg2[%c0_215, %c0_216, %c0_217] : memref<1x8x16xf32, #tpu.memory_space<vmem>>, vector<1x8x16xf32>
    %452 = vector.shape_cast %451 : vector<1x8x16xf32> to vector<8x16xf32>
    %c0_218 = arith.constant 0 : index
    %c0_219 = arith.constant 0 : index
    %c0_220 = arith.constant 0 : index
    %453 = vector.load %arg17[%c0_218, %c0_219, %c0_220] : memref<3x1x16xf32, #tpu.memory_space<vmem>>, vector<1x1x16xf32>
    %454 = vector.shape_cast %453 : vector<1x1x16xf32> to vector<1x16xf32>
    %c0_221 = arith.constant 0 : index
    %c0_222 = arith.constant 0 : index
    %c0_223 = arith.constant 0 : index
    %455 = vector.load %arg18[%c0_221, %c0_222, %c0_223] : memref<3x1x16xf32, #tpu.memory_space<vmem>>, vector<1x1x16xf32>
    %456 = vector.shape_cast %455 : vector<1x1x16xf32> to vector<1x16xf32>
    %cst_224 = arith.constant dense<0.000000e+00> : vector<8xf32>
    %457 = vector.multi_reduction <add>, %452, %cst_224 [1] : vector<8x16xf32> to vector<8xf32>
    %458 = vector.shape_cast %457 : vector<8xf32> to vector<8x1xf32>
    %cst_225 = arith.constant 1.600000e+01 : f32
    %459 = vector.broadcast %cst_225 : f32 to vector<8x1xf32>
    %460 = arith.divf %458, %459 : vector<8x1xf32>
    %461 = vector.broadcast %460 : vector<8x1xf32> to vector<8x16xf32>
    %462 = arith.subf %452, %461 : vector<8x16xf32>
    %463 = arith.mulf %462, %462 : vector<8x16xf32>
    %cst_226 = arith.constant dense<0.000000e+00> : vector<8xf32>
    %464 = vector.multi_reduction <add>, %463, %cst_226 [1] : vector<8x16xf32> to vector<8xf32>
    %465 = vector.shape_cast %464 : vector<8xf32> to vector<8x1xf32>
    %cst_227 = arith.constant 1.600000e+01 : f32
    %466 = vector.broadcast %cst_227 : f32 to vector<8x1xf32>
    %467 = arith.divf %465, %466 : vector<8x1xf32>
    %468 = vector.broadcast %460 : vector<8x1xf32> to vector<8x16xf32>
    %469 = arith.subf %452, %468 : vector<8x16xf32>
    %cst_228 = arith.constant 9.99999974E-6 : f32
    %470 = vector.broadcast %cst_228 : f32 to vector<8x1xf32>
    %471 = arith.addf %467, %470 : vector<8x1xf32>
    %472 = math.rsqrt %471 : vector<8x1xf32>
    %473 = vector.broadcast %472 : vector<8x1xf32> to vector<8x16xf32>
    %474 = arith.mulf %469, %473 : vector<8x16xf32>
    %475 = vector.broadcast %454 : vector<1x16xf32> to vector<8x16xf32>
    %476 = arith.mulf %474, %475 : vector<8x16xf32>
    %477 = vector.broadcast %456 : vector<1x16xf32> to vector<8x16xf32>
    %478 = arith.addf %476, %477 : vector<8x16xf32>
    %c0_229 = arith.constant 0 : index
    %c0_230 = arith.constant 0 : index
    %c0_231 = arith.constant 0 : index
    %479 = vector.load %arg19[%c0_229, %c0_230, %c0_231] : memref<3x16x48xf32, #tpu.memory_space<vmem>>, vector<1x16x48xf32>
    %480 = vector.shape_cast %479 : vector<1x16x48xf32> to vector<16x48xf32>
    %cst_232 = arith.constant dense<0.000000e+00> : vector<8x48xf32>
    %481 = tpu.matmul %478, %480, %cst_232 {dimension_numbers = #tpu.dot_dimension_numbers<[1], [0], [0], [1], [0, 0, 1, 1], [], []>} : vector<8x16xf32>, vector<16x48xf32>, vector<8x48xf32> -> vector<8x48xf32>
    %482 = vector.extract_strided_slice %481 {offsets = [0, 0], sizes = [8, 16], strides = [1, 1]} : vector<8x48xf32> to vector<8x16xf32>
    %483 = vector.extract_strided_slice %481 {offsets = [0, 16], sizes = [8, 16], strides = [1, 1]} : vector<8x48xf32> to vector<8x16xf32>
    %484 = vector.extract_strided_slice %481 {offsets = [0, 32], sizes = [8, 16], strides = [1, 1]} : vector<8x48xf32> to vector<8x16xf32>
    %485 = tpu.iota {dimensions = array<i32: 1>} : vector<8x16xi32>
    %c0_i32_233 = arith.constant 0 : i32
    %486 = vector.broadcast %c0_i32_233 : i32 to vector<8x16xi32>
    %487 = arith.cmpi sge, %485, %486 : vector<8x16xi32>
    %c4_i32_234 = arith.constant 4 : i32
    %488 = vector.broadcast %c4_i32_234 : i32 to vector<8x16xi32>
    %489 = arith.cmpi slt, %485, %488 : vector<8x16xi32>
    %490 = arith.andi %487, %489 : vector<8x16xi1>
    %c4_i32_235 = arith.constant 4 : i32
    %491 = vector.broadcast %c4_i32_235 : i32 to vector<8x16xi32>
    %492 = arith.cmpi sge, %485, %491 : vector<8x16xi32>
    %c8_i32_236 = arith.constant 8 : i32
    %493 = vector.broadcast %c8_i32_236 : i32 to vector<8x16xi32>
    %494 = arith.cmpi slt, %485, %493 : vector<8x16xi32>
    %495 = arith.andi %492, %494 : vector<8x16xi1>
    %c8_i32_237 = arith.constant 8 : i32
    %496 = vector.broadcast %c8_i32_237 : i32 to vector<8x16xi32>
    %497 = arith.cmpi sge, %485, %496 : vector<8x16xi32>
    %c12_i32_238 = arith.constant 12 : i32
    %498 = vector.broadcast %c12_i32_238 : i32 to vector<8x16xi32>
    %499 = arith.cmpi slt, %485, %498 : vector<8x16xi32>
    %500 = arith.andi %497, %499 : vector<8x16xi1>
    %c12_i32_239 = arith.constant 12 : i32
    %501 = vector.broadcast %c12_i32_239 : i32 to vector<8x16xi32>
    %502 = arith.cmpi sge, %485, %501 : vector<8x16xi32>
    %c16_i32_240 = arith.constant 16 : i32
    %503 = vector.broadcast %c16_i32_240 : i32 to vector<8x16xi32>
    %504 = arith.cmpi slt, %485, %503 : vector<8x16xi32>
    %505 = arith.andi %502, %504 : vector<8x16xi1>
    %cst_241 = arith.constant 0.333333343 : f32
    %506 = vector.broadcast %cst_241 : f32 to vector<8x16xf32>
    %507 = arith.mulf %482, %506 : vector<8x16xf32>
    %cst_242 = arith.constant 0.000000e+00 : f32
    %508 = vector.broadcast %cst_242 : f32 to vector<8x16xf32>
    %509 = arith.select %490, %507, %508 : vector<8x16xi1>, vector<8x16xf32>
    %cst_243 = arith.constant 0.000000e+00 : f32
    %510 = vector.broadcast %cst_243 : f32 to vector<8x16xf32>
    %511 = arith.select %495, %507, %510 : vector<8x16xi1>, vector<8x16xf32>
    %cst_244 = arith.constant 0.000000e+00 : f32
    %512 = vector.broadcast %cst_244 : f32 to vector<8x16xf32>
    %513 = arith.select %500, %507, %512 : vector<8x16xi1>, vector<8x16xf32>
    %cst_245 = arith.constant 0.000000e+00 : f32
    %514 = vector.broadcast %cst_245 : f32 to vector<8x16xf32>
    %515 = arith.select %505, %507, %514 : vector<8x16xi1>, vector<8x16xf32>
    %516 = tpu.concatenate %509, %511, %513, %515 in 0 : vector<8x16xf32>, vector<8x16xf32>, vector<8x16xf32>, vector<8x16xf32> -> vector<32x16xf32>
    %cst_246 = arith.constant dense<0.000000e+00> : vector<32x8xf32>
    %517 = tpu.matmul %516, %483, %cst_246 {dimension_numbers = #tpu.dot_dimension_numbers<[1], [1], [0], [0], [0, 0, 1, 0], [], []>} : vector<32x16xf32>, vector<8x16xf32>, vector<32x8xf32> -> vector<32x8xf32>
    %518 = tpu.iota {dimensions = array<i32: 0>} : vector<8x8xi32>
    %519 = tpu.concatenate %518, %518, %518, %518 in 0 : vector<8x8xi32>, vector<8x8xi32>, vector<8x8xi32>, vector<8x8xi32> -> vector<32x8xi32>
    %520 = tpu.iota {dimensions = array<i32: 1>} : vector<32x8xi32>
    %521 = arith.cmpi sle, %520, %519 : vector<32x8xi32>
    %cst_247 = arith.constant -1.000000e+30 : f32
    %522 = vector.broadcast %cst_247 : f32 to vector<32x8xf32>
    %523 = arith.select %521, %517, %522 : vector<32x8xi1>, vector<32x8xf32>
    %cst_248 = arith.constant dense<0xFF800000> : vector<32xf32>
    %524 = vector.multi_reduction <maximumf>, %523, %cst_248 [1] : vector<32x8xf32> to vector<32xf32>
    %525 = vector.shape_cast %524 : vector<32xf32> to vector<32x1xf32>
    %526 = vector.broadcast %525 : vector<32x1xf32> to vector<32x8xf32>
    %527 = arith.subf %523, %526 : vector<32x8xf32>
    %528 = math.exp %527 : vector<32x8xf32>
    %cst_249 = arith.constant dense<0.000000e+00> : vector<32xf32>
    %529 = vector.multi_reduction <add>, %528, %cst_249 [1] : vector<32x8xf32> to vector<32xf32>
    %530 = vector.shape_cast %529 : vector<32xf32> to vector<32x1xf32>
    %531 = vector.broadcast %530 : vector<32x1xf32> to vector<32x8xf32>
    %532 = arith.divf %528, %531 : vector<32x8xf32>
    %cst_250 = arith.constant dense<0.000000e+00> : vector<32x16xf32>
    %533 = tpu.matmul %532, %484, %cst_250 {dimension_numbers = #tpu.dot_dimension_numbers<[1], [0], [0], [1], [0, 0, 1, 1], [], []>} : vector<32x8xf32>, vector<8x16xf32>, vector<32x16xf32> -> vector<32x16xf32>
    %534 = vector.extract_strided_slice %533 {offsets = [0, 0], sizes = [8, 16], strides = [1, 1]} : vector<32x16xf32> to vector<8x16xf32>
    %cst_251 = arith.constant 0.000000e+00 : f32
    %535 = vector.broadcast %cst_251 : f32 to vector<8x16xf32>
    %536 = arith.select %490, %534, %535 : vector<8x16xi1>, vector<8x16xf32>
    %537 = vector.extract_strided_slice %533 {offsets = [8, 0], sizes = [8, 16], strides = [1, 1]} : vector<32x16xf32> to vector<8x16xf32>
    %cst_252 = arith.constant 0.000000e+00 : f32
    %538 = vector.broadcast %cst_252 : f32 to vector<8x16xf32>
    %539 = arith.select %495, %537, %538 : vector<8x16xi1>, vector<8x16xf32>
    %540 = arith.addf %536, %539 : vector<8x16xf32>
    %541 = vector.extract_strided_slice %533 {offsets = [16, 0], sizes = [8, 16], strides = [1, 1]} : vector<32x16xf32> to vector<8x16xf32>
    %cst_253 = arith.constant 0.000000e+00 : f32
    %542 = vector.broadcast %cst_253 : f32 to vector<8x16xf32>
    %543 = arith.select %500, %541, %542 : vector<8x16xi1>, vector<8x16xf32>
    %544 = arith.addf %540, %543 : vector<8x16xf32>
    %545 = vector.extract_strided_slice %533 {offsets = [24, 0], sizes = [8, 16], strides = [1, 1]} : vector<32x16xf32> to vector<8x16xf32>
    %cst_254 = arith.constant 0.000000e+00 : f32
    %546 = vector.broadcast %cst_254 : f32 to vector<8x16xf32>
    %547 = arith.select %505, %545, %546 : vector<8x16xi1>, vector<8x16xf32>
    %548 = arith.addf %544, %547 : vector<8x16xf32>
    %c0_255 = arith.constant 0 : index
    %c0_256 = arith.constant 0 : index
    %c0_257 = arith.constant 0 : index
    %549 = vector.load %arg20[%c0_255, %c0_256, %c0_257] : memref<3x16x16xf32, #tpu.memory_space<vmem>>, vector<1x16x16xf32>
    %550 = vector.shape_cast %549 : vector<1x16x16xf32> to vector<16x16xf32>
    %cst_258 = arith.constant dense<0.000000e+00> : vector<8x16xf32>
    %551 = tpu.matmul %548, %550, %cst_258 {dimension_numbers = #tpu.dot_dimension_numbers<[1], [0], [0], [1], [0, 0, 1, 1], [], []>} : vector<8x16xf32>, vector<16x16xf32>, vector<8x16xf32> -> vector<8x16xf32>
    %552 = arith.addf %452, %551 : vector<8x16xf32>
    %c0_259 = arith.constant 0 : index
    %c0_260 = arith.constant 0 : index
    %c0_261 = arith.constant 0 : index
    %553 = vector.load %arg21[%c0_259, %c0_260, %c0_261] : memref<3x1x16xf32, #tpu.memory_space<vmem>>, vector<1x1x16xf32>
    %554 = vector.shape_cast %553 : vector<1x1x16xf32> to vector<1x16xf32>
    %555 = vector.broadcast %554 : vector<1x16xf32> to vector<8x16xf32>
    %556 = arith.addf %552, %555 : vector<8x16xf32>
    %c0_262 = arith.constant 0 : index
    %c0_263 = arith.constant 0 : index
    %c0_264 = arith.constant 0 : index
    %557 = vector.load %arg22[%c0_262, %c0_263, %c0_264] : memref<3x1x16xf32, #tpu.memory_space<vmem>>, vector<1x1x16xf32>
    %558 = vector.shape_cast %557 : vector<1x1x16xf32> to vector<1x16xf32>
    %c0_265 = arith.constant 0 : index
    %c0_266 = arith.constant 0 : index
    %c0_267 = arith.constant 0 : index
    %559 = vector.load %arg23[%c0_265, %c0_266, %c0_267] : memref<3x1x16xf32, #tpu.memory_space<vmem>>, vector<1x1x16xf32>
    %560 = vector.shape_cast %559 : vector<1x1x16xf32> to vector<1x16xf32>
    %cst_268 = arith.constant dense<0.000000e+00> : vector<8xf32>
    %561 = vector.multi_reduction <add>, %556, %cst_268 [1] : vector<8x16xf32> to vector<8xf32>
    %562 = vector.shape_cast %561 : vector<8xf32> to vector<8x1xf32>
    %cst_269 = arith.constant 1.600000e+01 : f32
    %563 = vector.broadcast %cst_269 : f32 to vector<8x1xf32>
    %564 = arith.divf %562, %563 : vector<8x1xf32>
    %565 = vector.broadcast %564 : vector<8x1xf32> to vector<8x16xf32>
    %566 = arith.subf %556, %565 : vector<8x16xf32>
    %567 = arith.mulf %566, %566 : vector<8x16xf32>
    %cst_270 = arith.constant dense<0.000000e+00> : vector<8xf32>
    %568 = vector.multi_reduction <add>, %567, %cst_270 [1] : vector<8x16xf32> to vector<8xf32>
    %569 = vector.shape_cast %568 : vector<8xf32> to vector<8x1xf32>
    %cst_271 = arith.constant 1.600000e+01 : f32
    %570 = vector.broadcast %cst_271 : f32 to vector<8x1xf32>
    %571 = arith.divf %569, %570 : vector<8x1xf32>
    %572 = vector.broadcast %564 : vector<8x1xf32> to vector<8x16xf32>
    %573 = arith.subf %556, %572 : vector<8x16xf32>
    %cst_272 = arith.constant 9.99999974E-6 : f32
    %574 = vector.broadcast %cst_272 : f32 to vector<8x1xf32>
    %575 = arith.addf %571, %574 : vector<8x1xf32>
    %576 = math.rsqrt %575 : vector<8x1xf32>
    %577 = vector.broadcast %576 : vector<8x1xf32> to vector<8x16xf32>
    %578 = arith.mulf %573, %577 : vector<8x16xf32>
    %579 = vector.broadcast %558 : vector<1x16xf32> to vector<8x16xf32>
    %580 = arith.mulf %578, %579 : vector<8x16xf32>
    %581 = vector.broadcast %560 : vector<1x16xf32> to vector<8x16xf32>
    %582 = arith.addf %580, %581 : vector<8x16xf32>
    %c0_273 = arith.constant 0 : index
    %c0_274 = arith.constant 0 : index
    %c0_275 = arith.constant 0 : index
    %583 = vector.load %arg11[%c0_273, %c0_274, %c0_275] : memref<3x1x16xf32, #tpu.memory_space<vmem>>, vector<1x1x16xf32>
    %584 = vector.shape_cast %583 : vector<1x1x16xf32> to vector<1x16xf32>
    %c0_276 = arith.constant 0 : index
    %c0_277 = arith.constant 0 : index
    %c0_278 = arith.constant 0 : index
    %585 = vector.load %arg12[%c0_276, %c0_277, %c0_278] : memref<3x1x16xf32, #tpu.memory_space<vmem>>, vector<1x1x16xf32>
    %586 = vector.shape_cast %585 : vector<1x1x16xf32> to vector<1x16xf32>
    %cst_279 = arith.constant dense<0.000000e+00> : vector<16xf32>
    %587 = vector.multi_reduction <add>, %450, %cst_279 [1] : vector<16x16xf32> to vector<16xf32>
    %588 = vector.shape_cast %587 : vector<16xf32> to vector<16x1xf32>
    %cst_280 = arith.constant 1.600000e+01 : f32
    %589 = vector.broadcast %cst_280 : f32 to vector<16x1xf32>
    %590 = arith.divf %588, %589 : vector<16x1xf32>
    %591 = vector.broadcast %590 : vector<16x1xf32> to vector<16x16xf32>
    %592 = arith.subf %450, %591 : vector<16x16xf32>
    %593 = arith.mulf %592, %592 : vector<16x16xf32>
    %cst_281 = arith.constant dense<0.000000e+00> : vector<16xf32>
    %594 = vector.multi_reduction <add>, %593, %cst_281 [1] : vector<16x16xf32> to vector<16xf32>
    %595 = vector.shape_cast %594 : vector<16xf32> to vector<16x1xf32>
    %cst_282 = arith.constant 1.600000e+01 : f32
    %596 = vector.broadcast %cst_282 : f32 to vector<16x1xf32>
    %597 = arith.divf %595, %596 : vector<16x1xf32>
    %598 = vector.broadcast %590 : vector<16x1xf32> to vector<16x16xf32>
    %599 = arith.subf %450, %598 : vector<16x16xf32>
    %cst_283 = arith.constant 9.99999974E-6 : f32
    %600 = vector.broadcast %cst_283 : f32 to vector<16x1xf32>
    %601 = arith.addf %597, %600 : vector<16x1xf32>
    %602 = math.rsqrt %601 : vector<16x1xf32>
    %603 = vector.broadcast %602 : vector<16x1xf32> to vector<16x16xf32>
    %604 = arith.mulf %599, %603 : vector<16x16xf32>
    %605 = vector.broadcast %584 : vector<1x16xf32> to vector<16x16xf32>
    %606 = arith.mulf %604, %605 : vector<16x16xf32>
    %607 = vector.broadcast %586 : vector<1x16xf32> to vector<16x16xf32>
    %608 = arith.addf %606, %607 : vector<16x16xf32>
    %c0_284 = arith.constant 0 : index
    %c0_285 = arith.constant 0 : index
    %c0_286 = arith.constant 0 : index
    %609 = vector.load %arg24[%c0_284, %c0_285, %c0_286] : memref<3x16x16xf32, #tpu.memory_space<vmem>>, vector<1x16x16xf32>
    %610 = vector.shape_cast %609 : vector<1x16x16xf32> to vector<16x16xf32>
    %cst_287 = arith.constant dense<0.000000e+00> : vector<8x16xf32>
    %611 = tpu.matmul %582, %610, %cst_287 {dimension_numbers = #tpu.dot_dimension_numbers<[1], [0], [0], [1], [0, 0, 1, 1], [], []>} : vector<8x16xf32>, vector<16x16xf32>, vector<8x16xf32> -> vector<8x16xf32>
    %c0_288 = arith.constant 0 : index
    %c0_289 = arith.constant 0 : index
    %c0_290 = arith.constant 0 : index
    %612 = vector.load %arg25[%c0_288, %c0_289, %c0_290] : memref<3x16x32xf32, #tpu.memory_space<vmem>>, vector<1x16x32xf32>
    %613 = vector.shape_cast %612 : vector<1x16x32xf32> to vector<16x32xf32>
    %cst_291 = arith.constant dense<0.000000e+00> : vector<16x32xf32>
    %614 = tpu.matmul %608, %613, %cst_291 {dimension_numbers = #tpu.dot_dimension_numbers<[1], [0], [0], [1], [0, 0, 1, 1], [], []>} : vector<16x16xf32>, vector<16x32xf32>, vector<16x32xf32> -> vector<16x32xf32>
    %615 = vector.extract_strided_slice %614 {offsets = [0, 0], sizes = [16, 16], strides = [1, 1]} : vector<16x32xf32> to vector<16x16xf32>
    %616 = vector.extract_strided_slice %614 {offsets = [0, 16], sizes = [16, 16], strides = [1, 1]} : vector<16x32xf32> to vector<16x16xf32>
    %617 = tpu.iota {dimensions = array<i32: 1>} : vector<8x16xi32>
    %c0_i32_292 = arith.constant 0 : i32
    %618 = vector.broadcast %c0_i32_292 : i32 to vector<8x16xi32>
    %619 = arith.cmpi sge, %617, %618 : vector<8x16xi32>
    %c4_i32_293 = arith.constant 4 : i32
    %620 = vector.broadcast %c4_i32_293 : i32 to vector<8x16xi32>
    %621 = arith.cmpi slt, %617, %620 : vector<8x16xi32>
    %622 = arith.andi %619, %621 : vector<8x16xi1>
    %c4_i32_294 = arith.constant 4 : i32
    %623 = vector.broadcast %c4_i32_294 : i32 to vector<8x16xi32>
    %624 = arith.cmpi sge, %617, %623 : vector<8x16xi32>
    %c8_i32_295 = arith.constant 8 : i32
    %625 = vector.broadcast %c8_i32_295 : i32 to vector<8x16xi32>
    %626 = arith.cmpi slt, %617, %625 : vector<8x16xi32>
    %627 = arith.andi %624, %626 : vector<8x16xi1>
    %c8_i32_296 = arith.constant 8 : i32
    %628 = vector.broadcast %c8_i32_296 : i32 to vector<8x16xi32>
    %629 = arith.cmpi sge, %617, %628 : vector<8x16xi32>
    %c12_i32_297 = arith.constant 12 : i32
    %630 = vector.broadcast %c12_i32_297 : i32 to vector<8x16xi32>
    %631 = arith.cmpi slt, %617, %630 : vector<8x16xi32>
    %632 = arith.andi %629, %631 : vector<8x16xi1>
    %c12_i32_298 = arith.constant 12 : i32
    %633 = vector.broadcast %c12_i32_298 : i32 to vector<8x16xi32>
    %634 = arith.cmpi sge, %617, %633 : vector<8x16xi32>
    %c16_i32_299 = arith.constant 16 : i32
    %635 = vector.broadcast %c16_i32_299 : i32 to vector<8x16xi32>
    %636 = arith.cmpi slt, %617, %635 : vector<8x16xi32>
    %637 = arith.andi %634, %636 : vector<8x16xi1>
    %cst_300 = arith.constant 0.333333343 : f32
    %638 = vector.broadcast %cst_300 : f32 to vector<8x16xf32>
    %639 = arith.mulf %611, %638 : vector<8x16xf32>
    %cst_301 = arith.constant 0.000000e+00 : f32
    %640 = vector.broadcast %cst_301 : f32 to vector<8x16xf32>
    %641 = arith.select %622, %639, %640 : vector<8x16xi1>, vector<8x16xf32>
    %cst_302 = arith.constant 0.000000e+00 : f32
    %642 = vector.broadcast %cst_302 : f32 to vector<8x16xf32>
    %643 = arith.select %627, %639, %642 : vector<8x16xi1>, vector<8x16xf32>
    %cst_303 = arith.constant 0.000000e+00 : f32
    %644 = vector.broadcast %cst_303 : f32 to vector<8x16xf32>
    %645 = arith.select %632, %639, %644 : vector<8x16xi1>, vector<8x16xf32>
    %cst_304 = arith.constant 0.000000e+00 : f32
    %646 = vector.broadcast %cst_304 : f32 to vector<8x16xf32>
    %647 = arith.select %637, %639, %646 : vector<8x16xi1>, vector<8x16xf32>
    %648 = tpu.concatenate %641, %643, %645, %647 in 0 : vector<8x16xf32>, vector<8x16xf32>, vector<8x16xf32>, vector<8x16xf32> -> vector<32x16xf32>
    %cst_305 = arith.constant dense<0.000000e+00> : vector<32x16xf32>
    %649 = tpu.matmul %648, %615, %cst_305 {dimension_numbers = #tpu.dot_dimension_numbers<[1], [1], [0], [0], [0, 0, 1, 0], [], []>} : vector<32x16xf32>, vector<16x16xf32>, vector<32x16xf32> -> vector<32x16xf32>
    %cst_306 = arith.constant dense<0xFF800000> : vector<32xf32>
    %650 = vector.multi_reduction <maximumf>, %649, %cst_306 [1] : vector<32x16xf32> to vector<32xf32>
    %651 = vector.shape_cast %650 : vector<32xf32> to vector<32x1xf32>
    %652 = vector.broadcast %651 : vector<32x1xf32> to vector<32x16xf32>
    %653 = arith.subf %649, %652 : vector<32x16xf32>
    %654 = math.exp %653 : vector<32x16xf32>
    %cst_307 = arith.constant dense<0.000000e+00> : vector<32xf32>
    %655 = vector.multi_reduction <add>, %654, %cst_307 [1] : vector<32x16xf32> to vector<32xf32>
    %656 = vector.shape_cast %655 : vector<32xf32> to vector<32x1xf32>
    %657 = vector.broadcast %656 : vector<32x1xf32> to vector<32x16xf32>
    %658 = arith.divf %654, %657 : vector<32x16xf32>
    %cst_308 = arith.constant dense<0.000000e+00> : vector<32x16xf32>
    %659 = tpu.matmul %658, %616, %cst_308 {dimension_numbers = #tpu.dot_dimension_numbers<[1], [0], [0], [1], [0, 0, 1, 1], [], []>} : vector<32x16xf32>, vector<16x16xf32>, vector<32x16xf32> -> vector<32x16xf32>
    %660 = vector.extract_strided_slice %659 {offsets = [0, 0], sizes = [8, 16], strides = [1, 1]} : vector<32x16xf32> to vector<8x16xf32>
    %cst_309 = arith.constant 0.000000e+00 : f32
    %661 = vector.broadcast %cst_309 : f32 to vector<8x16xf32>
    %662 = arith.select %622, %660, %661 : vector<8x16xi1>, vector<8x16xf32>
    %663 = vector.extract_strided_slice %659 {offsets = [8, 0], sizes = [8, 16], strides = [1, 1]} : vector<32x16xf32> to vector<8x16xf32>
    %cst_310 = arith.constant 0.000000e+00 : f32
    %664 = vector.broadcast %cst_310 : f32 to vector<8x16xf32>
    %665 = arith.select %627, %663, %664 : vector<8x16xi1>, vector<8x16xf32>
    %666 = arith.addf %662, %665 : vector<8x16xf32>
    %667 = vector.extract_strided_slice %659 {offsets = [16, 0], sizes = [8, 16], strides = [1, 1]} : vector<32x16xf32> to vector<8x16xf32>
    %cst_311 = arith.constant 0.000000e+00 : f32
    %668 = vector.broadcast %cst_311 : f32 to vector<8x16xf32>
    %669 = arith.select %632, %667, %668 : vector<8x16xi1>, vector<8x16xf32>
    %670 = arith.addf %666, %669 : vector<8x16xf32>
    %671 = vector.extract_strided_slice %659 {offsets = [24, 0], sizes = [8, 16], strides = [1, 1]} : vector<32x16xf32> to vector<8x16xf32>
    %cst_312 = arith.constant 0.000000e+00 : f32
    %672 = vector.broadcast %cst_312 : f32 to vector<8x16xf32>
    %673 = arith.select %637, %671, %672 : vector<8x16xi1>, vector<8x16xf32>
    %674 = arith.addf %670, %673 : vector<8x16xf32>
    %c0_313 = arith.constant 0 : index
    %c0_314 = arith.constant 0 : index
    %c0_315 = arith.constant 0 : index
    %675 = vector.load %arg26[%c0_313, %c0_314, %c0_315] : memref<3x16x16xf32, #tpu.memory_space<vmem>>, vector<1x16x16xf32>
    %676 = vector.shape_cast %675 : vector<1x16x16xf32> to vector<16x16xf32>
    %cst_316 = arith.constant dense<0.000000e+00> : vector<8x16xf32>
    %677 = tpu.matmul %674, %676, %cst_316 {dimension_numbers = #tpu.dot_dimension_numbers<[1], [0], [0], [1], [0, 0, 1, 1], [], []>} : vector<8x16xf32>, vector<16x16xf32>, vector<8x16xf32> -> vector<8x16xf32>
    %678 = arith.addf %556, %677 : vector<8x16xf32>
    %c0_317 = arith.constant 0 : index
    %c0_318 = arith.constant 0 : index
    %c0_319 = arith.constant 0 : index
    %679 = vector.load %arg27[%c0_317, %c0_318, %c0_319] : memref<3x1x16xf32, #tpu.memory_space<vmem>>, vector<1x1x16xf32>
    %680 = vector.shape_cast %679 : vector<1x1x16xf32> to vector<1x16xf32>
    %681 = vector.broadcast %680 : vector<1x16xf32> to vector<8x16xf32>
    %682 = arith.addf %678, %681 : vector<8x16xf32>
    %c0_320 = arith.constant 0 : index
    %c0_321 = arith.constant 0 : index
    %c0_322 = arith.constant 0 : index
    %683 = vector.load %arg28[%c0_320, %c0_321, %c0_322] : memref<3x1x16xf32, #tpu.memory_space<vmem>>, vector<1x1x16xf32>
    %684 = vector.shape_cast %683 : vector<1x1x16xf32> to vector<1x16xf32>
    %c0_323 = arith.constant 0 : index
    %c0_324 = arith.constant 0 : index
    %c0_325 = arith.constant 0 : index
    %685 = vector.load %arg29[%c0_323, %c0_324, %c0_325] : memref<3x1x16xf32, #tpu.memory_space<vmem>>, vector<1x1x16xf32>
    %686 = vector.shape_cast %685 : vector<1x1x16xf32> to vector<1x16xf32>
    %cst_326 = arith.constant dense<0.000000e+00> : vector<8xf32>
    %687 = vector.multi_reduction <add>, %682, %cst_326 [1] : vector<8x16xf32> to vector<8xf32>
    %688 = vector.shape_cast %687 : vector<8xf32> to vector<8x1xf32>
    %cst_327 = arith.constant 1.600000e+01 : f32
    %689 = vector.broadcast %cst_327 : f32 to vector<8x1xf32>
    %690 = arith.divf %688, %689 : vector<8x1xf32>
    %691 = vector.broadcast %690 : vector<8x1xf32> to vector<8x16xf32>
    %692 = arith.subf %682, %691 : vector<8x16xf32>
    %693 = arith.mulf %692, %692 : vector<8x16xf32>
    %cst_328 = arith.constant dense<0.000000e+00> : vector<8xf32>
    %694 = vector.multi_reduction <add>, %693, %cst_328 [1] : vector<8x16xf32> to vector<8xf32>
    %695 = vector.shape_cast %694 : vector<8xf32> to vector<8x1xf32>
    %cst_329 = arith.constant 1.600000e+01 : f32
    %696 = vector.broadcast %cst_329 : f32 to vector<8x1xf32>
    %697 = arith.divf %695, %696 : vector<8x1xf32>
    %698 = vector.broadcast %690 : vector<8x1xf32> to vector<8x16xf32>
    %699 = arith.subf %682, %698 : vector<8x16xf32>
    %cst_330 = arith.constant 9.99999974E-6 : f32
    %700 = vector.broadcast %cst_330 : f32 to vector<8x1xf32>
    %701 = arith.addf %697, %700 : vector<8x1xf32>
    %702 = math.rsqrt %701 : vector<8x1xf32>
    %703 = vector.broadcast %702 : vector<8x1xf32> to vector<8x16xf32>
    %704 = arith.mulf %699, %703 : vector<8x16xf32>
    %705 = vector.broadcast %684 : vector<1x16xf32> to vector<8x16xf32>
    %706 = arith.mulf %704, %705 : vector<8x16xf32>
    %707 = vector.broadcast %686 : vector<1x16xf32> to vector<8x16xf32>
    %708 = arith.addf %706, %707 : vector<8x16xf32>
    %c0_331 = arith.constant 0 : index
    %c0_332 = arith.constant 0 : index
    %c0_333 = arith.constant 0 : index
    %709 = vector.load %arg30[%c0_331, %c0_332, %c0_333] : memref<3x16x32xf32, #tpu.memory_space<vmem>>, vector<1x16x32xf32>
    %710 = vector.shape_cast %709 : vector<1x16x32xf32> to vector<16x32xf32>
    %cst_334 = arith.constant dense<0.000000e+00> : vector<8x32xf32>
    %711 = tpu.matmul %708, %710, %cst_334 {dimension_numbers = #tpu.dot_dimension_numbers<[1], [0], [0], [1], [0, 0, 1, 1], [], []>} : vector<8x16xf32>, vector<16x32xf32>, vector<8x32xf32> -> vector<8x32xf32>
    %c0_335 = arith.constant 0 : index
    %c0_336 = arith.constant 0 : index
    %c0_337 = arith.constant 0 : index
    %712 = vector.load %arg31[%c0_335, %c0_336, %c0_337] : memref<3x1x32xf32, #tpu.memory_space<vmem>>, vector<1x1x32xf32>
    %713 = vector.shape_cast %712 : vector<1x1x32xf32> to vector<1x32xf32>
    %714 = vector.broadcast %713 : vector<1x32xf32> to vector<8x32xf32>
    %715 = arith.addf %711, %714 : vector<8x32xf32>
    %cst_338 = arith.constant 5.000000e-01 : f32
    %716 = vector.broadcast %cst_338 : f32 to vector<8x32xf32>
    %717 = arith.mulf %716, %715 : vector<8x32xf32>
    %cst_339 = arith.constant 0.707106769 : f32
    %718 = vector.broadcast %cst_339 : f32 to vector<8x32xf32>
    %719 = arith.mulf %715, %718 : vector<8x32xf32>
    %720 = math.erf %719 : vector<8x32xf32>
    %cst_340 = arith.constant 1.000000e+00 : f32
    %721 = vector.broadcast %cst_340 : f32 to vector<8x32xf32>
    %722 = arith.addf %721, %720 : vector<8x32xf32>
    %723 = arith.mulf %717, %722 : vector<8x32xf32>
    %c0_341 = arith.constant 0 : index
    %c0_342 = arith.constant 0 : index
    %c0_343 = arith.constant 0 : index
    %724 = vector.load %arg32[%c0_341, %c0_342, %c0_343] : memref<3x32x16xf32, #tpu.memory_space<vmem>>, vector<1x32x16xf32>
    %725 = vector.shape_cast %724 : vector<1x32x16xf32> to vector<32x16xf32>
    %cst_344 = arith.constant dense<0.000000e+00> : vector<8x16xf32>
    %726 = tpu.matmul %723, %725, %cst_344 {dimension_numbers = #tpu.dot_dimension_numbers<[1], [0], [0], [1], [0, 0, 1, 1], [], []>} : vector<8x32xf32>, vector<32x16xf32>, vector<8x16xf32> -> vector<8x16xf32>
    %727 = arith.addf %682, %726 : vector<8x16xf32>
    %c0_345 = arith.constant 0 : index
    %c0_346 = arith.constant 0 : index
    %c0_347 = arith.constant 0 : index
    %728 = vector.load %arg33[%c0_345, %c0_346, %c0_347] : memref<3x1x16xf32, #tpu.memory_space<vmem>>, vector<1x1x16xf32>
    %729 = vector.shape_cast %728 : vector<1x1x16xf32> to vector<1x16xf32>
    %730 = vector.broadcast %729 : vector<1x16xf32> to vector<8x16xf32>
    %731 = arith.addf %727, %730 : vector<8x16xf32>
    %c1_348 = arith.constant 1 : index
    %c0_349 = arith.constant 0 : index
    %c0_350 = arith.constant 0 : index
    %732 = vector.load %arg17[%c1_348, %c0_349, %c0_350] : memref<3x1x16xf32, #tpu.memory_space<vmem>>, vector<1x1x16xf32>
    %733 = vector.shape_cast %732 : vector<1x1x16xf32> to vector<1x16xf32>
    %c1_351 = arith.constant 1 : index
    %c0_352 = arith.constant 0 : index
    %c0_353 = arith.constant 0 : index
    %734 = vector.load %arg18[%c1_351, %c0_352, %c0_353] : memref<3x1x16xf32, #tpu.memory_space<vmem>>, vector<1x1x16xf32>
    %735 = vector.shape_cast %734 : vector<1x1x16xf32> to vector<1x16xf32>
    %cst_354 = arith.constant dense<0.000000e+00> : vector<8xf32>
    %736 = vector.multi_reduction <add>, %731, %cst_354 [1] : vector<8x16xf32> to vector<8xf32>
    %737 = vector.shape_cast %736 : vector<8xf32> to vector<8x1xf32>
    %cst_355 = arith.constant 1.600000e+01 : f32
    %738 = vector.broadcast %cst_355 : f32 to vector<8x1xf32>
    %739 = arith.divf %737, %738 : vector<8x1xf32>
    %740 = vector.broadcast %739 : vector<8x1xf32> to vector<8x16xf32>
    %741 = arith.subf %731, %740 : vector<8x16xf32>
    %742 = arith.mulf %741, %741 : vector<8x16xf32>
    %cst_356 = arith.constant dense<0.000000e+00> : vector<8xf32>
    %743 = vector.multi_reduction <add>, %742, %cst_356 [1] : vector<8x16xf32> to vector<8xf32>
    %744 = vector.shape_cast %743 : vector<8xf32> to vector<8x1xf32>
    %cst_357 = arith.constant 1.600000e+01 : f32
    %745 = vector.broadcast %cst_357 : f32 to vector<8x1xf32>
    %746 = arith.divf %744, %745 : vector<8x1xf32>
    %747 = vector.broadcast %739 : vector<8x1xf32> to vector<8x16xf32>
    %748 = arith.subf %731, %747 : vector<8x16xf32>
    %cst_358 = arith.constant 9.99999974E-6 : f32
    %749 = vector.broadcast %cst_358 : f32 to vector<8x1xf32>
    %750 = arith.addf %746, %749 : vector<8x1xf32>
    %751 = math.rsqrt %750 : vector<8x1xf32>
    %752 = vector.broadcast %751 : vector<8x1xf32> to vector<8x16xf32>
    %753 = arith.mulf %748, %752 : vector<8x16xf32>
    %754 = vector.broadcast %733 : vector<1x16xf32> to vector<8x16xf32>
    %755 = arith.mulf %753, %754 : vector<8x16xf32>
    %756 = vector.broadcast %735 : vector<1x16xf32> to vector<8x16xf32>
    %757 = arith.addf %755, %756 : vector<8x16xf32>
    %c1_359 = arith.constant 1 : index
    %c0_360 = arith.constant 0 : index
    %c0_361 = arith.constant 0 : index
    %758 = vector.load %arg19[%c1_359, %c0_360, %c0_361] : memref<3x16x48xf32, #tpu.memory_space<vmem>>, vector<1x16x48xf32>
    %759 = vector.shape_cast %758 : vector<1x16x48xf32> to vector<16x48xf32>
    %cst_362 = arith.constant dense<0.000000e+00> : vector<8x48xf32>
    %760 = tpu.matmul %757, %759, %cst_362 {dimension_numbers = #tpu.dot_dimension_numbers<[1], [0], [0], [1], [0, 0, 1, 1], [], []>} : vector<8x16xf32>, vector<16x48xf32>, vector<8x48xf32> -> vector<8x48xf32>
    %761 = vector.extract_strided_slice %760 {offsets = [0, 0], sizes = [8, 16], strides = [1, 1]} : vector<8x48xf32> to vector<8x16xf32>
    %762 = vector.extract_strided_slice %760 {offsets = [0, 16], sizes = [8, 16], strides = [1, 1]} : vector<8x48xf32> to vector<8x16xf32>
    %763 = vector.extract_strided_slice %760 {offsets = [0, 32], sizes = [8, 16], strides = [1, 1]} : vector<8x48xf32> to vector<8x16xf32>
    %764 = tpu.iota {dimensions = array<i32: 1>} : vector<8x16xi32>
    %c0_i32_363 = arith.constant 0 : i32
    %765 = vector.broadcast %c0_i32_363 : i32 to vector<8x16xi32>
    %766 = arith.cmpi sge, %764, %765 : vector<8x16xi32>
    %c4_i32_364 = arith.constant 4 : i32
    %767 = vector.broadcast %c4_i32_364 : i32 to vector<8x16xi32>
    %768 = arith.cmpi slt, %764, %767 : vector<8x16xi32>
    %769 = arith.andi %766, %768 : vector<8x16xi1>
    %c4_i32_365 = arith.constant 4 : i32
    %770 = vector.broadcast %c4_i32_365 : i32 to vector<8x16xi32>
    %771 = arith.cmpi sge, %764, %770 : vector<8x16xi32>
    %c8_i32_366 = arith.constant 8 : i32
    %772 = vector.broadcast %c8_i32_366 : i32 to vector<8x16xi32>
    %773 = arith.cmpi slt, %764, %772 : vector<8x16xi32>
    %774 = arith.andi %771, %773 : vector<8x16xi1>
    %c8_i32_367 = arith.constant 8 : i32
    %775 = vector.broadcast %c8_i32_367 : i32 to vector<8x16xi32>
    %776 = arith.cmpi sge, %764, %775 : vector<8x16xi32>
    %c12_i32_368 = arith.constant 12 : i32
    %777 = vector.broadcast %c12_i32_368 : i32 to vector<8x16xi32>
    %778 = arith.cmpi slt, %764, %777 : vector<8x16xi32>
    %779 = arith.andi %776, %778 : vector<8x16xi1>
    %c12_i32_369 = arith.constant 12 : i32
    %780 = vector.broadcast %c12_i32_369 : i32 to vector<8x16xi32>
    %781 = arith.cmpi sge, %764, %780 : vector<8x16xi32>
    %c16_i32_370 = arith.constant 16 : i32
    %782 = vector.broadcast %c16_i32_370 : i32 to vector<8x16xi32>
    %783 = arith.cmpi slt, %764, %782 : vector<8x16xi32>
    %784 = arith.andi %781, %783 : vector<8x16xi1>
    %cst_371 = arith.constant 0.333333343 : f32
    %785 = vector.broadcast %cst_371 : f32 to vector<8x16xf32>
    %786 = arith.mulf %761, %785 : vector<8x16xf32>
    %cst_372 = arith.constant 0.000000e+00 : f32
    %787 = vector.broadcast %cst_372 : f32 to vector<8x16xf32>
    %788 = arith.select %769, %786, %787 : vector<8x16xi1>, vector<8x16xf32>
    %cst_373 = arith.constant 0.000000e+00 : f32
    %789 = vector.broadcast %cst_373 : f32 to vector<8x16xf32>
    %790 = arith.select %774, %786, %789 : vector<8x16xi1>, vector<8x16xf32>
    %cst_374 = arith.constant 0.000000e+00 : f32
    %791 = vector.broadcast %cst_374 : f32 to vector<8x16xf32>
    %792 = arith.select %779, %786, %791 : vector<8x16xi1>, vector<8x16xf32>
    %cst_375 = arith.constant 0.000000e+00 : f32
    %793 = vector.broadcast %cst_375 : f32 to vector<8x16xf32>
    %794 = arith.select %784, %786, %793 : vector<8x16xi1>, vector<8x16xf32>
    %795 = tpu.concatenate %788, %790, %792, %794 in 0 : vector<8x16xf32>, vector<8x16xf32>, vector<8x16xf32>, vector<8x16xf32> -> vector<32x16xf32>
    %cst_376 = arith.constant dense<0.000000e+00> : vector<32x8xf32>
    %796 = tpu.matmul %795, %762, %cst_376 {dimension_numbers = #tpu.dot_dimension_numbers<[1], [1], [0], [0], [0, 0, 1, 0], [], []>} : vector<32x16xf32>, vector<8x16xf32>, vector<32x8xf32> -> vector<32x8xf32>
    %797 = tpu.iota {dimensions = array<i32: 0>} : vector<8x8xi32>
    %798 = tpu.concatenate %797, %797, %797, %797 in 0 : vector<8x8xi32>, vector<8x8xi32>, vector<8x8xi32>, vector<8x8xi32> -> vector<32x8xi32>
    %799 = tpu.iota {dimensions = array<i32: 1>} : vector<32x8xi32>
    %800 = arith.cmpi sle, %799, %798 : vector<32x8xi32>
    %cst_377 = arith.constant -1.000000e+30 : f32
    %801 = vector.broadcast %cst_377 : f32 to vector<32x8xf32>
    %802 = arith.select %800, %796, %801 : vector<32x8xi1>, vector<32x8xf32>
    %cst_378 = arith.constant dense<0xFF800000> : vector<32xf32>
    %803 = vector.multi_reduction <maximumf>, %802, %cst_378 [1] : vector<32x8xf32> to vector<32xf32>
    %804 = vector.shape_cast %803 : vector<32xf32> to vector<32x1xf32>
    %805 = vector.broadcast %804 : vector<32x1xf32> to vector<32x8xf32>
    %806 = arith.subf %802, %805 : vector<32x8xf32>
    %807 = math.exp %806 : vector<32x8xf32>
    %cst_379 = arith.constant dense<0.000000e+00> : vector<32xf32>
    %808 = vector.multi_reduction <add>, %807, %cst_379 [1] : vector<32x8xf32> to vector<32xf32>
    %809 = vector.shape_cast %808 : vector<32xf32> to vector<32x1xf32>
    %810 = vector.broadcast %809 : vector<32x1xf32> to vector<32x8xf32>
    %811 = arith.divf %807, %810 : vector<32x8xf32>
    %cst_380 = arith.constant dense<0.000000e+00> : vector<32x16xf32>
    %812 = tpu.matmul %811, %763, %cst_380 {dimension_numbers = #tpu.dot_dimension_numbers<[1], [0], [0], [1], [0, 0, 1, 1], [], []>} : vector<32x8xf32>, vector<8x16xf32>, vector<32x16xf32> -> vector<32x16xf32>
    %813 = vector.extract_strided_slice %812 {offsets = [0, 0], sizes = [8, 16], strides = [1, 1]} : vector<32x16xf32> to vector<8x16xf32>
    %cst_381 = arith.constant 0.000000e+00 : f32
    %814 = vector.broadcast %cst_381 : f32 to vector<8x16xf32>
    %815 = arith.select %769, %813, %814 : vector<8x16xi1>, vector<8x16xf32>
    %816 = vector.extract_strided_slice %812 {offsets = [8, 0], sizes = [8, 16], strides = [1, 1]} : vector<32x16xf32> to vector<8x16xf32>
    %cst_382 = arith.constant 0.000000e+00 : f32
    %817 = vector.broadcast %cst_382 : f32 to vector<8x16xf32>
    %818 = arith.select %774, %816, %817 : vector<8x16xi1>, vector<8x16xf32>
    %819 = arith.addf %815, %818 : vector<8x16xf32>
    %820 = vector.extract_strided_slice %812 {offsets = [16, 0], sizes = [8, 16], strides = [1, 1]} : vector<32x16xf32> to vector<8x16xf32>
    %cst_383 = arith.constant 0.000000e+00 : f32
    %821 = vector.broadcast %cst_383 : f32 to vector<8x16xf32>
    %822 = arith.select %779, %820, %821 : vector<8x16xi1>, vector<8x16xf32>
    %823 = arith.addf %819, %822 : vector<8x16xf32>
    %824 = vector.extract_strided_slice %812 {offsets = [24, 0], sizes = [8, 16], strides = [1, 1]} : vector<32x16xf32> to vector<8x16xf32>
    %cst_384 = arith.constant 0.000000e+00 : f32
    %825 = vector.broadcast %cst_384 : f32 to vector<8x16xf32>
    %826 = arith.select %784, %824, %825 : vector<8x16xi1>, vector<8x16xf32>
    %827 = arith.addf %823, %826 : vector<8x16xf32>
    %c1_385 = arith.constant 1 : index
    %c0_386 = arith.constant 0 : index
    %c0_387 = arith.constant 0 : index
    %828 = vector.load %arg20[%c1_385, %c0_386, %c0_387] : memref<3x16x16xf32, #tpu.memory_space<vmem>>, vector<1x16x16xf32>
    %829 = vector.shape_cast %828 : vector<1x16x16xf32> to vector<16x16xf32>
    %cst_388 = arith.constant dense<0.000000e+00> : vector<8x16xf32>
    %830 = tpu.matmul %827, %829, %cst_388 {dimension_numbers = #tpu.dot_dimension_numbers<[1], [0], [0], [1], [0, 0, 1, 1], [], []>} : vector<8x16xf32>, vector<16x16xf32>, vector<8x16xf32> -> vector<8x16xf32>
    %831 = arith.addf %731, %830 : vector<8x16xf32>
    %c1_389 = arith.constant 1 : index
    %c0_390 = arith.constant 0 : index
    %c0_391 = arith.constant 0 : index
    %832 = vector.load %arg21[%c1_389, %c0_390, %c0_391] : memref<3x1x16xf32, #tpu.memory_space<vmem>>, vector<1x1x16xf32>
    %833 = vector.shape_cast %832 : vector<1x1x16xf32> to vector<1x16xf32>
    %834 = vector.broadcast %833 : vector<1x16xf32> to vector<8x16xf32>
    %835 = arith.addf %831, %834 : vector<8x16xf32>
    %c1_392 = arith.constant 1 : index
    %c0_393 = arith.constant 0 : index
    %c0_394 = arith.constant 0 : index
    %836 = vector.load %arg22[%c1_392, %c0_393, %c0_394] : memref<3x1x16xf32, #tpu.memory_space<vmem>>, vector<1x1x16xf32>
    %837 = vector.shape_cast %836 : vector<1x1x16xf32> to vector<1x16xf32>
    %c1_395 = arith.constant 1 : index
    %c0_396 = arith.constant 0 : index
    %c0_397 = arith.constant 0 : index
    %838 = vector.load %arg23[%c1_395, %c0_396, %c0_397] : memref<3x1x16xf32, #tpu.memory_space<vmem>>, vector<1x1x16xf32>
    %839 = vector.shape_cast %838 : vector<1x1x16xf32> to vector<1x16xf32>
    %cst_398 = arith.constant dense<0.000000e+00> : vector<8xf32>
    %840 = vector.multi_reduction <add>, %835, %cst_398 [1] : vector<8x16xf32> to vector<8xf32>
    %841 = vector.shape_cast %840 : vector<8xf32> to vector<8x1xf32>
    %cst_399 = arith.constant 1.600000e+01 : f32
    %842 = vector.broadcast %cst_399 : f32 to vector<8x1xf32>
    %843 = arith.divf %841, %842 : vector<8x1xf32>
    %844 = vector.broadcast %843 : vector<8x1xf32> to vector<8x16xf32>
    %845 = arith.subf %835, %844 : vector<8x16xf32>
    %846 = arith.mulf %845, %845 : vector<8x16xf32>
    %cst_400 = arith.constant dense<0.000000e+00> : vector<8xf32>
    %847 = vector.multi_reduction <add>, %846, %cst_400 [1] : vector<8x16xf32> to vector<8xf32>
    %848 = vector.shape_cast %847 : vector<8xf32> to vector<8x1xf32>
    %cst_401 = arith.constant 1.600000e+01 : f32
    %849 = vector.broadcast %cst_401 : f32 to vector<8x1xf32>
    %850 = arith.divf %848, %849 : vector<8x1xf32>
    %851 = vector.broadcast %843 : vector<8x1xf32> to vector<8x16xf32>
    %852 = arith.subf %835, %851 : vector<8x16xf32>
    %cst_402 = arith.constant 9.99999974E-6 : f32
    %853 = vector.broadcast %cst_402 : f32 to vector<8x1xf32>
    %854 = arith.addf %850, %853 : vector<8x1xf32>
    %855 = math.rsqrt %854 : vector<8x1xf32>
    %856 = vector.broadcast %855 : vector<8x1xf32> to vector<8x16xf32>
    %857 = arith.mulf %852, %856 : vector<8x16xf32>
    %858 = vector.broadcast %837 : vector<1x16xf32> to vector<8x16xf32>
    %859 = arith.mulf %857, %858 : vector<8x16xf32>
    %860 = vector.broadcast %839 : vector<1x16xf32> to vector<8x16xf32>
    %861 = arith.addf %859, %860 : vector<8x16xf32>
    %c1_403 = arith.constant 1 : index
    %c0_404 = arith.constant 0 : index
    %c0_405 = arith.constant 0 : index
    %862 = vector.load %arg11[%c1_403, %c0_404, %c0_405] : memref<3x1x16xf32, #tpu.memory_space<vmem>>, vector<1x1x16xf32>
    %863 = vector.shape_cast %862 : vector<1x1x16xf32> to vector<1x16xf32>
    %c1_406 = arith.constant 1 : index
    %c0_407 = arith.constant 0 : index
    %c0_408 = arith.constant 0 : index
    %864 = vector.load %arg12[%c1_406, %c0_407, %c0_408] : memref<3x1x16xf32, #tpu.memory_space<vmem>>, vector<1x1x16xf32>
    %865 = vector.shape_cast %864 : vector<1x1x16xf32> to vector<1x16xf32>
    %cst_409 = arith.constant dense<0.000000e+00> : vector<16xf32>
    %866 = vector.multi_reduction <add>, %450, %cst_409 [1] : vector<16x16xf32> to vector<16xf32>
    %867 = vector.shape_cast %866 : vector<16xf32> to vector<16x1xf32>
    %cst_410 = arith.constant 1.600000e+01 : f32
    %868 = vector.broadcast %cst_410 : f32 to vector<16x1xf32>
    %869 = arith.divf %867, %868 : vector<16x1xf32>
    %870 = vector.broadcast %869 : vector<16x1xf32> to vector<16x16xf32>
    %871 = arith.subf %450, %870 : vector<16x16xf32>
    %872 = arith.mulf %871, %871 : vector<16x16xf32>
    %cst_411 = arith.constant dense<0.000000e+00> : vector<16xf32>
    %873 = vector.multi_reduction <add>, %872, %cst_411 [1] : vector<16x16xf32> to vector<16xf32>
    %874 = vector.shape_cast %873 : vector<16xf32> to vector<16x1xf32>
    %cst_412 = arith.constant 1.600000e+01 : f32
    %875 = vector.broadcast %cst_412 : f32 to vector<16x1xf32>
    %876 = arith.divf %874, %875 : vector<16x1xf32>
    %877 = vector.broadcast %869 : vector<16x1xf32> to vector<16x16xf32>
    %878 = arith.subf %450, %877 : vector<16x16xf32>
    %cst_413 = arith.constant 9.99999974E-6 : f32
    %879 = vector.broadcast %cst_413 : f32 to vector<16x1xf32>
    %880 = arith.addf %876, %879 : vector<16x1xf32>
    %881 = math.rsqrt %880 : vector<16x1xf32>
    %882 = vector.broadcast %881 : vector<16x1xf32> to vector<16x16xf32>
    %883 = arith.mulf %878, %882 : vector<16x16xf32>
    %884 = vector.broadcast %863 : vector<1x16xf32> to vector<16x16xf32>
    %885 = arith.mulf %883, %884 : vector<16x16xf32>
    %886 = vector.broadcast %865 : vector<1x16xf32> to vector<16x16xf32>
    %887 = arith.addf %885, %886 : vector<16x16xf32>
    %c1_414 = arith.constant 1 : index
    %c0_415 = arith.constant 0 : index
    %c0_416 = arith.constant 0 : index
    %888 = vector.load %arg24[%c1_414, %c0_415, %c0_416] : memref<3x16x16xf32, #tpu.memory_space<vmem>>, vector<1x16x16xf32>
    %889 = vector.shape_cast %888 : vector<1x16x16xf32> to vector<16x16xf32>
    %cst_417 = arith.constant dense<0.000000e+00> : vector<8x16xf32>
    %890 = tpu.matmul %861, %889, %cst_417 {dimension_numbers = #tpu.dot_dimension_numbers<[1], [0], [0], [1], [0, 0, 1, 1], [], []>} : vector<8x16xf32>, vector<16x16xf32>, vector<8x16xf32> -> vector<8x16xf32>
    %c1_418 = arith.constant 1 : index
    %c0_419 = arith.constant 0 : index
    %c0_420 = arith.constant 0 : index
    %891 = vector.load %arg25[%c1_418, %c0_419, %c0_420] : memref<3x16x32xf32, #tpu.memory_space<vmem>>, vector<1x16x32xf32>
    %892 = vector.shape_cast %891 : vector<1x16x32xf32> to vector<16x32xf32>
    %cst_421 = arith.constant dense<0.000000e+00> : vector<16x32xf32>
    %893 = tpu.matmul %887, %892, %cst_421 {dimension_numbers = #tpu.dot_dimension_numbers<[1], [0], [0], [1], [0, 0, 1, 1], [], []>} : vector<16x16xf32>, vector<16x32xf32>, vector<16x32xf32> -> vector<16x32xf32>
    %894 = vector.extract_strided_slice %893 {offsets = [0, 0], sizes = [16, 16], strides = [1, 1]} : vector<16x32xf32> to vector<16x16xf32>
    %895 = vector.extract_strided_slice %893 {offsets = [0, 16], sizes = [16, 16], strides = [1, 1]} : vector<16x32xf32> to vector<16x16xf32>
    %896 = tpu.iota {dimensions = array<i32: 1>} : vector<8x16xi32>
    %c0_i32_422 = arith.constant 0 : i32
    %897 = vector.broadcast %c0_i32_422 : i32 to vector<8x16xi32>
    %898 = arith.cmpi sge, %896, %897 : vector<8x16xi32>
    %c4_i32_423 = arith.constant 4 : i32
    %899 = vector.broadcast %c4_i32_423 : i32 to vector<8x16xi32>
    %900 = arith.cmpi slt, %896, %899 : vector<8x16xi32>
    %901 = arith.andi %898, %900 : vector<8x16xi1>
    %c4_i32_424 = arith.constant 4 : i32
    %902 = vector.broadcast %c4_i32_424 : i32 to vector<8x16xi32>
    %903 = arith.cmpi sge, %896, %902 : vector<8x16xi32>
    %c8_i32_425 = arith.constant 8 : i32
    %904 = vector.broadcast %c8_i32_425 : i32 to vector<8x16xi32>
    %905 = arith.cmpi slt, %896, %904 : vector<8x16xi32>
    %906 = arith.andi %903, %905 : vector<8x16xi1>
    %c8_i32_426 = arith.constant 8 : i32
    %907 = vector.broadcast %c8_i32_426 : i32 to vector<8x16xi32>
    %908 = arith.cmpi sge, %896, %907 : vector<8x16xi32>
    %c12_i32_427 = arith.constant 12 : i32
    %909 = vector.broadcast %c12_i32_427 : i32 to vector<8x16xi32>
    %910 = arith.cmpi slt, %896, %909 : vector<8x16xi32>
    %911 = arith.andi %908, %910 : vector<8x16xi1>
    %c12_i32_428 = arith.constant 12 : i32
    %912 = vector.broadcast %c12_i32_428 : i32 to vector<8x16xi32>
    %913 = arith.cmpi sge, %896, %912 : vector<8x16xi32>
    %c16_i32_429 = arith.constant 16 : i32
    %914 = vector.broadcast %c16_i32_429 : i32 to vector<8x16xi32>
    %915 = arith.cmpi slt, %896, %914 : vector<8x16xi32>
    %916 = arith.andi %913, %915 : vector<8x16xi1>
    %cst_430 = arith.constant 0.333333343 : f32
    %917 = vector.broadcast %cst_430 : f32 to vector<8x16xf32>
    %918 = arith.mulf %890, %917 : vector<8x16xf32>
    %cst_431 = arith.constant 0.000000e+00 : f32
    %919 = vector.broadcast %cst_431 : f32 to vector<8x16xf32>
    %920 = arith.select %901, %918, %919 : vector<8x16xi1>, vector<8x16xf32>
    %cst_432 = arith.constant 0.000000e+00 : f32
    %921 = vector.broadcast %cst_432 : f32 to vector<8x16xf32>
    %922 = arith.select %906, %918, %921 : vector<8x16xi1>, vector<8x16xf32>
    %cst_433 = arith.constant 0.000000e+00 : f32
    %923 = vector.broadcast %cst_433 : f32 to vector<8x16xf32>
    %924 = arith.select %911, %918, %923 : vector<8x16xi1>, vector<8x16xf32>
    %cst_434 = arith.constant 0.000000e+00 : f32
    %925 = vector.broadcast %cst_434 : f32 to vector<8x16xf32>
    %926 = arith.select %916, %918, %925 : vector<8x16xi1>, vector<8x16xf32>
    %927 = tpu.concatenate %920, %922, %924, %926 in 0 : vector<8x16xf32>, vector<8x16xf32>, vector<8x16xf32>, vector<8x16xf32> -> vector<32x16xf32>
    %cst_435 = arith.constant dense<0.000000e+00> : vector<32x16xf32>
    %928 = tpu.matmul %927, %894, %cst_435 {dimension_numbers = #tpu.dot_dimension_numbers<[1], [1], [0], [0], [0, 0, 1, 0], [], []>} : vector<32x16xf32>, vector<16x16xf32>, vector<32x16xf32> -> vector<32x16xf32>
    %cst_436 = arith.constant dense<0xFF800000> : vector<32xf32>
    %929 = vector.multi_reduction <maximumf>, %928, %cst_436 [1] : vector<32x16xf32> to vector<32xf32>
    %930 = vector.shape_cast %929 : vector<32xf32> to vector<32x1xf32>
    %931 = vector.broadcast %930 : vector<32x1xf32> to vector<32x16xf32>
    %932 = arith.subf %928, %931 : vector<32x16xf32>
    %933 = math.exp %932 : vector<32x16xf32>
    %cst_437 = arith.constant dense<0.000000e+00> : vector<32xf32>
    %934 = vector.multi_reduction <add>, %933, %cst_437 [1] : vector<32x16xf32> to vector<32xf32>
    %935 = vector.shape_cast %934 : vector<32xf32> to vector<32x1xf32>
    %936 = vector.broadcast %935 : vector<32x1xf32> to vector<32x16xf32>
    %937 = arith.divf %933, %936 : vector<32x16xf32>
    %cst_438 = arith.constant dense<0.000000e+00> : vector<32x16xf32>
    %938 = tpu.matmul %937, %895, %cst_438 {dimension_numbers = #tpu.dot_dimension_numbers<[1], [0], [0], [1], [0, 0, 1, 1], [], []>} : vector<32x16xf32>, vector<16x16xf32>, vector<32x16xf32> -> vector<32x16xf32>
    %939 = vector.extract_strided_slice %938 {offsets = [0, 0], sizes = [8, 16], strides = [1, 1]} : vector<32x16xf32> to vector<8x16xf32>
    %cst_439 = arith.constant 0.000000e+00 : f32
    %940 = vector.broadcast %cst_439 : f32 to vector<8x16xf32>
    %941 = arith.select %901, %939, %940 : vector<8x16xi1>, vector<8x16xf32>
    %942 = vector.extract_strided_slice %938 {offsets = [8, 0], sizes = [8, 16], strides = [1, 1]} : vector<32x16xf32> to vector<8x16xf32>
    %cst_440 = arith.constant 0.000000e+00 : f32
    %943 = vector.broadcast %cst_440 : f32 to vector<8x16xf32>
    %944 = arith.select %906, %942, %943 : vector<8x16xi1>, vector<8x16xf32>
    %945 = arith.addf %941, %944 : vector<8x16xf32>
    %946 = vector.extract_strided_slice %938 {offsets = [16, 0], sizes = [8, 16], strides = [1, 1]} : vector<32x16xf32> to vector<8x16xf32>
    %cst_441 = arith.constant 0.000000e+00 : f32
    %947 = vector.broadcast %cst_441 : f32 to vector<8x16xf32>
    %948 = arith.select %911, %946, %947 : vector<8x16xi1>, vector<8x16xf32>
    %949 = arith.addf %945, %948 : vector<8x16xf32>
    %950 = vector.extract_strided_slice %938 {offsets = [24, 0], sizes = [8, 16], strides = [1, 1]} : vector<32x16xf32> to vector<8x16xf32>
    %cst_442 = arith.constant 0.000000e+00 : f32
    %951 = vector.broadcast %cst_442 : f32 to vector<8x16xf32>
    %952 = arith.select %916, %950, %951 : vector<8x16xi1>, vector<8x16xf32>
    %953 = arith.addf %949, %952 : vector<8x16xf32>
    %c1_443 = arith.constant 1 : index
    %c0_444 = arith.constant 0 : index
    %c0_445 = arith.constant 0 : index
    %954 = vector.load %arg26[%c1_443, %c0_444, %c0_445] : memref<3x16x16xf32, #tpu.memory_space<vmem>>, vector<1x16x16xf32>
    %955 = vector.shape_cast %954 : vector<1x16x16xf32> to vector<16x16xf32>
    %cst_446 = arith.constant dense<0.000000e+00> : vector<8x16xf32>
    %956 = tpu.matmul %953, %955, %cst_446 {dimension_numbers = #tpu.dot_dimension_numbers<[1], [0], [0], [1], [0, 0, 1, 1], [], []>} : vector<8x16xf32>, vector<16x16xf32>, vector<8x16xf32> -> vector<8x16xf32>
    %957 = arith.addf %835, %956 : vector<8x16xf32>
    %c1_447 = arith.constant 1 : index
    %c0_448 = arith.constant 0 : index
    %c0_449 = arith.constant 0 : index
    %958 = vector.load %arg27[%c1_447, %c0_448, %c0_449] : memref<3x1x16xf32, #tpu.memory_space<vmem>>, vector<1x1x16xf32>
    %959 = vector.shape_cast %958 : vector<1x1x16xf32> to vector<1x16xf32>
    %960 = vector.broadcast %959 : vector<1x16xf32> to vector<8x16xf32>
    %961 = arith.addf %957, %960 : vector<8x16xf32>
    %c1_450 = arith.constant 1 : index
    %c0_451 = arith.constant 0 : index
    %c0_452 = arith.constant 0 : index
    %962 = vector.load %arg28[%c1_450, %c0_451, %c0_452] : memref<3x1x16xf32, #tpu.memory_space<vmem>>, vector<1x1x16xf32>
    %963 = vector.shape_cast %962 : vector<1x1x16xf32> to vector<1x16xf32>
    %c1_453 = arith.constant 1 : index
    %c0_454 = arith.constant 0 : index
    %c0_455 = arith.constant 0 : index
    %964 = vector.load %arg29[%c1_453, %c0_454, %c0_455] : memref<3x1x16xf32, #tpu.memory_space<vmem>>, vector<1x1x16xf32>
    %965 = vector.shape_cast %964 : vector<1x1x16xf32> to vector<1x16xf32>
    %cst_456 = arith.constant dense<0.000000e+00> : vector<8xf32>
    %966 = vector.multi_reduction <add>, %961, %cst_456 [1] : vector<8x16xf32> to vector<8xf32>
    %967 = vector.shape_cast %966 : vector<8xf32> to vector<8x1xf32>
    %cst_457 = arith.constant 1.600000e+01 : f32
    %968 = vector.broadcast %cst_457 : f32 to vector<8x1xf32>
    %969 = arith.divf %967, %968 : vector<8x1xf32>
    %970 = vector.broadcast %969 : vector<8x1xf32> to vector<8x16xf32>
    %971 = arith.subf %961, %970 : vector<8x16xf32>
    %972 = arith.mulf %971, %971 : vector<8x16xf32>
    %cst_458 = arith.constant dense<0.000000e+00> : vector<8xf32>
    %973 = vector.multi_reduction <add>, %972, %cst_458 [1] : vector<8x16xf32> to vector<8xf32>
    %974 = vector.shape_cast %973 : vector<8xf32> to vector<8x1xf32>
    %cst_459 = arith.constant 1.600000e+01 : f32
    %975 = vector.broadcast %cst_459 : f32 to vector<8x1xf32>
    %976 = arith.divf %974, %975 : vector<8x1xf32>
    %977 = vector.broadcast %969 : vector<8x1xf32> to vector<8x16xf32>
    %978 = arith.subf %961, %977 : vector<8x16xf32>
    %cst_460 = arith.constant 9.99999974E-6 : f32
    %979 = vector.broadcast %cst_460 : f32 to vector<8x1xf32>
    %980 = arith.addf %976, %979 : vector<8x1xf32>
    %981 = math.rsqrt %980 : vector<8x1xf32>
    %982 = vector.broadcast %981 : vector<8x1xf32> to vector<8x16xf32>
    %983 = arith.mulf %978, %982 : vector<8x16xf32>
    %984 = vector.broadcast %963 : vector<1x16xf32> to vector<8x16xf32>
    %985 = arith.mulf %983, %984 : vector<8x16xf32>
    %986 = vector.broadcast %965 : vector<1x16xf32> to vector<8x16xf32>
    %987 = arith.addf %985, %986 : vector<8x16xf32>
    %c1_461 = arith.constant 1 : index
    %c0_462 = arith.constant 0 : index
    %c0_463 = arith.constant 0 : index
    %988 = vector.load %arg30[%c1_461, %c0_462, %c0_463] : memref<3x16x32xf32, #tpu.memory_space<vmem>>, vector<1x16x32xf32>
    %989 = vector.shape_cast %988 : vector<1x16x32xf32> to vector<16x32xf32>
    %cst_464 = arith.constant dense<0.000000e+00> : vector<8x32xf32>
    %990 = tpu.matmul %987, %989, %cst_464 {dimension_numbers = #tpu.dot_dimension_numbers<[1], [0], [0], [1], [0, 0, 1, 1], [], []>} : vector<8x16xf32>, vector<16x32xf32>, vector<8x32xf32> -> vector<8x32xf32>
    %c1_465 = arith.constant 1 : index
    %c0_466 = arith.constant 0 : index
    %c0_467 = arith.constant 0 : index
    %991 = vector.load %arg31[%c1_465, %c0_466, %c0_467] : memref<3x1x32xf32, #tpu.memory_space<vmem>>, vector<1x1x32xf32>
    %992 = vector.shape_cast %991 : vector<1x1x32xf32> to vector<1x32xf32>
    %993 = vector.broadcast %992 : vector<1x32xf32> to vector<8x32xf32>
    %994 = arith.addf %990, %993 : vector<8x32xf32>
    %cst_468 = arith.constant 5.000000e-01 : f32
    %995 = vector.broadcast %cst_468 : f32 to vector<8x32xf32>
    %996 = arith.mulf %995, %994 : vector<8x32xf32>
    %cst_469 = arith.constant 0.707106769 : f32
    %997 = vector.broadcast %cst_469 : f32 to vector<8x32xf32>
    %998 = arith.mulf %994, %997 : vector<8x32xf32>
    %999 = math.erf %998 : vector<8x32xf32>
    %cst_470 = arith.constant 1.000000e+00 : f32
    %1000 = vector.broadcast %cst_470 : f32 to vector<8x32xf32>
    %1001 = arith.addf %1000, %999 : vector<8x32xf32>
    %1002 = arith.mulf %996, %1001 : vector<8x32xf32>
    %c1_471 = arith.constant 1 : index
    %c0_472 = arith.constant 0 : index
    %c0_473 = arith.constant 0 : index
    %1003 = vector.load %arg32[%c1_471, %c0_472, %c0_473] : memref<3x32x16xf32, #tpu.memory_space<vmem>>, vector<1x32x16xf32>
    %1004 = vector.shape_cast %1003 : vector<1x32x16xf32> to vector<32x16xf32>
    %cst_474 = arith.constant dense<0.000000e+00> : vector<8x16xf32>
    %1005 = tpu.matmul %1002, %1004, %cst_474 {dimension_numbers = #tpu.dot_dimension_numbers<[1], [0], [0], [1], [0, 0, 1, 1], [], []>} : vector<8x32xf32>, vector<32x16xf32>, vector<8x16xf32> -> vector<8x16xf32>
    %1006 = arith.addf %961, %1005 : vector<8x16xf32>
    %c1_475 = arith.constant 1 : index
    %c0_476 = arith.constant 0 : index
    %c0_477 = arith.constant 0 : index
    %1007 = vector.load %arg33[%c1_475, %c0_476, %c0_477] : memref<3x1x16xf32, #tpu.memory_space<vmem>>, vector<1x1x16xf32>
    %1008 = vector.shape_cast %1007 : vector<1x1x16xf32> to vector<1x16xf32>
    %1009 = vector.broadcast %1008 : vector<1x16xf32> to vector<8x16xf32>
    %1010 = arith.addf %1006, %1009 : vector<8x16xf32>
    %c2_478 = arith.constant 2 : index
    %c0_479 = arith.constant 0 : index
    %c0_480 = arith.constant 0 : index
    %1011 = vector.load %arg17[%c2_478, %c0_479, %c0_480] : memref<3x1x16xf32, #tpu.memory_space<vmem>>, vector<1x1x16xf32>
    %1012 = vector.shape_cast %1011 : vector<1x1x16xf32> to vector<1x16xf32>
    %c2_481 = arith.constant 2 : index
    %c0_482 = arith.constant 0 : index
    %c0_483 = arith.constant 0 : index
    %1013 = vector.load %arg18[%c2_481, %c0_482, %c0_483] : memref<3x1x16xf32, #tpu.memory_space<vmem>>, vector<1x1x16xf32>
    %1014 = vector.shape_cast %1013 : vector<1x1x16xf32> to vector<1x16xf32>
    %cst_484 = arith.constant dense<0.000000e+00> : vector<8xf32>
    %1015 = vector.multi_reduction <add>, %1010, %cst_484 [1] : vector<8x16xf32> to vector<8xf32>
    %1016 = vector.shape_cast %1015 : vector<8xf32> to vector<8x1xf32>
    %cst_485 = arith.constant 1.600000e+01 : f32
    %1017 = vector.broadcast %cst_485 : f32 to vector<8x1xf32>
    %1018 = arith.divf %1016, %1017 : vector<8x1xf32>
    %1019 = vector.broadcast %1018 : vector<8x1xf32> to vector<8x16xf32>
    %1020 = arith.subf %1010, %1019 : vector<8x16xf32>
    %1021 = arith.mulf %1020, %1020 : vector<8x16xf32>
    %cst_486 = arith.constant dense<0.000000e+00> : vector<8xf32>
    %1022 = vector.multi_reduction <add>, %1021, %cst_486 [1] : vector<8x16xf32> to vector<8xf32>
    %1023 = vector.shape_cast %1022 : vector<8xf32> to vector<8x1xf32>
    %cst_487 = arith.constant 1.600000e+01 : f32
    %1024 = vector.broadcast %cst_487 : f32 to vector<8x1xf32>
    %1025 = arith.divf %1023, %1024 : vector<8x1xf32>
    %1026 = vector.broadcast %1018 : vector<8x1xf32> to vector<8x16xf32>
    %1027 = arith.subf %1010, %1026 : vector<8x16xf32>
    %cst_488 = arith.constant 9.99999974E-6 : f32
    %1028 = vector.broadcast %cst_488 : f32 to vector<8x1xf32>
    %1029 = arith.addf %1025, %1028 : vector<8x1xf32>
    %1030 = math.rsqrt %1029 : vector<8x1xf32>
    %1031 = vector.broadcast %1030 : vector<8x1xf32> to vector<8x16xf32>
    %1032 = arith.mulf %1027, %1031 : vector<8x16xf32>
    %1033 = vector.broadcast %1012 : vector<1x16xf32> to vector<8x16xf32>
    %1034 = arith.mulf %1032, %1033 : vector<8x16xf32>
    %1035 = vector.broadcast %1014 : vector<1x16xf32> to vector<8x16xf32>
    %1036 = arith.addf %1034, %1035 : vector<8x16xf32>
    %c2_489 = arith.constant 2 : index
    %c0_490 = arith.constant 0 : index
    %c0_491 = arith.constant 0 : index
    %1037 = vector.load %arg19[%c2_489, %c0_490, %c0_491] : memref<3x16x48xf32, #tpu.memory_space<vmem>>, vector<1x16x48xf32>
    %1038 = vector.shape_cast %1037 : vector<1x16x48xf32> to vector<16x48xf32>
    %cst_492 = arith.constant dense<0.000000e+00> : vector<8x48xf32>
    %1039 = tpu.matmul %1036, %1038, %cst_492 {dimension_numbers = #tpu.dot_dimension_numbers<[1], [0], [0], [1], [0, 0, 1, 1], [], []>} : vector<8x16xf32>, vector<16x48xf32>, vector<8x48xf32> -> vector<8x48xf32>
    %1040 = vector.extract_strided_slice %1039 {offsets = [0, 0], sizes = [8, 16], strides = [1, 1]} : vector<8x48xf32> to vector<8x16xf32>
    %1041 = vector.extract_strided_slice %1039 {offsets = [0, 16], sizes = [8, 16], strides = [1, 1]} : vector<8x48xf32> to vector<8x16xf32>
    %1042 = vector.extract_strided_slice %1039 {offsets = [0, 32], sizes = [8, 16], strides = [1, 1]} : vector<8x48xf32> to vector<8x16xf32>
    %1043 = tpu.iota {dimensions = array<i32: 1>} : vector<8x16xi32>
    %c0_i32_493 = arith.constant 0 : i32
    %1044 = vector.broadcast %c0_i32_493 : i32 to vector<8x16xi32>
    %1045 = arith.cmpi sge, %1043, %1044 : vector<8x16xi32>
    %c4_i32_494 = arith.constant 4 : i32
    %1046 = vector.broadcast %c4_i32_494 : i32 to vector<8x16xi32>
    %1047 = arith.cmpi slt, %1043, %1046 : vector<8x16xi32>
    %1048 = arith.andi %1045, %1047 : vector<8x16xi1>
    %c4_i32_495 = arith.constant 4 : i32
    %1049 = vector.broadcast %c4_i32_495 : i32 to vector<8x16xi32>
    %1050 = arith.cmpi sge, %1043, %1049 : vector<8x16xi32>
    %c8_i32_496 = arith.constant 8 : i32
    %1051 = vector.broadcast %c8_i32_496 : i32 to vector<8x16xi32>
    %1052 = arith.cmpi slt, %1043, %1051 : vector<8x16xi32>
    %1053 = arith.andi %1050, %1052 : vector<8x16xi1>
    %c8_i32_497 = arith.constant 8 : i32
    %1054 = vector.broadcast %c8_i32_497 : i32 to vector<8x16xi32>
    %1055 = arith.cmpi sge, %1043, %1054 : vector<8x16xi32>
    %c12_i32_498 = arith.constant 12 : i32
    %1056 = vector.broadcast %c12_i32_498 : i32 to vector<8x16xi32>
    %1057 = arith.cmpi slt, %1043, %1056 : vector<8x16xi32>
    %1058 = arith.andi %1055, %1057 : vector<8x16xi1>
    %c12_i32_499 = arith.constant 12 : i32
    %1059 = vector.broadcast %c12_i32_499 : i32 to vector<8x16xi32>
    %1060 = arith.cmpi sge, %1043, %1059 : vector<8x16xi32>
    %c16_i32_500 = arith.constant 16 : i32
    %1061 = vector.broadcast %c16_i32_500 : i32 to vector<8x16xi32>
    %1062 = arith.cmpi slt, %1043, %1061 : vector<8x16xi32>
    %1063 = arith.andi %1060, %1062 : vector<8x16xi1>
    %cst_501 = arith.constant 0.333333343 : f32
    %1064 = vector.broadcast %cst_501 : f32 to vector<8x16xf32>
    %1065 = arith.mulf %1040, %1064 : vector<8x16xf32>
    %cst_502 = arith.constant 0.000000e+00 : f32
    %1066 = vector.broadcast %cst_502 : f32 to vector<8x16xf32>
    %1067 = arith.select %1048, %1065, %1066 : vector<8x16xi1>, vector<8x16xf32>
    %cst_503 = arith.constant 0.000000e+00 : f32
    %1068 = vector.broadcast %cst_503 : f32 to vector<8x16xf32>
    %1069 = arith.select %1053, %1065, %1068 : vector<8x16xi1>, vector<8x16xf32>
    %cst_504 = arith.constant 0.000000e+00 : f32
    %1070 = vector.broadcast %cst_504 : f32 to vector<8x16xf32>
    %1071 = arith.select %1058, %1065, %1070 : vector<8x16xi1>, vector<8x16xf32>
    %cst_505 = arith.constant 0.000000e+00 : f32
    %1072 = vector.broadcast %cst_505 : f32 to vector<8x16xf32>
    %1073 = arith.select %1063, %1065, %1072 : vector<8x16xi1>, vector<8x16xf32>
    %1074 = tpu.concatenate %1067, %1069, %1071, %1073 in 0 : vector<8x16xf32>, vector<8x16xf32>, vector<8x16xf32>, vector<8x16xf32> -> vector<32x16xf32>
    %cst_506 = arith.constant dense<0.000000e+00> : vector<32x8xf32>
    %1075 = tpu.matmul %1074, %1041, %cst_506 {dimension_numbers = #tpu.dot_dimension_numbers<[1], [1], [0], [0], [0, 0, 1, 0], [], []>} : vector<32x16xf32>, vector<8x16xf32>, vector<32x8xf32> -> vector<32x8xf32>
    %1076 = tpu.iota {dimensions = array<i32: 0>} : vector<8x8xi32>
    %1077 = tpu.concatenate %1076, %1076, %1076, %1076 in 0 : vector<8x8xi32>, vector<8x8xi32>, vector<8x8xi32>, vector<8x8xi32> -> vector<32x8xi32>
    %1078 = tpu.iota {dimensions = array<i32: 1>} : vector<32x8xi32>
    %1079 = arith.cmpi sle, %1078, %1077 : vector<32x8xi32>
    %cst_507 = arith.constant -1.000000e+30 : f32
    %1080 = vector.broadcast %cst_507 : f32 to vector<32x8xf32>
    %1081 = arith.select %1079, %1075, %1080 : vector<32x8xi1>, vector<32x8xf32>
    %cst_508 = arith.constant dense<0xFF800000> : vector<32xf32>
    %1082 = vector.multi_reduction <maximumf>, %1081, %cst_508 [1] : vector<32x8xf32> to vector<32xf32>
    %1083 = vector.shape_cast %1082 : vector<32xf32> to vector<32x1xf32>
    %1084 = vector.broadcast %1083 : vector<32x1xf32> to vector<32x8xf32>
    %1085 = arith.subf %1081, %1084 : vector<32x8xf32>
    %1086 = math.exp %1085 : vector<32x8xf32>
    %cst_509 = arith.constant dense<0.000000e+00> : vector<32xf32>
    %1087 = vector.multi_reduction <add>, %1086, %cst_509 [1] : vector<32x8xf32> to vector<32xf32>
    %1088 = vector.shape_cast %1087 : vector<32xf32> to vector<32x1xf32>
    %1089 = vector.broadcast %1088 : vector<32x1xf32> to vector<32x8xf32>
    %1090 = arith.divf %1086, %1089 : vector<32x8xf32>
    %cst_510 = arith.constant dense<0.000000e+00> : vector<32x16xf32>
    %1091 = tpu.matmul %1090, %1042, %cst_510 {dimension_numbers = #tpu.dot_dimension_numbers<[1], [0], [0], [1], [0, 0, 1, 1], [], []>} : vector<32x8xf32>, vector<8x16xf32>, vector<32x16xf32> -> vector<32x16xf32>
    %1092 = vector.extract_strided_slice %1091 {offsets = [0, 0], sizes = [8, 16], strides = [1, 1]} : vector<32x16xf32> to vector<8x16xf32>
    %cst_511 = arith.constant 0.000000e+00 : f32
    %1093 = vector.broadcast %cst_511 : f32 to vector<8x16xf32>
    %1094 = arith.select %1048, %1092, %1093 : vector<8x16xi1>, vector<8x16xf32>
    %1095 = vector.extract_strided_slice %1091 {offsets = [8, 0], sizes = [8, 16], strides = [1, 1]} : vector<32x16xf32> to vector<8x16xf32>
    %cst_512 = arith.constant 0.000000e+00 : f32
    %1096 = vector.broadcast %cst_512 : f32 to vector<8x16xf32>
    %1097 = arith.select %1053, %1095, %1096 : vector<8x16xi1>, vector<8x16xf32>
    %1098 = arith.addf %1094, %1097 : vector<8x16xf32>
    %1099 = vector.extract_strided_slice %1091 {offsets = [16, 0], sizes = [8, 16], strides = [1, 1]} : vector<32x16xf32> to vector<8x16xf32>
    %cst_513 = arith.constant 0.000000e+00 : f32
    %1100 = vector.broadcast %cst_513 : f32 to vector<8x16xf32>
    %1101 = arith.select %1058, %1099, %1100 : vector<8x16xi1>, vector<8x16xf32>
    %1102 = arith.addf %1098, %1101 : vector<8x16xf32>
    %1103 = vector.extract_strided_slice %1091 {offsets = [24, 0], sizes = [8, 16], strides = [1, 1]} : vector<32x16xf32> to vector<8x16xf32>
    %cst_514 = arith.constant 0.000000e+00 : f32
    %1104 = vector.broadcast %cst_514 : f32 to vector<8x16xf32>
    %1105 = arith.select %1063, %1103, %1104 : vector<8x16xi1>, vector<8x16xf32>
    %1106 = arith.addf %1102, %1105 : vector<8x16xf32>
    %c2_515 = arith.constant 2 : index
    %c0_516 = arith.constant 0 : index
    %c0_517 = arith.constant 0 : index
    %1107 = vector.load %arg20[%c2_515, %c0_516, %c0_517] : memref<3x16x16xf32, #tpu.memory_space<vmem>>, vector<1x16x16xf32>
    %1108 = vector.shape_cast %1107 : vector<1x16x16xf32> to vector<16x16xf32>
    %cst_518 = arith.constant dense<0.000000e+00> : vector<8x16xf32>
    %1109 = tpu.matmul %1106, %1108, %cst_518 {dimension_numbers = #tpu.dot_dimension_numbers<[1], [0], [0], [1], [0, 0, 1, 1], [], []>} : vector<8x16xf32>, vector<16x16xf32>, vector<8x16xf32> -> vector<8x16xf32>
    %1110 = arith.addf %1010, %1109 : vector<8x16xf32>
    %c2_519 = arith.constant 2 : index
    %c0_520 = arith.constant 0 : index
    %c0_521 = arith.constant 0 : index
    %1111 = vector.load %arg21[%c2_519, %c0_520, %c0_521] : memref<3x1x16xf32, #tpu.memory_space<vmem>>, vector<1x1x16xf32>
    %1112 = vector.shape_cast %1111 : vector<1x1x16xf32> to vector<1x16xf32>
    %1113 = vector.broadcast %1112 : vector<1x16xf32> to vector<8x16xf32>
    %1114 = arith.addf %1110, %1113 : vector<8x16xf32>
    %c2_522 = arith.constant 2 : index
    %c0_523 = arith.constant 0 : index
    %c0_524 = arith.constant 0 : index
    %1115 = vector.load %arg22[%c2_522, %c0_523, %c0_524] : memref<3x1x16xf32, #tpu.memory_space<vmem>>, vector<1x1x16xf32>
    %1116 = vector.shape_cast %1115 : vector<1x1x16xf32> to vector<1x16xf32>
    %c2_525 = arith.constant 2 : index
    %c0_526 = arith.constant 0 : index
    %c0_527 = arith.constant 0 : index
    %1117 = vector.load %arg23[%c2_525, %c0_526, %c0_527] : memref<3x1x16xf32, #tpu.memory_space<vmem>>, vector<1x1x16xf32>
    %1118 = vector.shape_cast %1117 : vector<1x1x16xf32> to vector<1x16xf32>
    %cst_528 = arith.constant dense<0.000000e+00> : vector<8xf32>
    %1119 = vector.multi_reduction <add>, %1114, %cst_528 [1] : vector<8x16xf32> to vector<8xf32>
    %1120 = vector.shape_cast %1119 : vector<8xf32> to vector<8x1xf32>
    %cst_529 = arith.constant 1.600000e+01 : f32
    %1121 = vector.broadcast %cst_529 : f32 to vector<8x1xf32>
    %1122 = arith.divf %1120, %1121 : vector<8x1xf32>
    %1123 = vector.broadcast %1122 : vector<8x1xf32> to vector<8x16xf32>
    %1124 = arith.subf %1114, %1123 : vector<8x16xf32>
    %1125 = arith.mulf %1124, %1124 : vector<8x16xf32>
    %cst_530 = arith.constant dense<0.000000e+00> : vector<8xf32>
    %1126 = vector.multi_reduction <add>, %1125, %cst_530 [1] : vector<8x16xf32> to vector<8xf32>
    %1127 = vector.shape_cast %1126 : vector<8xf32> to vector<8x1xf32>
    %cst_531 = arith.constant 1.600000e+01 : f32
    %1128 = vector.broadcast %cst_531 : f32 to vector<8x1xf32>
    %1129 = arith.divf %1127, %1128 : vector<8x1xf32>
    %1130 = vector.broadcast %1122 : vector<8x1xf32> to vector<8x16xf32>
    %1131 = arith.subf %1114, %1130 : vector<8x16xf32>
    %cst_532 = arith.constant 9.99999974E-6 : f32
    %1132 = vector.broadcast %cst_532 : f32 to vector<8x1xf32>
    %1133 = arith.addf %1129, %1132 : vector<8x1xf32>
    %1134 = math.rsqrt %1133 : vector<8x1xf32>
    %1135 = vector.broadcast %1134 : vector<8x1xf32> to vector<8x16xf32>
    %1136 = arith.mulf %1131, %1135 : vector<8x16xf32>
    %1137 = vector.broadcast %1116 : vector<1x16xf32> to vector<8x16xf32>
    %1138 = arith.mulf %1136, %1137 : vector<8x16xf32>
    %1139 = vector.broadcast %1118 : vector<1x16xf32> to vector<8x16xf32>
    %1140 = arith.addf %1138, %1139 : vector<8x16xf32>
    %c2_533 = arith.constant 2 : index
    %c0_534 = arith.constant 0 : index
    %c0_535 = arith.constant 0 : index
    %1141 = vector.load %arg11[%c2_533, %c0_534, %c0_535] : memref<3x1x16xf32, #tpu.memory_space<vmem>>, vector<1x1x16xf32>
    %1142 = vector.shape_cast %1141 : vector<1x1x16xf32> to vector<1x16xf32>
    %c2_536 = arith.constant 2 : index
    %c0_537 = arith.constant 0 : index
    %c0_538 = arith.constant 0 : index
    %1143 = vector.load %arg12[%c2_536, %c0_537, %c0_538] : memref<3x1x16xf32, #tpu.memory_space<vmem>>, vector<1x1x16xf32>
    %1144 = vector.shape_cast %1143 : vector<1x1x16xf32> to vector<1x16xf32>
    %cst_539 = arith.constant dense<0.000000e+00> : vector<16xf32>
    %1145 = vector.multi_reduction <add>, %450, %cst_539 [1] : vector<16x16xf32> to vector<16xf32>
    %1146 = vector.shape_cast %1145 : vector<16xf32> to vector<16x1xf32>
    %cst_540 = arith.constant 1.600000e+01 : f32
    %1147 = vector.broadcast %cst_540 : f32 to vector<16x1xf32>
    %1148 = arith.divf %1146, %1147 : vector<16x1xf32>
    %1149 = vector.broadcast %1148 : vector<16x1xf32> to vector<16x16xf32>
    %1150 = arith.subf %450, %1149 : vector<16x16xf32>
    %1151 = arith.mulf %1150, %1150 : vector<16x16xf32>
    %cst_541 = arith.constant dense<0.000000e+00> : vector<16xf32>
    %1152 = vector.multi_reduction <add>, %1151, %cst_541 [1] : vector<16x16xf32> to vector<16xf32>
    %1153 = vector.shape_cast %1152 : vector<16xf32> to vector<16x1xf32>
    %cst_542 = arith.constant 1.600000e+01 : f32
    %1154 = vector.broadcast %cst_542 : f32 to vector<16x1xf32>
    %1155 = arith.divf %1153, %1154 : vector<16x1xf32>
    %1156 = vector.broadcast %1148 : vector<16x1xf32> to vector<16x16xf32>
    %1157 = arith.subf %450, %1156 : vector<16x16xf32>
    %cst_543 = arith.constant 9.99999974E-6 : f32
    %1158 = vector.broadcast %cst_543 : f32 to vector<16x1xf32>
    %1159 = arith.addf %1155, %1158 : vector<16x1xf32>
    %1160 = math.rsqrt %1159 : vector<16x1xf32>
    %1161 = vector.broadcast %1160 : vector<16x1xf32> to vector<16x16xf32>
    %1162 = arith.mulf %1157, %1161 : vector<16x16xf32>
    %1163 = vector.broadcast %1142 : vector<1x16xf32> to vector<16x16xf32>
    %1164 = arith.mulf %1162, %1163 : vector<16x16xf32>
    %1165 = vector.broadcast %1144 : vector<1x16xf32> to vector<16x16xf32>
    %1166 = arith.addf %1164, %1165 : vector<16x16xf32>
    %c2_544 = arith.constant 2 : index
    %c0_545 = arith.constant 0 : index
    %c0_546 = arith.constant 0 : index
    %1167 = vector.load %arg24[%c2_544, %c0_545, %c0_546] : memref<3x16x16xf32, #tpu.memory_space<vmem>>, vector<1x16x16xf32>
    %1168 = vector.shape_cast %1167 : vector<1x16x16xf32> to vector<16x16xf32>
    %cst_547 = arith.constant dense<0.000000e+00> : vector<8x16xf32>
    %1169 = tpu.matmul %1140, %1168, %cst_547 {dimension_numbers = #tpu.dot_dimension_numbers<[1], [0], [0], [1], [0, 0, 1, 1], [], []>} : vector<8x16xf32>, vector<16x16xf32>, vector<8x16xf32> -> vector<8x16xf32>
    %c2_548 = arith.constant 2 : index
    %c0_549 = arith.constant 0 : index
    %c0_550 = arith.constant 0 : index
    %1170 = vector.load %arg25[%c2_548, %c0_549, %c0_550] : memref<3x16x32xf32, #tpu.memory_space<vmem>>, vector<1x16x32xf32>
    %1171 = vector.shape_cast %1170 : vector<1x16x32xf32> to vector<16x32xf32>
    %cst_551 = arith.constant dense<0.000000e+00> : vector<16x32xf32>
    %1172 = tpu.matmul %1166, %1171, %cst_551 {dimension_numbers = #tpu.dot_dimension_numbers<[1], [0], [0], [1], [0, 0, 1, 1], [], []>} : vector<16x16xf32>, vector<16x32xf32>, vector<16x32xf32> -> vector<16x32xf32>
    %1173 = vector.extract_strided_slice %1172 {offsets = [0, 0], sizes = [16, 16], strides = [1, 1]} : vector<16x32xf32> to vector<16x16xf32>
    %1174 = vector.extract_strided_slice %1172 {offsets = [0, 16], sizes = [16, 16], strides = [1, 1]} : vector<16x32xf32> to vector<16x16xf32>
    %1175 = tpu.iota {dimensions = array<i32: 1>} : vector<8x16xi32>
    %c0_i32_552 = arith.constant 0 : i32
    %1176 = vector.broadcast %c0_i32_552 : i32 to vector<8x16xi32>
    %1177 = arith.cmpi sge, %1175, %1176 : vector<8x16xi32>
    %c4_i32_553 = arith.constant 4 : i32
    %1178 = vector.broadcast %c4_i32_553 : i32 to vector<8x16xi32>
    %1179 = arith.cmpi slt, %1175, %1178 : vector<8x16xi32>
    %1180 = arith.andi %1177, %1179 : vector<8x16xi1>
    %c4_i32_554 = arith.constant 4 : i32
    %1181 = vector.broadcast %c4_i32_554 : i32 to vector<8x16xi32>
    %1182 = arith.cmpi sge, %1175, %1181 : vector<8x16xi32>
    %c8_i32_555 = arith.constant 8 : i32
    %1183 = vector.broadcast %c8_i32_555 : i32 to vector<8x16xi32>
    %1184 = arith.cmpi slt, %1175, %1183 : vector<8x16xi32>
    %1185 = arith.andi %1182, %1184 : vector<8x16xi1>
    %c8_i32_556 = arith.constant 8 : i32
    %1186 = vector.broadcast %c8_i32_556 : i32 to vector<8x16xi32>
    %1187 = arith.cmpi sge, %1175, %1186 : vector<8x16xi32>
    %c12_i32_557 = arith.constant 12 : i32
    %1188 = vector.broadcast %c12_i32_557 : i32 to vector<8x16xi32>
    %1189 = arith.cmpi slt, %1175, %1188 : vector<8x16xi32>
    %1190 = arith.andi %1187, %1189 : vector<8x16xi1>
    %c12_i32_558 = arith.constant 12 : i32
    %1191 = vector.broadcast %c12_i32_558 : i32 to vector<8x16xi32>
    %1192 = arith.cmpi sge, %1175, %1191 : vector<8x16xi32>
    %c16_i32_559 = arith.constant 16 : i32
    %1193 = vector.broadcast %c16_i32_559 : i32 to vector<8x16xi32>
    %1194 = arith.cmpi slt, %1175, %1193 : vector<8x16xi32>
    %1195 = arith.andi %1192, %1194 : vector<8x16xi1>
    %cst_560 = arith.constant 0.333333343 : f32
    %1196 = vector.broadcast %cst_560 : f32 to vector<8x16xf32>
    %1197 = arith.mulf %1169, %1196 : vector<8x16xf32>
    %cst_561 = arith.constant 0.000000e+00 : f32
    %1198 = vector.broadcast %cst_561 : f32 to vector<8x16xf32>
    %1199 = arith.select %1180, %1197, %1198 : vector<8x16xi1>, vector<8x16xf32>
    %cst_562 = arith.constant 0.000000e+00 : f32
    %1200 = vector.broadcast %cst_562 : f32 to vector<8x16xf32>
    %1201 = arith.select %1185, %1197, %1200 : vector<8x16xi1>, vector<8x16xf32>
    %cst_563 = arith.constant 0.000000e+00 : f32
    %1202 = vector.broadcast %cst_563 : f32 to vector<8x16xf32>
    %1203 = arith.select %1190, %1197, %1202 : vector<8x16xi1>, vector<8x16xf32>
    %cst_564 = arith.constant 0.000000e+00 : f32
    %1204 = vector.broadcast %cst_564 : f32 to vector<8x16xf32>
    %1205 = arith.select %1195, %1197, %1204 : vector<8x16xi1>, vector<8x16xf32>
    %1206 = tpu.concatenate %1199, %1201, %1203, %1205 in 0 : vector<8x16xf32>, vector<8x16xf32>, vector<8x16xf32>, vector<8x16xf32> -> vector<32x16xf32>
    %cst_565 = arith.constant dense<0.000000e+00> : vector<32x16xf32>
    %1207 = tpu.matmul %1206, %1173, %cst_565 {dimension_numbers = #tpu.dot_dimension_numbers<[1], [1], [0], [0], [0, 0, 1, 0], [], []>} : vector<32x16xf32>, vector<16x16xf32>, vector<32x16xf32> -> vector<32x16xf32>
    %cst_566 = arith.constant dense<0xFF800000> : vector<32xf32>
    %1208 = vector.multi_reduction <maximumf>, %1207, %cst_566 [1] : vector<32x16xf32> to vector<32xf32>
    %1209 = vector.shape_cast %1208 : vector<32xf32> to vector<32x1xf32>
    %1210 = vector.broadcast %1209 : vector<32x1xf32> to vector<32x16xf32>
    %1211 = arith.subf %1207, %1210 : vector<32x16xf32>
    %1212 = math.exp %1211 : vector<32x16xf32>
    %cst_567 = arith.constant dense<0.000000e+00> : vector<32xf32>
    %1213 = vector.multi_reduction <add>, %1212, %cst_567 [1] : vector<32x16xf32> to vector<32xf32>
    %1214 = vector.shape_cast %1213 : vector<32xf32> to vector<32x1xf32>
    %1215 = vector.broadcast %1214 : vector<32x1xf32> to vector<32x16xf32>
    %1216 = arith.divf %1212, %1215 : vector<32x16xf32>
    %cst_568 = arith.constant dense<0.000000e+00> : vector<32x16xf32>
    %1217 = tpu.matmul %1216, %1174, %cst_568 {dimension_numbers = #tpu.dot_dimension_numbers<[1], [0], [0], [1], [0, 0, 1, 1], [], []>} : vector<32x16xf32>, vector<16x16xf32>, vector<32x16xf32> -> vector<32x16xf32>
    %1218 = vector.extract_strided_slice %1217 {offsets = [0, 0], sizes = [8, 16], strides = [1, 1]} : vector<32x16xf32> to vector<8x16xf32>
    %cst_569 = arith.constant 0.000000e+00 : f32
    %1219 = vector.broadcast %cst_569 : f32 to vector<8x16xf32>
    %1220 = arith.select %1180, %1218, %1219 : vector<8x16xi1>, vector<8x16xf32>
    %1221 = vector.extract_strided_slice %1217 {offsets = [8, 0], sizes = [8, 16], strides = [1, 1]} : vector<32x16xf32> to vector<8x16xf32>
    %cst_570 = arith.constant 0.000000e+00 : f32
    %1222 = vector.broadcast %cst_570 : f32 to vector<8x16xf32>
    %1223 = arith.select %1185, %1221, %1222 : vector<8x16xi1>, vector<8x16xf32>
    %1224 = arith.addf %1220, %1223 : vector<8x16xf32>
    %1225 = vector.extract_strided_slice %1217 {offsets = [16, 0], sizes = [8, 16], strides = [1, 1]} : vector<32x16xf32> to vector<8x16xf32>
    %cst_571 = arith.constant 0.000000e+00 : f32
    %1226 = vector.broadcast %cst_571 : f32 to vector<8x16xf32>
    %1227 = arith.select %1190, %1225, %1226 : vector<8x16xi1>, vector<8x16xf32>
    %1228 = arith.addf %1224, %1227 : vector<8x16xf32>
    %1229 = vector.extract_strided_slice %1217 {offsets = [24, 0], sizes = [8, 16], strides = [1, 1]} : vector<32x16xf32> to vector<8x16xf32>
    %cst_572 = arith.constant 0.000000e+00 : f32
    %1230 = vector.broadcast %cst_572 : f32 to vector<8x16xf32>
    %1231 = arith.select %1195, %1229, %1230 : vector<8x16xi1>, vector<8x16xf32>
    %1232 = arith.addf %1228, %1231 : vector<8x16xf32>
    %c2_573 = arith.constant 2 : index
    %c0_574 = arith.constant 0 : index
    %c0_575 = arith.constant 0 : index
    %1233 = vector.load %arg26[%c2_573, %c0_574, %c0_575] : memref<3x16x16xf32, #tpu.memory_space<vmem>>, vector<1x16x16xf32>
    %1234 = vector.shape_cast %1233 : vector<1x16x16xf32> to vector<16x16xf32>
    %cst_576 = arith.constant dense<0.000000e+00> : vector<8x16xf32>
    %1235 = tpu.matmul %1232, %1234, %cst_576 {dimension_numbers = #tpu.dot_dimension_numbers<[1], [0], [0], [1], [0, 0, 1, 1], [], []>} : vector<8x16xf32>, vector<16x16xf32>, vector<8x16xf32> -> vector<8x16xf32>
    %1236 = arith.addf %1114, %1235 : vector<8x16xf32>
    %c2_577 = arith.constant 2 : index
    %c0_578 = arith.constant 0 : index
    %c0_579 = arith.constant 0 : index
    %1237 = vector.load %arg27[%c2_577, %c0_578, %c0_579] : memref<3x1x16xf32, #tpu.memory_space<vmem>>, vector<1x1x16xf32>
    %1238 = vector.shape_cast %1237 : vector<1x1x16xf32> to vector<1x16xf32>
    %1239 = vector.broadcast %1238 : vector<1x16xf32> to vector<8x16xf32>
    %1240 = arith.addf %1236, %1239 : vector<8x16xf32>
    %c2_580 = arith.constant 2 : index
    %c0_581 = arith.constant 0 : index
    %c0_582 = arith.constant 0 : index
    %1241 = vector.load %arg28[%c2_580, %c0_581, %c0_582] : memref<3x1x16xf32, #tpu.memory_space<vmem>>, vector<1x1x16xf32>
    %1242 = vector.shape_cast %1241 : vector<1x1x16xf32> to vector<1x16xf32>
    %c2_583 = arith.constant 2 : index
    %c0_584 = arith.constant 0 : index
    %c0_585 = arith.constant 0 : index
    %1243 = vector.load %arg29[%c2_583, %c0_584, %c0_585] : memref<3x1x16xf32, #tpu.memory_space<vmem>>, vector<1x1x16xf32>
    %1244 = vector.shape_cast %1243 : vector<1x1x16xf32> to vector<1x16xf32>
    %cst_586 = arith.constant dense<0.000000e+00> : vector<8xf32>
    %1245 = vector.multi_reduction <add>, %1240, %cst_586 [1] : vector<8x16xf32> to vector<8xf32>
    %1246 = vector.shape_cast %1245 : vector<8xf32> to vector<8x1xf32>
    %cst_587 = arith.constant 1.600000e+01 : f32
    %1247 = vector.broadcast %cst_587 : f32 to vector<8x1xf32>
    %1248 = arith.divf %1246, %1247 : vector<8x1xf32>
    %1249 = vector.broadcast %1248 : vector<8x1xf32> to vector<8x16xf32>
    %1250 = arith.subf %1240, %1249 : vector<8x16xf32>
    %1251 = arith.mulf %1250, %1250 : vector<8x16xf32>
    %cst_588 = arith.constant dense<0.000000e+00> : vector<8xf32>
    %1252 = vector.multi_reduction <add>, %1251, %cst_588 [1] : vector<8x16xf32> to vector<8xf32>
    %1253 = vector.shape_cast %1252 : vector<8xf32> to vector<8x1xf32>
    %cst_589 = arith.constant 1.600000e+01 : f32
    %1254 = vector.broadcast %cst_589 : f32 to vector<8x1xf32>
    %1255 = arith.divf %1253, %1254 : vector<8x1xf32>
    %1256 = vector.broadcast %1248 : vector<8x1xf32> to vector<8x16xf32>
    %1257 = arith.subf %1240, %1256 : vector<8x16xf32>
    %cst_590 = arith.constant 9.99999974E-6 : f32
    %1258 = vector.broadcast %cst_590 : f32 to vector<8x1xf32>
    %1259 = arith.addf %1255, %1258 : vector<8x1xf32>
    %1260 = math.rsqrt %1259 : vector<8x1xf32>
    %1261 = vector.broadcast %1260 : vector<8x1xf32> to vector<8x16xf32>
    %1262 = arith.mulf %1257, %1261 : vector<8x16xf32>
    %1263 = vector.broadcast %1242 : vector<1x16xf32> to vector<8x16xf32>
    %1264 = arith.mulf %1262, %1263 : vector<8x16xf32>
    %1265 = vector.broadcast %1244 : vector<1x16xf32> to vector<8x16xf32>
    %1266 = arith.addf %1264, %1265 : vector<8x16xf32>
    %c2_591 = arith.constant 2 : index
    %c0_592 = arith.constant 0 : index
    %c0_593 = arith.constant 0 : index
    %1267 = vector.load %arg30[%c2_591, %c0_592, %c0_593] : memref<3x16x32xf32, #tpu.memory_space<vmem>>, vector<1x16x32xf32>
    %1268 = vector.shape_cast %1267 : vector<1x16x32xf32> to vector<16x32xf32>
    %cst_594 = arith.constant dense<0.000000e+00> : vector<8x32xf32>
    %1269 = tpu.matmul %1266, %1268, %cst_594 {dimension_numbers = #tpu.dot_dimension_numbers<[1], [0], [0], [1], [0, 0, 1, 1], [], []>} : vector<8x16xf32>, vector<16x32xf32>, vector<8x32xf32> -> vector<8x32xf32>
    %c2_595 = arith.constant 2 : index
    %c0_596 = arith.constant 0 : index
    %c0_597 = arith.constant 0 : index
    %1270 = vector.load %arg31[%c2_595, %c0_596, %c0_597] : memref<3x1x32xf32, #tpu.memory_space<vmem>>, vector<1x1x32xf32>
    %1271 = vector.shape_cast %1270 : vector<1x1x32xf32> to vector<1x32xf32>
    %1272 = vector.broadcast %1271 : vector<1x32xf32> to vector<8x32xf32>
    %1273 = arith.addf %1269, %1272 : vector<8x32xf32>
    %cst_598 = arith.constant 5.000000e-01 : f32
    %1274 = vector.broadcast %cst_598 : f32 to vector<8x32xf32>
    %1275 = arith.mulf %1274, %1273 : vector<8x32xf32>
    %cst_599 = arith.constant 0.707106769 : f32
    %1276 = vector.broadcast %cst_599 : f32 to vector<8x32xf32>
    %1277 = arith.mulf %1273, %1276 : vector<8x32xf32>
    %1278 = math.erf %1277 : vector<8x32xf32>
    %cst_600 = arith.constant 1.000000e+00 : f32
    %1279 = vector.broadcast %cst_600 : f32 to vector<8x32xf32>
    %1280 = arith.addf %1279, %1278 : vector<8x32xf32>
    %1281 = arith.mulf %1275, %1280 : vector<8x32xf32>
    %c2_601 = arith.constant 2 : index
    %c0_602 = arith.constant 0 : index
    %c0_603 = arith.constant 0 : index
    %1282 = vector.load %arg32[%c2_601, %c0_602, %c0_603] : memref<3x32x16xf32, #tpu.memory_space<vmem>>, vector<1x32x16xf32>
    %1283 = vector.shape_cast %1282 : vector<1x32x16xf32> to vector<32x16xf32>
    %cst_604 = arith.constant dense<0.000000e+00> : vector<8x16xf32>
    %1284 = tpu.matmul %1281, %1283, %cst_604 {dimension_numbers = #tpu.dot_dimension_numbers<[1], [0], [0], [1], [0, 0, 1, 1], [], []>} : vector<8x32xf32>, vector<32x16xf32>, vector<8x16xf32> -> vector<8x16xf32>
    %1285 = arith.addf %1240, %1284 : vector<8x16xf32>
    %c2_605 = arith.constant 2 : index
    %c0_606 = arith.constant 0 : index
    %c0_607 = arith.constant 0 : index
    %1286 = vector.load %arg33[%c2_605, %c0_606, %c0_607] : memref<3x1x16xf32, #tpu.memory_space<vmem>>, vector<1x1x16xf32>
    %1287 = vector.shape_cast %1286 : vector<1x1x16xf32> to vector<1x16xf32>
    %1288 = vector.broadcast %1287 : vector<1x16xf32> to vector<8x16xf32>
    %1289 = arith.addf %1285, %1288 : vector<8x16xf32>
    %c0_608 = arith.constant 0 : index
    %c0_609 = arith.constant 0 : index
    %1290 = vector.load %arg34[%c0_608, %c0_609] : memref<16x128xf32, #tpu.memory_space<vmem>>, vector<16x128xf32>
    %cst_610 = arith.constant dense<0.000000e+00> : vector<8x128xf32>
    %1291 = tpu.matmul %1289, %1290, %cst_610 {dimension_numbers = #tpu.dot_dimension_numbers<[1], [0], [0], [1], [0, 0, 1, 1], [], []>} : vector<8x16xf32>, vector<16x128xf32>, vector<8x128xf32> -> vector<8x128xf32>
    %c0_611 = arith.constant 0 : index
    %c0_612 = arith.constant 0 : index
    %1292 = vector.load %arg35[%c0_611, %c0_612] : memref<1x128xf32, #tpu.memory_space<vmem>>, vector<1x128xf32>
    %1293 = vector.broadcast %1292 : vector<1x128xf32> to vector<8x128xf32>
    %1294 = arith.addf %1291, %1293 : vector<8x128xf32>
    %c0_613 = arith.constant 0 : index
    %c0_614 = arith.constant 0 : index
    %c0_615 = arith.constant 0 : index
    %1295 = vector.load %arg36[%c0_613, %c0_614, %c0_615] : memref<1x8x128xf32, #tpu.memory_space<vmem>>, vector<1x8x128xf32>
    %1296 = vector.shape_cast %1295 : vector<1x8x128xf32> to vector<8x128xf32>
    %1297 = vector.shape_cast %1294 : vector<8x128xf32> to vector<1x8x128xf32>
    tpu.vector_store %arg36[%c0_613, %c0_614, %c0_615], %1297 {strides = array<i32>} : memref<1x8x128xf32, #tpu.memory_space<vmem>>, vector<1x8x128xf32>,
    return
  }
  func.func @transform_0(%arg0: i32) -> (i32, i32, i32) {
    %c0_i32 = arith.constant 0 : i32
    %c0_i32_0 = arith.constant 0 : i32
    %c0_i32_1 = arith.constant 0 : i32
    return %arg0, %c0_i32, %c0_i32_0 : i32, i32, i32
  }
  func.func @transform_1(%arg0: i32) -> (i32, i32, i32) {
    %c0_i32 = arith.constant 0 : i32
    %c0_i32_0 = arith.constant 0 : i32
    %c0_i32_1 = arith.constant 0 : i32
    return %arg0, %c0_i32, %c0_i32_0 : i32, i32, i32
  }
  func.func @transform_2(%arg0: i32) -> (i32, i32) {
    %c0_i32 = arith.constant 0 : i32
    %c0_i32_0 = arith.constant 0 : i32
    %c0_i32_1 = arith.constant 0 : i32
    return %c0_i32, %c0_i32_0 : i32, i32
  }
  func.func @transform_3(%arg0: i32) -> (i32, i32) {
    %c0_i32 = arith.constant 0 : i32
    %c0_i32_0 = arith.constant 0 : i32
    %c0_i32_1 = arith.constant 0 : i32
    return %c0_i32, %c0_i32_0 : i32, i32
  }
  func.func @transform_4(%arg0: i32) -> (i32, i32, i32) {
    %c0_i32 = arith.constant 0 : i32
    %c0_i32_0 = arith.constant 0 : i32
    %c0_i32_1 = arith.constant 0 : i32
    %c0_i32_2 = arith.constant 0 : i32
    return %c0_i32, %c0_i32_0, %c0_i32_1 : i32, i32, i32
  }
  func.func @transform_5(%arg0: i32) -> (i32, i32, i32) {
    %c0_i32 = arith.constant 0 : i32
    %c0_i32_0 = arith.constant 0 : i32
    %c0_i32_1 = arith.constant 0 : i32
    %c0_i32_2 = arith.constant 0 : i32
    return %c0_i32, %c0_i32_0, %c0_i32_1 : i32, i32, i32
  }
  func.func @transform_6(%arg0: i32) -> (i32, i32, i32) {
    %c0_i32 = arith.constant 0 : i32
    %c0_i32_0 = arith.constant 0 : i32
    %c0_i32_1 = arith.constant 0 : i32
    %c0_i32_2 = arith.constant 0 : i32
    return %c0_i32, %c0_i32_0, %c0_i32_1 : i32, i32, i32
  }
  func.func @transform_7(%arg0: i32) -> (i32, i32, i32) {
    %c0_i32 = arith.constant 0 : i32
    %c0_i32_0 = arith.constant 0 : i32
    %c0_i32_1 = arith.constant 0 : i32
    %c0_i32_2 = arith.constant 0 : i32
    return %c0_i32, %c0_i32_0, %c0_i32_1 : i32, i32, i32
  }
  func.func @transform_8(%arg0: i32) -> (i32, i32, i32) {
    %c0_i32 = arith.constant 0 : i32
    %c0_i32_0 = arith.constant 0 : i32
    %c0_i32_1 = arith.constant 0 : i32
    %c0_i32_2 = arith.constant 0 : i32
    return %c0_i32, %c0_i32_0, %c0_i32_1 : i32, i32, i32
  }
  func.func @transform_9(%arg0: i32) -> (i32, i32, i32) {
    %c0_i32 = arith.constant 0 : i32
    %c0_i32_0 = arith.constant 0 : i32
    %c0_i32_1 = arith.constant 0 : i32
    %c0_i32_2 = arith.constant 0 : i32
    return %c0_i32, %c0_i32_0, %c0_i32_1 : i32, i32, i32
  }
  func.func @transform_10(%arg0: i32) -> (i32, i32, i32) {
    %c0_i32 = arith.constant 0 : i32
    %c0_i32_0 = arith.constant 0 : i32
    %c0_i32_1 = arith.constant 0 : i32
    %c0_i32_2 = arith.constant 0 : i32
    return %c0_i32, %c0_i32_0, %c0_i32_1 : i32, i32, i32
  }
  func.func @transform_11(%arg0: i32) -> (i32, i32, i32) {
    %c0_i32 = arith.constant 0 : i32
    %c0_i32_0 = arith.constant 0 : i32
    %c0_i32_1 = arith.constant 0 : i32
    %c0_i32_2 = arith.constant 0 : i32
    return %c0_i32, %c0_i32_0, %c0_i32_1 : i32, i32, i32
  }
  func.func @transform_12(%arg0: i32) -> (i32, i32, i32) {
    %c0_i32 = arith.constant 0 : i32
    %c0_i32_0 = arith.constant 0 : i32
    %c0_i32_1 = arith.constant 0 : i32
    %c0_i32_2 = arith.constant 0 : i32
    return %c0_i32, %c0_i32_0, %c0_i32_1 : i32, i32, i32
  }
  func.func @transform_13(%arg0: i32) -> (i32, i32, i32) {
    %c0_i32 = arith.constant 0 : i32
    %c0_i32_0 = arith.constant 0 : i32
    %c0_i32_1 = arith.constant 0 : i32
    %c0_i32_2 = arith.constant 0 : i32
    return %c0_i32, %c0_i32_0, %c0_i32_1 : i32, i32, i32
  }
  func.func @transform_14(%arg0: i32) -> (i32, i32, i32) {
    %c0_i32 = arith.constant 0 : i32
    %c0_i32_0 = arith.constant 0 : i32
    %c0_i32_1 = arith.constant 0 : i32
    %c0_i32_2 = arith.constant 0 : i32
    return %c0_i32, %c0_i32_0, %c0_i32_1 : i32, i32, i32
  }
  func.func @transform_15(%arg0: i32) -> (i32, i32, i32) {
    %c0_i32 = arith.constant 0 : i32
    %c0_i32_0 = arith.constant 0 : i32
    %c0_i32_1 = arith.constant 0 : i32
    %c0_i32_2 = arith.constant 0 : i32
    return %c0_i32, %c0_i32_0, %c0_i32_1 : i32, i32, i32
  }
  func.func @transform_16(%arg0: i32) -> (i32, i32, i32) {
    %c0_i32 = arith.constant 0 : i32
    %c0_i32_0 = arith.constant 0 : i32
    %c0_i32_1 = arith.constant 0 : i32
    %c0_i32_2 = arith.constant 0 : i32
    return %c0_i32, %c0_i32_0, %c0_i32_1 : i32, i32, i32
  }
  func.func @transform_17(%arg0: i32) -> (i32, i32, i32) {
    %c0_i32 = arith.constant 0 : i32
    %c0_i32_0 = arith.constant 0 : i32
    %c0_i32_1 = arith.constant 0 : i32
    %c0_i32_2 = arith.constant 0 : i32
    return %c0_i32, %c0_i32_0, %c0_i32_1 : i32, i32, i32
  }
  func.func @transform_18(%arg0: i32) -> (i32, i32, i32) {
    %c0_i32 = arith.constant 0 : i32
    %c0_i32_0 = arith.constant 0 : i32
    %c0_i32_1 = arith.constant 0 : i32
    %c0_i32_2 = arith.constant 0 : i32
    return %c0_i32, %c0_i32_0, %c0_i32_1 : i32, i32, i32
  }
  func.func @transform_19(%arg0: i32) -> (i32, i32, i32) {
    %c0_i32 = arith.constant 0 : i32
    %c0_i32_0 = arith.constant 0 : i32
    %c0_i32_1 = arith.constant 0 : i32
    %c0_i32_2 = arith.constant 0 : i32
    return %c0_i32, %c0_i32_0, %c0_i32_1 : i32, i32, i32
  }
  func.func @transform_20(%arg0: i32) -> (i32, i32, i32) {
    %c0_i32 = arith.constant 0 : i32
    %c0_i32_0 = arith.constant 0 : i32
    %c0_i32_1 = arith.constant 0 : i32
    %c0_i32_2 = arith.constant 0 : i32
    return %c0_i32, %c0_i32_0, %c0_i32_1 : i32, i32, i32
  }
  func.func @transform_21(%arg0: i32) -> (i32, i32, i32) {
    %c0_i32 = arith.constant 0 : i32
    %c0_i32_0 = arith.constant 0 : i32
    %c0_i32_1 = arith.constant 0 : i32
    %c0_i32_2 = arith.constant 0 : i32
    return %c0_i32, %c0_i32_0, %c0_i32_1 : i32, i32, i32
  }
  func.func @transform_22(%arg0: i32) -> (i32, i32, i32) {
    %c0_i32 = arith.constant 0 : i32
    %c0_i32_0 = arith.constant 0 : i32
    %c0_i32_1 = arith.constant 0 : i32
    %c0_i32_2 = arith.constant 0 : i32
    return %c0_i32, %c0_i32_0, %c0_i32_1 : i32, i32, i32
  }
  func.func @transform_23(%arg0: i32) -> (i32, i32, i32) {
    %c0_i32 = arith.constant 0 : i32
    %c0_i32_0 = arith.constant 0 : i32
    %c0_i32_1 = arith.constant 0 : i32
    %c0_i32_2 = arith.constant 0 : i32
    return %c0_i32, %c0_i32_0, %c0_i32_1 : i32, i32, i32
  }
  func.func @transform_24(%arg0: i32) -> (i32, i32, i32) {
    %c0_i32 = arith.constant 0 : i32
    %c0_i32_0 = arith.constant 0 : i32
    %c0_i32_1 = arith.constant 0 : i32
    %c0_i32_2 = arith.constant 0 : i32
    return %c0_i32, %c0_i32_0, %c0_i32_1 : i32, i32, i32
  }
  func.func @transform_25(%arg0: i32) -> (i32, i32, i32) {
    %c0_i32 = arith.constant 0 : i32
    %c0_i32_0 = arith.constant 0 : i32
    %c0_i32_1 = arith.constant 0 : i32
    %c0_i32_2 = arith.constant 0 : i32
    return %c0_i32, %c0_i32_0, %c0_i32_1 : i32, i32, i32
  }
  func.func @transform_26(%arg0: i32) -> (i32, i32, i32) {
    %c0_i32 = arith.constant 0 : i32
    %c0_i32_0 = arith.constant 0 : i32
    %c0_i32_1 = arith.constant 0 : i32
    %c0_i32_2 = arith.constant 0 : i32
    return %c0_i32, %c0_i32_0, %c0_i32_1 : i32, i32, i32
  }
  func.func @transform_27(%arg0: i32) -> (i32, i32, i32) {
    %c0_i32 = arith.constant 0 : i32
    %c0_i32_0 = arith.constant 0 : i32
    %c0_i32_1 = arith.constant 0 : i32
    %c0_i32_2 = arith.constant 0 : i32
    return %c0_i32, %c0_i32_0, %c0_i32_1 : i32, i32, i32
  }
  func.func @transform_28(%arg0: i32) -> (i32, i32, i32) {
    %c0_i32 = arith.constant 0 : i32
    %c0_i32_0 = arith.constant 0 : i32
    %c0_i32_1 = arith.constant 0 : i32
    %c0_i32_2 = arith.constant 0 : i32
    return %c0_i32, %c0_i32_0, %c0_i32_1 : i32, i32, i32
  }
  func.func @transform_29(%arg0: i32) -> (i32, i32, i32) {
    %c0_i32 = arith.constant 0 : i32
    %c0_i32_0 = arith.constant 0 : i32
    %c0_i32_1 = arith.constant 0 : i32
    %c0_i32_2 = arith.constant 0 : i32
    return %c0_i32, %c0_i32_0, %c0_i32_1 : i32, i32, i32
  }
  func.func @transform_30(%arg0: i32) -> (i32, i32, i32) {
    %c0_i32 = arith.constant 0 : i32
    %c0_i32_0 = arith.constant 0 : i32
    %c0_i32_1 = arith.constant 0 : i32
    %c0_i32_2 = arith.constant 0 : i32
    return %c0_i32, %c0_i32_0, %c0_i32_1 : i32, i32, i32
  }
  func.func @transform_31(%arg0: i32) -> (i32, i32, i32) {
    %c0_i32 = arith.constant 0 : i32
    %c0_i32_0 = arith.constant 0 : i32
    %c0_i32_1 = arith.constant 0 : i32
    %c0_i32_2 = arith.constant 0 : i32
    return %c0_i32, %c0_i32_0, %c0_i32_1 : i32, i32, i32
  }
  func.func @transform_32(%arg0: i32) -> (i32, i32, i32) {
    %c0_i32 = arith.constant 0 : i32
    %c0_i32_0 = arith.constant 0 : i32
    %c0_i32_1 = arith.constant 0 : i32
    %c0_i32_2 = arith.constant 0 : i32
    return %c0_i32, %c0_i32_0, %c0_i32_1 : i32, i32, i32
  }
  func.func @transform_33(%arg0: i32) -> (i32, i32) {
    %c0_i32 = arith.constant 0 : i32
    %c0_i32_0 = arith.constant 0 : i32
    %c0_i32_1 = arith.constant 0 : i32
    return %c0_i32, %c0_i32_0 : i32, i32
  }
  func.func @transform_34(%arg0: i32) -> (i32, i32) {
    %c0_i32 = arith.constant 0 : i32
    %c0_i32_0 = arith.constant 0 : i32
    %c0_i32_1 = arith.constant 0 : i32
    return %c0_i32, %c0_i32_0 : i32, i32
  }
  func.func @transform_35(%arg0: i32) -> (i32, i32, i32) {
    %c0_i32 = arith.constant 0 : i32
    %c0_i32_0 = arith.constant 0 : i32
    %c0_i32_1 = arith.constant 0 : i32
    return %arg0, %c0_i32, %c0_i32_0 : i32, i32, i32
  }
}

</mosaic_0001>

<llo_original>
// kernel: vit_forward.1
$region0: #{vit_forward.1}
  #allocation0 [shape = 'u32[]', space=smem, size = 0x4, offset = 0x4, fixed_abs, tag = 'smem constant byte address 0x4 - core index']
  #allocation1 [shape = 'u32[72,128]{1,0:T(1,128)}', space=vmem, size = 0x9000, scoped, tag = 'internal scratch']
  %s0 = inlined_call_operand.smem [shape: u32[36], index: -1, kind: input, shape index: {}]
  %s1 = sld [smem:[%s0]]
  %s2 = scalar_lea.smem %s0, 1
  %s3 = sld [smem:[%s2]]
  %s4 = scalar_lea.smem %s0, 2
  %s5 = sld [smem:[%s4]]
  %s6 = scalar_lea.smem %s0, 3
  %s7 = sld [smem:[%s6]]
  %s8 = scalar_lea.smem %s0, 4
  %s9 = sld [smem:[%s8]]
  %s10 = scalar_lea.smem %s0, 5
  %s11 = sld [smem:[%s10]]
  %s12 = scalar_lea.smem %s0, 6
  %s13 = sld [smem:[%s12]]
  %s14 = scalar_lea.smem %s0, 7
  %s15 = sld [smem:[%s14]]
  %s16 = scalar_lea.smem %s0, 8
  %s17 = sld [smem:[%s16]]
  %s18 = scalar_lea.smem %s0, 9
  %s19 = sld [smem:[%s18]]
  %s20 = scalar_lea.smem %s0, 10
  %s21 = sld [smem:[%s20]]
  %s22 = scalar_lea.smem %s0, 11
  %s23 = sld [smem:[%s22]]
  %s24 = scalar_lea.smem %s0, 12
  %s25 = sld [smem:[%s24]]
  %s26 = scalar_lea.smem %s0, 13
  %s27 = sld [smem:[%s26]]
  %s28 = scalar_lea.smem %s0, 14
  %s29 = sld [smem:[%s28]]
  %s30 = scalar_lea.smem %s0, 15
  %s31 = sld [smem:[%s30]]
  %s32 = scalar_lea.smem %s0, 16
  %s33 = sld [smem:[%s32]]
  %s34 = scalar_lea.smem %s0, 17
  %s35 = sld [smem:[%s34]]
  %s36 = scalar_lea.smem %s0, 18
  %s37 = sld [smem:[%s36]]
  %s38 = scalar_lea.smem %s0, 19
  %s39 = sld [smem:[%s38]]
  %s40 = scalar_lea.smem %s0, 20
  %s41 = sld [smem:[%s40]]
  %s42 = scalar_lea.smem %s0, 21
  %s43 = sld [smem:[%s42]]
  %s44 = scalar_lea.smem %s0, 22
  %s45 = sld [smem:[%s44]]
  %s46 = scalar_lea.smem %s0, 23
  %s47 = sld [smem:[%s46]]
  %s48 = scalar_lea.smem %s0, 24
  %s49 = sld [smem:[%s48]]
  %s50 = scalar_lea.smem %s0, 25
  %s51 = sld [smem:[%s50]]
  %s52 = scalar_lea.smem %s0, 26
  %s53 = sld [smem:[%s52]]
  %s54 = scalar_lea.smem %s0, 27
  %s55 = sld [smem:[%s54]]
  %s56 = scalar_lea.smem %s0, 28
  %s57 = sld [smem:[%s56]]
  %s58 = scalar_lea.smem %s0, 29
  %s59 = sld [smem:[%s58]]
  %s60 = scalar_lea.smem %s0, 30
  %s61 = sld [smem:[%s60]]
  %s62 = scalar_lea.smem %s0, 31
  %s63 = sld [smem:[%s62]]
  %s64 = scalar_lea.smem %s0, 32
  %s65 = sld [smem:[%s64]]
  %s66 = scalar_lea.smem %s0, 33
  %s67 = sld [smem:[%s66]]
  %s68 = scalar_lea.smem %s0, 34
  %s69 = sld [smem:[%s68]]
  %s70 = scalar_lea.smem %s0, 35
  %s71 = sld [smem:[%s70]]
  %s72 = sld [smem:[#allocation0]]
  $region225: #{vit_forward.1} parent=0
    _
  %s74 = ssub.s32 1, %s72
  %s75 = scalar_select 0, %s74, %s72
  $region1: #{vit_forward.1} parent=0
    #allocation2 [shape = 'u8[1536]{0}', space=vmem, size = 0x800, scoped, tag = 'input window, operand 11, single buffered']
    #allocation3 [shape = 's32[2]{0}', space=sflag, size = 0x8, scoped, tag = 'scoped memory for vit_forward.1']
    #allocation4 [shape = 's32[2]{0}', space=sflag, size = 0x8, scoped, tag = 'scoped memory for vit_forward.1']
    #allocation5 [shape = 'u8[1536]{0}', space=vmem, size = 0x800, scoped, tag = 'input window, operand 13, single buffered']
    #allocation6 [shape = 's32[1]{0}', space=sflag, size = 0x4, scoped, tag = 'scoped memory for vit_forward.1']
    #allocation7 [shape = 'u8[1536]{0}', space=vmem, size = 0x800, scoped, tag = 'input window, operand 15, single buffered']
    #allocation8 [shape = 'u8[1536]{0}', space=vmem, size = 0x800, scoped, tag = 'input window, operand 16, single buffered']
    #allocation9 [shape = 's32[1]{0}', space=sflag, size = 0x4, scoped, tag = 'scoped memory for vit_forward.1']
    #allocation10 [shape = 'u8[1536]{0}', space=vmem, size = 0x800, scoped, tag = 'input window, operand 17, single buffered']
    #allocation11 [shape = 'u8[1536]{0}', space=vmem, size = 0x800, scoped, tag = 'input window, operand 20, single buffered']
    #allocation12 [shape = 's32[1]{0}', space=sflag, size = 0x4, scoped, tag = 'scoped memory for vit_forward.1']
    #allocation13 [shape = 'u8[1536]{0}', space=vmem, size = 0x800, scoped, tag = 'input window, operand 21, single buffered']
    #allocation14 [shape = 'u8[1536]{0}', space=vmem, size = 0x800, scoped, tag = 'input window, operand 22, single buffered']
    #allocation15 [shape = 's32[1]{0}', space=sflag, size = 0x4, scoped, tag = 'scoped memory for vit_forward.1']
    #allocation16 [shape = 'u8[1536]{0}', space=vmem, size = 0x800, scoped, tag = 'input window, operand 26, single buffered']
    #allocation17 [shape = 'u8[1536]{0}', space=vmem, size = 0x800, scoped, tag = 'input window, operand 27, single buffered']
    #allocation18 [shape = 's32[1]{0}', space=sflag, size = 0x4, scoped, tag = 'scoped memory for vit_forward.1']
    #allocation19 [shape = 'u8[1536]{0}', space=vmem, size = 0x800, scoped, tag = 'input window, operand 28, single buffered']
    #allocation20 [shape = 'u8[1536]{0}', space=vmem, size = 0x800, scoped, tag = 'input window, operand 30, single buffered']
    #allocation21 [shape = 's32[1]{0}', space=sflag, size = 0x4, scoped, tag = 'scoped memory for vit_forward.1']
    #allocation22 [shape = 'u8[1536]{0}', space=vmem, size = 0x800, scoped, tag = 'input window, operand 32, single buffered']
    #allocation23 [shape = 'u8[8192]{0}', space=vmem, size = 0x2000, scoped, tag = 'output window, operand 0']
    %76 = vsyncpa [#allocation3], 0
    %77 = vsyncpa [#allocation6], 0
    %78 = vsyncpa [#allocation9], 0
    %79 = vsyncpa [#allocation12], 0
    %80 = vsyncpa [#allocation15], 0
    %81 = vsyncpa [#allocation18], 0
    %82 = vsyncpa [#allocation21], 0
    %83 = vsyncpa [#allocation4], 0
    %s84 = scalar_lea.sflag [#allocation4], 1
    %85 = vsyncpa %s84, 0
    loop: start=0, step=1, limit=4
    $region2: #{vit_forward.1} parent=1 // loop_pre_header
      _
    $region3: #{vit_forward.1} parent=1 // loop_header
      %s87 = sphi 0, %s91
      %p88 = scmp.ge.s32.totalorder %s87, 4
      %s97 = sphi 0, %s99
      %s100 = sphi 0, %s97
      %s101 = sphi 0, %s100
      %s117 = sphi 0, %s101
      %s123 = sphi 0, %s125
      %s126 = sphi 0, %s123
      %s127 = sphi 0, %s126
      %s143 = sphi 0, %s127
      %s147 = sphi 0, %s147
      %s149 = sphi 0, %s147
      %s150 = sphi 0, %s149
      %s164 = sphi 0, %s150
      %s168 = sphi 0, %s168
      %s170 = sphi 0, %s168
      %s171 = sphi 0, %s170
      %s185 = sphi 0, %s171
      %s189 = sphi 0, %s189
      %s191 = sphi 0, %s189
      %s192 = sphi 0, %s191
      %s206 = sphi 0, %s192
      %s210 = sphi 0, %s210
      %s212 = sphi 0, %s210
      %s213 = sphi 0, %s212
      %s227 = sphi 0, %s213
      %s231 = sphi 0, %s231
      %s233 = sphi 0, %s231
      %s234 = sphi 0, %s233
      %s248 = sphi 0, %s234
      %s252 = sphi 0, %s252
      %s254 = sphi 0, %s252
      %s255 = sphi 0, %s254
      %s269 = sphi 0, %s255
      %s273 = sphi 0, %s273
      %s275 = sphi 0, %s273
      %s276 = sphi 0, %s275
      %s290 = sphi 0, %s276
      %s294 = sphi 0, %s294
      %s296 = sphi 0, %s294
      %s297 = sphi 0, %s296
      %s311 = sphi 0, %s297
      %s315 = sphi 0, %s315
      %s317 = sphi 0, %s315
      %s318 = sphi 0, %s317
      %s332 = sphi 0, %s318
      %s336 = sphi 0, %s336
      %s338 = sphi 0, %s336
      %s339 = sphi 0, %s338
      %s353 = sphi 0, %s339
      %s357 = sphi 0, %s357
      %s359 = sphi 0, %s357
      %s360 = sphi 0, %s359
      %s374 = sphi 0, %s360
      %s378 = sphi 0, %s378
      %s380 = sphi 0, %s378
      %s381 = sphi 0, %s380
      %s395 = sphi 0, %s381
      %s399 = sphi 0, %s399
      %s401 = sphi 0, %s399
      %s402 = sphi 0, %s401
      %s416 = sphi 0, %s402
      %s420 = sphi 0, %s420
      %s422 = sphi 0, %s420
      %s423 = sphi 0, %s422
      %s437 = sphi 0, %s423
      %s441 = sphi 0, %s441
      %s443 = sphi 0, %s441
      %s444 = sphi 0, %s443
      %s458 = sphi 0, %s444
      %s462 = sphi 0, %s462
      %s464 = sphi 0, %s462
      %s465 = sphi 0, %s464
      %s479 = sphi 0, %s465
      %s483 = sphi 0, %s483
      %s485 = sphi 0, %s483
      %s486 = sphi 0, %s485
      %s500 = sphi 0, %s486
      %s504 = sphi 0, %s504
      %s506 = sphi 0, %s504
      %s507 = sphi 0, %s506
      %s521 = sphi 0, %s507
      %s525 = sphi 0, %s525
      %s527 = sphi 0, %s525
      %s528 = sphi 0, %s527
      %s542 = sphi 0, %s528
      %s546 = sphi 0, %s546
      %s548 = sphi 0, %s546
      %s549 = sphi 0, %s548
      %s563 = sphi 0, %s549
      %s567 = sphi 0, %s567
      %s569 = sphi 0, %s567
      %s570 = sphi 0, %s569
      %s584 = sphi 0, %s570
      %s588 = sphi 0, %s588
      %s590 = sphi 0, %s588
      %s591 = sphi 0, %s590
      %s605 = sphi 0, %s591
      %s609 = sphi 0, %s609
      %s611 = sphi 0, %s609
      %s612 = sphi 0, %s611
      %s626 = sphi 0, %s612
      %s630 = sphi 0, %s630
      %s632 = sphi 0, %s630
      %s633 = sphi 0, %s632
      %s647 = sphi 0, %s633
      %s651 = sphi 0, %s651
      %s653 = sphi 0, %s651
      %s654 = sphi 0, %s653
      %s668 = sphi 0, %s654
      %s672 = sphi 0, %s672
      %s674 = sphi 0, %s672
      %s675 = sphi 0, %s674
      %s689 = sphi 0, %s675
      %s693 = sphi 0, %s693
      %s695 = sphi 0, %s693
      %s696 = sphi 0, %s695
      %s710 = sphi 0, %s696
      %s714 = sphi 0, %s714
      %s716 = sphi 0, %s714
      %s717 = sphi 0, %s716
      %s731 = sphi 0, %s717
      %s735 = sphi 0, %s735
      %s737 = sphi 0, %s735
      %s738 = sphi 0, %s737
      %s752 = sphi 0, %s738
      %s756 = sphi 0, %s756
      %s758 = sphi 0, %s756
      %s759 = sphi 0, %s758
      %s773 = sphi 0, %s759
      %s777 = sphi 0, %s777
      %s779 = sphi 0, %s777
      %s780 = sphi 0, %s779
      %s794 = sphi 0, %s780
      %s798 = sphi 0, %s798
      %s800 = sphi 0, %s798
      %s801 = sphi 0, %s800
      %s815 = sphi 0, %s801
      %s819 = sphi 0, %s819
      %s821 = sphi 0, %s819
      %s822 = sphi 0, %s821
      %s836 = sphi 0, %s822
      %s842 = sphi 0, %s844
      %s845 = sphi 0, %s842
      %s846 = sphi 0, %s845
      %s862 = sphi 0, %s846
    $region4: #{vit_forward.1} parent=1 // loop_header_branch
      %90 = sbr.rel (%p88) target = $region8
    $region5: #{vit_forward.1} parent=1 // loop_body
      %s92 = ssub.s32 %s87, 1
      %s93 = ssub.s32 %s87, 2
      %s94 = sadd.s32 %s87, 1
      %s95 = ssub.s32 %s87, %s94
      %p96 = scmp.eq.s32.totalorder %s95, 0
      %s98 = sadd.s32 %s97, 1
      %s99 = scalar_select %p96, %s97, %s98
      %p102 = pneg %p96
      %p103 = scmp.eq.s32.totalorder %s87, 1
      %p104 = por %p102, %p103
      %p105 = scmp.ne.s32.totalorder %s97, %s100
      %p106 = scmp.eq.s32.totalorder %s87, 0
      %p107 = por %p105, %p106
      %p108 = scmp.ne.s32.totalorder %s97, %s100
      %p109 = scmp.eq.s32.totalorder %s92, 1
      %p110 = por %p108, %p109
      %p111 = scmp.ne.s32.totalorder %s100, %s101
      %p112 = scmp.eq.s32.totalorder %s92, 0
      %p113 = por %p111, %p112
      %p114 = scmp.ne.s32.totalorder %s100, %s101
      %p115 = scmp.eq.s32.totalorder %s93, 1
      %p116 = por %p114, %p115
      %p118 = scmp.ne.s32.totalorder %s101, %s117
      %p119 = scmp.eq.s32.totalorder %s93, 0
      %p120 = por %p118, %p119
      %s121 = ssub.s32 %s87, %s94
      %p122 = scmp.eq.s32.totalorder %s121, 0
      %s124 = sadd.s32 %s123, 1
      %s125 = scalar_select %p122, %s123, %s124
      %p128 = pneg %p122
      %p129 = scmp.eq.s32.totalorder %s87, 1
      %p130 = por %p128, %p129
      %p131 = scmp.ne.s32.totalorder %s123, %s126
      %p132 = scmp.eq.s32.totalorder %s87, 0
      %p133 = por %p131, %p132
      %p134 = scmp.ne.s32.totalorder %s123, %s126
      %p135 = scmp.eq.s32.totalorder %s92, 1
      %p136 = por %p134, %p135
      %p137 = scmp.ne.s32.totalorder %s126, %s127
      %p138 = scmp.eq.s32.totalorder %s92, 0
      %p139 = por %p137, %p138
      %p140 = scmp.ne.s32.totalorder %s126, %s127
      %p141 = scmp.eq.s32.totalorder %s93, 1
      %p142 = por %p140, %p141
      %p144 = scmp.ne.s32.totalorder %s127, %s143
      %p145 = scmp.eq.s32.totalorder %s93, 0
      %p146 = por %p144, %p145
      %s148 = sadd.s32 %s147, 1
      %p151 = scmp.eq.s32.totalorder %s87, 1
      %p152 = scmp.ne.s32.totalorder %s147, %s149
      %p153 = scmp.eq.s32.totalorder %s87, 0
      %p154 = por %p152, %p153
      %p155 = scmp.ne.s32.totalorder %s147, %s149
      %p156 = scmp.eq.s32.totalorder %s92, 1
      %p157 = por %p155, %p156
      %p158 = scmp.ne.s32.totalorder %s149, %s150
      %p159 = scmp.eq.s32.totalorder %s92, 0
      %p160 = por %p158, %p159
      %p161 = scmp.ne.s32.totalorder %s149, %s150
      %p162 = scmp.eq.s32.totalorder %s93, 1
      %p163 = por %p161, %p162
      %p165 = scmp.ne.s32.totalorder %s150, %s164
      %p166 = scmp.eq.s32.totalorder %s93, 0
      %p167 = por %p165, %p166
      %s169 = sadd.s32 %s168, 1
      %p172 = scmp.eq.s32.totalorder %s87, 1
      %p173 = scmp.ne.s32.totalorder %s168, %s170
      %p174 = scmp.eq.s32.totalorder %s87, 0
      %p175 = por %p173, %p174
      %p176 = scmp.ne.s32.totalorder %s168, %s170
      %p177 = scmp.eq.s32.totalorder %s92, 1
      %p178 = por %p176, %p177
      %p179 = scmp.ne.s32.totalorder %s170, %s171
      %p180 = scmp.eq.s32.totalorder %s92, 0
      %p181 = por %p179, %p180
      %p182 = scmp.ne.s32.totalorder %s170, %s171
      %p183 = scmp.eq.s32.totalorder %s93, 1
      %p184 = por %p182, %p183
      %p186 = scmp.ne.s32.totalorder %s171, %s185
      %p187 = scmp.eq.s32.totalorder %s93, 0
      %p188 = por %p186, %p187
      %s190 = sadd.s32 %s189, 1
      %p193 = scmp.eq.s32.totalorder %s87, 1
      %p194 = scmp.ne.s32.totalorder %s189, %s191
      %p195 = scmp.eq.s32.totalorder %s87, 0
      %p196 = por %p194, %p195
      %p197 = scmp.ne.s32.totalorder %s189, %s191
      %p198 = scmp.eq.s32.totalorder %s92, 1
      %p199 = por %p197, %p198
      %p200 = scmp.ne.s32.totalorder %s191, %s192
      %p201 = scmp.eq.s32.totalorder %s92, 0
      %p202 = por %p200, %p201
      %p203 = scmp.ne.s32.totalorder %s191, %s192
      %p204 = scmp.eq.s32.totalorder %s93, 1
      %p205 = por %p203, %p204
      %p207 = scmp.ne.s32.totalorder %s192, %s206
      %p208 = scmp.eq.s32.totalorder %s93, 0
      %p209 = por %p207, %p208
      %s211 = sadd.s32 %s210, 1
      %p214 = scmp.eq.s32.totalorder %s87, 1
      %p215 = scmp.ne.s32.totalorder %s210, %s212
      %p216 = scmp.eq.s32.totalorder %s87, 0
      %p217 = por %p215, %p216
      %p218 = scmp.ne.s32.totalorder %s210, %s212
      %p219 = scmp.eq.s32.totalorder %s92, 1
      %p220 = por %p218, %p219
      %p221 = scmp.ne.s32.totalorder %s212, %s213
      %p222 = scmp.eq.s32.totalorder %s92, 0
      %p223 = por %p221, %p222
      %p224 = scmp.ne.s32.totalorder %s212, %s213
      %p225 = scmp.eq.s32.totalorder %s93, 1
      %p226 = por %p224, %p225
      %p228 = scmp.ne.s32.totalorder %s213, %s227
      %p229 = scmp.eq.s32.totalorder %s93, 0
      %p230 = por %p228, %p229
      %s232 = sadd.s32 %s231, 1
      %p235 = scmp.eq.s32.totalorder %s87, 1
      %p236 = scmp.ne.s32.totalorder %s231, %s233
      %p237 = scmp.eq.s32.totalorder %s87, 0
      %p238 = por %p236, %p237
      %p239 = scmp.ne.s32.totalorder %s231, %s233
      %p240 = scmp.eq.s32.totalorder %s92, 1
      %p241 = por %p239, %p240
      %p242 = scmp.ne.s32.totalorder %s233, %s234
      %p243 = scmp.eq.s32.totalorder %s92, 0
      %p244 = por %p242, %p243
      %p245 = scmp.ne.s32.totalorder %s233, %s234
      %p246 = scmp.eq.s32.totalorder %s93, 1
      %p247 = por %p245, %p246
      %p249 = scmp.ne.s32.totalorder %s234, %s248
      %p250 = scmp.eq.s32.totalorder %s93, 0
      %p251 = por %p249, %p250
      %s253 = sadd.s32 %s252, 1
      %p256 = scmp.eq.s32.totalorder %s87, 1
      %p257 = scmp.ne.s32.totalorder %s252, %s254
      %p258 = scmp.eq.s32.totalorder %s87, 0
      %p259 = por %p257, %p258
      %p260 = scmp.ne.s32.totalorder %s252, %s254
      %p261 = scmp.eq.s32.totalorder %s92, 1
      %p262 = por %p260, %p261
      %p263 = scmp.ne.s32.totalorder %s254, %s255
      %p264 = scmp.eq.s32.totalorder %s92, 0
      %p265 = por %p263, %p264
      %p266 = scmp.ne.s32.totalorder %s254, %s255
      %p267 = scmp.eq.s32.totalorder %s93, 1
      %p268 = por %p266, %p267
      %p270 = scmp.ne.s32.totalorder %s255, %s269
      %p271 = scmp.eq.s32.totalorder %s93, 0
      %p272 = por %p270, %p271
      %s274 = sadd.s32 %s273, 1
      %p277 = scmp.eq.s32.totalorder %s87, 1
      %p278 = scmp.ne.s32.totalorder %s273, %s275
      %p279 = scmp.eq.s32.totalorder %s87, 0
      %p280 = por %p278, %p279
      %p281 = scmp.ne.s32.totalorder %s273, %s275
      %p282 = scmp.eq.s32.totalorder %s92, 1
      %p283 = por %p281, %p282
      %p284 = scmp.ne.s32.totalorder %s275, %s276
      %p285 = scmp.eq.s32.totalorder %s92, 0
      %p286 = por %p284, %p285
      %p287 = scmp.ne.s32.totalorder %s275, %s276
      %p288 = scmp.eq.s32.totalorder %s93, 1
      %p289 = por %p287, %p288
      %p291 = scmp.ne.s32.totalorder %s276, %s290
      %p292 = scmp.eq.s32.totalorder %s93, 0
      %p293 = por %p291, %p292
      %s295 = sadd.s32 %s294, 1
      %p298 = scmp.eq.s32.totalorder %s87, 1
      %p299 = scmp.ne.s32.totalorder %s294, %s296
      %p300 = scmp.eq.s32.totalorder %s87, 0
      %p301 = por %p299, %p300
      %p302 = scmp.ne.s32.totalorder %s294, %s296
      %p303 = scmp.eq.s32.totalorder %s92, 1
      %p304 = por %p302, %p303
      %p305 = scmp.ne.s32.totalorder %s296, %s297
      %p306 = scmp.eq.s32.totalorder %s92, 0
      %p307 = por %p305, %p306
      %p308 = scmp.ne.s32.totalorder %s296, %s297
      %p309 = scmp.eq.s32.totalorder %s93, 1
      %p310 = por %p308, %p309
      %p312 = scmp.ne.s32.totalorder %s297, %s311
      %p313 = scmp.eq.s32.totalorder %s93, 0
      %p314 = por %p312, %p313
      %s316 = sadd.s32 %s315, 1
      %p319 = scmp.eq.s32.totalorder %s87, 1
      %p320 = scmp.ne.s32.totalorder %s315, %s317
      %p321 = scmp.eq.s32.totalorder %s87, 0
      %p322 = por %p320, %p321
      %p323 = scmp.ne.s32.totalorder %s315, %s317
      %p324 = scmp.eq.s32.totalorder %s92, 1
      %p325 = por %p323, %p324
      %p326 = scmp.ne.s32.totalorder %s317, %s318
      %p327 = scmp.eq.s32.totalorder %s92, 0
      %p328 = por %p326, %p327
      %p329 = scmp.ne.s32.totalorder %s317, %s318
      %p330 = scmp.eq.s32.totalorder %s93, 1
      %p331 = por %p329, %p330
      %p333 = scmp.ne.s32.totalorder %s318, %s332
      %p334 = scmp.eq.s32.totalorder %s93, 0
      %p335 = por %p333, %p334
      %s337 = sadd.s32 %s336, 1
      %p340 = scmp.eq.s32.totalorder %s87, 1
      %p341 = scmp.ne.s32.totalorder %s336, %s338
      %p342 = scmp.eq.s32.totalorder %s87, 0
      %p343 = por %p341, %p342
      %p344 = scmp.ne.s32.totalorder %s336, %s338
      %p345 = scmp.eq.s32.totalorder %s92, 1
      %p346 = por %p344, %p345
      %p347 = scmp.ne.s32.totalorder %s338, %s339
      %p348 = scmp.eq.s32.totalorder %s92, 0
      %p349 = por %p347, %p348
      %p350 = scmp.ne.s32.totalorder %s338, %s339
      %p351 = scmp.eq.s32.totalorder %s93, 1
      %p352 = por %p350, %p351
      %p354 = scmp.ne.s32.totalorder %s339, %s353
      %p355 = scmp.eq.s32.totalorder %s93, 0
      %p356 = por %p354, %p355
      %s358 = sadd.s32 %s357, 1
      %p361 = scmp.eq.s32.totalorder %s87, 1
      %p362 = scmp.ne.s32.totalorder %s357, %s359
      %p363 = scmp.eq.s32.totalorder %s87, 0
      %p364 = por %p362, %p363
      %p365 = scmp.ne.s32.totalorder %s357, %s359
      %p366 = scmp.eq.s32.totalorder %s92, 1
      %p367 = por %p365, %p366
      %p368 = scmp.ne.s32.totalorder %s359, %s360
      %p369 = scmp.eq.s32.totalorder %s92, 0
      %p370 = por %p368, %p369
      %p371 = scmp.ne.s32.totalorder %s359, %s360
      %p372 = scmp.eq.s32.totalorder %s93, 1
      %p373 = por %p371, %p372
      %p375 = scmp.ne.s32.totalorder %s360, %s374
      %p376 = scmp.eq.s32.totalorder %s93, 0
      %p377 = por %p375, %p376
      %s379 = sadd.s32 %s378, 1
      %p382 = scmp.eq.s32.totalorder %s87, 1
      %p383 = scmp.ne.s32.totalorder %s378, %s380
      %p384 = scmp.eq.s32.totalorder %s87, 0
      %p385 = por %p383, %p384
      %p386 = scmp.ne.s32.totalorder %s378, %s380
      %p387 = scmp.eq.s32.totalorder %s92, 1
      %p388 = por %p386, %p387
      %p389 = scmp.ne.s32.totalorder %s380, %s381
      %p390 = scmp.eq.s32.totalorder %s92, 0
      %p391 = por %p389, %p390
      %p392 = scmp.ne.s32.totalorder %s380, %s381
      %p393 = scmp.eq.s32.totalorder %s93, 1
      %p394 = por %p392, %p393
      %p396 = scmp.ne.s32.totalorder %s381, %s395
      %p397 = scmp.eq.s32.totalorder %s93, 0
      %p398 = por %p396, %p397
      %s400 = sadd.s32 %s399, 1
      %p403 = scmp.eq.s32.totalorder %s87, 1
      %p404 = scmp.ne.s32.totalorder %s399, %s401
      %p405 = scmp.eq.s32.totalorder %s87, 0
      %p406 = por %p404, %p405
      %p407 = scmp.ne.s32.totalorder %s399, %s401
      %p408 = scmp.eq.s32.totalorder %s92, 1
      %p409 = por %p407, %p408
      %p410 = scmp.ne.s32.totalorder %s401, %s402
      %p411 = scmp.eq.s32.totalorder %s92, 0
      %p412 = por %p410, %p411
      %p413 = scmp.ne.s32.totalorder %s401, %s402
      %p414 = scmp.eq.s32.totalorder %s93, 1
      %p415 = por %p413, %p414
      %p417 = scmp.ne.s32.totalorder %s402, %s416
      %p418 = scmp.eq.s32.totalorder %s93, 0
      %p419 = por %p417, %p418
      %s421 = sadd.s32 %s420, 1
      %p424 = scmp.eq.s32.totalorder %s87, 1
      %p425 = scmp.ne.s32.totalorder %s420, %s422
      %p426 = scmp.eq.s32.totalorder %s87, 0
      %p427 = por %p425, %p426
      %p428 = scmp.ne.s32.totalorder %s420, %s422
      %p429 = scmp.eq.s32.totalorder %s92, 1
      %p430 = por %p428, %p429
      %p431 = scmp.ne.s32.totalorder %s422, %s423
      %p432 = scmp.eq.s32.totalorder %s92, 0
      %p433 = por %p431, %p432
      %p434 = scmp.ne.s32.totalorder %s422, %s423
      %p435 = scmp.eq.s32.totalorder %s93, 1
      %p436 = por %p434, %p435
      %p438 = scmp.ne.s32.totalorder %s423, %s437
      %p439 = scmp.eq.s32.totalorder %s93, 0
      %p440 = por %p438, %p439
      %s442 = sadd.s32 %s441, 1
      %p445 = scmp.eq.s32.totalorder %s87, 1
      %p446 = scmp.ne.s32.totalorder %s441, %s443
      %p447 = scmp.eq.s32.totalorder %s87, 0
      %p448 = por %p446, %p447
      %p449 = scmp.ne.s32.totalorder %s441, %s443
      %p450 = scmp.eq.s32.totalorder %s92, 1
      %p451 = por %p449, %p450
      %p452 = scmp.ne.s32.totalorder %s443, %s444
      %p453 = scmp.eq.s32.totalorder %s92, 0
      %p454 = por %p452, %p453
      %p455 = scmp.ne.s32.totalorder %s443, %s444
      %p456 = scmp.eq.s32.totalorder %s93, 1
      %p457 = por %p455, %p456
      %p459 = scmp.ne.s32.totalorder %s444, %s458
      %p460 = scmp.eq.s32.totalorder %s93, 0
      %p461 = por %p459, %p460
      %s463 = sadd.s32 %s462, 1
      %p466 = scmp.eq.s32.totalorder %s87, 1
      %p467 = scmp.ne.s32.totalorder %s462, %s464
      %p468 = scmp.eq.s32.totalorder %s87, 0
      %p469 = por %p467, %p468
      %p470 = scmp.ne.s32.totalorder %s462, %s464
      %p471 = scmp.eq.s32.totalorder %s92, 1
      %p472 = por %p470, %p471
      %p473 = scmp.ne.s32.totalorder %s464, %s465
      %p474 = scmp.eq.s32.totalorder %s92, 0
      %p475 = por %p473, %p474
      %p476 = scmp.ne.s32.totalorder %s464, %s465
      %p477 = scmp.eq.s32.totalorder %s93, 1
      %p478 = por %p476, %p477
      %p480 = scmp.ne.s32.totalorder %s465, %s479
      %p481 = scmp.eq.s32.totalorder %s93, 0
      %p482 = por %p480, %p481
      %s484 = sadd.s32 %s483, 1
      %p487 = scmp.eq.s32.totalorder %s87, 1
      %p488 = scmp.ne.s32.totalorder %s483, %s485
      %p489 = scmp.eq.s32.totalorder %s87, 0
      %p490 = por %p488, %p489
      %p491 = scmp.ne.s32.totalorder %s483, %s485
      %p492 = scmp.eq.s32.totalorder %s92, 1
      %p493 = por %p491, %p492
      %p494 = scmp.ne.s32.totalorder %s485, %s486
      %p495 = scmp.eq.s32.totalorder %s92, 0
      %p496 = por %p494, %p495
      %p497 = scmp.ne.s32.totalorder %s485, %s486
      %p498 = scmp.eq.s32.totalorder %s93, 1
      %p499 = por %p497, %p498
      %p501 = scmp.ne.s32.totalorder %s486, %s500
      %p502 = scmp.eq.s32.totalorder %s93, 0
      %p503 = por %p501, %p502
      %s505 = sadd.s32 %s504, 1
      %p508 = scmp.eq.s32.totalorder %s87, 1
      %p509 = scmp.ne.s32.totalorder %s504, %s506
      %p510 = scmp.eq.s32.totalorder %s87, 0
      %p511 = por %p509, %p510
      %p512 = scmp.ne.s32.totalorder %s504, %s506
      %p513 = scmp.eq.s32.totalorder %s92, 1
      %p514 = por %p512, %p513
      %p515 = scmp.ne.s32.totalorder %s506, %s507
      %p516 = scmp.eq.s32.totalorder %s92, 0
      %p517 = por %p515, %p516
      %p518 = scmp.ne.s32.totalorder %s506, %s507
      %p519 = scmp.eq.s32.totalorder %s93, 1
      %p520 = por %p518, %p519
      %p522 = scmp.ne.s32.totalorder %s507, %s521
      %p523 = scmp.eq.s32.totalorder %s93, 0
      %p524 = por %p522, %p523
      %s526 = sadd.s32 %s525, 1
      %p529 = scmp.eq.s32.totalorder %s87, 1
      %p530 = scmp.ne.s32.totalorder %s525, %s527
      %p531 = scmp.eq.s32.totalorder %s87, 0
      %p532 = por %p530, %p531
      %p533 = scmp.ne.s32.totalorder %s525, %s527
      %p534 = scmp.eq.s32.totalorder %s92, 1
      %p535 = por %p533, %p534
      %p536 = scmp.ne.s32.totalorder %s527, %s528
      %p537 = scmp.eq.s32.totalorder %s92, 0
      %p538 = por %p536, %p537
      %p539 = scmp.ne.s32.totalorder %s527, %s528
      %p540 = scmp.eq.s32.totalorder %s93, 1
      %p541 = por %p539, %p540
      %p543 = scmp.ne.s32.totalorder %s528, %s542
      %p544 = scmp.eq.s32.totalorder %s93, 0
      %p545 = por %p543, %p544
      %s547 = sadd.s32 %s546, 1
      %p550 = scmp.eq.s32.totalorder %s87, 1
      %p551 = scmp.ne.s32.totalorder %s546, %s548
      %p552 = scmp.eq.s32.totalorder %s87, 0
      %p553 = por %p551, %p552
      %p554 = scmp.ne.s32.totalorder %s546, %s548
      %p555 = scmp.eq.s32.totalorder %s92, 1
      %p556 = por %p554, %p555
      %p557 = scmp.ne.s32.totalorder %s548, %s549
      %p558 = scmp.eq.s32.totalorder %s92, 0
      %p559 = por %p557, %p558
      %p560 = scmp.ne.s32.totalorder %s548, %s549
      %p561 = scmp.eq.s32.totalorder %s93, 1
      %p562 = por %p560, %p561
      %p564 = scmp.ne.s32.totalorder %s549, %s563
      %p565 = scmp.eq.s32.totalorder %s93, 0
      %p566 = por %p564, %p565
      %s568 = sadd.s32 %s567, 1
      %p571 = scmp.eq.s32.totalorder %s87, 1
      %p572 = scmp.ne.s32.totalorder %s567, %s569
      %p573 = scmp.eq.s32.totalorder %s87, 0
      %p574 = por %p572, %p573
      %p575 = scmp.ne.s32.totalorder %s567, %s569
      %p576 = scmp.eq.s32.totalorder %s92, 1
      %p577 = por %p575, %p576
      %p578 = scmp.ne.s32.totalorder %s569, %s570
      %p579 = scmp.eq.s32.totalorder %s92, 0
      %p580 = por %p578, %p579
      %p581 = scmp.ne.s32.totalorder %s569, %s570
      %p582 = scmp.eq.s32.totalorder %s93, 1
      %p583 = por %p581, %p582
      %p585 = scmp.ne.s32.totalorder %s570, %s584
      %p586 = scmp.eq.s32.totalorder %s93, 0
      %p587 = por %p585, %p586
      %s589 = sadd.s32 %s588, 1
      %p592 = scmp.eq.s32.totalorder %s87, 1
      %p593 = scmp.ne.s32.totalorder %s588, %s590
      %p594 = scmp.eq.s32.totalorder %s87, 0
      %p595 = por %p593, %p594
      %p596 = scmp.ne.s32.totalorder %s588, %s590
      %p597 = scmp.eq.s32.totalorder %s92, 1
      %p598 = por %p596, %p597
      %p599 = scmp.ne.s32.totalorder %s590, %s591
      %p600 = scmp.eq.s32.totalorder %s92, 0
      %p601 = por %p599, %p600
      %p602 = scmp.ne.s32.totalorder %s590, %s591
      %p603 = scmp.eq.s32.totalorder %s93, 1
      %p604 = por %p602, %p603
      %p606 = scmp.ne.s32.totalorder %s591, %s605
      %p607 = scmp.eq.s32.totalorder %s93, 0
      %p608 = por %p606, %p607
      %s610 = sadd.s32 %s609, 1
      %p613 = scmp.eq.s32.totalorder %s87, 1
      %p614 = scmp.ne.s32.totalorder %s609, %s611
      %p615 = scmp.eq.s32.totalorder %s87, 0
      %p616 = por %p614, %p615
      %p617 = scmp.ne.s32.totalorder %s609, %s611
      %p618 = scmp.eq.s32.totalorder %s92, 1
      %p619 = por %p617, %p618
      %p620 = scmp.ne.s32.totalorder %s611, %s612
      %p621 = scmp.eq.s32.totalorder %s92, 0
      %p622 = por %p620, %p621
      %p623 = scmp.ne.s32.totalorder %s611, %s612
      %p624 = scmp.eq.s32.totalorder %s93, 1
      %p625 = por %p623, %p624
      %p627 = scmp.ne.s32.totalorder %s612, %s626
      %p628 = scmp.eq.s32.totalorder %s93, 0
      %p629 = por %p627, %p628
      %s631 = sadd.s32 %s630, 1
      %p634 = scmp.eq.s32.totalorder %s87, 1
      %p635 = scmp.ne.s32.totalorder %s630, %s632
      %p636 = scmp.eq.s32.totalorder %s87, 0
      %p637 = por %p635, %p636
      %p638 = scmp.ne.s32.totalorder %s630, %s632
      %p639 = scmp.eq.s32.totalorder %s92, 1
      %p640 = por %p638, %p639
      %p641 = scmp.ne.s32.totalorder %s632, %s633
      %p642 = scmp.eq.s32.totalorder %s92, 0
      %p643 = por %p641, %p642
      %p644 = scmp.ne.s32.totalorder %s632, %s633
      %p645 = scmp.eq.s32.totalorder %s93, 1
      %p646 = por %p644, %p645
      %p648 = scmp.ne.s32.totalorder %s633, %s647
      %p649 = scmp.eq.s32.totalorder %s93, 0
      %p650 = por %p648, %p649
      %s652 = sadd.s32 %s651, 1
      %p655 = scmp.eq.s32.totalorder %s87, 1
      %p656 = scmp.ne.s32.totalorder %s651, %s653
      %p657 = scmp.eq.s32.totalorder %s87, 0
      %p658 = por %p656, %p657
      %p659 = scmp.ne.s32.totalorder %s651, %s653
      %p660 = scmp.eq.s32.totalorder %s92, 1
      %p661 = por %p659, %p660
      %p662 = scmp.ne.s32.totalorder %s653, %s654
      %p663 = scmp.eq.s32.totalorder %s92, 0
      %p664 = por %p662, %p663
      %p665 = scmp.ne.s32.totalorder %s653, %s654
      %p666 = scmp.eq.s32.totalorder %s93, 1
      %p667 = por %p665, %p666
      %p669 = scmp.ne.s32.totalorder %s654, %s668
      %p670 = scmp.eq.s32.totalorder %s93, 0
      %p671 = por %p669, %p670
      %s673 = sadd.s32 %s672, 1
      %p676 = scmp.eq.s32.totalorder %s87, 1
      %p677 = scmp.ne.s32.totalorder %s672, %s674
      %p678 = scmp.eq.s32.totalorder %s87, 0
      %p679 = por %p677, %p678
      %p680 = scmp.ne.s32.totalorder %s672, %s674
      %p681 = scmp.eq.s32.totalorder %s92, 1
      %p682 = por %p680, %p681
      %p683 = scmp.ne.s32.totalorder %s674, %s675
      %p684 = scmp.eq.s32.totalorder %s92, 0
      %p685 = por %p683, %p684
      %p686 = scmp.ne.s32.totalorder %s674, %s675
      %p687 = scmp.eq.s32.totalorder %s93, 1
      %p688 = por %p686, %p687
      %p690 = scmp.ne.s32.totalorder %s675, %s689
      %p691 = scmp.eq.s32.totalorder %s93, 0
      %p692 = por %p690, %p691
      %s694 = sadd.s32 %s693, 1
      %p697 = scmp.eq.s32.totalorder %s87, 1
      %p698 = scmp.ne.s32.totalorder %s693, %s695
      %p699 = scmp.eq.s32.totalorder %s87, 0
      %p700 = por %p698, %p699
      %p701 = scmp.ne.s32.totalorder %s693, %s695
      %p702 = scmp.eq.s32.totalorder %s92, 1
      %p703 = por %p701, %p702
      %p704 = scmp.ne.s32.totalorder %s695, %s696
      %p705 = scmp.eq.s32.totalorder %s92, 0
      %p706 = por %p704, %p705
      %p707 = scmp.ne.s32.totalorder %s695, %s696
      %p708 = scmp.eq.s32.totalorder %s93, 1
      %p709 = por %p707, %p708
      %p711 = scmp.ne.s32.totalorder %s696, %s710
      %p712 = scmp.eq.s32.totalorder %s93, 0
      %p713 = por %p711, %p712
      %s715 = sadd.s32 %s714, 1
      %p718 = scmp.eq.s32.totalorder %s87, 1
      %p719 = scmp.ne.s32.totalorder %s714, %s716
      %p720 = scmp.eq.s32.totalorder %s87, 0
      %p721 = por %p719, %p720
      %p722 = scmp.ne.s32.totalorder %s714, %s716
      %p723 = scmp.eq.s32.totalorder %s92, 1
      %p724 = por %p722, %p723
      %p725 = scmp.ne.s32.totalorder %s716, %s717
      %p726 = scmp.eq.s32.totalorder %s92, 0
      %p727 = por %p725, %p726
      %p728 = scmp.ne.s32.totalorder %s716, %s717
      %p729 = scmp.eq.s32.totalorder %s93, 1
      %p730 = por %p728, %p729
      %p732 = scmp.ne.s32.totalorder %s717, %s731
      %p733 = scmp.eq.s32.totalorder %s93, 0
      %p734 = por %p732, %p733
      %s736 = sadd.s32 %s735, 1
      %p739 = scmp.eq.s32.totalorder %s87, 1
      %p740 = scmp.ne.s32.totalorder %s735, %s737
      %p741 = scmp.eq.s32.totalorder %s87, 0
      %p742 = por %p740, %p741
      %p743 = scmp.ne.s32.totalorder %s735, %s737
      %p744 = scmp.eq.s32.totalorder %s92, 1
      %p745 = por %p743, %p744
      %p746 = scmp.ne.s32.totalorder %s737, %s738
      %p747 = scmp.eq.s32.totalorder %s92, 0
      %p748 = por %p746, %p747
      %p749 = scmp.ne.s32.totalorder %s737, %s738
      %p750 = scmp.eq.s32.totalorder %s93, 1
      %p751 = por %p749, %p750
      %p753 = scmp.ne.s32.totalorder %s738, %s752
      %p754 = scmp.eq.s32.totalorder %s93, 0
      %p755 = por %p753, %p754
      %s757 = sadd.s32 %s756, 1
      %p760 = scmp.eq.s32.totalorder %s87, 1
      %p761 = scmp.ne.s32.totalorder %s756, %s758
      %p762 = scmp.eq.s32.totalorder %s87, 0
      %p763 = por %p761, %p762
      %p764 = scmp.ne.s32.totalorder %s756, %s758
      %p765 = scmp.eq.s32.totalorder %s92, 1
      %p766 = por %p764, %p765
      %p767 = scmp.ne.s32.totalorder %s758, %s759
      %p768 = scmp.eq.s32.totalorder %s92, 0
      %p769 = por %p767, %p768
      %p770 = scmp.ne.s32.totalorder %s758, %s759
      %p771 = scmp.eq.s32.totalorder %s93, 1
      %p772 = por %p770, %p771
      %p774 = scmp.ne.s32.totalorder %s759, %s773
      %p775 = scmp.eq.s32.totalorder %s93, 0
      %p776 = por %p774, %p775
      %s778 = sadd.s32 %s777, 1
      %p781 = scmp.eq.s32.totalorder %s87, 1
      %p782 = scmp.ne.s32.totalorder %s777, %s779
      %p783 = scmp.eq.s32.totalorder %s87, 0
      %p784 = por %p782, %p783
      %p785 = scmp.ne.s32.totalorder %s777, %s779
      %p786 = scmp.eq.s32.totalorder %s92, 1
      %p787 = por %p785, %p786
      %p788 = scmp.ne.s32.totalorder %s779, %s780
      %p789 = scmp.eq.s32.totalorder %s92, 0
      %p790 = por %p788, %p789
      %p791 = scmp.ne.s32.totalorder %s779, %s780
      %p792 = scmp.eq.s32.totalorder %s93, 1
      %p793 = por %p791, %p792
      %p795 = scmp.ne.s32.totalorder %s780, %s794
      %p796 = scmp.eq.s32.totalorder %s93, 0
      %p797 = por %p795, %p796
      %s799 = sadd.s32 %s798, 1
      %p802 = scmp.eq.s32.totalorder %s87, 1
      %p803 = scmp.ne.s32.totalorder %s798, %s800
      %p804 = scmp.eq.s32.totalorder %s87, 0
      %p805 = por %p803, %p804
      %p806 = scmp.ne.s32.totalorder %s798, %s800
      %p807 = scmp.eq.s32.totalorder %s92, 1
      %p808 = por %p806, %p807
      %p809 = scmp.ne.s32.totalorder %s800, %s801
      %p810 = scmp.eq.s32.totalorder %s92, 0
      %p811 = por %p809, %p810
      %p812 = scmp.ne.s32.totalorder %s800, %s801
      %p813 = scmp.eq.s32.totalorder %s93, 1
      %p814 = por %p812, %p813
      %p816 = scmp.ne.s32.totalorder %s801, %s815
      %p817 = scmp.eq.s32.totalorder %s93, 0
      %p818 = por %p816, %p817
      %s820 = sadd.s32 %s819, 1
      %p823 = scmp.eq.s32.totalorder %s87, 1
      %p824 = scmp.ne.s32.totalorder %s819, %s821
      %p825 = scmp.eq.s32.totalorder %s87, 0
      %p826 = por %p824, %p825
      %p827 = scmp.ne.s32.totalorder %s819, %s821
      %p828 = scmp.eq.s32.totalorder %s92, 1
      %p829 = por %p827, %p828
      %p830 = scmp.ne.s32.totalorder %s821, %s822
      %p831 = scmp.eq.s32.totalorder %s92, 0
      %p832 = por %p830, %p831
      %p833 = scmp.ne.s32.totalorder %s821, %s822
      %p834 = scmp.eq.s32.totalorder %s93, 1
      %p835 = por %p833, %p834
      %p837 = scmp.ne.s32.totalorder %s822, %s836
      %p838 = scmp.eq.s32.totalorder %s93, 0
      %p839 = por %p837, %p838
      %s840 = ssub.s32 %s87, %s94
      %p841 = scmp.eq.s32.totalorder %s840, 0
      %s843 = sadd.s32 %s842, 1
      %s844 = scalar_select %p841, %s842, %s843
      %p847 = pneg %p841
      %p848 = scmp.eq.s32.totalorder %s87, 1
      %p849 = por %p847, %p848
      %p850 = scmp.ne.s32.totalorder %s842, %s845
      %p851 = scmp.eq.s32.totalorder %s87, 0
      %p852 = por %p850, %p851
      %p853 = scmp.ne.s32.totalorder %s842, %s845
      %p854 = scmp.eq.s32.totalorder %s92, 1
      %p855 = por %p853, %p854
      %p856 = scmp.ne.s32.totalorder %s845, %s846
      %p857 = scmp.eq.s32.totalorder %s92, 0
      %p858 = por %p856, %p857
      %p859 = scmp.ne.s32.totalorder %s845, %s846
      %p860 = scmp.eq.s32.totalorder %s93, 1
      %p861 = por %p859, %p860
      %p863 = scmp.ne.s32.totalorder %s846, %s862
      %p864 = scmp.eq.s32.totalorder %s93, 0
      %p865 = por %p863, %p864
      %p866 = scmp.le.s32.totalorder 1, %s87
      %p867 = scmp.lt.s32.totalorder %s87, 3
      %p868 = pnand %p866, %p867
      %p869 = pneg %p868
      // Predicated region
      $region9: #{vit_forward.1} parent=5 // pred_check
        _
      $region10: #{vit_forward.1} parent=5 // pred_check_branch
        %871 = sbr.rel (%p868) target = $region12
      $region11: #{vit_forward.1} parent=5 // pred_region
        %s872 = ssub.s32 %s87, 1
        // Predicated region
        $region13: #{vit_forward.1} parent=11 // pred_check
          %p873 = pneg %p160
        $region14: #{vit_forward.1} parent=11 // pred_check_branch
          %875 = sbr.rel (%p873) target = $region16
        $region15: #{vit_forward.1} parent=11 // pred_region
          _
        $region16: #{vit_forward.1} parent=11 // pred_fallthru
          _
        // Predicated region
        $region17: #{vit_forward.1} parent=11 // pred_check
          %p876 = pneg %p181
        $region18: #{vit_forward.1} parent=11 // pred_check_branch
          %878 = sbr.rel (%p876) target = $region20
        $region19: #{vit_forward.1} parent=11 // pred_region
          _
        $region20: #{vit_forward.1} parent=11 // pred_fallthru
          _
        // Predicated region
        $region21: #{vit_forward.1} parent=11 // pred_check
          %p879 = pneg %p202
        $region22: #{vit_forward.1} parent=11 // pred_check_branch
          %881 = sbr.rel (%p879) target = $region24
        $region23: #{vit_forward.1} parent=11 // pred_region
          _
        $region24: #{vit_forward.1} parent=11 // pred_fallthru
          _
        // Predicated region
        $region25: #{vit_forward.1} parent=11 // pred_check
          %p882 = pneg %p223
        $region26: #{vit_forward.1} parent=11 // pred_check_branch
          %884 = sbr.rel (%p882) target = $region28
        $region27: #{vit_forward.1} parent=11 // pred_region
          _
        $region28: #{vit_forward.1} parent=11 // pred_fallthru
          _
        // Predicated region
        $region29: #{vit_forward.1} parent=11 // pred_check
          %p885 = pneg %p244
        $region30: #{vit_forward.1} parent=11 // pred_check_branch
          %887 = sbr.rel (%p885) target = $region32
        $region31: #{vit_forward.1} parent=11 // pred_region
          _
        $region32: #{vit_forward.1} parent=11 // pred_fallthru
          _
        // Predicated region
        $region33: #{vit_forward.1} parent=11 // pred_check
          %p888 = pneg %p265
        $region34: #{vit_forward.1} parent=11 // pred_check_branch
          %890 = sbr.rel (%p888) target = $region36
        $region35: #{vit_forward.1} parent=11 // pred_region
          _
        $region36: #{vit_forward.1} parent=11 // pred_fallthru
          _
        // Predicated region
        $region37: #{vit_forward.1} parent=11 // pred_check
          %p891 = pneg %p286
        $region38: #{vit_forward.1} parent=11 // pred_check_branch
          %893 = sbr.rel (%p891) target = $region40
        $region39: #{vit_forward.1} parent=11 // pred_region
          _
        $region40: #{vit_forward.1} parent=11 // pred_fallthru
          _
        // Predicated region
        $region41: #{vit_forward.1} parent=11 // pred_check
          %p894 = pneg %p307
        $region42: #{vit_forward.1} parent=11 // pred_check_branch
          %896 = sbr.rel (%p894) target = $region44
        $region43: #{vit_forward.1} parent=11 // pred_region
          _
        $region44: #{vit_forward.1} parent=11 // pred_fallthru
          _
        // Predicated region
        $region45: #{vit_forward.1} parent=11 // pred_check
          %p897 = pneg %p328
        $region46: #{vit_forward.1} parent=11 // pred_check_branch
          %899 = sbr.rel (%p897) target = $region48
        $region47: #{vit_forward.1} parent=11 // pred_region
          _
        $region48: #{vit_forward.1} parent=11 // pred_fallthru
          _
        // Predicated region
        $region49: #{vit_forward.1} parent=11 // pred_check
          %p900 = pneg %p349
        $region50: #{vit_forward.1} parent=11 // pred_check_branch
          %902 = sbr.rel (%p900) target = $region52
        $region51: #{vit_forward.1} parent=11 // pred_region
          %904 = vsyncadd [#allocation3], 0
          %s905 = sshll.u32 %s23, 4
          %s906 = int_to_ptr.hbm [resolvable:$true] %s905
          %s907 = sshll.u32 [#allocation2], 4
          %s908 = int_to_ptr.vmem [resolvable:$true] %s907
          %913 = dma.hbm_to_vmem [thread:$0]  %s906, 48, %s908, [#allocation3], 16, 16, 1
        $region52: #{vit_forward.1} parent=11 // pred_fallthru
          _
        // Predicated region
        $region53: #{vit_forward.1} parent=11 // pred_check
          %p914 = pneg %p370
        $region54: #{vit_forward.1} parent=11 // pred_check_branch
          %916 = sbr.rel (%p914) target = $region56
        $region55: #{vit_forward.1} parent=11 // pred_region
          _
        $region56: #{vit_forward.1} parent=11 // pred_fallthru
          _
        // Predicated region
        $region57: #{vit_forward.1} parent=11 // pred_check
          %p917 = pneg %p391
        $region58: #{vit_forward.1} parent=11 // pred_check_branch
          %919 = sbr.rel (%p917) target = $region60
        $region59: #{vit_forward.1} parent=11 // pred_region
          %921 = vsyncadd [#allocation6], 0
          %s922 = sshll.u32 %s27, 4
          %s923 = int_to_ptr.hbm [resolvable:$true] %s922
          %s924 = sshll.u32 [#allocation5], 4
          %s925 = int_to_ptr.vmem [resolvable:$true] %s924
          %930 = dma.hbm_to_vmem [thread:$0]  %s923, 48, %s925, [#allocation6], 16, 16, 1
        $region60: #{vit_forward.1} parent=11 // pred_fallthru
          _
        // Predicated region
        $region61: #{vit_forward.1} parent=11 // pred_check
          %p931 = pneg %p412
        $region62: #{vit_forward.1} parent=11 // pred_check_branch
          %933 = sbr.rel (%p931) target = $region64
        $region63: #{vit_forward.1} parent=11 // pred_region
          _
        $region64: #{vit_forward.1} parent=11 // pred_fallthru
          _
        // Predicated region
        $region65: #{vit_forward.1} parent=11 // pred_check
          %p934 = pneg %p433
        $region66: #{vit_forward.1} parent=11 // pred_check_branch
          %936 = sbr.rel (%p934) target = $region68
        $region67: #{vit_forward.1} parent=11 // pred_region
          %938 = vsyncadd [#allocation6], 0
          %s939 = sshll.u32 %s31, 4
          %s940 = int_to_ptr.hbm [resolvable:$true] %s939
          %s941 = sshll.u32 [#allocation7], 4
          %s942 = int_to_ptr.vmem [resolvable:$true] %s941
          %947 = dma.hbm_to_vmem [thread:$0]  %s940, 48, %s942, [#allocation6], 16, 16, 1
        $region68: #{vit_forward.1} parent=11 // pred_fallthru
          _
        // Predicated region
        $region69: #{vit_forward.1} parent=11 // pred_check
          %p948 = pneg %p454
        $region70: #{vit_forward.1} parent=11 // pred_check_branch
          %950 = sbr.rel (%p948) target = $region72
        $region71: #{vit_forward.1} parent=11 // pred_region
          %952 = vsyncadd [#allocation9], 0
          %s953 = sshll.u32 %s33, 4
          %s954 = int_to_ptr.hbm [resolvable:$true] %s953
          %s955 = sshll.u32 [#allocation8], 4
          %s956 = int_to_ptr.vmem [resolvable:$true] %s955
          %961 = dma.hbm_to_vmem [thread:$0]  %s954, 48, %s956, [#allocation9], 16, 16, 1
        $region72: #{vit_forward.1} parent=11 // pred_fallthru
          _
        // Predicated region
        $region73: #{vit_forward.1} parent=11 // pred_check
          %p962 = pneg %p475
        $region74: #{vit_forward.1} parent=11 // pred_check_branch
          %964 = sbr.rel (%p962) target = $region76
        $region75: #{vit_forward.1} parent=11 // pred_region
          %966 = vsyncadd [#allocation9], 0
          %s967 = sshll.u32 %s35, 4
          %s968 = int_to_ptr.hbm [resolvable:$true] %s967
          %s969 = sshll.u32 [#allocation10], 4
          %s970 = int_to_ptr.vmem [resolvable:$true] %s969
          %975 = dma.hbm_to_vmem [thread:$0]  %s968, 48, %s970, [#allocation9], 16, 16, 1
        $region76: #{vit_forward.1} parent=11 // pred_fallthru
          _
        // Predicated region
        $region77: #{vit_forward.1} parent=11 // pred_check
          %p976 = pneg %p496
        $region78: #{vit_forward.1} parent=11 // pred_check_branch
          %978 = sbr.rel (%p976) target = $region80
        $region79: #{vit_forward.1} parent=11 // pred_region
          _
        $region80: #{vit_forward.1} parent=11 // pred_fallthru
          _
        // Predicated region
        $region81: #{vit_forward.1} parent=11 // pred_check
          %p979 = pneg %p517
        $region82: #{vit_forward.1} parent=11 // pred_check_branch
          %981 = sbr.rel (%p979) target = $region84
        $region83: #{vit_forward.1} parent=11 // pred_region
          _
        $region84: #{vit_forward.1} parent=11 // pred_fallthru
          _
        // Predicated region
        $region85: #{vit_forward.1} parent=11 // pred_check
          %p982 = pneg %p538
        $region86: #{vit_forward.1} parent=11 // pred_check_branch
          %984 = sbr.rel (%p982) target = $region88
        $region87: #{vit_forward.1} parent=11 // pred_region
          %986 = vsyncadd [#allocation12], 0
          %s987 = sshll.u32 %s41, 4
          %s988 = int_to_ptr.hbm [resolvable:$true] %s987
          %s989 = sshll.u32 [#allocation11], 4
          %s990 = int_to_ptr.vmem [resolvable:$true] %s989
          %995 = dma.hbm_to_vmem [thread:$0]  %s988, 48, %s990, [#allocation12], 16, 16, 1
        $region88: #{vit_forward.1} parent=11 // pred_fallthru
          _
        // Predicated region
        $region89: #{vit_forward.1} parent=11 // pred_check
          %p996 = pneg %p559
        $region90: #{vit_forward.1} parent=11 // pred_check_branch
          %998 = sbr.rel (%p996) target = $region92
        $region91: #{vit_forward.1} parent=11 // pred_region
          %1000 = vsyncadd [#allocation12], 0
          %s1001 = sshll.u32 %s43, 4
          %s1002 = int_to_ptr.hbm [resolvable:$true] %s1001
          %s1003 = sshll.u32 [#allocation13], 4
          %s1004 = int_to_ptr.vmem [resolvable:$true] %s1003
          %1009 = dma.hbm_to_vmem [thread:$0]  %s1002, 48, %s1004, [#allocation12], 16, 16, 1
        $region92: #{vit_forward.1} parent=11 // pred_fallthru
          _
        // Predicated region
        $region93: #{vit_forward.1} parent=11 // pred_check
          %p1010 = pneg %p580
        $region94: #{vit_forward.1} parent=11 // pred_check_branch
          %1012 = sbr.rel (%p1010) target = $region96
        $region95: #{vit_forward.1} parent=11 // pred_region
          %1014 = vsyncadd [#allocation15], 0
          %s1015 = sshll.u32 %s45, 4
          %s1016 = int_to_ptr.hbm [resolvable:$true] %s1015
          %s1017 = sshll.u32 [#allocation14], 4
          %s1018 = int_to_ptr.vmem [resolvable:$true] %s1017
          %1023 = dma.hbm_to_vmem [thread:$0]  %s1016, 48, %s1018, [#allocation15], 16, 16, 1
        $region96: #{vit_forward.1} parent=11 // pred_fallthru
          _
        // Predicated region
        $region97: #{vit_forward.1} parent=11 // pred_check
          %p1024 = pneg %p601
        $region98: #{vit_forward.1} parent=11 // pred_check_branch
          %1026 = sbr.rel (%p1024) target = $region100
        $region99: #{vit_forward.1} parent=11 // pred_region
          _
        $region100: #{vit_forward.1} parent=11 // pred_fallthru
          _
        // Predicated region
        $region101: #{vit_forward.1} parent=11 // pred_check
          %p1027 = pneg %p622
        $region102: #{vit_forward.1} parent=11 // pred_check_branch
          %1029 = sbr.rel (%p1027) target = $region104
        $region103: #{vit_forward.1} parent=11 // pred_region
          _
        $region104: #{vit_forward.1} parent=11 // pred_fallthru
          _
        // Predicated region
        $region105: #{vit_forward.1} parent=11 // pred_check
          %p1030 = pneg %p643
        $region106: #{vit_forward.1} parent=11 // pred_check_branch
          %1032 = sbr.rel (%p1030) target = $region108
        $region107: #{vit_forward.1} parent=11 // pred_region
          _
        $region108: #{vit_forward.1} parent=11 // pred_fallthru
          _
        // Predicated region
        $region109: #{vit_forward.1} parent=11 // pred_check
          %p1033 = pneg %p664
        $region110: #{vit_forward.1} parent=11 // pred_check_branch
          %1035 = sbr.rel (%p1033) target = $region112
        $region111: #{vit_forward.1} parent=11 // pred_region
          %1037 = vsyncadd [#allocation15], 0
          %s1038 = sshll.u32 %s53, 4
          %s1039 = int_to_ptr.hbm [resolvable:$true] %s1038
          %s1040 = sshll.u32 [#allocation16], 4
          %s1041 = int_to_ptr.vmem [resolvable:$true] %s1040
          %1046 = dma.hbm_to_vmem [thread:$0]  %s1039, 48, %s1041, [#allocation15], 16, 16, 1
        $region112: #{vit_forward.1} parent=11 // pred_fallthru
          _
        // Predicated region
        $region113: #{vit_forward.1} parent=11 // pred_check
          %p1047 = pneg %p685
        $region114: #{vit_forward.1} parent=11 // pred_check_branch
          %1049 = sbr.rel (%p1047) target = $region116
        $region115: #{vit_forward.1} parent=11 // pred_region
          %1051 = vsyncadd [#allocation18], 0
          %s1052 = sshll.u32 %s55, 4
          %s1053 = int_to_ptr.hbm [resolvable:$true] %s1052
          %s1054 = sshll.u32 [#allocation17], 4
          %s1055 = int_to_ptr.vmem [resolvable:$true] %s1054
          %1060 = dma.hbm_to_vmem [thread:$0]  %s1053, 48, %s1055, [#allocation18], 16, 16, 1
        $region116: #{vit_forward.1} parent=11 // pred_fallthru
          _
        // Predicated region
        $region117: #{vit_forward.1} parent=11 // pred_check
          %p1061 = pneg %p706
        $region118: #{vit_forward.1} parent=11 // pred_check_branch
          %1063 = sbr.rel (%p1061) target = $region120
        $region119: #{vit_forward.1} parent=11 // pred_region
          %1065 = vsyncadd [#allocation18], 0
          %s1066 = sshll.u32 %s57, 4
          %s1067 = int_to_ptr.hbm [resolvable:$true] %s1066
          %s1068 = sshll.u32 [#allocation19], 4
          %s1069 = int_to_ptr.vmem [resolvable:$true] %s1068
          %1074 = dma.hbm_to_vmem [thread:$0]  %s1067, 48, %s1069, [#allocation18], 16, 16, 1
        $region120: #{vit_forward.1} parent=11 // pred_fallthru
          _
        // Predicated region
        $region121: #{vit_forward.1} parent=11 // pred_check
          %p1075 = pneg %p727
        $region122: #{vit_forward.1} parent=11 // pred_check_branch
          %1077 = sbr.rel (%p1075) target = $region124
        $region123: #{vit_forward.1} parent=11 // pred_region
          _
        $region124: #{vit_forward.1} parent=11 // pred_fallthru
          _
        // Predicated region
        $region125: #{vit_forward.1} parent=11 // pred_check
          %p1078 = pneg %p748
        $region126: #{vit_forward.1} parent=11 // pred_check_branch
          %1080 = sbr.rel (%p1078) target = $region128
        $region127: #{vit_forward.1} parent=11 // pred_region
          %1082 = vsyncadd [#allocation21], 0
          %s1083 = sshll.u32 %s61, 4
          %s1084 = int_to_ptr.hbm [resolvable:$true] %s1083
          %s1085 = sshll.u32 [#allocation20], 4
          %s1086 = int_to_ptr.vmem [resolvable:$true] %s1085
          %1091 = dma.hbm_to_vmem [thread:$0]  %s1084, 48, %s1086, [#allocation21], 16, 16, 1
        $region128: #{vit_forward.1} parent=11 // pred_fallthru
          _
        // Predicated region
        $region129: #{vit_forward.1} parent=11 // pred_check
          %p1092 = pneg %p769
        $region130: #{vit_forward.1} parent=11 // pred_check_branch
          %1094 = sbr.rel (%p1092) target = $region132
        $region131: #{vit_forward.1} parent=11 // pred_region
          _
        $region132: #{vit_forward.1} parent=11 // pred_fallthru
          _
        // Predicated region
        $region133: #{vit_forward.1} parent=11 // pred_check
          %p1095 = pneg %p790
        $region134: #{vit_forward.1} parent=11 // pred_check_branch
          %1097 = sbr.rel (%p1095) target = $region136
        $region135: #{vit_forward.1} parent=11 // pred_region
          %1099 = vsyncadd [#allocation21], 0
          %s1100 = sshll.u32 %s65, 4
          %s1101 = int_to_ptr.hbm [resolvable:$true] %s1100
          %s1102 = sshll.u32 [#allocation22], 4
          %s1103 = int_to_ptr.vmem [resolvable:$true] %s1102
          %1108 = dma.hbm_to_vmem [thread:$0]  %s1101, 48, %s1103, [#allocation21], 16, 16, 1
        $region136: #{vit_forward.1} parent=11 // pred_fallthru
          _
        // Predicated region
        $region137: #{vit_forward.1} parent=11 // pred_check
          %p1109 = pneg %p811
        $region138: #{vit_forward.1} parent=11 // pred_check_branch
          %1111 = sbr.rel (%p1109) target = $region140
        $region139: #{vit_forward.1} parent=11 // pred_region
          _
        $region140: #{vit_forward.1} parent=11 // pred_fallthru
          _
        // Predicated region
        $region141: #{vit_forward.1} parent=11 // pred_check
          %p1112 = pneg %p832
        $region142: #{vit_forward.1} parent=11 // pred_check_branch
          %1114 = sbr.rel (%p1112) target = $region144
        $region143: #{vit_forward.1} parent=11 // pred_region
          _
        $region144: #{vit_forward.1} parent=11 // pred_fallthru
          _
      $region12: #{vit_forward.1} parent=5 // pred_fallthru
        _
      %p1115 = scmp.lt.s32.totalorder %s87, 2
      // Predicated region
      $region145: #{vit_forward.1} parent=5 // pred_check
        %p1116 = pneg %p1115
      $region146: #{vit_forward.1} parent=5 // pred_check_branch
        %1118 = sbr.rel (%p1116) target = $region148
      $region147: #{vit_forward.1} parent=5 // pred_region
        // Predicated region
        $region149: #{vit_forward.1} parent=147 // pred_check
          %p1119 = pneg %p107
        $region150: #{vit_forward.1} parent=147 // pred_check_branch
          %1121 = sbr.rel (%p1119) target = $region152
        $region151: #{vit_forward.1} parent=147 // pred_region
          %p1122 = scmp.lt.s32.totalorder %s87, 1
          %s1123 = scalar_select %p1122, %s87, 1
          %s1124 = smul.addr %s1123, 2
          %s1125 = smul.addr %s1124, 8
          %s1126 = scalar_lea.vmem %s1, %s1125
        $region152: #{vit_forward.1} parent=147 // pred_fallthru
          _
        // Predicated region
        $region153: #{vit_forward.1} parent=147 // pred_check
          %p1127 = pneg %p133
        $region154: #{vit_forward.1} parent=147 // pred_check_branch
          %1129 = sbr.rel (%p1127) target = $region156
        $region155: #{vit_forward.1} parent=147 // pred_region
          %p1130 = scmp.lt.s32.totalorder %s87, 1
          %s1131 = scalar_select %p1130, %s87, 1
          %s1132 = smul.addr %s1131, 8
          %s1133 = scalar_lea.vmem %s3, %s1132
        $region156: #{vit_forward.1} parent=147 // pred_fallthru
          _
      $region148: #{vit_forward.1} parent=5 // pred_fallthru
        _
      %p1134 = scmp.le.s32.totalorder 1, %s87
      %p1135 = scmp.lt.s32.totalorder %s87, 3
      %p1136 = pnand %p1134, %p1135
      %p1137 = pneg %p1136
      // Predicated region
      $region157: #{vit_forward.1} parent=5 // pred_check
        _
      $region158: #{vit_forward.1} parent=5 // pred_check_branch
        %1139 = sbr.rel (%p1136) target = $region160
      $region159: #{vit_forward.1} parent=5 // pred_region
        %s1140 = ssub.s32 %s87, 1
        // Predicated region
        $region161: #{vit_forward.1} parent=159 // pred_check
          %p1141 = pneg %p349
        $region162: #{vit_forward.1} parent=159 // pred_check_branch
          %1143 = sbr.rel (%p1141) target = $region164
        $region163: #{vit_forward.1} parent=159 // pred_region
          %1145 = dma.done [#allocation3], 48
        $region164: #{vit_forward.1} parent=159 // pred_fallthru
          _
        // Predicated region
        $region165: #{vit_forward.1} parent=159 // pred_check
          %p1146 = pneg %p391
        $region166: #{vit_forward.1} parent=159 // pred_check_branch
          %1148 = sbr.rel (%p1146) target = $region168
        $region167: #{vit_forward.1} parent=159 // pred_region
          %1150 = dma.done [#allocation6], 48
        $region168: #{vit_forward.1} parent=159 // pred_fallthru
          _
        // Predicated region
        $region169: #{vit_forward.1} parent=159 // pred_check
          %p1151 = pneg %p433
        $region170: #{vit_forward.1} parent=159 // pred_check_branch
          %1153 = sbr.rel (%p1151) target = $region172
        $region171: #{vit_forward.1} parent=159 // pred_region
          %1155 = dma.done [#allocation6], 48
        $region172: #{vit_forward.1} parent=159 // pred_fallthru
          _
        // Predicated region
        $region173: #{vit_forward.1} parent=159 // pred_check
          %p1156 = pneg %p454
        $region174: #{vit_forward.1} parent=159 // pred_check_branch
          %1158 = sbr.rel (%p1156) target = $region176
        $region175: #{vit_forward.1} parent=159 // pred_region
          %1160 = dma.done [#allocation9], 48
        $region176: #{vit_forward.1} parent=159 // pred_fallthru
          _
        // Predicated region
        $region177: #{vit_forward.1} parent=159 // pred_check
          %p1161 = pneg %p475
        $region178: #{vit_forward.1} parent=159 // pred_check_branch
          %1163 = sbr.rel (%p1161) target = $region180
        $region179: #{vit_forward.1} parent=159 // pred_region
          %1165 = dma.done [#allocation9], 48
        $region180: #{vit_forward.1} parent=159 // pred_fallthru
          _
        // Predicated region
        $region181: #{vit_forward.1} parent=159 // pred_check
          %p1166 = pneg %p538
        $region182: #{vit_forward.1} parent=159 // pred_check_branch
          %1168 = sbr.rel (%p1166) target = $region184
        $region183: #{vit_forward.1} parent=159 // pred_region
          %1170 = dma.done [#allocation12], 48
        $region184: #{vit_forward.1} parent=159 // pred_fallthru
          _
        // Predicated region
        $region185: #{vit_forward.1} parent=159 // pred_check
          %p1171 = pneg %p559
        $region186: #{vit_forward.1} parent=159 // pred_check_branch
          %1173 = sbr.rel (%p1171) target = $region188
        $region187: #{vit_forward.1} parent=159 // pred_region
          %1175 = dma.done [#allocation12], 48
        $region188: #{vit_forward.1} parent=159 // pred_fallthru
          _
        // Predicated region
        $region189: #{vit_forward.1} parent=159 // pred_check
          %p1176 = pneg %p580
        $region190: #{vit_forward.1} parent=159 // pred_check_branch
          %1178 = sbr.rel (%p1176) target = $region192
        $region191: #{vit_forward.1} parent=159 // pred_region
          %1180 = dma.done [#allocation15], 48
        $region192: #{vit_forward.1} parent=159 // pred_fallthru
          _
        // Predicated region
        $region193: #{vit_forward.1} parent=159 // pred_check
          %p1181 = pneg %p664
        $region194: #{vit_forward.1} parent=159 // pred_check_branch
          %1183 = sbr.rel (%p1181) target = $region196
        $region195: #{vit_forward.1} parent=159 // pred_region
          %1185 = dma.done [#allocation15], 48
        $region196: #{vit_forward.1} parent=159 // pred_fallthru
          _
        // Predicated region
        $region197: #{vit_forward.1} parent=159 // pred_check
          %p1186 = pneg %p685
        $region198: #{vit_forward.1} parent=159 // pred_check_branch
          %1188 = sbr.rel (%p1186) target = $region200
        $region199: #{vit_forward.1} parent=159 // pred_region
          %1190 = dma.done [#allocation18], 48
        $region200: #{vit_forward.1} parent=159 // pred_fallthru
          _
        // Predicated region
        $region201: #{vit_forward.1} parent=159 // pred_check
          %p1191 = pneg %p706
        $region202: #{vit_forward.1} parent=159 // pred_check_branch
          %1193 = sbr.rel (%p1191) target = $region204
        $region203: #{vit_forward.1} parent=159 // pred_region
          %1195 = dma.done [#allocation18], 48
        $region204: #{vit_forward.1} parent=159 // pred_fallthru
          _
        // Predicated region
        $region205: #{vit_forward.1} parent=159 // pred_check
          %p1196 = pneg %p748
        $region206: #{vit_forward.1} parent=159 // pred_check_branch
          %1198 = sbr.rel (%p1196) target = $region208
        $region207: #{vit_forward.1} parent=159 // pred_region
          %1200 = dma.done [#allocation21], 48
        $region208: #{vit_forward.1} parent=159 // pred_fallthru
          _
        // Predicated region
        $region209: #{vit_forward.1} parent=159 // pred_check
          %p1201 = pneg %p790
        $region210: #{vit_forward.1} parent=159 // pred_check_branch
          %1203 = sbr.rel (%p1201) target = $region212
        $region211: #{vit_forward.1} parent=159 // pred_region
          %1205 = dma.done [#allocation21], 48
        $region212: #{vit_forward.1} parent=159 // pred_fallthru
          _
        %p1206 = scmp.lt.s32.totalorder %s92, 1
        %s1207 = scalar_select %p1206, %s92, 1
        %s1208 = smul.addr %s1207, 2
        %s1209 = smul.addr %s1208, 8
        %s1210 = scalar_lea.vmem %s1, %s1209
        %p1211 = pneg %p113
        %p1212 = pneg %p110
        %p1213 = scmp.lt.s32.totalorder %s92, 1
        %s1214 = scalar_select %p1213, %s92, 1
        %s1215 = smul.addr %s1214, 8
        %s1216 = scalar_lea.vmem %s3, %s1215
        %p1217 = pneg %p139
        %p1218 = pneg %p136
        %p1219 = pneg %p160
        %p1220 = pneg %p157
        %p1221 = pneg %p181
        %p1222 = pneg %p178
        %p1223 = pneg %p202
        %p1224 = pneg %p199
        %p1225 = pneg %p223
        %p1226 = pneg %p220
        %p1227 = pneg %p244
        %p1228 = pneg %p241
        %p1229 = pneg %p265
        %p1230 = pneg %p262
        %p1231 = pneg %p286
        %p1232 = pneg %p283
        %p1233 = pneg %p307
        %p1234 = pneg %p304
        %p1235 = pneg %p328
        %p1236 = pneg %p325
        %p1237 = pneg %p349
        %p1238 = pneg %p346
        %p1239 = pneg %p370
        %p1240 = pneg %p367
        %p1241 = pneg %p391
        %p1242 = pneg %p388
        %p1243 = pneg %p412
        %p1244 = pneg %p409
        %p1245 = pneg %p433
        %p1246 = pneg %p430
        %p1247 = pneg %p454
        %p1248 = pneg %p451
        %p1249 = pneg %p475
        %p1250 = pneg %p472
        %p1251 = pneg %p496
        %p1252 = pneg %p493
        %p1253 = pneg %p517
        %p1254 = pneg %p514
        %p1255 = pneg %p538
        %p1256 = pneg %p535
        %p1257 = pneg %p559
        %p1258 = pneg %p556
        %p1259 = pneg %p580
        %p1260 = pneg %p577
        %p1261 = pneg %p601
        %p1262 = pneg %p598
        %p1263 = pneg %p622
        %p1264 = pneg %p619
        %p1265 = pneg %p643
        %p1266 = pneg %p640
        %p1267 = pneg %p664
        %p1268 = pneg %p661
        %p1269 = pneg %p685
        %p1270 = pneg %p682
        %p1271 = pneg %p706
        %p1272 = pneg %p703
        %p1273 = pneg %p727
        %p1274 = pneg %p724
        %p1275 = pneg %p748
        %p1276 = pneg %p745
        %p1277 = pneg %p769
        %p1278 = pneg %p766
        %p1279 = pneg %p790
        %p1280 = pneg %p787
        %p1281 = pneg %p811
        %p1282 = pneg %p808
        %p1283 = pneg %p832
        %p1284 = pneg %p829
        %p1285 = pneg %p858
        %p1286 = pneg %p855
        %s1287 = sand.u32 %s845, 1
        %s1288 = scalar_lea.sflag [#allocation4], %s1287
        %s1289 = sand.u32 %s845, 1
        %s1290 = smul.addr %s1289, 8
        %s1291 = scalar_lea.vmem [#allocation23], %s1290
        %p1292 = scmp.lt.s32.totalorder %s92, 1
        %s1293 = scalar_select %p1292, %s92, 1
        %s1294 = smul.addr %s1293, 2
        %s1295 = smul.addr %s1294, 8
        %s1296 = scalar_lea.vmem %s1, %s1295
        %p1297 = scmp.lt.s32.totalorder %s92, 1
        %s1298 = scalar_select %p1297, %s92, 1
        %s1299 = smul.addr %s1298, 8
        %s1300 = scalar_lea.vmem %s3, %s1299
        %v1301 = vld [vmem:[%s1296] sm:$0xff]
        %v1302 = vld [vmem:[%s1296 + $0x8] sm:$0xff]
        %v1303 = vld [vmem:[%s5] sm:$0xff]
        %v1304 = vld [vmem:[%s5 + $0x8] sm:$0xff]
        %v1305 = vld [vmem:[%s5 + $0x10] sm:$0xff]
        %v1306 = vld [vmem:[%s5 + $0x18] sm:$0xff]
        %v1307 = vld [vmem:[%s5 + $0x20] sm:$0xf]
        %v1308 = vld [vmem:[%s7] sm:$0x1]
        %v1310 = vperm.slane %v1308, 0
        %vm1312 = vcmask 293888
        %v1314 = vsel %vm1312, %v1301, 0
        %v1317 = vsel %vm1312, %v1302, 0
        %vm1319 = vcmask 1043456
        %v1321 = vsel %vm1319, %v1307, 0
        %1323 = vmatpush.msra.mxu0 0.0
        %1324 = vmatpush.msra.mxu0 0.0
        %1325 = vmatpush.msra.mxu0 0.0
        %1326 = vmatpush.msra.mxu0 0.0
        %1327 = vmatpush.msra.mxu0 0.0
        %1328 = vmatpush.msra.mxu0 0.0
        %1329 = vmatpush.msra.mxu0 0.0
        %1330 = vmatpush.msra.mxu0 0.0
        %1331 = vmatpush.msra.mxu0 0.0
        %1332 = vmatpush.msra.mxu0 0.0
        %1333 = vmatpush.msra.mxu0 0.0
        %1334 = vmatpush.msra.mxu0 %v1321
        %1335 = vmatpush.msra.mxu0 %v1306
        %1336 = vmatpush.msra.mxu0 %v1305
        %1337 = vmatpush.msra.mxu0 %v1304
        %1338 = vmatpush.msra.mxu0 %v1303
        %1339 = vmatmul.f32.gmra.mxu0 %v1314
        %v1340 = vpop.f32.mrf.mxu0
        %v1341 = vadd.f32 %v1310, %v1340
        %1342 = vmatmul.f32.gmra.mxu0 %v1317
        %v1343 = vpop.f32.mrf.mxu0
        %v1344 = vadd.f32 %v1310, %v1343
        %1345 = vdwg.mxu0
        %v1346 = vld [vmem:[%s9] sm:$0xff]
        %v1347 = vld [vmem:[%s9 + $0x8] sm:$0xff]
        %v1348 = vadd.f32 %v1341, %v1346
        %v1349 = vadd.f32 %v1344, %v1347
        %v1350 = vld [vmem:[%s11] sm:$0x1]
        %v1351 = vld [vmem:[%s13] sm:$0x1]
        %vm1352 = vcmask 130048
        %v1353 = vsel %vm1352, %v1348, 0.0
        %1354 = vadd.xlane.f32.xlu0 %v1353
        %v1355 = vpop.xlane.xlu0 %1354
        %v1356 = vsel %vm1352, %v1349, 0.0
        %1357 = vadd.xlane.f32.xlu0 %v1356
        %v1358 = vpop.xlane.xlu0 %1357
        %v1359 = vrcp.pop 16.0
        %v1360 = vmul.f32 16.0, %v1359
        %v1361 = vsub.f32 1.0, %v1360
        %v1362 = vmul.f32 %v1359, %v1361
        %v1363 = vadd.f32 %v1359, %v1362
        %vm1364 = vweird.f32 %v1359
        %v1365 = vsel %vm1364, %v1359, %v1363
        %v1366 = vmul.f32 %v1355, %v1365
        %v1367 = vmul.f32 %v1358, %v1365
        %v1368 = vsub.f32 %v1348, %v1366
        %v1369 = vsub.f32 %v1349, %v1367
        %v1370 = vmul.f32 %v1368, %v1368
        %v1371 = vmul.f32 %v1369, %v1369
        %v1372 = vsel %vm1352, %v1370, 0.0
        %1373 = vadd.xlane.f32.xlu0 %v1372
        %v1374 = vpop.xlane.xlu0 %1373
        %v1375 = vsel %vm1352, %v1371, 0.0
        %1376 = vadd.xlane.f32.xlu0 %v1375
        %v1377 = vpop.xlane.xlu0 %1376
        %v1378 = vmul.f32 %v1374, %v1365
        %v1379 = vmul.f32 %v1377, %v1365
        %v1380 = vadd.f32 %v1378, 1e-05
        %v1381 = vadd.f32 %v1379, 1e-05
        %v1382 = vrsqrt.pop %v1380
        %v1383 = vmul.f32 %v1382, %v1380
        %v1384 = vmul.f32 %v1383, %v1382
        %v1385 = vmul.f32 0.5, %v1384
        %v1386 = vsub.f32 1.5, %v1385
        %v1387 = vmul.f32 %v1382, %v1386
        %vm1388 = vweird.f32 %v1380
        %vm1389 = vweird.f32 %v1382
        %vm1390 = vmor %vm1388, %vm1389
        %v1391 = vsel %vm1390, %v1382, %v1387
        %v1392 = vrsqrt.pop %v1381
        %v1393 = vmul.f32 %v1392, %v1381
        %v1394 = vmul.f32 %v1393, %v1392
        %v1395 = vmul.f32 0.5, %v1394
        %v1396 = vsub.f32 1.5, %v1395
        %v1397 = vmul.f32 %v1392, %v1396
        %vm1398 = vweird.f32 %v1381
        %vm1399 = vweird.f32 %v1392
        %vm1400 = vmor %vm1398, %vm1399
        %v1401 = vsel %vm1400, %v1392, %v1397
        %v1402 = vmul.f32 %v1368, %v1391
        %v1403 = vmul.f32 %v1369, %v1401
        %v1405 = vperm.slane %v1350, 0
        %v1407 = vmul.f32 %v1402, %v1405
        %v1408 = vmul.f32 %v1403, %v1405
        %v1410 = vperm.slane %v1351, 0
        %v1412 = vadd.f32 %v1407, %v1410
        %v1413 = vadd.f32 %v1408, %v1410
        %v1414 = vld [vmem:[%s15] sm:$0xff]
        %v1415 = vld [vmem:[%s15 + $0x8] sm:$0xff]
        %v1417 = vsel %vm1352, %v1412, 0
        %v1420 = vsel %vm1352, %v1413, 0
        %1422 = vmatpush.msra.mxu0 0.0
        %1423 = vmatpush.msra.mxu0 0.0
        %1424 = vmatpush.msra.mxu0 0.0
        %1425 = vmatpush.msra.mxu0 0.0
        %1426 = vmatpush.msra.mxu0 0.0
        %1427 = vmatpush.msra.mxu0 0.0
        %1428 = vmatpush.msra.mxu0 0.0
        %1429 = vmatpush.msra.mxu0 0.0
        %1430 = vmatpush.msra.mxu0 0.0
        %1431 = vmatpush.msra.mxu0 0.0
        %1432 = vmatpush.msra.mxu0 0.0
        %1433 = vmatpush.msra.mxu0 0.0
        %1434 = vmatpush.msra.mxu0 0.0
        %1435 = vmatpush.msra.mxu0 0.0
        %1436 = vmatpush.msra.mxu0 %v1415
        %1437 = vmatpush.msra.mxu0 %v1414
        %1438 = vmatmul.f32.gmra.mxu0 %v1417
        %v1439 = vpop.f32.mrf.mxu0
        %v1440 = vadd.f32 0.0, %v1439
        %1441 = vmatmul.f32.gmra.mxu0 %v1420
        %v1442 = vpop.f32.mrf.mxu0
        %v1443 = vadd.f32 0.0, %v1442
        %1444 = vdwg.mxu0
        %v1445 = vlaneseq
        %v1446 = vand.u32 %v1445, 127
        %vm1447 = vcmp.ge.s32.totalorder %v1446, 0
        %vm1448 = vcmp.lt.s32.totalorder %v1446, 4
        %vm1449 = vmand %vm1447, %vm1448
        %vm1450 = vcmp.ge.s32.totalorder %v1446, 4
        %vm1451 = vcmp.lt.s32.totalorder %v1446, 8
        %vm1452 = vmand %vm1450, %vm1451
        %vm1453 = vcmp.ge.s32.totalorder %v1446, 8
        %vm1454 = vcmp.lt.s32.totalorder %v1446, 12
        %vm1455 = vmand %vm1453, %vm1454
        %vm1456 = vcmp.ge.s32.totalorder %v1446, 12
        %vm1457 = vcmp.lt.s32.totalorder %v1446, 16
        %vm1458 = vmand %vm1456, %vm1457
        %v1459 = vmul.f32 %v1440, 0.25
        %v1460 = vmul.f32 %v1443, 0.25
        %v1461 = vsel %vm1449, %v1459, 0.0
        %v1462 = vsel %vm1449, %v1460, 0.0
        %v1463 = vsel %vm1452, %v1459, 0.0
        %v1464 = vsel %vm1452, %v1460, 0.0
        %v1465 = vsel %vm1455, %v1459, 0.0
        %v1466 = vsel %vm1455, %v1460, 0.0
        %v1467 = vsel %vm1458, %v1459, 0.0
        %v1468 = vsel %vm1458, %v1460, 0.0
        %1471 = vrot.lane.b32.xlu0 %v1440, 112
        %v1472 = vpop.permute.xlu0 %1471
        %1473 = vrot.lane.b32.xlu0 %v1443, 112
        %v1474 = vpop.permute.xlu0 %1473
        %v1476 = vsel %vm1352, %v1461, 0
        %v1479 = vsel %vm1352, %v1462, 0
        %v1482 = vsel %vm1352, %v1463, 0
        %v1485 = vsel %vm1352, %v1464, 0
        %v1488 = vsel %vm1352, %v1465, 0
        %v1491 = vsel %vm1352, %v1466, 0
        %v1494 = vsel %vm1352, %v1467, 0
        %v1497 = vsel %vm1352, %v1468, 0
        %v1499 = vsel %vm1352, %v1472, 0
        %v1501 = vsel %vm1352, %v1474, 0
        %1503 = vmatpush.xpose.msra.mxu0 0.0
        %1504 = vmatpush.xpose.msra.mxu0 0.0
        %1505 = vmatpush.xpose.msra.mxu0 0.0
        %1506 = vmatpush.xpose.msra.mxu0 0.0
        %1507 = vmatpush.xpose.msra.mxu0 0.0
        %1508 = vmatpush.xpose.msra.mxu0 0.0
        %1509 = vmatpush.xpose.msra.mxu0 0.0
        %1510 = vmatpush.xpose.msra.mxu0 0.0
        %1511 = vmatpush.xpose.msra.mxu0 0.0
        %1512 = vmatpush.xpose.msra.mxu0 0.0
        %1513 = vmatpush.xpose.msra.mxu0 0.0
        %1514 = vmatpush.xpose.msra.mxu0 0.0
        %1515 = vmatpush.xpose.msra.mxu0 0.0
        %1516 = vmatpush.xpose.msra.mxu0 0.0
        %1517 = vmatpush.xpose.msra.mxu0 %v1501
        %1518 = vmatpush.xpose.msra.mxu0 %v1499
        %1519 = vmatmul.f32.gmra.mxu0 %v1476
        %v1520 = vpop.f32.mrf.mxu0
        %v1521 = vadd.f32 0.0, %v1520
        %1522 = vmatmul.f32.gmra.mxu0 %v1479
        %v1523 = vpop.f32.mrf.mxu0
        %v1524 = vadd.f32 0.0, %v1523
        %1525 = vmatmul.f32.gmra.mxu0 %v1482
        %v1526 = vpop.f32.mrf.mxu0
        %v1527 = vadd.f32 0.0, %v1526
        %1528 = vmatmul.f32.gmra.mxu0 %v1485
        %v1529 = vpop.f32.mrf.mxu0
        %v1530 = vadd.f32 0.0, %v1529
        %1531 = vmatmul.f32.gmra.mxu0 %v1488
        %v1532 = vpop.f32.mrf.mxu0
        %v1533 = vadd.f32 0.0, %v1532
        %1534 = vmatmul.f32.gmra.mxu0 %v1491
        %v1535 = vpop.f32.mrf.mxu0
        %v1536 = vadd.f32 0.0, %v1535
        %1537 = vmatmul.f32.gmra.mxu0 %v1494
        %v1538 = vpop.f32.mrf.mxu0
        %v1539 = vadd.f32 0.0, %v1538
        %1540 = vmatmul.f32.gmra.mxu0 %v1497
        %v1541 = vpop.f32.mrf.mxu0
        %v1542 = vadd.f32 0.0, %v1541
        %1543 = vdwg.mxu0
        %v1544 = vsel %vm1352, %v1521, -inf
        %1545 = vmax.xlane.f32.xlu0 %v1544
        %v1546 = vpop.xlane.xlu0 %1545
        %v1547 = vsel %vm1352, %v1524, -inf
        %1548 = vmax.xlane.f32.xlu0 %v1547
        %v1549 = vpop.xlane.xlu0 %1548
        %v1550 = vsel %vm1352, %v1527, -inf
        %1551 = vmax.xlane.f32.xlu0 %v1550
        %v1552 = vpop.xlane.xlu0 %1551
        %v1553 = vsel %vm1352, %v1530, -inf
        %1554 = vmax.xlane.f32.xlu0 %v1553
        %v1555 = vpop.xlane.xlu0 %1554
        %v1556 = vsel %vm1352, %v1533, -inf
        %1557 = vmax.xlane.f32.xlu0 %v1556
        %v1558 = vpop.xlane.xlu0 %1557
        %v1559 = vsel %vm1352, %v1536, -inf
        %1560 = vmax.xlane.f32.xlu0 %v1559
        %v1561 = vpop.xlane.xlu0 %1560
        %v1562 = vsel %vm1352, %v1539, -inf
        %1563 = vmax.xlane.f32.xlu0 %v1562
        %v1564 = vpop.xlane.xlu0 %1563
        %v1565 = vsel %vm1352, %v1542, -inf
        %1566 = vmax.xlane.f32.xlu0 %v1565
        %v1567 = vpop.xlane.xlu0 %1566
        %v1568 = vsub.f32 %v1521, %v1546
        %v1569 = vsub.f32 %v1524, %v1549
        %v1570 = vsub.f32 %v1527, %v1552
        %v1571 = vsub.f32 %v1530, %v1555
        %v1572 = vsub.f32 %v1533, %v1558
        %v1573 = vsub.f32 %v1536, %v1561
        %v1574 = vsub.f32 %v1539, %v1564
        %v1575 = vsub.f32 %v1542, %v1567
        %v1576 = vmul.f32 %v1568, 1.442695
        %v1577 = vpow.pop %v1576
        %v1578 = vmul.f32 %v1569, 1.442695
        %v1579 = vpow.pop %v1578
        %v1580 = vmul.f32 %v1570, 1.442695
        %v1581 = vpow.pop %v1580
        %v1582 = vmul.f32 %v1571, 1.442695
        %v1583 = vpow.pop %v1582
        %v1584 = vmul.f32 %v1572, 1.442695
        %v1585 = vpow.pop %v1584
        %v1586 = vmul.f32 %v1573, 1.442695
        %v1587 = vpow.pop %v1586
        %v1588 = vmul.f32 %v1574, 1.442695
        %v1589 = vpow.pop %v1588
        %v1590 = vmul.f32 %v1575, 1.442695
        %v1591 = vpow.pop %v1590
        %v1592 = vsel %vm1352, %v1577, 0.0
        %1593 = vadd.xlane.f32.xlu0 %v1592
        %v1594 = vpop.xlane.xlu0 %1593
        %v1595 = vsel %vm1352, %v1579, 0.0
        %1596 = vadd.xlane.f32.xlu0 %v1595
        %v1597 = vpop.xlane.xlu0 %1596
        %v1598 = vsel %vm1352, %v1581, 0.0
        %1599 = vadd.xlane.f32.xlu0 %v1598
        %v1600 = vpop.xlane.xlu0 %1599
        %v1601 = vsel %vm1352, %v1583, 0.0
        %1602 = vadd.xlane.f32.xlu0 %v1601
        %v1603 = vpop.xlane.xlu0 %1602
        %v1604 = vsel %vm1352, %v1585, 0.0
        %1605 = vadd.xlane.f32.xlu0 %v1604
        %v1606 = vpop.xlane.xlu0 %1605
        %v1607 = vsel %vm1352, %v1587, 0.0
        %1608 = vadd.xlane.f32.xlu0 %v1607
        %v1609 = vpop.xlane.xlu0 %1608
        %v1610 = vsel %vm1352, %v1589, 0.0
        %1611 = vadd.xlane.f32.xlu0 %v1610
        %v1612 = vpop.xlane.xlu0 %1611
        %v1613 = vsel %vm1352, %v1591, 0.0
        %1614 = vadd.xlane.f32.xlu0 %v1613
        %v1615 = vpop.xlane.xlu0 %1614
        %v1616 = vrcp.pop %v1594
        %v1617 = vmul.f32 %v1594, %v1616
        %v1618 = vsub.f32 1.0, %v1617
        %v1619 = vmul.f32 %v1616, %v1618
        %v1620 = vadd.f32 %v1616, %v1619
        %vm1621 = vweird.f32 %v1594
        %vm1622 = vweird.f32 %v1616
        %vm1623 = vmor %vm1621, %vm1622
        %v1624 = vsel %vm1623, %v1616, %v1620
        %v1625 = vand.u32 2147483647, %v1594
        %vm1626 = vcmp.eq.f32.partialorder %v1625, 8.507059e+37
        %v1627 = vand.u32 %v1594, 2147483648
        %v1628 = vor.u32 1.1754944e-38, %v1627
        %v1629 = vsel %vm1626, %v1628, %v1624
        %v1630 = vmul.f32 %v1577, %v1629
        %v1631 = vrcp.pop %v1597
        %v1632 = vmul.f32 %v1597, %v1631
        %v1633 = vsub.f32 1.0, %v1632
        %v1634 = vmul.f32 %v1631, %v1633
        %v1635 = vadd.f32 %v1631, %v1634
        %vm1636 = vweird.f32 %v1597
        %vm1637 = vweird.f32 %v1631
        %vm1638 = vmor %vm1636, %vm1637
        %v1639 = vsel %vm1638, %v1631, %v1635
        %v1640 = vand.u32 2147483647, %v1597
        %vm1641 = vcmp.eq.f32.partialorder %v1640, 8.507059e+37
        %v1642 = vand.u32 %v1597, 2147483648
        %v1643 = vor.u32 1.1754944e-38, %v1642
        %v1644 = vsel %vm1641, %v1643, %v1639
        %v1645 = vmul.f32 %v1579, %v1644
        %v1646 = vrcp.pop %v1600
        %v1647 = vmul.f32 %v1600, %v1646
        %v1648 = vsub.f32 1.0, %v1647
        %v1649 = vmul.f32 %v1646, %v1648
        %v1650 = vadd.f32 %v1646, %v1649
        %vm1651 = vweird.f32 %v1600
        %vm1652 = vweird.f32 %v1646
        %vm1653 = vmor %vm1651, %vm1652
        %v1654 = vsel %vm1653, %v1646, %v1650
        %v1655 = vand.u32 2147483647, %v1600
        %vm1656 = vcmp.eq.f32.partialorder %v1655, 8.507059e+37
        %v1657 = vand.u32 %v1600, 2147483648
        %v1658 = vor.u32 1.1754944e-38, %v1657
        %v1659 = vsel %vm1656, %v1658, %v1654
        %v1660 = vmul.f32 %v1581, %v1659
        %v1661 = vrcp.pop %v1603
        %v1662 = vmul.f32 %v1603, %v1661
        %v1663 = vsub.f32 1.0, %v1662
        %v1664 = vmul.f32 %v1661, %v1663
        %v1665 = vadd.f32 %v1661, %v1664
        %vm1666 = vweird.f32 %v1603
        %vm1667 = vweird.f32 %v1661
        %vm1668 = vmor %vm1666, %vm1667
        %v1669 = vsel %vm1668, %v1661, %v1665
        %v1670 = vand.u32 2147483647, %v1603
        %vm1671 = vcmp.eq.f32.partialorder %v1670, 8.507059e+37
        %v1672 = vand.u32 %v1603, 2147483648
        %v1673 = vor.u32 1.1754944e-38, %v1672
        %v1674 = vsel %vm1671, %v1673, %v1669
        %v1675 = vmul.f32 %v1583, %v1674
        %v1676 = vrcp.pop %v1606
        %v1677 = vmul.f32 %v1606, %v1676
        %v1678 = vsub.f32 1.0, %v1677
        %v1679 = vmul.f32 %v1676, %v1678
        %v1680 = vadd.f32 %v1676, %v1679
        %vm1681 = vweird.f32 %v1606
        %vm1682 = vweird.f32 %v1676
        %vm1683 = vmor %vm1681, %vm1682
        %v1684 = vsel %vm1683, %v1676, %v1680
        %v1685 = vand.u32 2147483647, %v1606
        %vm1686 = vcmp.eq.f32.partialorder %v1685, 8.507059e+37
        %v1687 = vand.u32 %v1606, 2147483648
        %v1688 = vor.u32 1.1754944e-38, %v1687
        %v1689 = vsel %vm1686, %v1688, %v1684
        %v1690 = vmul.f32 %v1585, %v1689
        %v1691 = vrcp.pop %v1609
        %v1692 = vmul.f32 %v1609, %v1691
        %v1693 = vsub.f32 1.0, %v1692
        %v1694 = vmul.f32 %v1691, %v1693
        %v1695 = vadd.f32 %v1691, %v1694
        %vm1696 = vweird.f32 %v1609
        %vm1697 = vweird.f32 %v1691
        %vm1698 = vmor %vm1696, %vm1697
        %v1699 = vsel %vm1698, %v1691, %v1695
        %v1700 = vand.u32 2147483647, %v1609
        %vm1701 = vcmp.eq.f32.partialorder %v1700, 8.507059e+37
        %v1702 = vand.u32 %v1609, 2147483648
        %v1703 = vor.u32 1.1754944e-38, %v1702
        %v1704 = vsel %vm1701, %v1703, %v1699
        %v1705 = vmul.f32 %v1587, %v1704
        %v1706 = vrcp.pop %v1612
        %v1707 = vmul.f32 %v1612, %v1706
        %v1708 = vsub.f32 1.0, %v1707
        %v1709 = vmul.f32 %v1706, %v1708
        %v1710 = vadd.f32 %v1706, %v1709
        %vm1711 = vweird.f32 %v1612
        %vm1712 = vweird.f32 %v1706
        %vm1713 = vmor %vm1711, %vm1712
        %v1714 = vsel %vm1713, %v1706, %v1710
        %v1715 = vand.u32 2147483647, %v1612
        %vm1716 = vcmp.eq.f32.partialorder %v1715, 8.507059e+37
        %v1717 = vand.u32 %v1612, 2147483648
        %v1718 = vor.u32 1.1754944e-38, %v1717
        %v1719 = vsel %vm1716, %v1718, %v1714
        %v1720 = vmul.f32 %v1589, %v1719
        %v1721 = vrcp.pop %v1615
        %v1722 = vmul.f32 %v1615, %v1721
        %v1723 = vsub.f32 1.0, %v1722
        %v1724 = vmul.f32 %v1721, %v1723
        %v1725 = vadd.f32 %v1721, %v1724
        %vm1726 = vweird.f32 %v1615
        %vm1727 = vweird.f32 %v1721
        %vm1728 = vmor %vm1726, %vm1727
        %v1729 = vsel %vm1728, %v1721, %v1725
        %v1730 = vand.u32 2147483647, %v1615
        %vm1731 = vcmp.eq.f32.partialorder %v1730, 8.507059e+37
        %v1732 = vand.u32 %v1615, 2147483648
        %v1733 = vor.u32 1.1754944e-38, %v1732
        %v1734 = vsel %vm1731, %v1733, %v1729
        %v1735 = vmul.f32 %v1591, %v1734
        %1736 = vrot.lane.b32.xlu0 %v1440, 96
        %v1737 = vpop.permute.xlu0 %1736
        %1738 = vrot.lane.b32.xlu0 %v1443, 96
        %v1739 = vpop.permute.xlu0 %1738
        %v1743 = vsel %vm1352, %v1630, 0
        %v1746 = vsel %vm1352, %v1645, 0
        %v1749 = vsel %vm1352, %v1660, 0
        %v1752 = vsel %vm1352, %v1675, 0
        %v1755 = vsel %vm1352, %v1690, 0
        %v1758 = vsel %vm1352, %v1705, 0
        %v1761 = vsel %vm1352, %v1720, 0
        %v1764 = vsel %vm1352, %v1735, 0
        %1766 = vmatpush.msra.mxu0 0.0
        %1767 = vmatpush.msra.mxu0 0.0
        %1768 = vmatpush.msra.mxu0 0.0
        %1769 = vmatpush.msra.mxu0 0.0
        %1770 = vmatpush.msra.mxu0 0.0
        %1771 = vmatpush.msra.mxu0 0.0
        %1772 = vmatpush.msra.mxu0 0.0
        %1773 = vmatpush.msra.mxu0 0.0
        %1774 = vmatpush.msra.mxu0 0.0
        %1775 = vmatpush.msra.mxu0 0.0
        %1776 = vmatpush.msra.mxu0 0.0
        %1777 = vmatpush.msra.mxu0 0.0
        %1778 = vmatpush.msra.mxu0 0.0
        %1779 = vmatpush.msra.mxu0 0.0
        %1780 = vmatpush.msra.mxu0 %v1739
        %1781 = vmatpush.msra.mxu0 %v1737
        %1782 = vmatmul.f32.gmra.mxu0 %v1743
        %v1783 = vpop.f32.mrf.mxu0
        %v1784 = vadd.f32 0.0, %v1783
        %1785 = vmatmul.f32.gmra.mxu0 %v1746
        %v1786 = vpop.f32.mrf.mxu0
        %v1787 = vadd.f32 0.0, %v1786
        %1788 = vmatmul.f32.gmra.mxu0 %v1749
        %v1789 = vpop.f32.mrf.mxu0
        %v1790 = vadd.f32 0.0, %v1789
        %1791 = vmatmul.f32.gmra.mxu0 %v1752
        %v1792 = vpop.f32.mrf.mxu0
        %v1793 = vadd.f32 0.0, %v1792
        %1794 = vmatmul.f32.gmra.mxu0 %v1755
        %v1795 = vpop.f32.mrf.mxu0
        %v1796 = vadd.f32 0.0, %v1795
        %1797 = vmatmul.f32.gmra.mxu0 %v1758
        %v1798 = vpop.f32.mrf.mxu0
        %v1799 = vadd.f32 0.0, %v1798
        %1800 = vmatmul.f32.gmra.mxu0 %v1761
        %v1801 = vpop.f32.mrf.mxu0
        %v1802 = vadd.f32 0.0, %v1801
        %1803 = vmatmul.f32.gmra.mxu0 %v1764
        %v1804 = vpop.f32.mrf.mxu0
        %v1805 = vadd.f32 0.0, %v1804
        %1806 = vdwg.mxu0
        %v1807 = vsel %vm1449, %v1784, 0.0
        %v1808 = vsel %vm1449, %v1787, 0.0
        %v1809 = vsel %vm1452, %v1790, 0.0
        %v1810 = vsel %vm1452, %v1793, 0.0
        %v1811 = vadd.f32 %v1807, %v1809
        %v1812 = vadd.f32 %v1808, %v1810
        %v1813 = vsel %vm1455, %v1796, 0.0
        %v1814 = vsel %vm1455, %v1799, 0.0
        %v1815 = vadd.f32 %v1811, %v1813
        %v1816 = vadd.f32 %v1812, %v1814
        %v1817 = vsel %vm1458, %v1802, 0.0
        %v1818 = vsel %vm1458, %v1805, 0.0
        %v1819 = vadd.f32 %v1815, %v1817
        %v1820 = vadd.f32 %v1816, %v1818
        %v1821 = vld [vmem:[%s17] sm:$0xff]
        %v1822 = vld [vmem:[%s17 + $0x8] sm:$0xff]
        %v1824 = vsel %vm1352, %v1819, 0
        %v1827 = vsel %vm1352, %v1820, 0
        %1829 = vmatpush.msra.mxu0 0.0
        %1830 = vmatpush.msra.mxu0 0.0
        %1831 = vmatpush.msra.mxu0 0.0
        %1832 = vmatpush.msra.mxu0 0.0
        %1833 = vmatpush.msra.mxu0 0.0
        %1834 = vmatpush.msra.mxu0 0.0
        %1835 = vmatpush.msra.mxu0 0.0
        %1836 = vmatpush.msra.mxu0 0.0
        %1837 = vmatpush.msra.mxu0 0.0
        %1838 = vmatpush.msra.mxu0 0.0
        %1839 = vmatpush.msra.mxu0 0.0
        %1840 = vmatpush.msra.mxu0 0.0
        %1841 = vmatpush.msra.mxu0 0.0
        %1842 = vmatpush.msra.mxu0 0.0
        %1843 = vmatpush.msra.mxu0 %v1822
        %1844 = vmatpush.msra.mxu0 %v1821
        %1845 = vmatmul.f32.gmra.mxu0 %v1824
        %v1846 = vpop.f32.mrf.mxu0
        %v1847 = vadd.f32 0.0, %v1846
        %1848 = vmatmul.f32.gmra.mxu0 %v1827
        %v1849 = vpop.f32.mrf.mxu0
        %v1850 = vadd.f32 0.0, %v1849
        %1851 = vdwg.mxu0
        %v1852 = vadd.f32 %v1348, %v1847
        %v1853 = vadd.f32 %v1349, %v1850
        %v1854 = vld [vmem:[%s19] sm:$0x1]
        %v1856 = vperm.slane %v1854, 0
        %v1858 = vadd.f32 %v1852, %v1856
        %v1859 = vadd.f32 %v1853, %v1856
        %v1860 = vld [vmem:[%s21] sm:$0x1]
        %v1861 = vld [vmem:[#allocation2] sm:$0x1]
        %v1862 = vsel %vm1352, %v1858, 0.0
        %1863 = vadd.xlane.f32.xlu0 %v1862
        %v1864 = vpop.xlane.xlu0 %1863
        %v1865 = vsel %vm1352, %v1859, 0.0
        %1866 = vadd.xlane.f32.xlu0 %v1865
        %v1867 = vpop.xlane.xlu0 %1866
        %v1868 = vmul.f32 %v1864, %v1365
        %v1869 = vmul.f32 %v1867, %v1365
        %v1870 = vsub.f32 %v1858, %v1868
        %v1871 = vsub.f32 %v1859, %v1869
        %v1872 = vmul.f32 %v1870, %v1870
        %v1873 = vmul.f32 %v1871, %v1871
        %v1874 = vsel %vm1352, %v1872, 0.0
        %1875 = vadd.xlane.f32.xlu0 %v1874
        %v1876 = vpop.xlane.xlu0 %1875
        %v1877 = vsel %vm1352, %v1873, 0.0
        %1878 = vadd.xlane.f32.xlu0 %v1877
        %v1879 = vpop.xlane.xlu0 %1878
        %v1880 = vmul.f32 %v1876, %v1365
        %v1881 = vmul.f32 %v1879, %v1365
        %v1882 = vadd.f32 %v1880, 1e-05
        %v1883 = vadd.f32 %v1881, 1e-05
        %v1884 = vrsqrt.pop %v1882
        %v1885 = vmul.f32 %v1884, %v1882
        %v1886 = vmul.f32 %v1885, %v1884
        %v1887 = vmul.f32 0.5, %v1886
        %v1888 = vsub.f32 1.5, %v1887
        %v1889 = vmul.f32 %v1884, %v1888
        %vm1890 = vweird.f32 %v1882
        %vm1891 = vweird.f32 %v1884
        %vm1892 = vmor %vm1890, %vm1891
        %v1893 = vsel %vm1892, %v1884, %v1889
        %v1894 = vrsqrt.pop %v1883
        %v1895 = vmul.f32 %v1894, %v1883
        %v1896 = vmul.f32 %v1895, %v1894
        %v1897 = vmul.f32 0.5, %v1896
        %v1898 = vsub.f32 1.5, %v1897
        %v1899 = vmul.f32 %v1894, %v1898
        %vm1900 = vweird.f32 %v1883
        %vm1901 = vweird.f32 %v1894
        %vm1902 = vmor %vm1900, %vm1901
        %v1903 = vsel %vm1902, %v1894, %v1899
        %v1904 = vmul.f32 %v1870, %v1893
        %v1905 = vmul.f32 %v1871, %v1903
        %v1907 = vperm.slane %v1860, 0
        %v1909 = vmul.f32 %v1904, %v1907
        %v1910 = vmul.f32 %v1905, %v1907
        %v1912 = vperm.slane %v1861, 0
        %v1914 = vadd.f32 %v1909, %v1912
        %v1915 = vadd.f32 %v1910, %v1912
        %v1916 = vld [vmem:[%s25] sm:$0xff]
        %v1917 = vld [vmem:[%s25 + $0x8] sm:$0xff]
        %v1918 = vld [vmem:[#allocation5] sm:$0x1]
        %v1920 = vperm.slane %v1918, 0
        %v1923 = vsel %vm1352, %v1914, 0
        %v1926 = vsel %vm1352, %v1915, 0
        %1928 = vmatpush.msra.mxu0 0.0
        %1929 = vmatpush.msra.mxu0 0.0
        %1930 = vmatpush.msra.mxu0 0.0
        %1931 = vmatpush.msra.mxu0 0.0
        %1932 = vmatpush.msra.mxu0 0.0
        %1933 = vmatpush.msra.mxu0 0.0
        %1934 = vmatpush.msra.mxu0 0.0
        %1935 = vmatpush.msra.mxu0 0.0
        %1936 = vmatpush.msra.mxu0 0.0
        %1937 = vmatpush.msra.mxu0 0.0
        %1938 = vmatpush.msra.mxu0 0.0
        %1939 = vmatpush.msra.mxu0 0.0
        %1940 = vmatpush.msra.mxu0 0.0
        %1941 = vmatpush.msra.mxu0 0.0
        %1942 = vmatpush.msra.mxu0 %v1917
        %1943 = vmatpush.msra.mxu0 %v1916
        %1944 = vmatmul.f32.gmra.mxu0 %v1923
        %v1945 = vpop.f32.mrf.mxu0
        %v1946 = vadd.f32 %v1920, %v1945
        %1947 = vmatmul.f32.gmra.mxu0 %v1926
        %v1948 = vpop.f32.mrf.mxu0
        %v1949 = vadd.f32 %v1920, %v1948
        %1950 = vdwg.mxu0
        %v1951 = vmul.f32 %v1946, 0.5
        %v1952 = vmul.f32 %v1949, 0.5
        %v1953 = vmul.f32 %v1946, 0.70710677
        %v1954 = vmul.f32 %v1949, 0.70710677
        %v1955 = vmul.f32 %v1953, %v1953
        %v1956 = vmin.f32 16.0, %v1955
        %v1957 = vmul.f32 %v1956, 2.1237322e-06
        %v1958 = vadd.f32 %v1957, 0.00028619796
        %v1959 = vmul.f32 %v1956, %v1958
        %v1960 = vadd.f32 %v1959, 0.0036580483
        %v1961 = vmul.f32 %v1956, %v1960
        %v1962 = vadd.f32 %v1961, 0.05243302
        %v1963 = vmul.f32 %v1956, %v1962
        %v1964 = vadd.f32 %v1963, 0.18741608
        %v1965 = vmul.f32 %v1956, %v1964
        %v1966 = vadd.f32 %v1965, 1.1283791
        %v1967 = vmul.f32 %v1953, %v1966
        %v1968 = vmul.f32 %v1956, 3.8918573e-05
        %v1969 = vadd.f32 %v1968, 0.001143296
        %v1970 = vmul.f32 %v1956, %v1969
        %v1971 = vadd.f32 %v1970, 0.014752088
        %v1972 = vmul.f32 %v1956, %v1971
        %v1973 = vadd.f32 %v1972, 0.112945676
        %v1974 = vmul.f32 %v1956, %v1973
        %v1975 = vadd.f32 %v1974, 0.4994258
        %v1976 = vmul.f32 %v1956, %v1975
        %v1977 = vadd.f32 %v1976, 1.0
        %v1978 = vrcp.pop %v1977
        %v1979 = vmul.f32 %v1977, %v1978
        %v1980 = vsub.f32 1.0, %v1979
        %v1981 = vmul.f32 %v1978, %v1980
        %v1982 = vadd.f32 %v1978, %v1981
        %vm1983 = vweird.f32 %v1977
        %vm1984 = vweird.f32 %v1978
        %vm1985 = vmor %vm1983, %vm1984
        %v1986 = vsel %vm1985, %v1978, %v1982
        %v1987 = vand.u32 2147483647, %v1977
        %vm1988 = vcmp.eq.f32.partialorder %v1987, 8.507059e+37
        %v1989 = vand.u32 %v1977, 2147483648
        %v1990 = vor.u32 1.1754944e-38, %v1989
        %v1991 = vsel %vm1988, %v1990, %v1986
        %v1992 = vmul.f32 %v1967, %v1991
        %v1993 = vmin.f32 %v1992, 1.0
        %v1994 = vmax.f32 %v1993, -1.0
        %v1995 = vmul.f32 %v1954, %v1954
        %v1996 = vmin.f32 16.0, %v1995
        %v1997 = vmul.f32 %v1996, 2.1237322e-06
        %v1998 = vadd.f32 %v1997, 0.00028619796
        %v1999 = vmul.f32 %v1996, %v1998
        %v2000 = vadd.f32 %v1999, 0.0036580483
        %v2001 = vmul.f32 %v1996, %v2000
        %v2002 = vadd.f32 %v2001, 0.05243302
        %v2003 = vmul.f32 %v1996, %v2002
        %v2004 = vadd.f32 %v2003, 0.18741608
        %v2005 = vmul.f32 %v1996, %v2004
        %v2006 = vadd.f32 %v2005, 1.1283791
        %v2007 = vmul.f32 %v1954, %v2006
        %v2008 = vmul.f32 %v1996, 3.8918573e-05
        %v2009 = vadd.f32 %v2008, 0.001143296
        %v2010 = vmul.f32 %v1996, %v2009
        %v2011 = vadd.f32 %v2010, 0.014752088
        %v2012 = vmul.f32 %v1996, %v2011
        %v2013 = vadd.f32 %v2012, 0.112945676
        %v2014 = vmul.f32 %v1996, %v2013
        %v2015 = vadd.f32 %v2014, 0.4994258
        %v2016 = vmul.f32 %v1996, %v2015
        %v2017 = vadd.f32 %v2016, 1.0
        %v2018 = vrcp.pop %v2017
        %v2019 = vmul.f32 %v2017, %v2018
        %v2020 = vsub.f32 1.0, %v2019
        %v2021 = vmul.f32 %v2018, %v2020
        %v2022 = vadd.f32 %v2018, %v2021
        %vm2023 = vweird.f32 %v2017
        %vm2024 = vweird.f32 %v2018
        %vm2025 = vmor %vm2023, %vm2024
        %v2026 = vsel %vm2025, %v2018, %v2022
        %v2027 = vand.u32 2147483647, %v2017
        %vm2028 = vcmp.eq.f32.partialorder %v2027, 8.507059e+37
        %v2029 = vand.u32 %v2017, 2147483648
        %v2030 = vor.u32 1.1754944e-38, %v2029
        %v2031 = vsel %vm2028, %v2030, %v2026
        %v2032 = vmul.f32 %v2007, %v2031
        %v2033 = vmin.f32 %v2032, 1.0
        %v2034 = vmax.f32 %v2033, -1.0
        %v2035 = vadd.f32 %v1994, 1.0
        %v2036 = vadd.f32 %v2034, 1.0
        %v2037 = vmul.f32 %v1951, %v2035
        %v2038 = vmul.f32 %v1952, %v2036
        %v2039 = vld [vmem:[%s29] sm:$0xff]
        %v2040 = vld [vmem:[%s29 + $0x8] sm:$0xff]
        %v2041 = vld [vmem:[%s29 + $0x10] sm:$0xff]
        %v2042 = vld [vmem:[%s29 + $0x18] sm:$0xff]
        %vm2043 = vcmask 261120
        %v2045 = vsel %vm2043, %v2037, 0
        %v2048 = vsel %vm2043, %v2038, 0
        %2050 = vmatpush.msra.mxu0 0.0
        %2051 = vmatpush.msra.mxu0 0.0
        %2052 = vmatpush.msra.mxu0 0.0
        %2053 = vmatpush.msra.mxu0 0.0
        %2054 = vmatpush.msra.mxu0 0.0
        %2055 = vmatpush.msra.mxu0 0.0
        %2056 = vmatpush.msra.mxu0 0.0
        %2057 = vmatpush.msra.mxu0 0.0
        %2058 = vmatpush.msra.mxu0 0.0
        %2059 = vmatpush.msra.mxu0 0.0
        %2060 = vmatpush.msra.mxu0 0.0
        %2061 = vmatpush.msra.mxu0 0.0
        %2062 = vmatpush.msra.mxu0 %v2042
        %2063 = vmatpush.msra.mxu0 %v2041
        %2064 = vmatpush.msra.mxu0 %v2040
        %2065 = vmatpush.msra.mxu0 %v2039
        %2066 = vmatmul.f32.gmra.mxu0 %v2045
        %v2067 = vpop.f32.mrf.mxu0
        %v2068 = vadd.f32 0.0, %v2067
        %2069 = vmatmul.f32.gmra.mxu0 %v2048
        %v2070 = vpop.f32.mrf.mxu0
        %v2071 = vadd.f32 0.0, %v2070
        %2072 = vdwg.mxu0
        %v2073 = vadd.f32 %v1858, %v2068
        %v2074 = vadd.f32 %v1859, %v2071
        %v2075 = vld [vmem:[#allocation7] sm:$0x1]
        %v2077 = vperm.slane %v2075, 0
        %v2079 = vadd.f32 %v2073, %v2077
        %v2080 = vadd.f32 %v2074, %v2077
        %s2081 = scalar_lea.vmem %s11, 1
        %v2082 = vld [vmem:[%s2081] sm:$0x1]
        %s2083 = scalar_lea.vmem %s13, 1
        %v2084 = vld [vmem:[%s2083] sm:$0x1]
        %v2085 = vsel %vm1352, %v2079, 0.0
        %2086 = vadd.xlane.f32.xlu0 %v2085
        %v2087 = vpop.xlane.xlu0 %2086
        %v2088 = vsel %vm1352, %v2080, 0.0
        %2089 = vadd.xlane.f32.xlu0 %v2088
        %v2090 = vpop.xlane.xlu0 %2089
        %v2091 = vmul.f32 %v2087, %v1365
        %v2092 = vmul.f32 %v2090, %v1365
        %v2093 = vsub.f32 %v2079, %v2091
        %v2094 = vsub.f32 %v2080, %v2092
        %v2095 = vmul.f32 %v2093, %v2093
        %v2096 = vmul.f32 %v2094, %v2094
        %v2097 = vsel %vm1352, %v2095, 0.0
        %2098 = vadd.xlane.f32.xlu0 %v2097
        %v2099 = vpop.xlane.xlu0 %2098
        %v2100 = vsel %vm1352, %v2096, 0.0
        %2101 = vadd.xlane.f32.xlu0 %v2100
        %v2102 = vpop.xlane.xlu0 %2101
        %v2103 = vmul.f32 %v2099, %v1365
        %v2104 = vmul.f32 %v2102, %v1365
        %v2105 = vadd.f32 %v2103, 1e-05
        %v2106 = vadd.f32 %v2104, 1e-05
        %v2107 = vrsqrt.pop %v2105
        %v2108 = vmul.f32 %v2107, %v2105
        %v2109 = vmul.f32 %v2108, %v2107
        %v2110 = vmul.f32 0.5, %v2109
        %v2111 = vsub.f32 1.5, %v2110
        %v2112 = vmul.f32 %v2107, %v2111
        %vm2113 = vweird.f32 %v2105
        %vm2114 = vweird.f32 %v2107
        %vm2115 = vmor %vm2113, %vm2114
        %v2116 = vsel %vm2115, %v2107, %v2112
        %v2117 = vrsqrt.pop %v2106
        %v2118 = vmul.f32 %v2117, %v2106
        %v2119 = vmul.f32 %v2118, %v2117
        %v2120 = vmul.f32 0.5, %v2119
        %v2121 = vsub.f32 1.5, %v2120
        %v2122 = vmul.f32 %v2117, %v2121
        %vm2123 = vweird.f32 %v2106
        %vm2124 = vweird.f32 %v2117
        %vm2125 = vmor %vm2123, %vm2124
        %v2126 = vsel %vm2125, %v2117, %v2122
        %v2127 = vmul.f32 %v2093, %v2116
        %v2128 = vmul.f32 %v2094, %v2126
        %v2130 = vperm.slane %v2082, 0
        %v2132 = vmul.f32 %v2127, %v2130
        %v2133 = vmul.f32 %v2128, %v2130
        %v2135 = vperm.slane %v2084, 0
        %v2137 = vadd.f32 %v2132, %v2135
        %v2138 = vadd.f32 %v2133, %v2135
        %s2139 = scalar_lea.vmem %s15, 16
        %v2140 = vld [vmem:[%s2139] sm:$0xff]
        %v2141 = vld [vmem:[%s2139 + $0x8] sm:$0xff]
        %v2143 = vsel %vm1352, %v2137, 0
        %v2146 = vsel %vm1352, %v2138, 0
        %2148 = vmatpush.msra.mxu0 0.0
        %2149 = vmatpush.msra.mxu0 0.0
        %2150 = vmatpush.msra.mxu0 0.0
        %2151 = vmatpush.msra.mxu0 0.0
        %2152 = vmatpush.msra.mxu0 0.0
        %2153 = vmatpush.msra.mxu0 0.0
        %2154 = vmatpush.msra.mxu0 0.0
        %2155 = vmatpush.msra.mxu0 0.0
        %2156 = vmatpush.msra.mxu0 0.0
        %2157 = vmatpush.msra.mxu0 0.0
        %2158 = vmatpush.msra.mxu0 0.0
        %2159 = vmatpush.msra.mxu0 0.0
        %2160 = vmatpush.msra.mxu0 0.0
        %2161 = vmatpush.msra.mxu0 0.0
        %2162 = vmatpush.msra.mxu0 %v2141
        %2163 = vmatpush.msra.mxu0 %v2140
        %2164 = vmatmul.f32.gmra.mxu0 %v2143
        %v2165 = vpop.f32.mrf.mxu0
        %v2166 = vadd.f32 0.0, %v2165
        %2167 = vmatmul.f32.gmra.mxu0 %v2146
        %v2168 = vpop.f32.mrf.mxu0
        %v2169 = vadd.f32 0.0, %v2168
        %2170 = vdwg.mxu0
        %v2171 = vmul.f32 %v2166, 0.25
        %v2172 = vmul.f32 %v2169, 0.25
        %v2173 = vsel %vm1449, %v2171, 0.0
        %v2174 = vsel %vm1449, %v2172, 0.0
        %v2175 = vsel %vm1452, %v2171, 0.0
        %v2176 = vsel %vm1452, %v2172, 0.0
        %v2177 = vsel %vm1455, %v2171, 0.0
        %v2178 = vsel %vm1455, %v2172, 0.0
        %v2179 = vsel %vm1458, %v2171, 0.0
        %v2180 = vsel %vm1458, %v2172, 0.0
        %2183 = vrot.lane.b32.xlu0 %v2166, 112
        %v2184 = vpop.permute.xlu0 %2183
        %2185 = vrot.lane.b32.xlu0 %v2169, 112
        %v2186 = vpop.permute.xlu0 %2185
        %v2188 = vsel %vm1352, %v2173, 0
        %v2191 = vsel %vm1352, %v2174, 0
        %v2194 = vsel %vm1352, %v2175, 0
        %v2197 = vsel %vm1352, %v2176, 0
        %v2200 = vsel %vm1352, %v2177, 0
        %v2203 = vsel %vm1352, %v2178, 0
        %v2206 = vsel %vm1352, %v2179, 0
        %v2209 = vsel %vm1352, %v2180, 0
        %v2211 = vsel %vm1352, %v2184, 0
        %v2213 = vsel %vm1352, %v2186, 0
        %2215 = vmatpush.xpose.msra.mxu0 0.0
        %2216 = vmatpush.xpose.msra.mxu0 0.0
        %2217 = vmatpush.xpose.msra.mxu0 0.0
        %2218 = vmatpush.xpose.msra.mxu0 0.0
        %2219 = vmatpush.xpose.msra.mxu0 0.0
        %2220 = vmatpush.xpose.msra.mxu0 0.0
        %2221 = vmatpush.xpose.msra.mxu0 0.0
        %2222 = vmatpush.xpose.msra.mxu0 0.0
        %2223 = vmatpush.xpose.msra.mxu0 0.0
        %2224 = vmatpush.xpose.msra.mxu0 0.0
        %2225 = vmatpush.xpose.msra.mxu0 0.0
        %2226 = vmatpush.xpose.msra.mxu0 0.0
        %2227 = vmatpush.xpose.msra.mxu0 0.0
        %2228 = vmatpush.xpose.msra.mxu0 0.0
        %2229 = vmatpush.xpose.msra.mxu0 %v2213
        %2230 = vmatpush.xpose.msra.mxu0 %v2211
        %2231 = vmatmul.f32.gmra.mxu0 %v2188
        %v2232 = vpop.f32.mrf.mxu0
        %v2233 = vadd.f32 0.0, %v2232
        %2234 = vmatmul.f32.gmra.mxu0 %v2191
        %v2235 = vpop.f32.mrf.mxu0
        %v2236 = vadd.f32 0.0, %v2235
        %2237 = vmatmul.f32.gmra.mxu0 %v2194
        %v2238 = vpop.f32.mrf.mxu0
        %v2239 = vadd.f32 0.0, %v2238
        %2240 = vmatmul.f32.gmra.mxu0 %v2197
        %v2241 = vpop.f32.mrf.mxu0
        %v2242 = vadd.f32 0.0, %v2241
        %2243 = vmatmul.f32.gmra.mxu0 %v2200
        %v2244 = vpop.f32.mrf.mxu0
        %v2245 = vadd.f32 0.0, %v2244
        %2246 = vmatmul.f32.gmra.mxu0 %v2203
        %v2247 = vpop.f32.mrf.mxu0
        %v2248 = vadd.f32 0.0, %v2247
        %2249 = vmatmul.f32.gmra.mxu0 %v2206
        %v2250 = vpop.f32.mrf.mxu0
        %v2251 = vadd.f32 0.0, %v2250
        %2252 = vmatmul.f32.gmra.mxu0 %v2209
        %v2253 = vpop.f32.mrf.mxu0
        %v2254 = vadd.f32 0.0, %v2253
        %2255 = vdwg.mxu0
        %v2256 = vsel %vm1352, %v2233, -inf
        %2257 = vmax.xlane.f32.xlu0 %v2256
        %v2258 = vpop.xlane.xlu0 %2257
        %v2259 = vsel %vm1352, %v2236, -inf
        %2260 = vmax.xlane.f32.xlu0 %v2259
        %v2261 = vpop.xlane.xlu0 %2260
        %v2262 = vsel %vm1352, %v2239, -inf
        %2263 = vmax.xlane.f32.xlu0 %v2262
        %v2264 = vpop.xlane.xlu0 %2263
        %v2265 = vsel %vm1352, %v2242, -inf
        %2266 = vmax.xlane.f32.xlu0 %v2265
        %v2267 = vpop.xlane.xlu0 %2266
        %v2268 = vsel %vm1352, %v2245, -inf
        %2269 = vmax.xlane.f32.xlu0 %v2268
        %v2270 = vpop.xlane.xlu0 %2269
        %v2271 = vsel %vm1352, %v2248, -inf
        %2272 = vmax.xlane.f32.xlu0 %v2271
        %v2273 = vpop.xlane.xlu0 %2272
        %v2274 = vsel %vm1352, %v2251, -inf
        %2275 = vmax.xlane.f32.xlu0 %v2274
        %v2276 = vpop.xlane.xlu0 %2275
        %v2277 = vsel %vm1352, %v2254, -inf
        %2278 = vmax.xlane.f32.xlu0 %v2277
        %v2279 = vpop.xlane.xlu0 %2278
        %v2280 = vsub.f32 %v2233, %v2258
        %v2281 = vsub.f32 %v2236, %v2261
        %v2282 = vsub.f32 %v2239, %v2264
        %v2283 = vsub.f32 %v2242, %v2267
        %v2284 = vsub.f32 %v2245, %v2270
        %v2285 = vsub.f32 %v2248, %v2273
        %v2286 = vsub.f32 %v2251, %v2276
        %v2287 = vsub.f32 %v2254, %v2279
        %v2288 = vmul.f32 %v2280, 1.442695
        %v2289 = vpow.pop %v2288
        %v2290 = vmul.f32 %v2281, 1.442695
        %v2291 = vpow.pop %v2290
        %v2292 = vmul.f32 %v2282, 1.442695
        %v2293 = vpow.pop %v2292
        %v2294 = vmul.f32 %v2283, 1.442695
        %v2295 = vpow.pop %v2294
        %v2296 = vmul.f32 %v2284, 1.442695
        %v2297 = vpow.pop %v2296
        %v2298 = vmul.f32 %v2285, 1.442695
        %v2299 = vpow.pop %v2298
        %v2300 = vmul.f32 %v2286, 1.442695
        %v2301 = vpow.pop %v2300
        %v2302 = vmul.f32 %v2287, 1.442695
        %v2303 = vpow.pop %v2302
        %v2304 = vsel %vm1352, %v2289, 0.0
        %2305 = vadd.xlane.f32.xlu0 %v2304
        %v2306 = vpop.xlane.xlu0 %2305
        %v2307 = vsel %vm1352, %v2291, 0.0
        %2308 = vadd.xlane.f32.xlu0 %v2307
        %v2309 = vpop.xlane.xlu0 %2308
        %v2310 = vsel %vm1352, %v2293, 0.0
        %2311 = vadd.xlane.f32.xlu0 %v2310
        %v2312 = vpop.xlane.xlu0 %2311
        %v2313 = vsel %vm1352, %v2295, 0.0
        %2314 = vadd.xlane.f32.xlu0 %v2313
        %v2315 = vpop.xlane.xlu0 %2314
        %v2316 = vsel %vm1352, %v2297, 0.0
        %2317 = vadd.xlane.f32.xlu0 %v2316
        %v2318 = vpop.xlane.xlu0 %2317
        %v2319 = vsel %vm1352, %v2299, 0.0
        %2320 = vadd.xlane.f32.xlu0 %v2319
        %v2321 = vpop.xlane.xlu0 %2320
        %v2322 = vsel %vm1352, %v2301, 0.0
        %2323 = vadd.xlane.f32.xlu0 %v2322
        %v2324 = vpop.xlane.xlu0 %2323
        %v2325 = vsel %vm1352, %v2303, 0.0
        %2326 = vadd.xlane.f32.xlu0 %v2325
        %v2327 = vpop.xlane.xlu0 %2326
        %v2328 = vrcp.pop %v2306
        %v2329 = vmul.f32 %v2306, %v2328
        %v2330 = vsub.f32 1.0, %v2329
        %v2331 = vmul.f32 %v2328, %v2330
        %v2332 = vadd.f32 %v2328, %v2331
        %vm2333 = vweird.f32 %v2306
        %vm2334 = vweird.f32 %v2328
        %vm2335 = vmor %vm2333, %vm2334
        %v2336 = vsel %vm2335, %v2328, %v2332
        %v2337 = vand.u32 2147483647, %v2306
        %vm2338 = vcmp.eq.f32.partialorder %v2337, 8.507059e+37
        %v2339 = vand.u32 %v2306, 2147483648
        %v2340 = vor.u32 1.1754944e-38, %v2339
        %v2341 = vsel %vm2338, %v2340, %v2336
        %v2342 = vmul.f32 %v2289, %v2341
        %v2343 = vrcp.pop %v2309
        %v2344 = vmul.f32 %v2309, %v2343
        %v2345 = vsub.f32 1.0, %v2344
        %v2346 = vmul.f32 %v2343, %v2345
        %v2347 = vadd.f32 %v2343, %v2346
        %vm2348 = vweird.f32 %v2309
        %vm2349 = vweird.f32 %v2343
        %vm2350 = vmor %vm2348, %vm2349
        %v2351 = vsel %vm2350, %v2343, %v2347
        %v2352 = vand.u32 2147483647, %v2309
        %vm2353 = vcmp.eq.f32.partialorder %v2352, 8.507059e+37
        %v2354 = vand.u32 %v2309, 2147483648
        %v2355 = vor.u32 1.1754944e-38, %v2354
        %v2356 = vsel %vm2353, %v2355, %v2351
        %v2357 = vmul.f32 %v2291, %v2356
        %v2358 = vrcp.pop %v2312
        %v2359 = vmul.f32 %v2312, %v2358
        %v2360 = vsub.f32 1.0, %v2359
        %v2361 = vmul.f32 %v2358, %v2360
        %v2362 = vadd.f32 %v2358, %v2361
        %vm2363 = vweird.f32 %v2312
        %vm2364 = vweird.f32 %v2358
        %vm2365 = vmor %vm2363, %vm2364
        %v2366 = vsel %vm2365, %v2358, %v2362
        %v2367 = vand.u32 2147483647, %v2312
        %vm2368 = vcmp.eq.f32.partialorder %v2367, 8.507059e+37
        %v2369 = vand.u32 %v2312, 2147483648
        %v2370 = vor.u32 1.1754944e-38, %v2369
        %v2371 = vsel %vm2368, %v2370, %v2366
        %v2372 = vmul.f32 %v2293, %v2371
        %v2373 = vrcp.pop %v2315
        %v2374 = vmul.f32 %v2315, %v2373
        %v2375 = vsub.f32 1.0, %v2374
        %v2376 = vmul.f32 %v2373, %v2375
        %v2377 = vadd.f32 %v2373, %v2376
        %vm2378 = vweird.f32 %v2315
        %vm2379 = vweird.f32 %v2373
        %vm2380 = vmor %vm2378, %vm2379
        %v2381 = vsel %vm2380, %v2373, %v2377
        %v2382 = vand.u32 2147483647, %v2315
        %vm2383 = vcmp.eq.f32.partialorder %v2382, 8.507059e+37
        %v2384 = vand.u32 %v2315, 2147483648
        %v2385 = vor.u32 1.1754944e-38, %v2384
        %v2386 = vsel %vm2383, %v2385, %v2381
        %v2387 = vmul.f32 %v2295, %v2386
        %v2388 = vrcp.pop %v2318
        %v2389 = vmul.f32 %v2318, %v2388
        %v2390 = vsub.f32 1.0, %v2389
        %v2391 = vmul.f32 %v2388, %v2390
        %v2392 = vadd.f32 %v2388, %v2391
        %vm2393 = vweird.f32 %v2318
        %vm2394 = vweird.f32 %v2388
        %vm2395 = vmor %vm2393, %vm2394
        %v2396 = vsel %vm2395, %v2388, %v2392
        %v2397 = vand.u32 2147483647, %v2318
        %vm2398 = vcmp.eq.f32.partialorder %v2397, 8.507059e+37
        %v2399 = vand.u32 %v2318, 2147483648
        %v2400 = vor.u32 1.1754944e-38, %v2399
        %v2401 = vsel %vm2398, %v2400, %v2396
        %v2402 = vmul.f32 %v2297, %v2401
        %v2403 = vrcp.pop %v2321
        %v2404 = vmul.f32 %v2321, %v2403
        %v2405 = vsub.f32 1.0, %v2404
        %v2406 = vmul.f32 %v2403, %v2405
        %v2407 = vadd.f32 %v2403, %v2406
        %vm2408 = vweird.f32 %v2321
        %vm2409 = vweird.f32 %v2403
        %vm2410 = vmor %vm2408, %vm2409
        %v2411 = vsel %vm2410, %v2403, %v2407
        %v2412 = vand.u32 2147483647, %v2321
        %vm2413 = vcmp.eq.f32.partialorder %v2412, 8.507059e+37
        %v2414 = vand.u32 %v2321, 2147483648
        %v2415 = vor.u32 1.1754944e-38, %v2414
        %v2416 = vsel %vm2413, %v2415, %v2411
        %v2417 = vmul.f32 %v2299, %v2416
        %v2418 = vrcp.pop %v2324
        %v2419 = vmul.f32 %v2324, %v2418
        %v2420 = vsub.f32 1.0, %v2419
        %v2421 = vmul.f32 %v2418, %v2420
        %v2422 = vadd.f32 %v2418, %v2421
        %vm2423 = vweird.f32 %v2324
        %vm2424 = vweird.f32 %v2418
        %vm2425 = vmor %vm2423, %vm2424
        %v2426 = vsel %vm2425, %v2418, %v2422
        %v2427 = vand.u32 2147483647, %v2324
        %vm2428 = vcmp.eq.f32.partialorder %v2427, 8.507059e+37
        %v2429 = vand.u32 %v2324, 2147483648
        %v2430 = vor.u32 1.1754944e-38, %v2429
        %v2431 = vsel %vm2428, %v2430, %v2426
        %v2432 = vmul.f32 %v2301, %v2431
        %v2433 = vrcp.pop %v2327
        %v2434 = vmul.f32 %v2327, %v2433
        %v2435 = vsub.f32 1.0, %v2434
        %v2436 = vmul.f32 %v2433, %v2435
        %v2437 = vadd.f32 %v2433, %v2436
        %vm2438 = vweird.f32 %v2327
        %vm2439 = vweird.f32 %v2433
        %vm2440 = vmor %vm2438, %vm2439
        %v2441 = vsel %vm2440, %v2433, %v2437
        %v2442 = vand.u32 2147483647, %v2327
        %vm2443 = vcmp.eq.f32.partialorder %v2442, 8.507059e+37
        %v2444 = vand.u32 %v2327, 2147483648
        %v2445 = vor.u32 1.1754944e-38, %v2444
        %v2446 = vsel %vm2443, %v2445, %v2441
        %v2447 = vmul.f32 %v2303, %v2446
        %2448 = vrot.lane.b32.xlu0 %v2166, 96
        %v2449 = vpop.permute.xlu0 %2448
        %2450 = vrot.lane.b32.xlu0 %v2169, 96
        %v2451 = vpop.permute.xlu0 %2450
        %v2455 = vsel %vm1352, %v2342, 0
        %v2458 = vsel %vm1352, %v2357, 0
        %v2461 = vsel %vm1352, %v2372, 0
        %v2464 = vsel %vm1352, %v2387, 0
        %v2467 = vsel %vm1352, %v2402, 0
        %v2470 = vsel %vm1352, %v2417, 0
        %v2473 = vsel %vm1352, %v2432, 0
        %v2476 = vsel %vm1352, %v2447, 0
        %2478 = vmatpush.msra.mxu0 0.0
        %2479 = vmatpush.msra.mxu0 0.0
        %2480 = vmatpush.msra.mxu0 0.0
        %2481 = vmatpush.msra.mxu0 0.0
        %2482 = vmatpush.msra.mxu0 0.0
        %2483 = vmatpush.msra.mxu0 0.0
        %2484 = vmatpush.msra.mxu0 0.0
        %2485 = vmatpush.msra.mxu0 0.0
        %2486 = vmatpush.msra.mxu0 0.0
        %2487 = vmatpush.msra.mxu0 0.0
        %2488 = vmatpush.msra.mxu0 0.0
        %2489 = vmatpush.msra.mxu0 0.0
        %2490 = vmatpush.msra.mxu0 0.0
        %2491 = vmatpush.msra.mxu0 0.0
        %2492 = vmatpush.msra.mxu0 %v2451
        %2493 = vmatpush.msra.mxu0 %v2449
        %2494 = vmatmul.f32.gmra.mxu0 %v2455
        %v2495 = vpop.f32.mrf.mxu0
        %v2496 = vadd.f32 0.0, %v2495
        %2497 = vmatmul.f32.gmra.mxu0 %v2458
        %v2498 = vpop.f32.mrf.mxu0
        %v2499 = vadd.f32 0.0, %v2498
        %2500 = vmatmul.f32.gmra.mxu0 %v2461
        %v2501 = vpop.f32.mrf.mxu0
        %v2502 = vadd.f32 0.0, %v2501
        %2503 = vmatmul.f32.gmra.mxu0 %v2464
        %v2504 = vpop.f32.mrf.mxu0
        %v2505 = vadd.f32 0.0, %v2504
        %2506 = vmatmul.f32.gmra.mxu0 %v2467
        %v2507 = vpop.f32.mrf.mxu0
        %v2508 = vadd.f32 0.0, %v2507
        %2509 = vmatmul.f32.gmra.mxu0 %v2470
        %v2510 = vpop.f32.mrf.mxu0
        %v2511 = vadd.f32 0.0, %v2510
        %2512 = vmatmul.f32.gmra.mxu0 %v2473
        %v2513 = vpop.f32.mrf.mxu0
        %v2514 = vadd.f32 0.0, %v2513
        %2515 = vmatmul.f32.gmra.mxu0 %v2476
        %v2516 = vpop.f32.mrf.mxu0
        %v2517 = vadd.f32 0.0, %v2516
        %2518 = vdwg.mxu0
        %v2519 = vsel %vm1449, %v2496, 0.0
        %v2520 = vsel %vm1449, %v2499, 0.0
        %v2521 = vsel %vm1452, %v2502, 0.0
        %v2522 = vsel %vm1452, %v2505, 0.0
        %v2523 = vadd.f32 %v2519, %v2521
        %v2524 = vadd.f32 %v2520, %v2522
        %v2525 = vsel %vm1455, %v2508, 0.0
        %v2526 = vsel %vm1455, %v2511, 0.0
        %v2527 = vadd.f32 %v2523, %v2525
        %v2528 = vadd.f32 %v2524, %v2526
        %v2529 = vsel %vm1458, %v2514, 0.0
        %v2530 = vsel %vm1458, %v2517, 0.0
        %v2531 = vadd.f32 %v2527, %v2529
        %v2532 = vadd.f32 %v2528, %v2530
        %s2533 = scalar_lea.vmem %s17, 16
        %v2534 = vld [vmem:[%s2533] sm:$0xff]
        %v2535 = vld [vmem:[%s2533 + $0x8] sm:$0xff]
        %v2537 = vsel %vm1352, %v2531, 0
        %v2540 = vsel %vm1352, %v2532, 0
        %2542 = vmatpush.msra.mxu0 0.0
        %2543 = vmatpush.msra.mxu0 0.0
        %2544 = vmatpush.msra.mxu0 0.0
        %2545 = vmatpush.msra.mxu0 0.0
        %2546 = vmatpush.msra.mxu0 0.0
        %2547 = vmatpush.msra.mxu0 0.0
        %2548 = vmatpush.msra.mxu0 0.0
        %2549 = vmatpush.msra.mxu0 0.0
        %2550 = vmatpush.msra.mxu0 0.0
        %2551 = vmatpush.msra.mxu0 0.0
        %2552 = vmatpush.msra.mxu0 0.0
        %2553 = vmatpush.msra.mxu0 0.0
        %2554 = vmatpush.msra.mxu0 0.0
        %2555 = vmatpush.msra.mxu0 0.0
        %2556 = vmatpush.msra.mxu0 %v2535
        %2557 = vmatpush.msra.mxu0 %v2534
        %2558 = vmatmul.f32.gmra.mxu0 %v2537
        %v2559 = vpop.f32.mrf.mxu0
        %v2560 = vadd.f32 0.0, %v2559
        %2561 = vmatmul.f32.gmra.mxu0 %v2540
        %v2562 = vpop.f32.mrf.mxu0
        %v2563 = vadd.f32 0.0, %v2562
        %2564 = vdwg.mxu0
        %v2565 = vadd.f32 %v2079, %v2560
        %v2566 = vadd.f32 %v2080, %v2563
        %s2567 = scalar_lea.vmem %s19, 1
        %v2568 = vld [vmem:[%s2567] sm:$0x1]
        %v2570 = vperm.slane %v2568, 0
        %v2572 = vadd.f32 %v2565, %v2570
        %v2573 = vadd.f32 %v2566, %v2570
        %s2574 = scalar_lea.vmem %s21, 1
        %v2575 = vld [vmem:[%s2574] sm:$0x1]
        %s2576 = scalar_lea.vmem [#allocation2], 1
        %v2577 = vld [vmem:[%s2576] sm:$0x1]
        %v2578 = vsel %vm1352, %v2572, 0.0
        %2579 = vadd.xlane.f32.xlu0 %v2578
        %v2580 = vpop.xlane.xlu0 %2579
        %v2581 = vsel %vm1352, %v2573, 0.0
        %2582 = vadd.xlane.f32.xlu0 %v2581
        %v2583 = vpop.xlane.xlu0 %2582
        %v2584 = vmul.f32 %v2580, %v1365
        %v2585 = vmul.f32 %v2583, %v1365
        %v2586 = vsub.f32 %v2572, %v2584
        %v2587 = vsub.f32 %v2573, %v2585
        %v2588 = vmul.f32 %v2586, %v2586
        %v2589 = vmul.f32 %v2587, %v2587
        %v2590 = vsel %vm1352, %v2588, 0.0
        %2591 = vadd.xlane.f32.xlu0 %v2590
        %v2592 = vpop.xlane.xlu0 %2591
        %v2593 = vsel %vm1352, %v2589, 0.0
        %2594 = vadd.xlane.f32.xlu0 %v2593
        %v2595 = vpop.xlane.xlu0 %2594
        %v2596 = vmul.f32 %v2592, %v1365
        %v2597 = vmul.f32 %v2595, %v1365
        %v2598 = vadd.f32 %v2596, 1e-05
        %v2599 = vadd.f32 %v2597, 1e-05
        %v2600 = vrsqrt.pop %v2598
        %v2601 = vmul.f32 %v2600, %v2598
        %v2602 = vmul.f32 %v2601, %v2600
        %v2603 = vmul.f32 0.5, %v2602
        %v2604 = vsub.f32 1.5, %v2603
        %v2605 = vmul.f32 %v2600, %v2604
        %vm2606 = vweird.f32 %v2598
        %vm2607 = vweird.f32 %v2600
        %vm2608 = vmor %vm2606, %vm2607
        %v2609 = vsel %vm2608, %v2600, %v2605
        %v2610 = vrsqrt.pop %v2599
        %v2611 = vmul.f32 %v2610, %v2599
        %v2612 = vmul.f32 %v2611, %v2610
        %v2613 = vmul.f32 0.5, %v2612
        %v2614 = vsub.f32 1.5, %v2613
        %v2615 = vmul.f32 %v2610, %v2614
        %vm2616 = vweird.f32 %v2599
        %vm2617 = vweird.f32 %v2610
        %vm2618 = vmor %vm2616, %vm2617
        %v2619 = vsel %vm2618, %v2610, %v2615
        %v2620 = vmul.f32 %v2586, %v2609
        %v2621 = vmul.f32 %v2587, %v2619
        %v2623 = vperm.slane %v2575, 0
        %v2625 = vmul.f32 %v2620, %v2623
        %v2626 = vmul.f32 %v2621, %v2623
        %v2628 = vperm.slane %v2577, 0
        %v2630 = vadd.f32 %v2625, %v2628
        %v2631 = vadd.f32 %v2626, %v2628
        %s2632 = scalar_lea.vmem %s25, 16
        %v2633 = vld [vmem:[%s2632] sm:$0xff]
        %v2634 = vld [vmem:[%s2632 + $0x8] sm:$0xff]
        %s2635 = scalar_lea.vmem [#allocation5], 1
        %v2636 = vld [vmem:[%s2635] sm:$0x1]
        %v2638 = vperm.slane %v2636, 0
        %v2641 = vsel %vm1352, %v2630, 0
        %v2644 = vsel %vm1352, %v2631, 0
        %2646 = vmatpush.msra.mxu0 0.0
        %2647 = vmatpush.msra.mxu0 0.0
        %2648 = vmatpush.msra.mxu0 0.0
        %2649 = vmatpush.msra.mxu0 0.0
        %2650 = vmatpush.msra.mxu0 0.0
        %2651 = vmatpush.msra.mxu0 0.0
        %2652 = vmatpush.msra.mxu0 0.0
        %2653 = vmatpush.msra.mxu0 0.0
        %2654 = vmatpush.msra.mxu0 0.0
        %2655 = vmatpush.msra.mxu0 0.0
        %2656 = vmatpush.msra.mxu0 0.0
        %2657 = vmatpush.msra.mxu0 0.0
        %2658 = vmatpush.msra.mxu0 0.0
        %2659 = vmatpush.msra.mxu0 0.0
        %2660 = vmatpush.msra.mxu0 %v2634
        %2661 = vmatpush.msra.mxu0 %v2633
        %2662 = vmatmul.f32.gmra.mxu0 %v2641
        %v2663 = vpop.f32.mrf.mxu0
        %v2664 = vadd.f32 %v2638, %v2663
        %2665 = vmatmul.f32.gmra.mxu0 %v2644
        %v2666 = vpop.f32.mrf.mxu0
        %v2667 = vadd.f32 %v2638, %v2666
        %2668 = vdwg.mxu0
        %v2669 = vmul.f32 %v2664, 0.5
        %v2670 = vmul.f32 %v2667, 0.5
        %v2671 = vmul.f32 %v2664, 0.70710677
        %v2672 = vmul.f32 %v2667, 0.70710677
        %v2673 = vmul.f32 %v2671, %v2671
        %v2674 = vmin.f32 16.0, %v2673
        %v2675 = vmul.f32 %v2674, 2.1237322e-06
        %v2676 = vadd.f32 %v2675, 0.00028619796
        %v2677 = vmul.f32 %v2674, %v2676
        %v2678 = vadd.f32 %v2677, 0.0036580483
        %v2679 = vmul.f32 %v2674, %v2678
        %v2680 = vadd.f32 %v2679, 0.05243302
        %v2681 = vmul.f32 %v2674, %v2680
        %v2682 = vadd.f32 %v2681, 0.18741608
        %v2683 = vmul.f32 %v2674, %v2682
        %v2684 = vadd.f32 %v2683, 1.1283791
        %v2685 = vmul.f32 %v2671, %v2684
        %v2686 = vmul.f32 %v2674, 3.8918573e-05
        %v2687 = vadd.f32 %v2686, 0.001143296
        %v2688 = vmul.f32 %v2674, %v2687
        %v2689 = vadd.f32 %v2688, 0.014752088
        %v2690 = vmul.f32 %v2674, %v2689
        %v2691 = vadd.f32 %v2690, 0.112945676
        %v2692 = vmul.f32 %v2674, %v2691
        %v2693 = vadd.f32 %v2692, 0.4994258
        %v2694 = vmul.f32 %v2674, %v2693
        %v2695 = vadd.f32 %v2694, 1.0
        %v2696 = vrcp.pop %v2695
        %v2697 = vmul.f32 %v2695, %v2696
        %v2698 = vsub.f32 1.0, %v2697
        %v2699 = vmul.f32 %v2696, %v2698
        %v2700 = vadd.f32 %v2696, %v2699
        %vm2701 = vweird.f32 %v2695
        %vm2702 = vweird.f32 %v2696
        %vm2703 = vmor %vm2701, %vm2702
        %v2704 = vsel %vm2703, %v2696, %v2700
        %v2705 = vand.u32 2147483647, %v2695
        %vm2706 = vcmp.eq.f32.partialorder %v2705, 8.507059e+37
        %v2707 = vand.u32 %v2695, 2147483648
        %v2708 = vor.u32 1.1754944e-38, %v2707
        %v2709 = vsel %vm2706, %v2708, %v2704
        %v2710 = vmul.f32 %v2685, %v2709
        %v2711 = vmin.f32 %v2710, 1.0
        %v2712 = vmax.f32 %v2711, -1.0
        %v2713 = vmul.f32 %v2672, %v2672
        %v2714 = vmin.f32 16.0, %v2713
        %v2715 = vmul.f32 %v2714, 2.1237322e-06
        %v2716 = vadd.f32 %v2715, 0.00028619796
        %v2717 = vmul.f32 %v2714, %v2716
        %v2718 = vadd.f32 %v2717, 0.0036580483
        %v2719 = vmul.f32 %v2714, %v2718
        %v2720 = vadd.f32 %v2719, 0.05243302
        %v2721 = vmul.f32 %v2714, %v2720
        %v2722 = vadd.f32 %v2721, 0.18741608
        %v2723 = vmul.f32 %v2714, %v2722
        %v2724 = vadd.f32 %v2723, 1.1283791
        %v2725 = vmul.f32 %v2672, %v2724
        %v2726 = vmul.f32 %v2714, 3.8918573e-05
        %v2727 = vadd.f32 %v2726, 0.001143296
        %v2728 = vmul.f32 %v2714, %v2727
        %v2729 = vadd.f32 %v2728, 0.014752088
        %v2730 = vmul.f32 %v2714, %v2729
        %v2731 = vadd.f32 %v2730, 0.112945676
        %v2732 = vmul.f32 %v2714, %v2731
        %v2733 = vadd.f32 %v2732, 0.4994258
        %v2734 = vmul.f32 %v2714, %v2733
        %v2735 = vadd.f32 %v2734, 1.0
        %v2736 = vrcp.pop %v2735
        %v2737 = vmul.f32 %v2735, %v2736
        %v2738 = vsub.f32 1.0, %v2737
        %v2739 = vmul.f32 %v2736, %v2738
        %v2740 = vadd.f32 %v2736, %v2739
        %vm2741 = vweird.f32 %v2735
        %vm2742 = vweird.f32 %v2736
        %vm2743 = vmor %vm2741, %vm2742
        %v2744 = vsel %vm2743, %v2736, %v2740
        %v2745 = vand.u32 2147483647, %v2735
        %vm2746 = vcmp.eq.f32.partialorder %v2745, 8.507059e+37
        %v2747 = vand.u32 %v2735, 2147483648
        %v2748 = vor.u32 1.1754944e-38, %v2747
        %v2749 = vsel %vm2746, %v2748, %v2744
        %v2750 = vmul.f32 %v2725, %v2749
        %v2751 = vmin.f32 %v2750, 1.0
        %v2752 = vmax.f32 %v2751, -1.0
        %v2753 = vadd.f32 %v2712, 1.0
        %v2754 = vadd.f32 %v2752, 1.0
        %v2755 = vmul.f32 %v2669, %v2753
        %v2756 = vmul.f32 %v2670, %v2754
        %s2757 = scalar_lea.vmem %s29, 32
        %v2758 = vld [vmem:[%s2757] sm:$0xff]
        %v2759 = vld [vmem:[%s2757 + $0x8] sm:$0xff]
        %v2760 = vld [vmem:[%s2757 + $0x10] sm:$0xff]
        %v2761 = vld [vmem:[%s2757 + $0x18] sm:$0xff]
        %v2763 = vsel %vm2043, %v2755, 0
        %v2766 = vsel %vm2043, %v2756, 0
        %2768 = vmatpush.msra.mxu0 0.0
        %2769 = vmatpush.msra.mxu0 0.0
        %2770 = vmatpush.msra.mxu0 0.0
        %2771 = vmatpush.msra.mxu0 0.0
        %2772 = vmatpush.msra.mxu0 0.0
        %2773 = vmatpush.msra.mxu0 0.0
        %2774 = vmatpush.msra.mxu0 0.0
        %2775 = vmatpush.msra.mxu0 0.0
        %2776 = vmatpush.msra.mxu0 0.0
        %2777 = vmatpush.msra.mxu0 0.0
        %2778 = vmatpush.msra.mxu0 0.0
        %2779 = vmatpush.msra.mxu0 0.0
        %2780 = vmatpush.msra.mxu0 %v2761
        %2781 = vmatpush.msra.mxu0 %v2760
        %2782 = vmatpush.msra.mxu0 %v2759
        %2783 = vmatpush.msra.mxu0 %v2758
        %2784 = vmatmul.f32.gmra.mxu0 %v2763
        %v2785 = vpop.f32.mrf.mxu0
        %v2786 = vadd.f32 0.0, %v2785
        %2787 = vmatmul.f32.gmra.mxu0 %v2766
        %v2788 = vpop.f32.mrf.mxu0
        %v2789 = vadd.f32 0.0, %v2788
        %2790 = vdwg.mxu0
        %v2791 = vadd.f32 %v2572, %v2786
        %v2792 = vadd.f32 %v2573, %v2789
        %s2793 = scalar_lea.vmem [#allocation7], 1
        %v2794 = vld [vmem:[%s2793] sm:$0x1]
        %v2796 = vperm.slane %v2794, 0
        %v2798 = vadd.f32 %v2791, %v2796
        %v2799 = vadd.f32 %v2792, %v2796
        %s2800 = scalar_lea.vmem %s11, 2
        %v2801 = vld [vmem:[%s2800] sm:$0x1]
        %s2802 = scalar_lea.vmem %s13, 2
        %v2803 = vld [vmem:[%s2802] sm:$0x1]
        %v2804 = vsel %vm1352, %v2798, 0.0
        %2805 = vadd.xlane.f32.xlu0 %v2804
        %v2806 = vpop.xlane.xlu0 %2805
        %v2807 = vsel %vm1352, %v2799, 0.0
        %2808 = vadd.xlane.f32.xlu0 %v2807
        %v2809 = vpop.xlane.xlu0 %2808
        %v2810 = vmul.f32 %v2806, %v1365
        %v2811 = vmul.f32 %v2809, %v1365
        %v2812 = vsub.f32 %v2798, %v2810
        %v2813 = vsub.f32 %v2799, %v2811
        %v2814 = vmul.f32 %v2812, %v2812
        %v2815 = vmul.f32 %v2813, %v2813
        %v2816 = vsel %vm1352, %v2814, 0.0
        %2817 = vadd.xlane.f32.xlu0 %v2816
        %v2818 = vpop.xlane.xlu0 %2817
        %v2819 = vsel %vm1352, %v2815, 0.0
        %2820 = vadd.xlane.f32.xlu0 %v2819
        %v2821 = vpop.xlane.xlu0 %2820
        %v2822 = vmul.f32 %v2818, %v1365
        %v2823 = vmul.f32 %v2821, %v1365
        %v2824 = vadd.f32 %v2822, 1e-05
        %v2825 = vadd.f32 %v2823, 1e-05
        %v2826 = vrsqrt.pop %v2824
        %v2827 = vmul.f32 %v2826, %v2824
        %v2828 = vmul.f32 %v2827, %v2826
        %v2829 = vmul.f32 0.5, %v2828
        %v2830 = vsub.f32 1.5, %v2829
        %v2831 = vmul.f32 %v2826, %v2830
        %vm2832 = vweird.f32 %v2824
        %vm2833 = vweird.f32 %v2826
        %vm2834 = vmor %vm2832, %vm2833
        %v2835 = vsel %vm2834, %v2826, %v2831
        %v2836 = vrsqrt.pop %v2825
        %v2837 = vmul.f32 %v2836, %v2825
        %v2838 = vmul.f32 %v2837, %v2836
        %v2839 = vmul.f32 0.5, %v2838
        %v2840 = vsub.f32 1.5, %v2839
        %v2841 = vmul.f32 %v2836, %v2840
        %vm2842 = vweird.f32 %v2825
        %vm2843 = vweird.f32 %v2836
        %vm2844 = vmor %vm2842, %vm2843
        %v2845 = vsel %vm2844, %v2836, %v2841
        %v2846 = vmul.f32 %v2812, %v2835
        %v2847 = vmul.f32 %v2813, %v2845
        %v2849 = vperm.slane %v2801, 0
        %v2851 = vmul.f32 %v2846, %v2849
        %v2852 = vmul.f32 %v2847, %v2849
        %v2854 = vperm.slane %v2803, 0
        %v2856 = vadd.f32 %v2851, %v2854
        %v2857 = vadd.f32 %v2852, %v2854
        %s2858 = scalar_lea.vmem %s15, 32
        %v2859 = vld [vmem:[%s2858] sm:$0xff]
        %v2860 = vld [vmem:[%s2858 + $0x8] sm:$0xff]
        %v2862 = vsel %vm1352, %v2856, 0
        %v2865 = vsel %vm1352, %v2857, 0
        %2867 = vmatpush.msra.mxu0 0.0
        %2868 = vmatpush.msra.mxu0 0.0
        %2869 = vmatpush.msra.mxu0 0.0
        %2870 = vmatpush.msra.mxu0 0.0
        %2871 = vmatpush.msra.mxu0 0.0
        %2872 = vmatpush.msra.mxu0 0.0
        %2873 = vmatpush.msra.mxu0 0.0
        %2874 = vmatpush.msra.mxu0 0.0
        %2875 = vmatpush.msra.mxu0 0.0
        %2876 = vmatpush.msra.mxu0 0.0
        %2877 = vmatpush.msra.mxu0 0.0
        %2878 = vmatpush.msra.mxu0 0.0
        %2879 = vmatpush.msra.mxu0 0.0
        %2880 = vmatpush.msra.mxu0 0.0
        %2881 = vmatpush.msra.mxu0 %v2860
        %2882 = vmatpush.msra.mxu0 %v2859
        %2883 = vmatmul.f32.gmra.mxu0 %v2862
        %v2884 = vpop.f32.mrf.mxu0
        %v2885 = vadd.f32 0.0, %v2884
        %2886 = vmatmul.f32.gmra.mxu0 %v2865
        %v2887 = vpop.f32.mrf.mxu0
        %v2888 = vadd.f32 0.0, %v2887
        %2889 = vdwg.mxu0
        %v2890 = vmul.f32 %v2885, 0.25
        %v2891 = vmul.f32 %v2888, 0.25
        %v2892 = vsel %vm1449, %v2890, 0.0
        %v2893 = vsel %vm1449, %v2891, 0.0
        %v2894 = vsel %vm1452, %v2890, 0.0
        %v2895 = vsel %vm1452, %v2891, 0.0
        %v2896 = vsel %vm1455, %v2890, 0.0
        %v2897 = vsel %vm1455, %v2891, 0.0
        %v2898 = vsel %vm1458, %v2890, 0.0
        %v2899 = vsel %vm1458, %v2891, 0.0
        %2902 = vrot.lane.b32.xlu0 %v2885, 112
        %v2903 = vpop.permute.xlu0 %2902
        %2904 = vrot.lane.b32.xlu0 %v2888, 112
        %v2905 = vpop.permute.xlu0 %2904
        %v2907 = vsel %vm1352, %v2892, 0
        %v2910 = vsel %vm1352, %v2893, 0
        %v2913 = vsel %vm1352, %v2894, 0
        %v2916 = vsel %vm1352, %v2895, 0
        %v2919 = vsel %vm1352, %v2896, 0
        %v2922 = vsel %vm1352, %v2897, 0
        %v2925 = vsel %vm1352, %v2898, 0
        %v2928 = vsel %vm1352, %v2899, 0
        %v2930 = vsel %vm1352, %v2903, 0
        %v2932 = vsel %vm1352, %v2905, 0
        %2934 = vmatpush.xpose.msra.mxu0 0.0
        %2935 = vmatpush.xpose.msra.mxu0 0.0
        %2936 = vmatpush.xpose.msra.mxu0 0.0
        %2937 = vmatpush.xpose.msra.mxu0 0.0
        %2938 = vmatpush.xpose.msra.mxu0 0.0
        %2939 = vmatpush.xpose.msra.mxu0 0.0
        %2940 = vmatpush.xpose.msra.mxu0 0.0
        %2941 = vmatpush.xpose.msra.mxu0 0.0
        %2942 = vmatpush.xpose.msra.mxu0 0.0
        %2943 = vmatpush.xpose.msra.mxu0 0.0
        %2944 = vmatpush.xpose.msra.mxu0 0.0
        %2945 = vmatpush.xpose.msra.mxu0 0.0
        %2946 = vmatpush.xpose.msra.mxu0 0.0
        %2947 = vmatpush.xpose.msra.mxu0 0.0
        %2948 = vmatpush.xpose.msra.mxu0 %v2932
        %2949 = vmatpush.xpose.msra.mxu0 %v2930
        %2950 = vmatmul.f32.gmra.mxu0 %v2907
        %v2951 = vpop.f32.mrf.mxu0
        %v2952 = vadd.f32 0.0, %v2951
        %2953 = vmatmul.f32.gmra.mxu0 %v2910
        %v2954 = vpop.f32.mrf.mxu0
        %v2955 = vadd.f32 0.0, %v2954
        %2956 = vmatmul.f32.gmra.mxu0 %v2913
        %v2957 = vpop.f32.mrf.mxu0
        %v2958 = vadd.f32 0.0, %v2957
        %2959 = vmatmul.f32.gmra.mxu0 %v2916
        %v2960 = vpop.f32.mrf.mxu0
        %v2961 = vadd.f32 0.0, %v2960
        %2962 = vmatmul.f32.gmra.mxu0 %v2919
        %v2963 = vpop.f32.mrf.mxu0
        %v2964 = vadd.f32 0.0, %v2963
        %2965 = vmatmul.f32.gmra.mxu0 %v2922
        %v2966 = vpop.f32.mrf.mxu0
        %v2967 = vadd.f32 0.0, %v2966
        %2968 = vmatmul.f32.gmra.mxu0 %v2925
        %v2969 = vpop.f32.mrf.mxu0
        %v2970 = vadd.f32 0.0, %v2969
        %2971 = vmatmul.f32.gmra.mxu0 %v2928
        %v2972 = vpop.f32.mrf.mxu0
        %v2973 = vadd.f32 0.0, %v2972
        %2974 = vdwg.mxu0
        %v2975 = vsel %vm1352, %v2952, -inf
        %2976 = vmax.xlane.f32.xlu0 %v2975
        %v2977 = vpop.xlane.xlu0 %2976
        %v2978 = vsel %vm1352, %v2955, -inf
        %2979 = vmax.xlane.f32.xlu0 %v2978
        %v2980 = vpop.xlane.xlu0 %2979
        %v2981 = vsel %vm1352, %v2958, -inf
        %2982 = vmax.xlane.f32.xlu0 %v2981
        %v2983 = vpop.xlane.xlu0 %2982
        %v2984 = vsel %vm1352, %v2961, -inf
        %2985 = vmax.xlane.f32.xlu0 %v2984
        %v2986 = vpop.xlane.xlu0 %2985
        %v2987 = vsel %vm1352, %v2964, -inf
        %2988 = vmax.xlane.f32.xlu0 %v2987
        %v2989 = vpop.xlane.xlu0 %2988
        %v2990 = vsel %vm1352, %v2967, -inf
        %2991 = vmax.xlane.f32.xlu0 %v2990
        %v2992 = vpop.xlane.xlu0 %2991
        %v2993 = vsel %vm1352, %v2970, -inf
        %2994 = vmax.xlane.f32.xlu0 %v2993
        %v2995 = vpop.xlane.xlu0 %2994
        %v2996 = vsel %vm1352, %v2973, -inf
        %2997 = vmax.xlane.f32.xlu0 %v2996
        %v2998 = vpop.xlane.xlu0 %2997
        %v2999 = vsub.f32 %v2952, %v2977
        %v3000 = vsub.f32 %v2955, %v2980
        %v3001 = vsub.f32 %v2958, %v2983
        %v3002 = vsub.f32 %v2961, %v2986
        %v3003 = vsub.f32 %v2964, %v2989
        %v3004 = vsub.f32 %v2967, %v2992
        %v3005 = vsub.f32 %v2970, %v2995
        %v3006 = vsub.f32 %v2973, %v2998
        %v3007 = vmul.f32 %v2999, 1.442695
        %v3008 = vpow.pop %v3007
        %v3009 = vmul.f32 %v3000, 1.442695
        %v3010 = vpow.pop %v3009
        %v3011 = vmul.f32 %v3001, 1.442695
        %v3012 = vpow.pop %v3011
        %v3013 = vmul.f32 %v3002, 1.442695
        %v3014 = vpow.pop %v3013
        %v3015 = vmul.f32 %v3003, 1.442695
        %v3016 = vpow.pop %v3015
        %v3017 = vmul.f32 %v3004, 1.442695
        %v3018 = vpow.pop %v3017
        %v3019 = vmul.f32 %v3005, 1.442695
        %v3020 = vpow.pop %v3019
        %v3021 = vmul.f32 %v3006, 1.442695
        %v3022 = vpow.pop %v3021
        %v3023 = vsel %vm1352, %v3008, 0.0
        %3024 = vadd.xlane.f32.xlu0 %v3023
        %v3025 = vpop.xlane.xlu0 %3024
        %v3026 = vsel %vm1352, %v3010, 0.0
        %3027 = vadd.xlane.f32.xlu0 %v3026
        %v3028 = vpop.xlane.xlu0 %3027
        %v3029 = vsel %vm1352, %v3012, 0.0
        %3030 = vadd.xlane.f32.xlu0 %v3029
        %v3031 = vpop.xlane.xlu0 %3030
        %v3032 = vsel %vm1352, %v3014, 0.0
        %3033 = vadd.xlane.f32.xlu0 %v3032
        %v3034 = vpop.xlane.xlu0 %3033
        %v3035 = vsel %vm1352, %v3016, 0.0
        %3036 = vadd.xlane.f32.xlu0 %v3035
        %v3037 = vpop.xlane.xlu0 %3036
        %v3038 = vsel %vm1352, %v3018, 0.0
        %3039 = vadd.xlane.f32.xlu0 %v3038
        %v3040 = vpop.xlane.xlu0 %3039
        %v3041 = vsel %vm1352, %v3020, 0.0
        %3042 = vadd.xlane.f32.xlu0 %v3041
        %v3043 = vpop.xlane.xlu0 %3042
        %v3044 = vsel %vm1352, %v3022, 0.0
        %3045 = vadd.xlane.f32.xlu0 %v3044
        %v3046 = vpop.xlane.xlu0 %3045
        %v3047 = vrcp.pop %v3025
        %v3048 = vmul.f32 %v3025, %v3047
        %v3049 = vsub.f32 1.0, %v3048
        %v3050 = vmul.f32 %v3047, %v3049
        %v3051 = vadd.f32 %v3047, %v3050
        %vm3052 = vweird.f32 %v3025
        %vm3053 = vweird.f32 %v3047
        %vm3054 = vmor %vm3052, %vm3053
        %v3055 = vsel %vm3054, %v3047, %v3051
        %v3056 = vand.u32 2147483647, %v3025
        %vm3057 = vcmp.eq.f32.partialorder %v3056, 8.507059e+37
        %v3058 = vand.u32 %v3025, 2147483648
        %v3059 = vor.u32 1.1754944e-38, %v3058
        %v3060 = vsel %vm3057, %v3059, %v3055
        %v3061 = vmul.f32 %v3008, %v3060
        %v3062 = vrcp.pop %v3028
        %v3063 = vmul.f32 %v3028, %v3062
        %v3064 = vsub.f32 1.0, %v3063
        %v3065 = vmul.f32 %v3062, %v3064
        %v3066 = vadd.f32 %v3062, %v3065
        %vm3067 = vweird.f32 %v3028
        %vm3068 = vweird.f32 %v3062
        %vm3069 = vmor %vm3067, %vm3068
        %v3070 = vsel %vm3069, %v3062, %v3066
        %v3071 = vand.u32 2147483647, %v3028
        %vm3072 = vcmp.eq.f32.partialorder %v3071, 8.507059e+37
        %v3073 = vand.u32 %v3028, 2147483648
        %v3074 = vor.u32 1.1754944e-38, %v3073
        %v3075 = vsel %vm3072, %v3074, %v3070
        %v3076 = vmul.f32 %v3010, %v3075
        %v3077 = vrcp.pop %v3031
        %v3078 = vmul.f32 %v3031, %v3077
        %v3079 = vsub.f32 1.0, %v3078
        %v3080 = vmul.f32 %v3077, %v3079
        %v3081 = vadd.f32 %v3077, %v3080
        %vm3082 = vweird.f32 %v3031
        %vm3083 = vweird.f32 %v3077
        %vm3084 = vmor %vm3082, %vm3083
        %v3085 = vsel %vm3084, %v3077, %v3081
        %v3086 = vand.u32 2147483647, %v3031
        %vm3087 = vcmp.eq.f32.partialorder %v3086, 8.507059e+37
        %v3088 = vand.u32 %v3031, 2147483648
        %v3089 = vor.u32 1.1754944e-38, %v3088
        %v3090 = vsel %vm3087, %v3089, %v3085
        %v3091 = vmul.f32 %v3012, %v3090
        %v3092 = vrcp.pop %v3034
        %v3093 = vmul.f32 %v3034, %v3092
        %v3094 = vsub.f32 1.0, %v3093
        %v3095 = vmul.f32 %v3092, %v3094
        %v3096 = vadd.f32 %v3092, %v3095
        %vm3097 = vweird.f32 %v3034
        %vm3098 = vweird.f32 %v3092
        %vm3099 = vmor %vm3097, %vm3098
        %v3100 = vsel %vm3099, %v3092, %v3096
        %v3101 = vand.u32 2147483647, %v3034
        %vm3102 = vcmp.eq.f32.partialorder %v3101, 8.507059e+37
        %v3103 = vand.u32 %v3034, 2147483648
        %v3104 = vor.u32 1.1754944e-38, %v3103
        %v3105 = vsel %vm3102, %v3104, %v3100
        %v3106 = vmul.f32 %v3014, %v3105
        %v3107 = vrcp.pop %v3037
        %v3108 = vmul.f32 %v3037, %v3107
        %v3109 = vsub.f32 1.0, %v3108
        %v3110 = vmul.f32 %v3107, %v3109
        %v3111 = vadd.f32 %v3107, %v3110
        %vm3112 = vweird.f32 %v3037
        %vm3113 = vweird.f32 %v3107
        %vm3114 = vmor %vm3112, %vm3113
        %v3115 = vsel %vm3114, %v3107, %v3111
        %v3116 = vand.u32 2147483647, %v3037
        %vm3117 = vcmp.eq.f32.partialorder %v3116, 8.507059e+37
        %v3118 = vand.u32 %v3037, 2147483648
        %v3119 = vor.u32 1.1754944e-38, %v3118
        %v3120 = vsel %vm3117, %v3119, %v3115
        %v3121 = vmul.f32 %v3016, %v3120
        %v3122 = vrcp.pop %v3040
        %v3123 = vmul.f32 %v3040, %v3122
        %v3124 = vsub.f32 1.0, %v3123
        %v3125 = vmul.f32 %v3122, %v3124
        %v3126 = vadd.f32 %v3122, %v3125
        %vm3127 = vweird.f32 %v3040
        %vm3128 = vweird.f32 %v3122
        %vm3129 = vmor %vm3127, %vm3128
        %v3130 = vsel %vm3129, %v3122, %v3126
        %v3131 = vand.u32 2147483647, %v3040
        %vm3132 = vcmp.eq.f32.partialorder %v3131, 8.507059e+37
        %v3133 = vand.u32 %v3040, 2147483648
        %v3134 = vor.u32 1.1754944e-38, %v3133
        %v3135 = vsel %vm3132, %v3134, %v3130
        %v3136 = vmul.f32 %v3018, %v3135
        %v3137 = vrcp.pop %v3043
        %v3138 = vmul.f32 %v3043, %v3137
        %v3139 = vsub.f32 1.0, %v3138
        %v3140 = vmul.f32 %v3137, %v3139
        %v3141 = vadd.f32 %v3137, %v3140
        %vm3142 = vweird.f32 %v3043
        %vm3143 = vweird.f32 %v3137
        %vm3144 = vmor %vm3142, %vm3143
        %v3145 = vsel %vm3144, %v3137, %v3141
        %v3146 = vand.u32 2147483647, %v3043
        %vm3147 = vcmp.eq.f32.partialorder %v3146, 8.507059e+37
        %v3148 = vand.u32 %v3043, 2147483648
        %v3149 = vor.u32 1.1754944e-38, %v3148
        %v3150 = vsel %vm3147, %v3149, %v3145
        %v3151 = vmul.f32 %v3020, %v3150
        %v3152 = vrcp.pop %v3046
        %v3153 = vmul.f32 %v3046, %v3152
        %v3154 = vsub.f32 1.0, %v3153
        %v3155 = vmul.f32 %v3152, %v3154
        %v3156 = vadd.f32 %v3152, %v3155
        %vm3157 = vweird.f32 %v3046
        %vm3158 = vweird.f32 %v3152
        %vm3159 = vmor %vm3157, %vm3158
        %v3160 = vsel %vm3159, %v3152, %v3156
        %v3161 = vand.u32 2147483647, %v3046
        %vm3162 = vcmp.eq.f32.partialorder %v3161, 8.507059e+37
        %v3163 = vand.u32 %v3046, 2147483648
        %v3164 = vor.u32 1.1754944e-38, %v3163
        %v3165 = vsel %vm3162, %v3164, %v3160
        %v3166 = vmul.f32 %v3022, %v3165
        %3167 = vrot.lane.b32.xlu0 %v2885, 96
        %v3168 = vpop.permute.xlu0 %3167
        %3169 = vrot.lane.b32.xlu0 %v2888, 96
        %v3170 = vpop.permute.xlu0 %3169
        %v3174 = vsel %vm1352, %v3061, 0
        %v3177 = vsel %vm1352, %v3076, 0
        %v3180 = vsel %vm1352, %v3091, 0
        %v3183 = vsel %vm1352, %v3106, 0
        %v3186 = vsel %vm1352, %v3121, 0
        %v3189 = vsel %vm1352, %v3136, 0
        %v3192 = vsel %vm1352, %v3151, 0
        %v3195 = vsel %vm1352, %v3166, 0
        %3197 = vmatpush.msra.mxu0 0.0
        %3198 = vmatpush.msra.mxu0 0.0
        %3199 = vmatpush.msra.mxu0 0.0
        %3200 = vmatpush.msra.mxu0 0.0
        %3201 = vmatpush.msra.mxu0 0.0
        %3202 = vmatpush.msra.mxu0 0.0
        %3203 = vmatpush.msra.mxu0 0.0
        %3204 = vmatpush.msra.mxu0 0.0
        %3205 = vmatpush.msra.mxu0 0.0
        %3206 = vmatpush.msra.mxu0 0.0
        %3207 = vmatpush.msra.mxu0 0.0
        %3208 = vmatpush.msra.mxu0 0.0
        %3209 = vmatpush.msra.mxu0 0.0
        %3210 = vmatpush.msra.mxu0 0.0
        %3211 = vmatpush.msra.mxu0 %v3170
        %3212 = vmatpush.msra.mxu0 %v3168
        %3213 = vmatmul.f32.gmra.mxu0 %v3174
        %v3214 = vpop.f32.mrf.mxu0
        %v3215 = vadd.f32 0.0, %v3214
        %3216 = vmatmul.f32.gmra.mxu0 %v3177
        %v3217 = vpop.f32.mrf.mxu0
        %v3218 = vadd.f32 0.0, %v3217
        %3219 = vmatmul.f32.gmra.mxu0 %v3180
        %v3220 = vpop.f32.mrf.mxu0
        %v3221 = vadd.f32 0.0, %v3220
        %3222 = vmatmul.f32.gmra.mxu0 %v3183
        %v3223 = vpop.f32.mrf.mxu0
        %v3224 = vadd.f32 0.0, %v3223
        %3225 = vmatmul.f32.gmra.mxu0 %v3186
        %v3226 = vpop.f32.mrf.mxu0
        %v3227 = vadd.f32 0.0, %v3226
        %3228 = vmatmul.f32.gmra.mxu0 %v3189
        %v3229 = vpop.f32.mrf.mxu0
        %v3230 = vadd.f32 0.0, %v3229
        %3231 = vmatmul.f32.gmra.mxu0 %v3192
        %v3232 = vpop.f32.mrf.mxu0
        %v3233 = vadd.f32 0.0, %v3232
        %3234 = vmatmul.f32.gmra.mxu0 %v3195
        %v3235 = vpop.f32.mrf.mxu0
        %v3236 = vadd.f32 0.0, %v3235
        %3237 = vdwg.mxu0
        %v3238 = vsel %vm1449, %v3215, 0.0
        %v3239 = vsel %vm1449, %v3218, 0.0
        %v3240 = vsel %vm1452, %v3221, 0.0
        %v3241 = vsel %vm1452, %v3224, 0.0
        %v3242 = vadd.f32 %v3238, %v3240
        %v3243 = vadd.f32 %v3239, %v3241
        %v3244 = vsel %vm1455, %v3227, 0.0
        %v3245 = vsel %vm1455, %v3230, 0.0
        %v3246 = vadd.f32 %v3242, %v3244
        %v3247 = vadd.f32 %v3243, %v3245
        %v3248 = vsel %vm1458, %v3233, 0.0
        %v3249 = vsel %vm1458, %v3236, 0.0
        %v3250 = vadd.f32 %v3246, %v3248
        %v3251 = vadd.f32 %v3247, %v3249
        %s3252 = scalar_lea.vmem %s17, 32
        %v3253 = vld [vmem:[%s3252] sm:$0xff]
        %v3254 = vld [vmem:[%s3252 + $0x8] sm:$0xff]
        %v3256 = vsel %vm1352, %v3250, 0
        %v3259 = vsel %vm1352, %v3251, 0
        %3261 = vmatpush.msra.mxu0 0.0
        %3262 = vmatpush.msra.mxu0 0.0
        %3263 = vmatpush.msra.mxu0 0.0
        %3264 = vmatpush.msra.mxu0 0.0
        %3265 = vmatpush.msra.mxu0 0.0
        %3266 = vmatpush.msra.mxu0 0.0
        %3267 = vmatpush.msra.mxu0 0.0
        %3268 = vmatpush.msra.mxu0 0.0
        %3269 = vmatpush.msra.mxu0 0.0
        %3270 = vmatpush.msra.mxu0 0.0
        %3271 = vmatpush.msra.mxu0 0.0
        %3272 = vmatpush.msra.mxu0 0.0
        %3273 = vmatpush.msra.mxu0 0.0
        %3274 = vmatpush.msra.mxu0 0.0
        %3275 = vmatpush.msra.mxu0 %v3254
        %3276 = vmatpush.msra.mxu0 %v3253
        %3277 = vmatmul.f32.gmra.mxu0 %v3256
        %v3278 = vpop.f32.mrf.mxu0
        %v3279 = vadd.f32 0.0, %v3278
        %3280 = vmatmul.f32.gmra.mxu0 %v3259
        %v3281 = vpop.f32.mrf.mxu0
        %v3282 = vadd.f32 0.0, %v3281
        %3283 = vdwg.mxu0
        %v3284 = vadd.f32 %v2798, %v3279
        %v3285 = vadd.f32 %v2799, %v3282
        %s3286 = scalar_lea.vmem %s19, 2
        %v3287 = vld [vmem:[%s3286] sm:$0x1]
        %v3289 = vperm.slane %v3287, 0
        %v3291 = vadd.f32 %v3284, %v3289
        %v3292 = vadd.f32 %v3285, %v3289
        %s3293 = scalar_lea.vmem %s21, 2
        %v3294 = vld [vmem:[%s3293] sm:$0x1]
        %s3295 = scalar_lea.vmem [#allocation2], 2
        %v3296 = vld [vmem:[%s3295] sm:$0x1]
        %v3297 = vsel %vm1352, %v3291, 0.0
        %3298 = vadd.xlane.f32.xlu0 %v3297
        %v3299 = vpop.xlane.xlu0 %3298
        %v3300 = vsel %vm1352, %v3292, 0.0
        %3301 = vadd.xlane.f32.xlu0 %v3300
        %v3302 = vpop.xlane.xlu0 %3301
        %v3303 = vmul.f32 %v3299, %v1365
        %v3304 = vmul.f32 %v3302, %v1365
        %v3305 = vsub.f32 %v3291, %v3303
        %v3306 = vsub.f32 %v3292, %v3304
        %v3307 = vmul.f32 %v3305, %v3305
        %v3308 = vmul.f32 %v3306, %v3306
        %v3309 = vsel %vm1352, %v3307, 0.0
        %3310 = vadd.xlane.f32.xlu0 %v3309
        %v3311 = vpop.xlane.xlu0 %3310
        %v3312 = vsel %vm1352, %v3308, 0.0
        %3313 = vadd.xlane.f32.xlu0 %v3312
        %v3314 = vpop.xlane.xlu0 %3313
        %v3315 = vmul.f32 %v3311, %v1365
        %v3316 = vmul.f32 %v3314, %v1365
        %v3317 = vadd.f32 %v3315, 1e-05
        %v3318 = vadd.f32 %v3316, 1e-05
        %v3319 = vrsqrt.pop %v3317
        %v3320 = vmul.f32 %v3319, %v3317
        %v3321 = vmul.f32 %v3320, %v3319
        %v3322 = vmul.f32 0.5, %v3321
        %v3323 = vsub.f32 1.5, %v3322
        %v3324 = vmul.f32 %v3319, %v3323
        %vm3325 = vweird.f32 %v3317
        %vm3326 = vweird.f32 %v3319
        %vm3327 = vmor %vm3325, %vm3326
        %v3328 = vsel %vm3327, %v3319, %v3324
        %v3329 = vrsqrt.pop %v3318
        %v3330 = vmul.f32 %v3329, %v3318
        %v3331 = vmul.f32 %v3330, %v3329
        %v3332 = vmul.f32 0.5, %v3331
        %v3333 = vsub.f32 1.5, %v3332
        %v3334 = vmul.f32 %v3329, %v3333
        %vm3335 = vweird.f32 %v3318
        %vm3336 = vweird.f32 %v3329
        %vm3337 = vmor %vm3335, %vm3336
        %v3338 = vsel %vm3337, %v3329, %v3334
        %v3339 = vmul.f32 %v3305, %v3328
        %v3340 = vmul.f32 %v3306, %v3338
        %v3342 = vperm.slane %v3294, 0
        %v3344 = vmul.f32 %v3339, %v3342
        %v3345 = vmul.f32 %v3340, %v3342
        %v3347 = vperm.slane %v3296, 0
        %v3349 = vadd.f32 %v3344, %v3347
        %v3350 = vadd.f32 %v3345, %v3347
        %s3351 = scalar_lea.vmem %s25, 32
        %v3352 = vld [vmem:[%s3351] sm:$0xff]
        %v3353 = vld [vmem:[%s3351 + $0x8] sm:$0xff]
        %s3354 = scalar_lea.vmem [#allocation5], 2
        %v3355 = vld [vmem:[%s3354] sm:$0x1]
        %v3357 = vperm.slane %v3355, 0
        %v3360 = vsel %vm1352, %v3349, 0
        %v3363 = vsel %vm1352, %v3350, 0
        %3365 = vmatpush.msra.mxu0 0.0
        %3366 = vmatpush.msra.mxu0 0.0
        %3367 = vmatpush.msra.mxu0 0.0
        %3368 = vmatpush.msra.mxu0 0.0
        %3369 = vmatpush.msra.mxu0 0.0
        %3370 = vmatpush.msra.mxu0 0.0
        %3371 = vmatpush.msra.mxu0 0.0
        %3372 = vmatpush.msra.mxu0 0.0
        %3373 = vmatpush.msra.mxu0 0.0
        %3374 = vmatpush.msra.mxu0 0.0
        %3375 = vmatpush.msra.mxu0 0.0
        %3376 = vmatpush.msra.mxu0 0.0
        %3377 = vmatpush.msra.mxu0 0.0
        %3378 = vmatpush.msra.mxu0 0.0
        %3379 = vmatpush.msra.mxu0 %v3353
        %3380 = vmatpush.msra.mxu0 %v3352
        %3381 = vmatmul.f32.gmra.mxu0 %v3360
        %v3382 = vpop.f32.mrf.mxu0
        %v3383 = vadd.f32 %v3357, %v3382
        %3384 = vmatmul.f32.gmra.mxu0 %v3363
        %v3385 = vpop.f32.mrf.mxu0
        %v3386 = vadd.f32 %v3357, %v3385
        %3387 = vdwg.mxu0
        %v3388 = vmul.f32 %v3383, 0.5
        %v3389 = vmul.f32 %v3386, 0.5
        %v3390 = vmul.f32 %v3383, 0.70710677
        %v3391 = vmul.f32 %v3386, 0.70710677
        %v3392 = vmul.f32 %v3390, %v3390
        %v3393 = vmin.f32 16.0, %v3392
        %v3394 = vmul.f32 %v3393, 2.1237322e-06
        %v3395 = vadd.f32 %v3394, 0.00028619796
        %v3396 = vmul.f32 %v3393, %v3395
        %v3397 = vadd.f32 %v3396, 0.0036580483
        %v3398 = vmul.f32 %v3393, %v3397
        %v3399 = vadd.f32 %v3398, 0.05243302
        %v3400 = vmul.f32 %v3393, %v3399
        %v3401 = vadd.f32 %v3400, 0.18741608
        %v3402 = vmul.f32 %v3393, %v3401
        %v3403 = vadd.f32 %v3402, 1.1283791
        %v3404 = vmul.f32 %v3390, %v3403
        %v3405 = vmul.f32 %v3393, 3.8918573e-05
        %v3406 = vadd.f32 %v3405, 0.001143296
        %v3407 = vmul.f32 %v3393, %v3406
        %v3408 = vadd.f32 %v3407, 0.014752088
        %v3409 = vmul.f32 %v3393, %v3408
        %v3410 = vadd.f32 %v3409, 0.112945676
        %v3411 = vmul.f32 %v3393, %v3410
        %v3412 = vadd.f32 %v3411, 0.4994258
        %v3413 = vmul.f32 %v3393, %v3412
        %v3414 = vadd.f32 %v3413, 1.0
        %v3415 = vrcp.pop %v3414
        %v3416 = vmul.f32 %v3414, %v3415
        %v3417 = vsub.f32 1.0, %v3416
        %v3418 = vmul.f32 %v3415, %v3417
        %v3419 = vadd.f32 %v3415, %v3418
        %vm3420 = vweird.f32 %v3414
        %vm3421 = vweird.f32 %v3415
        %vm3422 = vmor %vm3420, %vm3421
        %v3423 = vsel %vm3422, %v3415, %v3419
        %v3424 = vand.u32 2147483647, %v3414
        %vm3425 = vcmp.eq.f32.partialorder %v3424, 8.507059e+37
        %v3426 = vand.u32 %v3414, 2147483648
        %v3427 = vor.u32 1.1754944e-38, %v3426
        %v3428 = vsel %vm3425, %v3427, %v3423
        %v3429 = vmul.f32 %v3404, %v3428
        %v3430 = vmin.f32 %v3429, 1.0
        %v3431 = vmax.f32 %v3430, -1.0
        %v3432 = vmul.f32 %v3391, %v3391
        %v3433 = vmin.f32 16.0, %v3432
        %v3434 = vmul.f32 %v3433, 2.1237322e-06
        %v3435 = vadd.f32 %v3434, 0.00028619796
        %v3436 = vmul.f32 %v3433, %v3435
        %v3437 = vadd.f32 %v3436, 0.0036580483
        %v3438 = vmul.f32 %v3433, %v3437
        %v3439 = vadd.f32 %v3438, 0.05243302
        %v3440 = vmul.f32 %v3433, %v3439
        %v3441 = vadd.f32 %v3440, 0.18741608
        %v3442 = vmul.f32 %v3433, %v3441
        %v3443 = vadd.f32 %v3442, 1.1283791
        %v3444 = vmul.f32 %v3391, %v3443
        %v3445 = vmul.f32 %v3433, 3.8918573e-05
        %v3446 = vadd.f32 %v3445, 0.001143296
        %v3447 = vmul.f32 %v3433, %v3446
        %v3448 = vadd.f32 %v3447, 0.014752088
        %v3449 = vmul.f32 %v3433, %v3448
        %v3450 = vadd.f32 %v3449, 0.112945676
        %v3451 = vmul.f32 %v3433, %v3450
        %v3452 = vadd.f32 %v3451, 0.4994258
        %v3453 = vmul.f32 %v3433, %v3452
        %v3454 = vadd.f32 %v3453, 1.0
        %v3455 = vrcp.pop %v3454
        %v3456 = vmul.f32 %v3454, %v3455
        %v3457 = vsub.f32 1.0, %v3456
        %v3458 = vmul.f32 %v3455, %v3457
        %v3459 = vadd.f32 %v3455, %v3458
        %vm3460 = vweird.f32 %v3454
        %vm3461 = vweird.f32 %v3455
        %vm3462 = vmor %vm3460, %vm3461
        %v3463 = vsel %vm3462, %v3455, %v3459
        %v3464 = vand.u32 2147483647, %v3454
        %vm3465 = vcmp.eq.f32.partialorder %v3464, 8.507059e+37
        %v3466 = vand.u32 %v3454, 2147483648
        %v3467 = vor.u32 1.1754944e-38, %v3466
        %v3468 = vsel %vm3465, %v3467, %v3463
        %v3469 = vmul.f32 %v3444, %v3468
        %v3470 = vmin.f32 %v3469, 1.0
        %v3471 = vmax.f32 %v3470, -1.0
        %v3472 = vadd.f32 %v3431, 1.0
        %v3473 = vadd.f32 %v3471, 1.0
        %v3474 = vmul.f32 %v3388, %v3472
        %v3475 = vmul.f32 %v3389, %v3473
        %s3476 = scalar_lea.vmem %s29, 64
        %v3477 = vld [vmem:[%s3476] sm:$0xff]
        %v3478 = vld [vmem:[%s3476 + $0x8] sm:$0xff]
        %v3479 = vld [vmem:[%s3476 + $0x10] sm:$0xff]
        %v3480 = vld [vmem:[%s3476 + $0x18] sm:$0xff]
        %v3482 = vsel %vm2043, %v3474, 0
        %v3485 = vsel %vm2043, %v3475, 0
        %3487 = vmatpush.msra.mxu0 0.0
        %3488 = vmatpush.msra.mxu0 0.0
        %3489 = vmatpush.msra.mxu0 0.0
        %3490 = vmatpush.msra.mxu0 0.0
        %3491 = vmatpush.msra.mxu0 0.0
        %3492 = vmatpush.msra.mxu0 0.0
        %3493 = vmatpush.msra.mxu0 0.0
        %3494 = vmatpush.msra.mxu0 0.0
        %3495 = vmatpush.msra.mxu0 0.0
        %3496 = vmatpush.msra.mxu0 0.0
        %3497 = vmatpush.msra.mxu0 0.0
        %3498 = vmatpush.msra.mxu0 0.0
        %3499 = vmatpush.msra.mxu0 %v3480
        %3500 = vmatpush.msra.mxu0 %v3479
        %3501 = vmatpush.msra.mxu0 %v3478
        %3502 = vmatpush.msra.mxu0 %v3477
        %3503 = vmatmul.f32.gmra.mxu0 %v3482
        %v3504 = vpop.f32.mrf.mxu0
        %v3505 = vadd.f32 0.0, %v3504
        %3506 = vmatmul.f32.gmra.mxu0 %v3485
        %v3507 = vpop.f32.mrf.mxu0
        %v3508 = vadd.f32 0.0, %v3507
        %3509 = vdwg.mxu0
        %v3510 = vadd.f32 %v3291, %v3505
        %v3511 = vadd.f32 %v3292, %v3508
        %s3512 = scalar_lea.vmem [#allocation7], 2
        %v3513 = vld [vmem:[%s3512] sm:$0x1]
        %v3515 = vperm.slane %v3513, 0
        %v3517 = vadd.f32 %v3510, %v3515
        %v3518 = vadd.f32 %v3511, %v3515
        %v3519 = vld [vmem:[%s1300] sm:$0xff]
        %v3520 = vld [vmem:[#allocation8] sm:$0x1]
        %v3521 = vld [vmem:[#allocation10] sm:$0x1]
        %v3522 = vsel %vm1352, %v3519, 0.0
        %3523 = vadd.xlane.f32.xlu0 %v3522
        %v3524 = vpop.xlane.xlu0 %3523
        %v3525 = vmul.f32 %v3524, %v1365
        %v3526 = vsub.f32 %v3519, %v3525
        %v3527 = vmul.f32 %v3526, %v3526
        %v3528 = vsel %vm1352, %v3527, 0.0
        %3529 = vadd.xlane.f32.xlu0 %v3528
        %v3530 = vpop.xlane.xlu0 %3529
        %v3531 = vmul.f32 %v3530, %v1365
        %v3532 = vadd.f32 %v3531, 1e-05
        %v3533 = vrsqrt.pop %v3532
        %v3534 = vmul.f32 %v3533, %v3532
        %v3535 = vmul.f32 %v3534, %v3533
        %v3536 = vmul.f32 0.5, %v3535
        %v3537 = vsub.f32 1.5, %v3536
        %v3538 = vmul.f32 %v3533, %v3537
        %vm3539 = vweird.f32 %v3532
        %vm3540 = vweird.f32 %v3533
        %vm3541 = vmor %vm3539, %vm3540
        %v3542 = vsel %vm3541, %v3533, %v3538
        %v3543 = vmul.f32 %v3526, %v3542
        %v3545 = vperm.slane %v3520, 0
        %v3547 = vmul.f32 %v3543, %v3545
        %v3549 = vperm.slane %v3521, 0
        %v3551 = vadd.f32 %v3547, %v3549
        %v3552 = vld [vmem:[%s37] sm:$0xff]
        %v3553 = vld [vmem:[%s37 + $0x8] sm:$0xff]
        %v3555 = vsel %vm1352, %v3551, 0
        %3557 = vmatpush.msra.mxu0 0.0
        %3558 = vmatpush.msra.mxu0 0.0
        %3559 = vmatpush.msra.mxu0 0.0
        %3560 = vmatpush.msra.mxu0 0.0
        %3561 = vmatpush.msra.mxu0 0.0
        %3562 = vmatpush.msra.mxu0 0.0
        %3563 = vmatpush.msra.mxu0 0.0
        %3564 = vmatpush.msra.mxu0 0.0
        %3565 = vmatpush.msra.mxu0 0.0
        %3566 = vmatpush.msra.mxu0 0.0
        %3567 = vmatpush.msra.mxu0 0.0
        %3568 = vmatpush.msra.mxu0 0.0
        %3569 = vmatpush.msra.mxu0 0.0
        %3570 = vmatpush.msra.mxu0 0.0
        %3571 = vmatpush.msra.mxu0 %v3553
        %3572 = vmatpush.msra.mxu0 %v3552
        %3573 = vmatmul.f32.gmra.mxu0 %v3555
        %v3574 = vpop.f32.mrf.mxu0
        %v3575 = vadd.f32 0.0, %v3574
        %3576 = vdwg.mxu0
        %v3577 = vmul.f32 %v3575, 0.33333334
        %v3578 = vsel %vm1449, %v3577, 0.0
        %v3579 = vsel %vm1452, %v3577, 0.0
        %v3580 = vsel %vm1455, %v3577, 0.0
        %v3581 = vsel %vm1458, %v3577, 0.0
        %3583 = vrot.lane.b32.xlu0 %v3575, 112
        %v3584 = vpop.permute.xlu0 %3583
        %v3586 = vsel %vm1352, %v3578, 0
        %v3589 = vsel %vm1352, %v3579, 0
        %v3592 = vsel %vm1352, %v3580, 0
        %v3595 = vsel %vm1352, %v3581, 0
        %v3597 = vsel %vm1352, %v3584, 0
        %3599 = vmatpush.xpose.msra.mxu0 0.0
        %3600 = vmatpush.xpose.msra.mxu0 0.0
        %3601 = vmatpush.xpose.msra.mxu0 0.0
        %3602 = vmatpush.xpose.msra.mxu0 0.0
        %3603 = vmatpush.xpose.msra.mxu0 0.0
        %3604 = vmatpush.xpose.msra.mxu0 0.0
        %3605 = vmatpush.xpose.msra.mxu0 0.0
        %3606 = vmatpush.xpose.msra.mxu0 0.0
        %3607 = vmatpush.xpose.msra.mxu0 0.0
        %3608 = vmatpush.xpose.msra.mxu0 0.0
        %3609 = vmatpush.xpose.msra.mxu0 0.0
        %3610 = vmatpush.xpose.msra.mxu0 0.0
        %3611 = vmatpush.xpose.msra.mxu0 0.0
        %3612 = vmatpush.xpose.msra.mxu0 0.0
        %3613 = vmatpush.xpose.msra.mxu0 0.0
        %3614 = vmatpush.xpose.msra.mxu0 %v3597
        %3615 = vmatmul.f32.gmra.mxu0 %v3586
        %v3616 = vpop.f32.mrf.mxu0
        %v3617 = vadd.f32 0.0, %v3616
        %3618 = vmatmul.f32.gmra.mxu0 %v3589
        %v3619 = vpop.f32.mrf.mxu0
        %v3620 = vadd.f32 0.0, %v3619
        %3621 = vmatmul.f32.gmra.mxu0 %v3592
        %v3622 = vpop.f32.mrf.mxu0
        %v3623 = vadd.f32 0.0, %v3622
        %3624 = vmatmul.f32.gmra.mxu0 %v3595
        %v3625 = vpop.f32.mrf.mxu0
        %v3626 = vadd.f32 0.0, %v3625
        %3627 = vdwg.mxu0
        %v3628 = vlaneseq
        %v3629 = vshrl.u32 %v3628, 7
        %vm3630 = vcmp.le.s32.totalorder %v1446, %v3629
        %v3631 = vsel %vm3630, %v3617, -1e+30
        %v3632 = vsel %vm3630, %v3620, -1e+30
        %v3633 = vsel %vm3630, %v3623, -1e+30
        %v3634 = vsel %vm3630, %v3626, -1e+30
        %vm3635 = vcmask 64512
        %v3636 = vsel %vm3635, %v3631, -inf
        %3637 = vmax.xlane.f32.xlu0 %v3636
        %v3638 = vpop.xlane.xlu0 %3637
        %v3639 = vsel %vm3635, %v3632, -inf
        %3640 = vmax.xlane.f32.xlu0 %v3639
        %v3641 = vpop.xlane.xlu0 %3640
        %v3642 = vsel %vm3635, %v3633, -inf
        %3643 = vmax.xlane.f32.xlu0 %v3642
        %v3644 = vpop.xlane.xlu0 %3643
        %v3645 = vsel %vm3635, %v3634, -inf
        %3646 = vmax.xlane.f32.xlu0 %v3645
        %v3647 = vpop.xlane.xlu0 %3646
        %v3648 = vsub.f32 %v3631, %v3638
        %v3649 = vsub.f32 %v3632, %v3641
        %v3650 = vsub.f32 %v3633, %v3644
        %v3651 = vsub.f32 %v3634, %v3647
        %v3652 = vmul.f32 %v3648, 1.442695
        %v3653 = vpow.pop %v3652
        %v3654 = vmul.f32 %v3649, 1.442695
        %v3655 = vpow.pop %v3654
        %v3656 = vmul.f32 %v3650, 1.442695
        %v3657 = vpow.pop %v3656
        %v3658 = vmul.f32 %v3651, 1.442695
        %v3659 = vpow.pop %v3658
        %v3660 = vsel %vm3635, %v3653, 0.0
        %3661 = vadd.xlane.f32.xlu0 %v3660
        %v3662 = vpop.xlane.xlu0 %3661
        %v3663 = vsel %vm3635, %v3655, 0.0
        %3664 = vadd.xlane.f32.xlu0 %v3663
        %v3665 = vpop.xlane.xlu0 %3664
        %v3666 = vsel %vm3635, %v3657, 0.0
        %3667 = vadd.xlane.f32.xlu0 %v3666
        %v3668 = vpop.xlane.xlu0 %3667
        %v3669 = vsel %vm3635, %v3659, 0.0
        %3670 = vadd.xlane.f32.xlu0 %v3669
        %v3671 = vpop.xlane.xlu0 %3670
        %v3672 = vrcp.pop %v3662
        %v3673 = vmul.f32 %v3662, %v3672
        %v3674 = vsub.f32 1.0, %v3673
        %v3675 = vmul.f32 %v3672, %v3674
        %v3676 = vadd.f32 %v3672, %v3675
        %vm3677 = vweird.f32 %v3662
        %vm3678 = vweird.f32 %v3672
        %vm3679 = vmor %vm3677, %vm3678
        %v3680 = vsel %vm3679, %v3672, %v3676
        %v3681 = vand.u32 2147483647, %v3662
        %vm3682 = vcmp.eq.f32.partialorder %v3681, 8.507059e+37
        %v3683 = vand.u32 %v3662, 2147483648
        %v3684 = vor.u32 1.1754944e-38, %v3683
        %v3685 = vsel %vm3682, %v3684, %v3680
        %v3686 = vmul.f32 %v3653, %v3685
        %v3687 = vrcp.pop %v3665
        %v3688 = vmul.f32 %v3665, %v3687
        %v3689 = vsub.f32 1.0, %v3688
        %v3690 = vmul.f32 %v3687, %v3689
        %v3691 = vadd.f32 %v3687, %v3690
        %vm3692 = vweird.f32 %v3665
        %vm3693 = vweird.f32 %v3687
        %vm3694 = vmor %vm3692, %vm3693
        %v3695 = vsel %vm3694, %v3687, %v3691
        %v3696 = vand.u32 2147483647, %v3665
        %vm3697 = vcmp.eq.f32.partialorder %v3696, 8.507059e+37
        %v3698 = vand.u32 %v3665, 2147483648
        %v3699 = vor.u32 1.1754944e-38, %v3698
        %v3700 = vsel %vm3697, %v3699, %v3695
        %v3701 = vmul.f32 %v3655, %v3700
        %v3702 = vrcp.pop %v3668
        %v3703 = vmul.f32 %v3668, %v3702
        %v3704 = vsub.f32 1.0, %v3703
        %v3705 = vmul.f32 %v3702, %v3704
        %v3706 = vadd.f32 %v3702, %v3705
        %vm3707 = vweird.f32 %v3668
        %vm3708 = vweird.f32 %v3702
        %vm3709 = vmor %vm3707, %vm3708
        %v3710 = vsel %vm3709, %v3702, %v3706
        %v3711 = vand.u32 2147483647, %v3668
        %vm3712 = vcmp.eq.f32.partialorder %v3711, 8.507059e+37
        %v3713 = vand.u32 %v3668, 2147483648
        %v3714 = vor.u32 1.1754944e-38, %v3713
        %v3715 = vsel %vm3712, %v3714, %v3710
        %v3716 = vmul.f32 %v3657, %v3715
        %v3717 = vrcp.pop %v3671
        %v3718 = vmul.f32 %v3671, %v3717
        %v3719 = vsub.f32 1.0, %v3718
        %v3720 = vmul.f32 %v3717, %v3719
        %v3721 = vadd.f32 %v3717, %v3720
        %vm3722 = vweird.f32 %v3671
        %vm3723 = vweird.f32 %v3717
        %vm3724 = vmor %vm3722, %vm3723
        %v3725 = vsel %vm3724, %v3717, %v3721
        %v3726 = vand.u32 2147483647, %v3671
        %vm3727 = vcmp.eq.f32.partialorder %v3726, 8.507059e+37
        %v3728 = vand.u32 %v3671, 2147483648
        %v3729 = vor.u32 1.1754944e-38, %v3728
        %v3730 = vsel %vm3727, %v3729, %v3725
        %v3731 = vmul.f32 %v3659, %v3730
        %3732 = vrot.lane.b32.xlu0 %v3575, 96
        %v3733 = vpop.permute.xlu0 %3732
        %v3736 = vsel %vm3635, %v3686, 0
        %v3739 = vsel %vm3635, %v3701, 0
        %v3742 = vsel %vm3635, %v3716, 0
        %v3745 = vsel %vm3635, %v3731, 0
        %3747 = vmatpush.msra.mxu0 0.0
        %3748 = vmatpush.msra.mxu0 0.0
        %3749 = vmatpush.msra.mxu0 0.0
        %3750 = vmatpush.msra.mxu0 0.0
        %3751 = vmatpush.msra.mxu0 0.0
        %3752 = vmatpush.msra.mxu0 0.0
        %3753 = vmatpush.msra.mxu0 0.0
        %3754 = vmatpush.msra.mxu0 0.0
        %3755 = vmatpush.msra.mxu0 0.0
        %3756 = vmatpush.msra.mxu0 0.0
        %3757 = vmatpush.msra.mxu0 0.0
        %3758 = vmatpush.msra.mxu0 0.0
        %3759 = vmatpush.msra.mxu0 0.0
        %3760 = vmatpush.msra.mxu0 0.0
        %3761 = vmatpush.msra.mxu0 0.0
        %3762 = vmatpush.msra.mxu0 %v3733
        %3763 = vmatmul.f32.gmra.mxu0 %v3736
        %v3764 = vpop.f32.mrf.mxu0
        %v3765 = vadd.f32 0.0, %v3764
        %3766 = vmatmul.f32.gmra.mxu0 %v3739
        %v3767 = vpop.f32.mrf.mxu0
        %v3768 = vadd.f32 0.0, %v3767
        %3769 = vmatmul.f32.gmra.mxu0 %v3742
        %v3770 = vpop.f32.mrf.mxu0
        %v3771 = vadd.f32 0.0, %v3770
        %3772 = vmatmul.f32.gmra.mxu0 %v3745
        %v3773 = vpop.f32.mrf.mxu0
        %v3774 = vadd.f32 0.0, %v3773
        %3775 = vdwg.mxu0
        %v3776 = vsel %vm1449, %v3765, 0.0
        %v3777 = vsel %vm1452, %v3768, 0.0
        %v3778 = vadd.f32 %v3776, %v3777
        %v3779 = vsel %vm1455, %v3771, 0.0
        %v3780 = vadd.f32 %v3778, %v3779
        %v3781 = vsel %vm1458, %v3774, 0.0
        %v3782 = vadd.f32 %v3780, %v3781
        %v3783 = vld [vmem:[%s39] sm:$0xff]
        %v3784 = vld [vmem:[%s39 + $0x8] sm:$0xff]
        %v3786 = vsel %vm1352, %v3782, 0
        %3788 = vmatpush.msra.mxu0 0.0
        %3789 = vmatpush.msra.mxu0 0.0
        %3790 = vmatpush.msra.mxu0 0.0
        %3791 = vmatpush.msra.mxu0 0.0
        %3792 = vmatpush.msra.mxu0 0.0
        %3793 = vmatpush.msra.mxu0 0.0
        %3794 = vmatpush.msra.mxu0 0.0
        %3795 = vmatpush.msra.mxu0 0.0
        %3796 = vmatpush.msra.mxu0 0.0
        %3797 = vmatpush.msra.mxu0 0.0
        %3798 = vmatpush.msra.mxu0 0.0
        %3799 = vmatpush.msra.mxu0 0.0
        %3800 = vmatpush.msra.mxu0 0.0
        %3801 = vmatpush.msra.mxu0 0.0
        %3802 = vmatpush.msra.mxu0 %v3784
        %3803 = vmatpush.msra.mxu0 %v3783
        %3804 = vmatmul.f32.gmra.mxu0 %v3786
        %v3805 = vpop.f32.mrf.mxu0
        %v3806 = vadd.f32 0.0, %v3805
        %3807 = vdwg.mxu0
        %v3808 = vadd.f32 %v3519, %v3806
        %v3809 = vld [vmem:[#allocation11] sm:$0x1]
        %v3811 = vperm.slane %v3809, 0
        %v3813 = vadd.f32 %v3808, %v3811
        %v3814 = vld [vmem:[#allocation13] sm:$0x1]
        %v3815 = vld [vmem:[#allocation14] sm:$0x1]
        %v3816 = vsel %vm1352, %v3813, 0.0
        %3817 = vadd.xlane.f32.xlu0 %v3816
        %v3818 = vpop.xlane.xlu0 %3817
        %v3819 = vmul.f32 %v3818, %v1365
        %v3820 = vsub.f32 %v3813, %v3819
        %v3821 = vmul.f32 %v3820, %v3820
        %v3822 = vsel %vm1352, %v3821, 0.0
        %3823 = vadd.xlane.f32.xlu0 %v3822
        %v3824 = vpop.xlane.xlu0 %3823
        %v3825 = vmul.f32 %v3824, %v1365
        %v3826 = vadd.f32 %v3825, 1e-05
        %v3827 = vrsqrt.pop %v3826
        %v3828 = vmul.f32 %v3827, %v3826
        %v3829 = vmul.f32 %v3828, %v3827
        %v3830 = vmul.f32 0.5, %v3829
        %v3831 = vsub.f32 1.5, %v3830
        %v3832 = vmul.f32 %v3827, %v3831
        %vm3833 = vweird.f32 %v3826
        %vm3834 = vweird.f32 %v3827
        %vm3835 = vmor %vm3833, %vm3834
        %v3836 = vsel %vm3835, %v3827, %v3832
        %v3837 = vmul.f32 %v3820, %v3836
        %v3839 = vperm.slane %v3814, 0
        %v3841 = vmul.f32 %v3837, %v3839
        %v3843 = vperm.slane %v3815, 0
        %v3845 = vadd.f32 %v3841, %v3843
        %v3846 = vsel %vm1352, %v3517, 0.0
        %3847 = vadd.xlane.f32.xlu0 %v3846
        %v3848 = vpop.xlane.xlu0 %3847
        %v3849 = vsel %vm1352, %v3518, 0.0
        %3850 = vadd.xlane.f32.xlu0 %v3849
        %v3851 = vpop.xlane.xlu0 %3850
        %v3852 = vmul.f32 %v3848, %v1365
        %v3853 = vmul.f32 %v3851, %v1365
        %v3854 = vsub.f32 %v3517, %v3852
        %v3855 = vsub.f32 %v3518, %v3853
        %v3856 = vmul.f32 %v3854, %v3854
        %v3857 = vmul.f32 %v3855, %v3855
        %v3858 = vsel %vm1352, %v3856, 0.0
        %3859 = vadd.xlane.f32.xlu0 %v3858
        %v3860 = vpop.xlane.xlu0 %3859
        %v3861 = vsel %vm1352, %v3857, 0.0
        %3862 = vadd.xlane.f32.xlu0 %v3861
        %v3863 = vpop.xlane.xlu0 %3862
        %v3864 = vmul.f32 %v3860, %v1365
        %v3865 = vmul.f32 %v3863, %v1365
        %v3866 = vadd.f32 %v3864, 1e-05
        %v3867 = vadd.f32 %v3865, 1e-05
        %v3868 = vrsqrt.pop %v3866
        %v3869 = vmul.f32 %v3868, %v3866
        %v3870 = vmul.f32 %v3869, %v3868
        %v3871 = vmul.f32 0.5, %v3870
        %v3872 = vsub.f32 1.5, %v3871
        %v3873 = vmul.f32 %v3868, %v3872
        %vm3874 = vweird.f32 %v3866
        %vm3875 = vweird.f32 %v3868
        %vm3876 = vmor %vm3874, %vm3875
        %v3877 = vsel %vm3876, %v3868, %v3873
        %v3878 = vrsqrt.pop %v3867
        %v3879 = vmul.f32 %v3878, %v3867
        %v3880 = vmul.f32 %v3879, %v3878
        %v3881 = vmul.f32 0.5, %v3880
        %v3882 = vsub.f32 1.5, %v3881
        %v3883 = vmul.f32 %v3878, %v3882
        %vm3884 = vweird.f32 %v3867
        %vm3885 = vweird.f32 %v3878
        %vm3886 = vmor %vm3884, %vm3885
        %v3887 = vsel %vm3886, %v3878, %v3883
        %v3888 = vmul.f32 %v3854, %v3877
        %v3889 = vmul.f32 %v3855, %v3887
        %v3890 = vmul.f32 %v3888, %v1907
        %v3891 = vmul.f32 %v3889, %v1907
        %v3892 = vadd.f32 %v3890, %v1912
        %v3893 = vadd.f32 %v3891, %v1912
        %v3894 = vld [vmem:[%s47] sm:$0xff]
        %v3895 = vld [vmem:[%s47 + $0x8] sm:$0xff]
        %v3897 = vsel %vm1352, %v3845, 0
        %3899 = vmatpush.msra.mxu0 0.0
        %3900 = vmatpush.msra.mxu0 0.0
        %3901 = vmatpush.msra.mxu0 0.0
        %3902 = vmatpush.msra.mxu0 0.0
        %3903 = vmatpush.msra.mxu0 0.0
        %3904 = vmatpush.msra.mxu0 0.0
        %3905 = vmatpush.msra.mxu0 0.0
        %3906 = vmatpush.msra.mxu0 0.0
        %3907 = vmatpush.msra.mxu0 0.0
        %3908 = vmatpush.msra.mxu0 0.0
        %3909 = vmatpush.msra.mxu0 0.0
        %3910 = vmatpush.msra.mxu0 0.0
        %3911 = vmatpush.msra.mxu0 0.0
        %3912 = vmatpush.msra.mxu0 0.0
        %3913 = vmatpush.msra.mxu0 %v3895
        %3914 = vmatpush.msra.mxu0 %v3894
        %3915 = vmatmul.f32.gmra.mxu0 %v3897
        %v3916 = vpop.f32.mrf.mxu0
        %v3917 = vadd.f32 0.0, %v3916
        %3918 = vdwg.mxu0
        %v3919 = vld [vmem:[%s49] sm:$0xff]
        %v3920 = vld [vmem:[%s49 + $0x8] sm:$0xff]
        %v3922 = vsel %vm1352, %v3892, 0
        %v3925 = vsel %vm1352, %v3893, 0
        %3927 = vmatpush.msra.mxu0 0.0
        %3928 = vmatpush.msra.mxu0 0.0
        %3929 = vmatpush.msra.mxu0 0.0
        %3930 = vmatpush.msra.mxu0 0.0
        %3931 = vmatpush.msra.mxu0 0.0
        %3932 = vmatpush.msra.mxu0 0.0
        %3933 = vmatpush.msra.mxu0 0.0
        %3934 = vmatpush.msra.mxu0 0.0
        %3935 = vmatpush.msra.mxu0 0.0
        %3936 = vmatpush.msra.mxu0 0.0
        %3937 = vmatpush.msra.mxu0 0.0
        %3938 = vmatpush.msra.mxu0 0.0
        %3939 = vmatpush.msra.mxu0 0.0
        %3940 = vmatpush.msra.mxu0 0.0
        %3941 = vmatpush.msra.mxu0 %v3920
        %3942 = vmatpush.msra.mxu0 %v3919
        %3943 = vmatmul.f32.gmra.mxu0 %v3922
        %v3944 = vpop.f32.mrf.mxu0
        %v3945 = vadd.f32 0.0, %v3944
        %3946 = vmatmul.f32.gmra.mxu0 %v3925
        %v3947 = vpop.f32.mrf.mxu0
        %v3948 = vadd.f32 0.0, %v3947
        %3949 = vdwg.mxu0
        %v3950 = vmul.f32 %v3917, 0.33333334
        %v3951 = vsel %vm1449, %v3950, 0.0
        %v3952 = vsel %vm1452, %v3950, 0.0
        %v3953 = vsel %vm1455, %v3950, 0.0
        %v3954 = vsel %vm1458, %v3950, 0.0
        %v3956 = vsel %vm1352, %v3951, 0
        %v3959 = vsel %vm1352, %v3952, 0
        %v3962 = vsel %vm1352, %v3953, 0
        %v3965 = vsel %vm1352, %v3954, 0
        %v3968 = vsel %vm1352, %v3945, 0
        %v3971 = vsel %vm1352, %v3948, 0
        %3973 = vmatpush.xpose.msra.mxu0 0.0
        %3974 = vmatpush.xpose.msra.mxu0 0.0
        %3975 = vmatpush.xpose.msra.mxu0 0.0
        %3976 = vmatpush.xpose.msra.mxu0 0.0
        %3977 = vmatpush.xpose.msra.mxu0 0.0
        %3978 = vmatpush.xpose.msra.mxu0 0.0
        %3979 = vmatpush.xpose.msra.mxu0 0.0
        %3980 = vmatpush.xpose.msra.mxu0 0.0
        %3981 = vmatpush.xpose.msra.mxu0 0.0
        %3982 = vmatpush.xpose.msra.mxu0 0.0
        %3983 = vmatpush.xpose.msra.mxu0 0.0
        %3984 = vmatpush.xpose.msra.mxu0 0.0
        %3985 = vmatpush.xpose.msra.mxu0 0.0
        %3986 = vmatpush.xpose.msra.mxu0 0.0
        %3987 = vmatpush.xpose.msra.mxu0 %v3971
        %3988 = vmatpush.xpose.msra.mxu0 %v3968
        %3989 = vmatmul.f32.gmra.mxu0 %v3956
        %v3990 = vpop.f32.mrf.mxu0
        %v3991 = vadd.f32 0.0, %v3990
        %3992 = vmatmul.f32.gmra.mxu0 %v3959
        %v3993 = vpop.f32.mrf.mxu0
        %v3994 = vadd.f32 0.0, %v3993
        %3995 = vmatmul.f32.gmra.mxu0 %v3962
        %v3996 = vpop.f32.mrf.mxu0
        %v3997 = vadd.f32 0.0, %v3996
        %3998 = vmatmul.f32.gmra.mxu0 %v3965
        %v3999 = vpop.f32.mrf.mxu0
        %v4000 = vadd.f32 0.0, %v3999
        %4001 = vdwg.mxu0
        %v4002 = vsel %vm1352, %v3991, -inf
        %4003 = vmax.xlane.f32.xlu0 %v4002
        %v4004 = vpop.xlane.xlu0 %4003
        %v4005 = vsel %vm1352, %v3994, -inf
        %4006 = vmax.xlane.f32.xlu0 %v4005
        %v4007 = vpop.xlane.xlu0 %4006
        %v4008 = vsel %vm1352, %v3997, -inf
        %4009 = vmax.xlane.f32.xlu0 %v4008
        %v4010 = vpop.xlane.xlu0 %4009
        %v4011 = vsel %vm1352, %v4000, -inf
        %4012 = vmax.xlane.f32.xlu0 %v4011
        %v4013 = vpop.xlane.xlu0 %4012
        %v4014 = vsub.f32 %v3991, %v4004
        %v4015 = vsub.f32 %v3994, %v4007
        %v4016 = vsub.f32 %v3997, %v4010
        %v4017 = vsub.f32 %v4000, %v4013
        %v4018 = vmul.f32 %v4014, 1.442695
        %v4019 = vpow.pop %v4018
        %v4020 = vmul.f32 %v4015, 1.442695
        %v4021 = vpow.pop %v4020
        %v4022 = vmul.f32 %v4016, 1.442695
        %v4023 = vpow.pop %v4022
        %v4024 = vmul.f32 %v4017, 1.442695
        %v4025 = vpow.pop %v4024
        %v4026 = vsel %vm1352, %v4019, 0.0
        %4027 = vadd.xlane.f32.xlu0 %v4026
        %v4028 = vpop.xlane.xlu0 %4027
        %v4029 = vsel %vm1352, %v4021, 0.0
        %4030 = vadd.xlane.f32.xlu0 %v4029
        %v4031 = vpop.xlane.xlu0 %4030
        %v4032 = vsel %vm1352, %v4023, 0.0
        %4033 = vadd.xlane.f32.xlu0 %v4032
        %v4034 = vpop.xlane.xlu0 %4033
        %v4035 = vsel %vm1352, %v4025, 0.0
        %4036 = vadd.xlane.f32.xlu0 %v4035
        %v4037 = vpop.xlane.xlu0 %4036
        %v4038 = vrcp.pop %v4028
        %v4039 = vmul.f32 %v4028, %v4038
        %v4040 = vsub.f32 1.0, %v4039
        %v4041 = vmul.f32 %v4038, %v4040
        %v4042 = vadd.f32 %v4038, %v4041
        %vm4043 = vweird.f32 %v4028
        %vm4044 = vweird.f32 %v4038
        %vm4045 = vmor %vm4043, %vm4044
        %v4046 = vsel %vm4045, %v4038, %v4042
        %v4047 = vand.u32 2147483647, %v4028
        %vm4048 = vcmp.eq.f32.partialorder %v4047, 8.507059e+37
        %v4049 = vand.u32 %v4028, 2147483648
        %v4050 = vor.u32 1.1754944e-38, %v4049
        %v4051 = vsel %vm4048, %v4050, %v4046
        %v4052 = vmul.f32 %v4019, %v4051
        %v4053 = vrcp.pop %v4031
        %v4054 = vmul.f32 %v4031, %v4053
        %v4055 = vsub.f32 1.0, %v4054
        %v4056 = vmul.f32 %v4053, %v4055
        %v4057 = vadd.f32 %v4053, %v4056
        %vm4058 = vweird.f32 %v4031
        %vm4059 = vweird.f32 %v4053
        %vm4060 = vmor %vm4058, %vm4059
        %v4061 = vsel %vm4060, %v4053, %v4057
        %v4062 = vand.u32 2147483647, %v4031
        %vm4063 = vcmp.eq.f32.partialorder %v4062, 8.507059e+37
        %v4064 = vand.u32 %v4031, 2147483648
        %v4065 = vor.u32 1.1754944e-38, %v4064
        %v4066 = vsel %vm4063, %v4065, %v4061
        %v4067 = vmul.f32 %v4021, %v4066
        %v4068 = vrcp.pop %v4034
        %v4069 = vmul.f32 %v4034, %v4068
        %v4070 = vsub.f32 1.0, %v4069
        %v4071 = vmul.f32 %v4068, %v4070
        %v4072 = vadd.f32 %v4068, %v4071
        %vm4073 = vweird.f32 %v4034
        %vm4074 = vweird.f32 %v4068
        %vm4075 = vmor %vm4073, %vm4074
        %v4076 = vsel %vm4075, %v4068, %v4072
        %v4077 = vand.u32 2147483647, %v4034
        %vm4078 = vcmp.eq.f32.partialorder %v4077, 8.507059e+37
        %v4079 = vand.u32 %v4034, 2147483648
        %v4080 = vor.u32 1.1754944e-38, %v4079
        %v4081 = vsel %vm4078, %v4080, %v4076
        %v4082 = vmul.f32 %v4023, %v4081
        %v4083 = vrcp.pop %v4037
        %v4084 = vmul.f32 %v4037, %v4083
        %v4085 = vsub.f32 1.0, %v4084
        %v4086 = vmul.f32 %v4083, %v4085
        %v4087 = vadd.f32 %v4083, %v4086
        %vm4088 = vweird.f32 %v4037
        %vm4089 = vweird.f32 %v4083
        %vm4090 = vmor %vm4088, %vm4089
        %v4091 = vsel %vm4090, %v4083, %v4087
        %v4092 = vand.u32 2147483647, %v4037
        %vm4093 = vcmp.eq.f32.partialorder %v4092, 8.507059e+37
        %v4094 = vand.u32 %v4037, 2147483648
        %v4095 = vor.u32 1.1754944e-38, %v4094
        %v4096 = vsel %vm4093, %v4095, %v4091
        %v4097 = vmul.f32 %v4025, %v4096
        %4098 = vrot.lane.b32.xlu0 %v3945, 112
        %v4099 = vpop.permute.xlu0 %4098
        %4100 = vrot.lane.b32.xlu0 %v3948, 112
        %v4101 = vpop.permute.xlu0 %4100
        %v4105 = vsel %vm1352, %v4052, 0
        %v4108 = vsel %vm1352, %v4067, 0
        %v4111 = vsel %vm1352, %v4082, 0
        %v4114 = vsel %vm1352, %v4097, 0
        %4116 = vmatpush.msra.mxu0 0.0
        %4117 = vmatpush.msra.mxu0 0.0
        %4118 = vmatpush.msra.mxu0 0.0
        %4119 = vmatpush.msra.mxu0 0.0
        %4120 = vmatpush.msra.mxu0 0.0
        %4121 = vmatpush.msra.mxu0 0.0
        %4122 = vmatpush.msra.mxu0 0.0
        %4123 = vmatpush.msra.mxu0 0.0
        %4124 = vmatpush.msra.mxu0 0.0
        %4125 = vmatpush.msra.mxu0 0.0
        %4126 = vmatpush.msra.mxu0 0.0
        %4127 = vmatpush.msra.mxu0 0.0
        %4128 = vmatpush.msra.mxu0 0.0
        %4129 = vmatpush.msra.mxu0 0.0
        %4130 = vmatpush.msra.mxu0 %v4101
        %4131 = vmatpush.msra.mxu0 %v4099
        %4132 = vmatmul.f32.gmra.mxu0 %v4105
        %v4133 = vpop.f32.mrf.mxu0
        %v4134 = vadd.f32 0.0, %v4133
        %4135 = vmatmul.f32.gmra.mxu0 %v4108
        %v4136 = vpop.f32.mrf.mxu0
        %v4137 = vadd.f32 0.0, %v4136
        %4138 = vmatmul.f32.gmra.mxu0 %v4111
        %v4139 = vpop.f32.mrf.mxu0
        %v4140 = vadd.f32 0.0, %v4139
        %4141 = vmatmul.f32.gmra.mxu0 %v4114
        %v4142 = vpop.f32.mrf.mxu0
        %v4143 = vadd.f32 0.0, %v4142
        %4144 = vdwg.mxu0
        %v4145 = vsel %vm1449, %v4134, 0.0
        %v4146 = vsel %vm1452, %v4137, 0.0
        %v4147 = vadd.f32 %v4145, %v4146
        %v4148 = vsel %vm1455, %v4140, 0.0
        %v4149 = vadd.f32 %v4147, %v4148
        %v4150 = vsel %vm1458, %v4143, 0.0
        %v4151 = vadd.f32 %v4149, %v4150
        %v4152 = vld [vmem:[%s51] sm:$0xff]
        %v4153 = vld [vmem:[%s51 + $0x8] sm:$0xff]
        %v4155 = vsel %vm1352, %v4151, 0
        %4157 = vmatpush.msra.mxu0 0.0
        %4158 = vmatpush.msra.mxu0 0.0
        %4159 = vmatpush.msra.mxu0 0.0
        %4160 = vmatpush.msra.mxu0 0.0
        %4161 = vmatpush.msra.mxu0 0.0
        %4162 = vmatpush.msra.mxu0 0.0
        %4163 = vmatpush.msra.mxu0 0.0
        %4164 = vmatpush.msra.mxu0 0.0
        %4165 = vmatpush.msra.mxu0 0.0
        %4166 = vmatpush.msra.mxu0 0.0
        %4167 = vmatpush.msra.mxu0 0.0
        %4168 = vmatpush.msra.mxu0 0.0
        %4169 = vmatpush.msra.mxu0 0.0
        %4170 = vmatpush.msra.mxu0 0.0
        %4171 = vmatpush.msra.mxu0 %v4153
        %4172 = vmatpush.msra.mxu0 %v4152
        %4173 = vmatmul.f32.gmra.mxu0 %v4155
        %v4174 = vpop.f32.mrf.mxu0
        %v4175 = vadd.f32 0.0, %v4174
        %4176 = vdwg.mxu0
        %v4177 = vadd.f32 %v3813, %v4175
        %v4178 = vld [vmem:[#allocation16] sm:$0x1]
        %v4180 = vperm.slane %v4178, 0
        %v4182 = vadd.f32 %v4177, %v4180
        %v4183 = vld [vmem:[#allocation17] sm:$0x1]
        %v4184 = vld [vmem:[#allocation19] sm:$0x1]
        %v4185 = vsel %vm1352, %v4182, 0.0
        %4186 = vadd.xlane.f32.xlu0 %v4185
        %v4187 = vpop.xlane.xlu0 %4186
        %v4188 = vmul.f32 %v4187, %v1365
        %v4189 = vsub.f32 %v4182, %v4188
        %v4190 = vmul.f32 %v4189, %v4189
        %v4191 = vsel %vm1352, %v4190, 0.0
        %4192 = vadd.xlane.f32.xlu0 %v4191
        %v4193 = vpop.xlane.xlu0 %4192
        %v4194 = vmul.f32 %v4193, %v1365
        %v4195 = vadd.f32 %v4194, 1e-05
        %v4196 = vrsqrt.pop %v4195
        %v4197 = vmul.f32 %v4196, %v4195
        %v4198 = vmul.f32 %v4197, %v4196
        %v4199 = vmul.f32 0.5, %v4198
        %v4200 = vsub.f32 1.5, %v4199
        %v4201 = vmul.f32 %v4196, %v4200
        %vm4202 = vweird.f32 %v4195
        %vm4203 = vweird.f32 %v4196
        %vm4204 = vmor %vm4202, %vm4203
        %v4205 = vsel %vm4204, %v4196, %v4201
        %v4206 = vmul.f32 %v4189, %v4205
        %v4208 = vperm.slane %v4183, 0
        %v4210 = vmul.f32 %v4206, %v4208
        %v4212 = vperm.slane %v4184, 0
        %v4214 = vadd.f32 %v4210, %v4212
        %v4215 = vld [vmem:[%s59] sm:$0xff]
        %v4216 = vld [vmem:[%s59 + $0x8] sm:$0xff]
        %v4217 = vld [vmem:[#allocation20] sm:$0x1]
        %v4219 = vperm.slane %v4217, 0
        %v4222 = vsel %vm1352, %v4214, 0
        %4224 = vmatpush.msra.mxu0 0.0
        %4225 = vmatpush.msra.mxu0 0.0
        %4226 = vmatpush.msra.mxu0 0.0
        %4227 = vmatpush.msra.mxu0 0.0
        %4228 = vmatpush.msra.mxu0 0.0
        %4229 = vmatpush.msra.mxu0 0.0
        %4230 = vmatpush.msra.mxu0 0.0
        %4231 = vmatpush.msra.mxu0 0.0
        %4232 = vmatpush.msra.mxu0 0.0
        %4233 = vmatpush.msra.mxu0 0.0
        %4234 = vmatpush.msra.mxu0 0.0
        %4235 = vmatpush.msra.mxu0 0.0
        %4236 = vmatpush.msra.mxu0 0.0
        %4237 = vmatpush.msra.mxu0 0.0
        %4238 = vmatpush.msra.mxu0 %v4216
        %4239 = vmatpush.msra.mxu0 %v4215
        %4240 = vmatmul.f32.gmra.mxu0 %v4222
        %v4241 = vpop.f32.mrf.mxu0
        %v4242 = vadd.f32 %v4219, %v4241
        %4243 = vdwg.mxu0
        %v4244 = vmul.f32 %v4242, 0.5
        %v4245 = vmul.f32 %v4242, 0.70710677
        %v4246 = vmul.f32 %v4245, %v4245
        %v4247 = vmin.f32 16.0, %v4246
        %v4248 = vmul.f32 %v4247, 2.1237322e-06
        %v4249 = vadd.f32 %v4248, 0.00028619796
        %v4250 = vmul.f32 %v4247, %v4249
        %v4251 = vadd.f32 %v4250, 0.0036580483
        %v4252 = vmul.f32 %v4247, %v4251
        %v4253 = vadd.f32 %v4252, 0.05243302
        %v4254 = vmul.f32 %v4247, %v4253
        %v4255 = vadd.f32 %v4254, 0.18741608
        %v4256 = vmul.f32 %v4247, %v4255
        %v4257 = vadd.f32 %v4256, 1.1283791
        %v4258 = vmul.f32 %v4245, %v4257
        %v4259 = vmul.f32 %v4247, 3.8918573e-05
        %v4260 = vadd.f32 %v4259, 0.001143296
        %v4261 = vmul.f32 %v4247, %v4260
        %v4262 = vadd.f32 %v4261, 0.014752088
        %v4263 = vmul.f32 %v4247, %v4262
        %v4264 = vadd.f32 %v4263, 0.112945676
        %v4265 = vmul.f32 %v4247, %v4264
        %v4266 = vadd.f32 %v4265, 0.4994258
        %v4267 = vmul.f32 %v4247, %v4266
        %v4268 = vadd.f32 %v4267, 1.0
        %v4269 = vrcp.pop %v4268
        %v4270 = vmul.f32 %v4268, %v4269
        %v4271 = vsub.f32 1.0, %v4270
        %v4272 = vmul.f32 %v4269, %v4271
        %v4273 = vadd.f32 %v4269, %v4272
        %vm4274 = vweird.f32 %v4268
        %vm4275 = vweird.f32 %v4269
        %vm4276 = vmor %vm4274, %vm4275
        %v4277 = vsel %vm4276, %v4269, %v4273
        %v4278 = vand.u32 2147483647, %v4268
        %vm4279 = vcmp.eq.f32.partialorder %v4278, 8.507059e+37
        %v4280 = vand.u32 %v4268, 2147483648
        %v4281 = vor.u32 1.1754944e-38, %v4280
        %v4282 = vsel %vm4279, %v4281, %v4277
        %v4283 = vmul.f32 %v4258, %v4282
        %v4284 = vmin.f32 %v4283, 1.0
        %v4285 = vmax.f32 %v4284, -1.0
        %v4286 = vadd.f32 %v4285, 1.0
        %v4287 = vmul.f32 %v4244, %v4286
        %v4288 = vld [vmem:[%s63] sm:$0xff]
        %v4289 = vld [vmem:[%s63 + $0x8] sm:$0xff]
        %v4290 = vld [vmem:[%s63 + $0x10] sm:$0xff]
        %v4291 = vld [vmem:[%s63 + $0x18] sm:$0xff]
        %v4293 = vsel %vm2043, %v4287, 0
        %4295 = vmatpush.msra.mxu0 0.0
        %4296 = vmatpush.msra.mxu0 0.0
        %4297 = vmatpush.msra.mxu0 0.0
        %4298 = vmatpush.msra.mxu0 0.0
        %4299 = vmatpush.msra.mxu0 0.0
        %4300 = vmatpush.msra.mxu0 0.0
        %4301 = vmatpush.msra.mxu0 0.0
        %4302 = vmatpush.msra.mxu0 0.0
        %4303 = vmatpush.msra.mxu0 0.0
        %4304 = vmatpush.msra.mxu0 0.0
        %4305 = vmatpush.msra.mxu0 0.0
        %4306 = vmatpush.msra.mxu0 0.0
        %4307 = vmatpush.msra.mxu0 %v4291
        %4308 = vmatpush.msra.mxu0 %v4290
        %4309 = vmatpush.msra.mxu0 %v4289
        %4310 = vmatpush.msra.mxu0 %v4288
        %4311 = vmatmul.f32.gmra.mxu0 %v4293
        %v4312 = vpop.f32.mrf.mxu0
        %v4313 = vadd.f32 0.0, %v4312
        %4314 = vdwg.mxu0
        %v4315 = vadd.f32 %v4182, %v4313
        %v4316 = vld [vmem:[#allocation22] sm:$0x1]
        %v4318 = vperm.slane %v4316, 0
        %v4320 = vadd.f32 %v4315, %v4318
        %s4321 = scalar_lea.vmem [#allocation8], 1
        %v4322 = vld [vmem:[%s4321] sm:$0x1]
        %s4323 = scalar_lea.vmem [#allocation10], 1
        %v4324 = vld [vmem:[%s4323] sm:$0x1]
        %v4325 = vsel %vm1352, %v4320, 0.0
        %4326 = vadd.xlane.f32.xlu0 %v4325
        %v4327 = vpop.xlane.xlu0 %4326
        %v4328 = vmul.f32 %v4327, %v1365
        %v4329 = vsub.f32 %v4320, %v4328
        %v4330 = vmul.f32 %v4329, %v4329
        %v4331 = vsel %vm1352, %v4330, 0.0
        %4332 = vadd.xlane.f32.xlu0 %v4331
        %v4333 = vpop.xlane.xlu0 %4332
        %v4334 = vmul.f32 %v4333, %v1365
        %v4335 = vadd.f32 %v4334, 1e-05
        %v4336 = vrsqrt.pop %v4335
        %v4337 = vmul.f32 %v4336, %v4335
        %v4338 = vmul.f32 %v4337, %v4336
        %v4339 = vmul.f32 0.5, %v4338
        %v4340 = vsub.f32 1.5, %v4339
        %v4341 = vmul.f32 %v4336, %v4340
        %vm4342 = vweird.f32 %v4335
        %vm4343 = vweird.f32 %v4336
        %vm4344 = vmor %vm4342, %vm4343
        %v4345 = vsel %vm4344, %v4336, %v4341
        %v4346 = vmul.f32 %v4329, %v4345
        %v4348 = vperm.slane %v4322, 0
        %v4350 = vmul.f32 %v4346, %v4348
        %v4352 = vperm.slane %v4324, 0
        %v4354 = vadd.f32 %v4350, %v4352
        %s4355 = scalar_lea.vmem %s37, 16
        %v4356 = vld [vmem:[%s4355] sm:$0xff]
        %v4357 = vld [vmem:[%s4355 + $0x8] sm:$0xff]
        %v4359 = vsel %vm1352, %v4354, 0
        %4361 = vmatpush.msra.mxu0 0.0
        %4362 = vmatpush.msra.mxu0 0.0
        %4363 = vmatpush.msra.mxu0 0.0
        %4364 = vmatpush.msra.mxu0 0.0
        %4365 = vmatpush.msra.mxu0 0.0
        %4366 = vmatpush.msra.mxu0 0.0
        %4367 = vmatpush.msra.mxu0 0.0
        %4368 = vmatpush.msra.mxu0 0.0
        %4369 = vmatpush.msra.mxu0 0.0
        %4370 = vmatpush.msra.mxu0 0.0
        %4371 = vmatpush.msra.mxu0 0.0
        %4372 = vmatpush.msra.mxu0 0.0
        %4373 = vmatpush.msra.mxu0 0.0
        %4374 = vmatpush.msra.mxu0 0.0
        %4375 = vmatpush.msra.mxu0 %v4357
        %4376 = vmatpush.msra.mxu0 %v4356
        %4377 = vmatmul.f32.gmra.mxu0 %v4359
        %v4378 = vpop.f32.mrf.mxu0
        %v4379 = vadd.f32 0.0, %v4378
        %4380 = vdwg.mxu0
        %v4381 = vmul.f32 %v4379, 0.33333334
        %v4382 = vsel %vm1449, %v4381, 0.0
        %v4383 = vsel %vm1452, %v4381, 0.0
        %v4384 = vsel %vm1455, %v4381, 0.0
        %v4385 = vsel %vm1458, %v4381, 0.0
        %4387 = vrot.lane.b32.xlu0 %v4379, 112
        %v4388 = vpop.permute.xlu0 %4387
        %v4390 = vsel %vm1352, %v4382, 0
        %v4393 = vsel %vm1352, %v4383, 0
        %v4396 = vsel %vm1352, %v4384, 0
        %v4399 = vsel %vm1352, %v4385, 0
        %v4401 = vsel %vm1352, %v4388, 0
        %4403 = vmatpush.xpose.msra.mxu0 0.0
        %4404 = vmatpush.xpose.msra.mxu0 0.0
        %4405 = vmatpush.xpose.msra.mxu0 0.0
        %4406 = vmatpush.xpose.msra.mxu0 0.0
        %4407 = vmatpush.xpose.msra.mxu0 0.0
        %4408 = vmatpush.xpose.msra.mxu0 0.0
        %4409 = vmatpush.xpose.msra.mxu0 0.0
        %4410 = vmatpush.xpose.msra.mxu0 0.0
        %4411 = vmatpush.xpose.msra.mxu0 0.0
        %4412 = vmatpush.xpose.msra.mxu0 0.0
        %4413 = vmatpush.xpose.msra.mxu0 0.0
        %4414 = vmatpush.xpose.msra.mxu0 0.0
        %4415 = vmatpush.xpose.msra.mxu0 0.0
        %4416 = vmatpush.xpose.msra.mxu0 0.0
        %4417 = vmatpush.xpose.msra.mxu0 0.0
        %4418 = vmatpush.xpose.msra.mxu0 %v4401
        %4419 = vmatmul.f32.gmra.mxu0 %v4390
        %v4420 = vpop.f32.mrf.mxu0
        %v4421 = vadd.f32 0.0, %v4420
        %4422 = vmatmul.f32.gmra.mxu0 %v4393
        %v4423 = vpop.f32.mrf.mxu0
        %v4424 = vadd.f32 0.0, %v4423
        %4425 = vmatmul.f32.gmra.mxu0 %v4396
        %v4426 = vpop.f32.mrf.mxu0
        %v4427 = vadd.f32 0.0, %v4426
        %4428 = vmatmul.f32.gmra.mxu0 %v4399
        %v4429 = vpop.f32.mrf.mxu0
        %v4430 = vadd.f32 0.0, %v4429
        %4431 = vdwg.mxu0
        %v4432 = vsel %vm3630, %v4421, -1e+30
        %v4433 = vsel %vm3630, %v4424, -1e+30
        %v4434 = vsel %vm3630, %v4427, -1e+30
        %v4435 = vsel %vm3630, %v4430, -1e+30
        %v4436 = vsel %vm3635, %v4432, -inf
        %4437 = vmax.xlane.f32.xlu0 %v4436
        %v4438 = vpop.xlane.xlu0 %4437
        %v4439 = vsel %vm3635, %v4433, -inf
        %4440 = vmax.xlane.f32.xlu0 %v4439
        %v4441 = vpop.xlane.xlu0 %4440
        %v4442 = vsel %vm3635, %v4434, -inf
        %4443 = vmax.xlane.f32.xlu0 %v4442
        %v4444 = vpop.xlane.xlu0 %4443
        %v4445 = vsel %vm3635, %v4435, -inf
        %4446 = vmax.xlane.f32.xlu0 %v4445
        %v4447 = vpop.xlane.xlu0 %4446
        %v4448 = vsub.f32 %v4432, %v4438
        %v4449 = vsub.f32 %v4433, %v4441
        %v4450 = vsub.f32 %v4434, %v4444
        %v4451 = vsub.f32 %v4435, %v4447
        %v4452 = vmul.f32 %v4448, 1.442695
        %v4453 = vpow.pop %v4452
        %v4454 = vmul.f32 %v4449, 1.442695
        %v4455 = vpow.pop %v4454
        %v4456 = vmul.f32 %v4450, 1.442695
        %v4457 = vpow.pop %v4456
        %v4458 = vmul.f32 %v4451, 1.442695
        %v4459 = vpow.pop %v4458
        %v4460 = vsel %vm3635, %v4453, 0.0
        %4461 = vadd.xlane.f32.xlu0 %v4460
        %v4462 = vpop.xlane.xlu0 %4461
        %v4463 = vsel %vm3635, %v4455, 0.0
        %4464 = vadd.xlane.f32.xlu0 %v4463
        %v4465 = vpop.xlane.xlu0 %4464
        %v4466 = vsel %vm3635, %v4457, 0.0
        %4467 = vadd.xlane.f32.xlu0 %v4466
        %v4468 = vpop.xlane.xlu0 %4467
        %v4469 = vsel %vm3635, %v4459, 0.0
        %4470 = vadd.xlane.f32.xlu0 %v4469
        %v4471 = vpop.xlane.xlu0 %4470
        %v4472 = vrcp.pop %v4462
        %v4473 = vmul.f32 %v4462, %v4472
        %v4474 = vsub.f32 1.0, %v4473
        %v4475 = vmul.f32 %v4472, %v4474
        %v4476 = vadd.f32 %v4472, %v4475
        %vm4477 = vweird.f32 %v4462
        %vm4478 = vweird.f32 %v4472
        %vm4479 = vmor %vm4477, %vm4478
        %v4480 = vsel %vm4479, %v4472, %v4476
        %v4481 = vand.u32 2147483647, %v4462
        %vm4482 = vcmp.eq.f32.partialorder %v4481, 8.507059e+37
        %v4483 = vand.u32 %v4462, 2147483648
        %v4484 = vor.u32 1.1754944e-38, %v4483
        %v4485 = vsel %vm4482, %v4484, %v4480
        %v4486 = vmul.f32 %v4453, %v4485
        %v4487 = vrcp.pop %v4465
        %v4488 = vmul.f32 %v4465, %v4487
        %v4489 = vsub.f32 1.0, %v4488
        %v4490 = vmul.f32 %v4487, %v4489
        %v4491 = vadd.f32 %v4487, %v4490
        %vm4492 = vweird.f32 %v4465
        %vm4493 = vweird.f32 %v4487
        %vm4494 = vmor %vm4492, %vm4493
        %v4495 = vsel %vm4494, %v4487, %v4491
        %v4496 = vand.u32 2147483647, %v4465
        %vm4497 = vcmp.eq.f32.partialorder %v4496, 8.507059e+37
        %v4498 = vand.u32 %v4465, 2147483648
        %v4499 = vor.u32 1.1754944e-38, %v4498
        %v4500 = vsel %vm4497, %v4499, %v4495
        %v4501 = vmul.f32 %v4455, %v4500
        %v4502 = vrcp.pop %v4468
        %v4503 = vmul.f32 %v4468, %v4502
        %v4504 = vsub.f32 1.0, %v4503
        %v4505 = vmul.f32 %v4502, %v4504
        %v4506 = vadd.f32 %v4502, %v4505
        %vm4507 = vweird.f32 %v4468
        %vm4508 = vweird.f32 %v4502
        %vm4509 = vmor %vm4507, %vm4508
        %v4510 = vsel %vm4509, %v4502, %v4506
        %v4511 = vand.u32 2147483647, %v4468
        %vm4512 = vcmp.eq.f32.partialorder %v4511, 8.507059e+37
        %v4513 = vand.u32 %v4468, 2147483648
        %v4514 = vor.u32 1.1754944e-38, %v4513
        %v4515 = vsel %vm4512, %v4514, %v4510
        %v4516 = vmul.f32 %v4457, %v4515
        %v4517 = vrcp.pop %v4471
        %v4518 = vmul.f32 %v4471, %v4517
        %v4519 = vsub.f32 1.0, %v4518
        %v4520 = vmul.f32 %v4517, %v4519
        %v4521 = vadd.f32 %v4517, %v4520
        %vm4522 = vweird.f32 %v4471
        %vm4523 = vweird.f32 %v4517
        %vm4524 = vmor %vm4522, %vm4523
        %v4525 = vsel %vm4524, %v4517, %v4521
        %v4526 = vand.u32 2147483647, %v4471
        %vm4527 = vcmp.eq.f32.partialorder %v4526, 8.507059e+37
        %v4528 = vand.u32 %v4471, 2147483648
        %v4529 = vor.u32 1.1754944e-38, %v4528
        %v4530 = vsel %vm4527, %v4529, %v4525
        %v4531 = vmul.f32 %v4459, %v4530
        %4532 = vrot.lane.b32.xlu0 %v4379, 96
        %v4533 = vpop.permute.xlu0 %4532
        %v4536 = vsel %vm3635, %v4486, 0
        %v4539 = vsel %vm3635, %v4501, 0
        %v4542 = vsel %vm3635, %v4516, 0
        %v4545 = vsel %vm3635, %v4531, 0
        %4547 = vmatpush.msra.mxu0 0.0
        %4548 = vmatpush.msra.mxu0 0.0
        %4549 = vmatpush.msra.mxu0 0.0
        %4550 = vmatpush.msra.mxu0 0.0
        %4551 = vmatpush.msra.mxu0 0.0
        %4552 = vmatpush.msra.mxu0 0.0
        %4553 = vmatpush.msra.mxu0 0.0
        %4554 = vmatpush.msra.mxu0 0.0
        %4555 = vmatpush.msra.mxu0 0.0
        %4556 = vmatpush.msra.mxu0 0.0
        %4557 = vmatpush.msra.mxu0 0.0
        %4558 = vmatpush.msra.mxu0 0.0
        %4559 = vmatpush.msra.mxu0 0.0
        %4560 = vmatpush.msra.mxu0 0.0
        %4561 = vmatpush.msra.mxu0 0.0
        %4562 = vmatpush.msra.mxu0 %v4533
        %4563 = vmatmul.f32.gmra.mxu0 %v4536
        %v4564 = vpop.f32.mrf.mxu0
        %v4565 = vadd.f32 0.0, %v4564
        %4566 = vmatmul.f32.gmra.mxu0 %v4539
        %v4567 = vpop.f32.mrf.mxu0
        %v4568 = vadd.f32 0.0, %v4567
        %4569 = vmatmul.f32.gmra.mxu0 %v4542
        %v4570 = vpop.f32.mrf.mxu0
        %v4571 = vadd.f32 0.0, %v4570
        %4572 = vmatmul.f32.gmra.mxu0 %v4545
        %v4573 = vpop.f32.mrf.mxu0
        %v4574 = vadd.f32 0.0, %v4573
        %4575 = vdwg.mxu0
        %v4576 = vsel %vm1449, %v4565, 0.0
        %v4577 = vsel %vm1452, %v4568, 0.0
        %v4578 = vadd.f32 %v4576, %v4577
        %v4579 = vsel %vm1455, %v4571, 0.0
        %v4580 = vadd.f32 %v4578, %v4579
        %v4581 = vsel %vm1458, %v4574, 0.0
        %v4582 = vadd.f32 %v4580, %v4581
        %s4583 = scalar_lea.vmem %s39, 16
        %v4584 = vld [vmem:[%s4583] sm:$0xff]
        %v4585 = vld [vmem:[%s4583 + $0x8] sm:$0xff]
        %v4587 = vsel %vm1352, %v4582, 0
        %4589 = vmatpush.msra.mxu0 0.0
        %4590 = vmatpush.msra.mxu0 0.0
        %4591 = vmatpush.msra.mxu0 0.0
        %4592 = vmatpush.msra.mxu0 0.0
        %4593 = vmatpush.msra.mxu0 0.0
        %4594 = vmatpush.msra.mxu0 0.0
        %4595 = vmatpush.msra.mxu0 0.0
        %4596 = vmatpush.msra.mxu0 0.0
        %4597 = vmatpush.msra.mxu0 0.0
        %4598 = vmatpush.msra.mxu0 0.0
        %4599 = vmatpush.msra.mxu0 0.0
        %4600 = vmatpush.msra.mxu0 0.0
        %4601 = vmatpush.msra.mxu0 0.0
        %4602 = vmatpush.msra.mxu0 0.0
        %4603 = vmatpush.msra.mxu0 %v4585
        %4604 = vmatpush.msra.mxu0 %v4584
        %4605 = vmatmul.f32.gmra.mxu0 %v4587
        %v4606 = vpop.f32.mrf.mxu0
        %v4607 = vadd.f32 0.0, %v4606
        %4608 = vdwg.mxu0
        %v4609 = vadd.f32 %v4320, %v4607
        %s4610 = scalar_lea.vmem [#allocation11], 1
        %v4611 = vld [vmem:[%s4610] sm:$0x1]
        %v4613 = vperm.slane %v4611, 0
        %v4615 = vadd.f32 %v4609, %v4613
        %s4616 = scalar_lea.vmem [#allocation13], 1
        %v4617 = vld [vmem:[%s4616] sm:$0x1]
        %s4618 = scalar_lea.vmem [#allocation14], 1
        %v4619 = vld [vmem:[%s4618] sm:$0x1]
        %v4620 = vsel %vm1352, %v4615, 0.0
        %4621 = vadd.xlane.f32.xlu0 %v4620
        %v4622 = vpop.xlane.xlu0 %4621
        %v4623 = vmul.f32 %v4622, %v1365
        %v4624 = vsub.f32 %v4615, %v4623
        %v4625 = vmul.f32 %v4624, %v4624
        %v4626 = vsel %vm1352, %v4625, 0.0
        %4627 = vadd.xlane.f32.xlu0 %v4626
        %v4628 = vpop.xlane.xlu0 %4627
        %v4629 = vmul.f32 %v4628, %v1365
        %v4630 = vadd.f32 %v4629, 1e-05
        %v4631 = vrsqrt.pop %v4630
        %v4632 = vmul.f32 %v4631, %v4630
        %v4633 = vmul.f32 %v4632, %v4631
        %v4634 = vmul.f32 0.5, %v4633
        %v4635 = vsub.f32 1.5, %v4634
        %v4636 = vmul.f32 %v4631, %v4635
        %vm4637 = vweird.f32 %v4630
        %vm4638 = vweird.f32 %v4631
        %vm4639 = vmor %vm4637, %vm4638
        %v4640 = vsel %vm4639, %v4631, %v4636
        %v4641 = vmul.f32 %v4624, %v4640
        %v4643 = vperm.slane %v4617, 0
        %v4645 = vmul.f32 %v4641, %v4643
        %v4647 = vperm.slane %v4619, 0
        %v4649 = vadd.f32 %v4645, %v4647
        %v4650 = vmul.f32 %v3888, %v2623
        %v4651 = vmul.f32 %v3889, %v2623
        %v4652 = vadd.f32 %v4650, %v2628
        %v4653 = vadd.f32 %v4651, %v2628
        %s4654 = scalar_lea.vmem %s47, 16
        %v4655 = vld [vmem:[%s4654] sm:$0xff]
        %v4656 = vld [vmem:[%s4654 + $0x8] sm:$0xff]
        %v4658 = vsel %vm1352, %v4649, 0
        %4660 = vmatpush.msra.mxu0 0.0
        %4661 = vmatpush.msra.mxu0 0.0
        %4662 = vmatpush.msra.mxu0 0.0
        %4663 = vmatpush.msra.mxu0 0.0
        %4664 = vmatpush.msra.mxu0 0.0
        %4665 = vmatpush.msra.mxu0 0.0
        %4666 = vmatpush.msra.mxu0 0.0
        %4667 = vmatpush.msra.mxu0 0.0
        %4668 = vmatpush.msra.mxu0 0.0
        %4669 = vmatpush.msra.mxu0 0.0
        %4670 = vmatpush.msra.mxu0 0.0
        %4671 = vmatpush.msra.mxu0 0.0
        %4672 = vmatpush.msra.mxu0 0.0
        %4673 = vmatpush.msra.mxu0 0.0
        %4674 = vmatpush.msra.mxu0 %v4656
        %4675 = vmatpush.msra.mxu0 %v4655
        %4676 = vmatmul.f32.gmra.mxu0 %v4658
        %v4677 = vpop.f32.mrf.mxu0
        %v4678 = vadd.f32 0.0, %v4677
        %4679 = vdwg.mxu0
        %s4680 = scalar_lea.vmem %s49, 16
        %v4681 = vld [vmem:[%s4680] sm:$0xff]
        %v4682 = vld [vmem:[%s4680 + $0x8] sm:$0xff]
        %v4684 = vsel %vm1352, %v4652, 0
        %v4687 = vsel %vm1352, %v4653, 0
        %4689 = vmatpush.msra.mxu0 0.0
        %4690 = vmatpush.msra.mxu0 0.0
        %4691 = vmatpush.msra.mxu0 0.0
        %4692 = vmatpush.msra.mxu0 0.0
        %4693 = vmatpush.msra.mxu0 0.0
        %4694 = vmatpush.msra.mxu0 0.0
        %4695 = vmatpush.msra.mxu0 0.0
        %4696 = vmatpush.msra.mxu0 0.0
        %4697 = vmatpush.msra.mxu0 0.0
        %4698 = vmatpush.msra.mxu0 0.0
        %4699 = vmatpush.msra.mxu0 0.0
        %4700 = vmatpush.msra.mxu0 0.0
        %4701 = vmatpush.msra.mxu0 0.0
        %4702 = vmatpush.msra.mxu0 0.0
        %4703 = vmatpush.msra.mxu0 %v4682
        %4704 = vmatpush.msra.mxu0 %v4681
        %4705 = vmatmul.f32.gmra.mxu0 %v4684
        %v4706 = vpop.f32.mrf.mxu0
        %v4707 = vadd.f32 0.0, %v4706
        %4708 = vmatmul.f32.gmra.mxu0 %v4687
        %v4709 = vpop.f32.mrf.mxu0
        %v4710 = vadd.f32 0.0, %v4709
        %4711 = vdwg.mxu0
        %v4712 = vmul.f32 %v4678, 0.33333334
        %v4713 = vsel %vm1449, %v4712, 0.0
        %v4714 = vsel %vm1452, %v4712, 0.0
        %v4715 = vsel %vm1455, %v4712, 0.0
        %v4716 = vsel %vm1458, %v4712, 0.0
        %v4718 = vsel %vm1352, %v4713, 0
        %v4721 = vsel %vm1352, %v4714, 0
        %v4724 = vsel %vm1352, %v4715, 0
        %v4727 = vsel %vm1352, %v4716, 0
        %v4730 = vsel %vm1352, %v4707, 0
        %v4733 = vsel %vm1352, %v4710, 0
        %4735 = vmatpush.xpose.msra.mxu0 0.0
        %4736 = vmatpush.xpose.msra.mxu0 0.0
        %4737 = vmatpush.xpose.msra.mxu0 0.0
        %4738 = vmatpush.xpose.msra.mxu0 0.0
        %4739 = vmatpush.xpose.msra.mxu0 0.0
        %4740 = vmatpush.xpose.msra.mxu0 0.0
        %4741 = vmatpush.xpose.msra.mxu0 0.0
        %4742 = vmatpush.xpose.msra.mxu0 0.0
        %4743 = vmatpush.xpose.msra.mxu0 0.0
        %4744 = vmatpush.xpose.msra.mxu0 0.0
        %4745 = vmatpush.xpose.msra.mxu0 0.0
        %4746 = vmatpush.xpose.msra.mxu0 0.0
        %4747 = vmatpush.xpose.msra.mxu0 0.0
        %4748 = vmatpush.xpose.msra.mxu0 0.0
        %4749 = vmatpush.xpose.msra.mxu0 %v4733
        %4750 = vmatpush.xpose.msra.mxu0 %v4730
        %4751 = vmatmul.f32.gmra.mxu0 %v4718
        %v4752 = vpop.f32.mrf.mxu0
        %v4753 = vadd.f32 0.0, %v4752
        %4754 = vmatmul.f32.gmra.mxu0 %v4721
        %v4755 = vpop.f32.mrf.mxu0
        %v4756 = vadd.f32 0.0, %v4755
        %4757 = vmatmul.f32.gmra.mxu0 %v4724
        %v4758 = vpop.f32.mrf.mxu0
        %v4759 = vadd.f32 0.0, %v4758
        %4760 = vmatmul.f32.gmra.mxu0 %v4727
        %v4761 = vpop.f32.mrf.mxu0
        %v4762 = vadd.f32 0.0, %v4761
        %4763 = vdwg.mxu0
        %v4764 = vsel %vm1352, %v4753, -inf
        %4765 = vmax.xlane.f32.xlu0 %v4764
        %v4766 = vpop.xlane.xlu0 %4765
        %v4767 = vsel %vm1352, %v4756, -inf
        %4768 = vmax.xlane.f32.xlu0 %v4767
        %v4769 = vpop.xlane.xlu0 %4768
        %v4770 = vsel %vm1352, %v4759, -inf
        %4771 = vmax.xlane.f32.xlu0 %v4770
        %v4772 = vpop.xlane.xlu0 %4771
        %v4773 = vsel %vm1352, %v4762, -inf
        %4774 = vmax.xlane.f32.xlu0 %v4773
        %v4775 = vpop.xlane.xlu0 %4774
        %v4776 = vsub.f32 %v4753, %v4766
        %v4777 = vsub.f32 %v4756, %v4769
        %v4778 = vsub.f32 %v4759, %v4772
        %v4779 = vsub.f32 %v4762, %v4775
        %v4780 = vmul.f32 %v4776, 1.442695
        %v4781 = vpow.pop %v4780
        %v4782 = vmul.f32 %v4777, 1.442695
        %v4783 = vpow.pop %v4782
        %v4784 = vmul.f32 %v4778, 1.442695
        %v4785 = vpow.pop %v4784
        %v4786 = vmul.f32 %v4779, 1.442695
        %v4787 = vpow.pop %v4786
        %v4788 = vsel %vm1352, %v4781, 0.0
        %4789 = vadd.xlane.f32.xlu0 %v4788
        %v4790 = vpop.xlane.xlu0 %4789
        %v4791 = vsel %vm1352, %v4783, 0.0
        %4792 = vadd.xlane.f32.xlu0 %v4791
        %v4793 = vpop.xlane.xlu0 %4792
        %v4794 = vsel %vm1352, %v4785, 0.0
        %4795 = vadd.xlane.f32.xlu0 %v4794
        %v4796 = vpop.xlane.xlu0 %4795
        %v4797 = vsel %vm1352, %v4787, 0.0
        %4798 = vadd.xlane.f32.xlu0 %v4797
        %v4799 = vpop.xlane.xlu0 %4798
        %v4800 = vrcp.pop %v4790
        %v4801 = vmul.f32 %v4790, %v4800
        %v4802 = vsub.f32 1.0, %v4801
        %v4803 = vmul.f32 %v4800, %v4802
        %v4804 = vadd.f32 %v4800, %v4803
        %vm4805 = vweird.f32 %v4790
        %vm4806 = vweird.f32 %v4800
        %vm4807 = vmor %vm4805, %vm4806
        %v4808 = vsel %vm4807, %v4800, %v4804
        %v4809 = vand.u32 2147483647, %v4790
        %vm4810 = vcmp.eq.f32.partialorder %v4809, 8.507059e+37
        %v4811 = vand.u32 %v4790, 2147483648
        %v4812 = vor.u32 1.1754944e-38, %v4811
        %v4813 = vsel %vm4810, %v4812, %v4808
        %v4814 = vmul.f32 %v4781, %v4813
        %v4815 = vrcp.pop %v4793
        %v4816 = vmul.f32 %v4793, %v4815
        %v4817 = vsub.f32 1.0, %v4816
        %v4818 = vmul.f32 %v4815, %v4817
        %v4819 = vadd.f32 %v4815, %v4818
        %vm4820 = vweird.f32 %v4793
        %vm4821 = vweird.f32 %v4815
        %vm4822 = vmor %vm4820, %vm4821
        %v4823 = vsel %vm4822, %v4815, %v4819
        %v4824 = vand.u32 2147483647, %v4793
        %vm4825 = vcmp.eq.f32.partialorder %v4824, 8.507059e+37
        %v4826 = vand.u32 %v4793, 2147483648
        %v4827 = vor.u32 1.1754944e-38, %v4826
        %v4828 = vsel %vm4825, %v4827, %v4823
        %v4829 = vmul.f32 %v4783, %v4828
        %v4830 = vrcp.pop %v4796
        %v4831 = vmul.f32 %v4796, %v4830
        %v4832 = vsub.f32 1.0, %v4831
        %v4833 = vmul.f32 %v4830, %v4832
        %v4834 = vadd.f32 %v4830, %v4833
        %vm4835 = vweird.f32 %v4796
        %vm4836 = vweird.f32 %v4830
        %vm4837 = vmor %vm4835, %vm4836
        %v4838 = vsel %vm4837, %v4830, %v4834
        %v4839 = vand.u32 2147483647, %v4796
        %vm4840 = vcmp.eq.f32.partialorder %v4839, 8.507059e+37
        %v4841 = vand.u32 %v4796, 2147483648
        %v4842 = vor.u32 1.1754944e-38, %v4841
        %v4843 = vsel %vm4840, %v4842, %v4838
        %v4844 = vmul.f32 %v4785, %v4843
        %v4845 = vrcp.pop %v4799
        %v4846 = vmul.f32 %v4799, %v4845
        %v4847 = vsub.f32 1.0, %v4846
        %v4848 = vmul.f32 %v4845, %v4847
        %v4849 = vadd.f32 %v4845, %v4848
        %vm4850 = vweird.f32 %v4799
        %vm4851 = vweird.f32 %v4845
        %vm4852 = vmor %vm4850, %vm4851
        %v4853 = vsel %vm4852, %v4845, %v4849
        %v4854 = vand.u32 2147483647, %v4799
        %vm4855 = vcmp.eq.f32.partialorder %v4854, 8.507059e+37
        %v4856 = vand.u32 %v4799, 2147483648
        %v4857 = vor.u32 1.1754944e-38, %v4856
        %v4858 = vsel %vm4855, %v4857, %v4853
        %v4859 = vmul.f32 %v4787, %v4858
        %4860 = vrot.lane.b32.xlu0 %v4707, 112
        %v4861 = vpop.permute.xlu0 %4860
        %4862 = vrot.lane.b32.xlu0 %v4710, 112
        %v4863 = vpop.permute.xlu0 %4862
        %v4867 = vsel %vm1352, %v4814, 0
        %v4870 = vsel %vm1352, %v4829, 0
        %v4873 = vsel %vm1352, %v4844, 0
        %v4876 = vsel %vm1352, %v4859, 0
        %4878 = vmatpush.msra.mxu0 0.0
        %4879 = vmatpush.msra.mxu0 0.0
        %4880 = vmatpush.msra.mxu0 0.0
        %4881 = vmatpush.msra.mxu0 0.0
        %4882 = vmatpush.msra.mxu0 0.0
        %4883 = vmatpush.msra.mxu0 0.0
        %4884 = vmatpush.msra.mxu0 0.0
        %4885 = vmatpush.msra.mxu0 0.0
        %4886 = vmatpush.msra.mxu0 0.0
        %4887 = vmatpush.msra.mxu0 0.0
        %4888 = vmatpush.msra.mxu0 0.0
        %4889 = vmatpush.msra.mxu0 0.0
        %4890 = vmatpush.msra.mxu0 0.0
        %4891 = vmatpush.msra.mxu0 0.0
        %4892 = vmatpush.msra.mxu0 %v4863
        %4893 = vmatpush.msra.mxu0 %v4861
        %4894 = vmatmul.f32.gmra.mxu0 %v4867
        %v4895 = vpop.f32.mrf.mxu0
        %v4896 = vadd.f32 0.0, %v4895
        %4897 = vmatmul.f32.gmra.mxu0 %v4870
        %v4898 = vpop.f32.mrf.mxu0
        %v4899 = vadd.f32 0.0, %v4898
        %4900 = vmatmul.f32.gmra.mxu0 %v4873
        %v4901 = vpop.f32.mrf.mxu0
        %v4902 = vadd.f32 0.0, %v4901
        %4903 = vmatmul.f32.gmra.mxu0 %v4876
        %v4904 = vpop.f32.mrf.mxu0
        %v4905 = vadd.f32 0.0, %v4904
        %4906 = vdwg.mxu0
        %v4907 = vsel %vm1449, %v4896, 0.0
        %v4908 = vsel %vm1452, %v4899, 0.0
        %v4909 = vadd.f32 %v4907, %v4908
        %v4910 = vsel %vm1455, %v4902, 0.0
        %v4911 = vadd.f32 %v4909, %v4910
        %v4912 = vsel %vm1458, %v4905, 0.0
        %v4913 = vadd.f32 %v4911, %v4912
        %s4914 = scalar_lea.vmem %s51, 16
        %v4915 = vld [vmem:[%s4914] sm:$0xff]
        %v4916 = vld [vmem:[%s4914 + $0x8] sm:$0xff]
        %v4918 = vsel %vm1352, %v4913, 0
        %4920 = vmatpush.msra.mxu0 0.0
        %4921 = vmatpush.msra.mxu0 0.0
        %4922 = vmatpush.msra.mxu0 0.0
        %4923 = vmatpush.msra.mxu0 0.0
        %4924 = vmatpush.msra.mxu0 0.0
        %4925 = vmatpush.msra.mxu0 0.0
        %4926 = vmatpush.msra.mxu0 0.0
        %4927 = vmatpush.msra.mxu0 0.0
        %4928 = vmatpush.msra.mxu0 0.0
        %4929 = vmatpush.msra.mxu0 0.0
        %4930 = vmatpush.msra.mxu0 0.0
        %4931 = vmatpush.msra.mxu0 0.0
        %4932 = vmatpush.msra.mxu0 0.0
        %4933 = vmatpush.msra.mxu0 0.0
        %4934 = vmatpush.msra.mxu0 %v4916
        %4935 = vmatpush.msra.mxu0 %v4915
        %4936 = vmatmul.f32.gmra.mxu0 %v4918
        %v4937 = vpop.f32.mrf.mxu0
        %v4938 = vadd.f32 0.0, %v4937
        %4939 = vdwg.mxu0
        %v4940 = vadd.f32 %v4615, %v4938
        %s4941 = scalar_lea.vmem [#allocation16], 1
        %v4942 = vld [vmem:[%s4941] sm:$0x1]
        %v4944 = vperm.slane %v4942, 0
        %v4946 = vadd.f32 %v4940, %v4944
        %s4947 = scalar_lea.vmem [#allocation17], 1
        %v4948 = vld [vmem:[%s4947] sm:$0x1]
        %s4949 = scalar_lea.vmem [#allocation19], 1
        %v4950 = vld [vmem:[%s4949] sm:$0x1]
        %v4951 = vsel %vm1352, %v4946, 0.0
        %4952 = vadd.xlane.f32.xlu0 %v4951
        %v4953 = vpop.xlane.xlu0 %4952
        %v4954 = vmul.f32 %v4953, %v1365
        %v4955 = vsub.f32 %v4946, %v4954
        %v4956 = vmul.f32 %v4955, %v4955
        %v4957 = vsel %vm1352, %v4956, 0.0
        %4958 = vadd.xlane.f32.xlu0 %v4957
        %v4959 = vpop.xlane.xlu0 %4958
        %v4960 = vmul.f32 %v4959, %v1365
        %v4961 = vadd.f32 %v4960, 1e-05
        %v4962 = vrsqrt.pop %v4961
        %v4963 = vmul.f32 %v4962, %v4961
        %v4964 = vmul.f32 %v4963, %v4962
        %v4965 = vmul.f32 0.5, %v4964
        %v4966 = vsub.f32 1.5, %v4965
        %v4967 = vmul.f32 %v4962, %v4966
        %vm4968 = vweird.f32 %v4961
        %vm4969 = vweird.f32 %v4962
        %vm4970 = vmor %vm4968, %vm4969
        %v4971 = vsel %vm4970, %v4962, %v4967
        %v4972 = vmul.f32 %v4955, %v4971
        %v4974 = vperm.slane %v4948, 0
        %v4976 = vmul.f32 %v4972, %v4974
        %v4978 = vperm.slane %v4950, 0
        %v4980 = vadd.f32 %v4976, %v4978
        %s4981 = scalar_lea.vmem %s59, 16
        %v4982 = vld [vmem:[%s4981] sm:$0xff]
        %v4983 = vld [vmem:[%s4981 + $0x8] sm:$0xff]
        %s4984 = scalar_lea.vmem [#allocation20], 1
        %v4985 = vld [vmem:[%s4984] sm:$0x1]
        %v4987 = vperm.slane %v4985, 0
        %v4990 = vsel %vm1352, %v4980, 0
        %4992 = vmatpush.msra.mxu0 0.0
        %4993 = vmatpush.msra.mxu0 0.0
        %4994 = vmatpush.msra.mxu0 0.0
        %4995 = vmatpush.msra.mxu0 0.0
        %4996 = vmatpush.msra.mxu0 0.0
        %4997 = vmatpush.msra.mxu0 0.0
        %4998 = vmatpush.msra.mxu0 0.0
        %4999 = vmatpush.msra.mxu0 0.0
        %5000 = vmatpush.msra.mxu0 0.0
        %5001 = vmatpush.msra.mxu0 0.0
        %5002 = vmatpush.msra.mxu0 0.0
        %5003 = vmatpush.msra.mxu0 0.0
        %5004 = vmatpush.msra.mxu0 0.0
        %5005 = vmatpush.msra.mxu0 0.0
        %5006 = vmatpush.msra.mxu0 %v4983
        %5007 = vmatpush.msra.mxu0 %v4982
        %5008 = vmatmul.f32.gmra.mxu0 %v4990
        %v5009 = vpop.f32.mrf.mxu0
        %v5010 = vadd.f32 %v4987, %v5009
        %5011 = vdwg.mxu0
        %v5012 = vmul.f32 %v5010, 0.5
        %v5013 = vmul.f32 %v5010, 0.70710677
        %v5014 = vmul.f32 %v5013, %v5013
        %v5015 = vmin.f32 16.0, %v5014
        %v5016 = vmul.f32 %v5015, 2.1237322e-06
        %v5017 = vadd.f32 %v5016, 0.00028619796
        %v5018 = vmul.f32 %v5015, %v5017
        %v5019 = vadd.f32 %v5018, 0.0036580483
        %v5020 = vmul.f32 %v5015, %v5019
        %v5021 = vadd.f32 %v5020, 0.05243302
        %v5022 = vmul.f32 %v5015, %v5021
        %v5023 = vadd.f32 %v5022, 0.18741608
        %v5024 = vmul.f32 %v5015, %v5023
        %v5025 = vadd.f32 %v5024, 1.1283791
        %v5026 = vmul.f32 %v5013, %v5025
        %v5027 = vmul.f32 %v5015, 3.8918573e-05
        %v5028 = vadd.f32 %v5027, 0.001143296
        %v5029 = vmul.f32 %v5015, %v5028
        %v5030 = vadd.f32 %v5029, 0.014752088
        %v5031 = vmul.f32 %v5015, %v5030
        %v5032 = vadd.f32 %v5031, 0.112945676
        %v5033 = vmul.f32 %v5015, %v5032
        %v5034 = vadd.f32 %v5033, 0.4994258
        %v5035 = vmul.f32 %v5015, %v5034
        %v5036 = vadd.f32 %v5035, 1.0
        %v5037 = vrcp.pop %v5036
        %v5038 = vmul.f32 %v5036, %v5037
        %v5039 = vsub.f32 1.0, %v5038
        %v5040 = vmul.f32 %v5037, %v5039
        %v5041 = vadd.f32 %v5037, %v5040
        %vm5042 = vweird.f32 %v5036
        %vm5043 = vweird.f32 %v5037
        %vm5044 = vmor %vm5042, %vm5043
        %v5045 = vsel %vm5044, %v5037, %v5041
        %v5046 = vand.u32 2147483647, %v5036
        %vm5047 = vcmp.eq.f32.partialorder %v5046, 8.507059e+37
        %v5048 = vand.u32 %v5036, 2147483648
        %v5049 = vor.u32 1.1754944e-38, %v5048
        %v5050 = vsel %vm5047, %v5049, %v5045
        %v5051 = vmul.f32 %v5026, %v5050
        %v5052 = vmin.f32 %v5051, 1.0
        %v5053 = vmax.f32 %v5052, -1.0
        %v5054 = vadd.f32 %v5053, 1.0
        %v5055 = vmul.f32 %v5012, %v5054
        %s5056 = scalar_lea.vmem %s63, 32
        %v5057 = vld [vmem:[%s5056] sm:$0xff]
        %v5058 = vld [vmem:[%s5056 + $0x8] sm:$0xff]
        %v5059 = vld [vmem:[%s5056 + $0x10] sm:$0xff]
        %v5060 = vld [vmem:[%s5056 + $0x18] sm:$0xff]
        %v5062 = vsel %vm2043, %v5055, 0
        %5064 = vmatpush.msra.mxu0 0.0
        %5065 = vmatpush.msra.mxu0 0.0
        %5066 = vmatpush.msra.mxu0 0.0
        %5067 = vmatpush.msra.mxu0 0.0
        %5068 = vmatpush.msra.mxu0 0.0
        %5069 = vmatpush.msra.mxu0 0.0
        %5070 = vmatpush.msra.mxu0 0.0
        %5071 = vmatpush.msra.mxu0 0.0
        %5072 = vmatpush.msra.mxu0 0.0
        %5073 = vmatpush.msra.mxu0 0.0
        %5074 = vmatpush.msra.mxu0 0.0
        %5075 = vmatpush.msra.mxu0 0.0
        %5076 = vmatpush.msra.mxu0 %v5060
        %5077 = vmatpush.msra.mxu0 %v5059
        %5078 = vmatpush.msra.mxu0 %v5058
        %5079 = vmatpush.msra.mxu0 %v5057
        %5080 = vmatmul.f32.gmra.mxu0 %v5062
        %v5081 = vpop.f32.mrf.mxu0
        %v5082 = vadd.f32 0.0, %v5081
        %5083 = vdwg.mxu0
        %v5084 = vadd.f32 %v4946, %v5082
        %s5085 = scalar_lea.vmem [#allocation22], 1
        %v5086 = vld [vmem:[%s5085] sm:$0x1]
        %v5088 = vperm.slane %v5086, 0
        %v5090 = vadd.f32 %v5084, %v5088
        %s5091 = scalar_lea.vmem [#allocation8], 2
        %v5092 = vld [vmem:[%s5091] sm:$0x1]
        %s5093 = scalar_lea.vmem [#allocation10], 2
        %v5094 = vld [vmem:[%s5093] sm:$0x1]
        %v5095 = vsel %vm1352, %v5090, 0.0
        %5096 = vadd.xlane.f32.xlu0 %v5095
        %v5097 = vpop.xlane.xlu0 %5096
        %v5098 = vmul.f32 %v5097, %v1365
        %v5099 = vsub.f32 %v5090, %v5098
        %v5100 = vmul.f32 %v5099, %v5099
        %v5101 = vsel %vm1352, %v5100, 0.0
        %5102 = vadd.xlane.f32.xlu0 %v5101
        %v5103 = vpop.xlane.xlu0 %5102
        %v5104 = vmul.f32 %v5103, %v1365
        %v5105 = vadd.f32 %v5104, 1e-05
        %v5106 = vrsqrt.pop %v5105
        %v5107 = vmul.f32 %v5106, %v5105
        %v5108 = vmul.f32 %v5107, %v5106
        %v5109 = vmul.f32 0.5, %v5108
        %v5110 = vsub.f32 1.5, %v5109
        %v5111 = vmul.f32 %v5106, %v5110
        %vm5112 = vweird.f32 %v5105
        %vm5113 = vweird.f32 %v5106
        %vm5114 = vmor %vm5112, %vm5113
        %v5115 = vsel %vm5114, %v5106, %v5111
        %v5116 = vmul.f32 %v5099, %v5115
        %v5118 = vperm.slane %v5092, 0
        %v5120 = vmul.f32 %v5116, %v5118
        %v5122 = vperm.slane %v5094, 0
        %v5124 = vadd.f32 %v5120, %v5122
        %s5125 = scalar_lea.vmem %s37, 32
        %v5126 = vld [vmem:[%s5125] sm:$0xff]
        %v5127 = vld [vmem:[%s5125 + $0x8] sm:$0xff]
        %v5129 = vsel %vm1352, %v5124, 0
        %5131 = vmatpush.msra.mxu0 0.0
        %5132 = vmatpush.msra.mxu0 0.0
        %5133 = vmatpush.msra.mxu0 0.0
        %5134 = vmatpush.msra.mxu0 0.0
        %5135 = vmatpush.msra.mxu0 0.0
        %5136 = vmatpush.msra.mxu0 0.0
        %5137 = vmatpush.msra.mxu0 0.0
        %5138 = vmatpush.msra.mxu0 0.0
        %5139 = vmatpush.msra.mxu0 0.0
        %5140 = vmatpush.msra.mxu0 0.0
        %5141 = vmatpush.msra.mxu0 0.0
        %5142 = vmatpush.msra.mxu0 0.0
        %5143 = vmatpush.msra.mxu0 0.0
        %5144 = vmatpush.msra.mxu0 0.0
        %5145 = vmatpush.msra.mxu0 %v5127
        %5146 = vmatpush.msra.mxu0 %v5126
        %5147 = vmatmul.f32.gmra.mxu0 %v5129
        %v5148 = vpop.f32.mrf.mxu0
        %v5149 = vadd.f32 0.0, %v5148
        %5150 = vdwg.mxu0
        %v5151 = vmul.f32 %v5149, 0.33333334
        %v5152 = vsel %vm1449, %v5151, 0.0
        %v5153 = vsel %vm1452, %v5151, 0.0
        %v5154 = vsel %vm1455, %v5151, 0.0
        %v5155 = vsel %vm1458, %v5151, 0.0
        %5157 = vrot.lane.b32.xlu0 %v5149, 112
        %v5158 = vpop.permute.xlu0 %5157
        %v5160 = vsel %vm1352, %v5152, 0
        %v5163 = vsel %vm1352, %v5153, 0
        %v5166 = vsel %vm1352, %v5154, 0
        %v5169 = vsel %vm1352, %v5155, 0
        %v5171 = vsel %vm1352, %v5158, 0
        %5173 = vmatpush.xpose.msra.mxu0 0.0
        %5174 = vmatpush.xpose.msra.mxu0 0.0
        %5175 = vmatpush.xpose.msra.mxu0 0.0
        %5176 = vmatpush.xpose.msra.mxu0 0.0
        %5177 = vmatpush.xpose.msra.mxu0 0.0
        %5178 = vmatpush.xpose.msra.mxu0 0.0
        %5179 = vmatpush.xpose.msra.mxu0 0.0
        %5180 = vmatpush.xpose.msra.mxu0 0.0
        %5181 = vmatpush.xpose.msra.mxu0 0.0
        %5182 = vmatpush.xpose.msra.mxu0 0.0
        %5183 = vmatpush.xpose.msra.mxu0 0.0
        %5184 = vmatpush.xpose.msra.mxu0 0.0
        %5185 = vmatpush.xpose.msra.mxu0 0.0
        %5186 = vmatpush.xpose.msra.mxu0 0.0
        %5187 = vmatpush.xpose.msra.mxu0 0.0
        %5188 = vmatpush.xpose.msra.mxu0 %v5171
        %5189 = vmatmul.f32.gmra.mxu0 %v5160
        %v5190 = vpop.f32.mrf.mxu0
        %v5191 = vadd.f32 0.0, %v5190
        %5192 = vmatmul.f32.gmra.mxu0 %v5163
        %v5193 = vpop.f32.mrf.mxu0
        %v5194 = vadd.f32 0.0, %v5193
        %5195 = vmatmul.f32.gmra.mxu0 %v5166
        %v5196 = vpop.f32.mrf.mxu0
        %v5197 = vadd.f32 0.0, %v5196
        %5198 = vmatmul.f32.gmra.mxu0 %v5169
        %v5199 = vpop.f32.mrf.mxu0
        %v5200 = vadd.f32 0.0, %v5199
        %5201 = vdwg.mxu0
        %v5202 = vsel %vm3630, %v5191, -1e+30
        %v5203 = vsel %vm3630, %v5194, -1e+30
        %v5204 = vsel %vm3630, %v5197, -1e+30
        %v5205 = vsel %vm3630, %v5200, -1e+30
        %v5206 = vsel %vm3635, %v5202, -inf
        %5207 = vmax.xlane.f32.xlu0 %v5206
        %v5208 = vpop.xlane.xlu0 %5207
        %v5209 = vsel %vm3635, %v5203, -inf
        %5210 = vmax.xlane.f32.xlu0 %v5209
        %v5211 = vpop.xlane.xlu0 %5210
        %v5212 = vsel %vm3635, %v5204, -inf
        %5213 = vmax.xlane.f32.xlu0 %v5212
        %v5214 = vpop.xlane.xlu0 %5213
        %v5215 = vsel %vm3635, %v5205, -inf
        %5216 = vmax.xlane.f32.xlu0 %v5215
        %v5217 = vpop.xlane.xlu0 %5216
        %v5218 = vsub.f32 %v5202, %v5208
        %v5219 = vsub.f32 %v5203, %v5211
        %v5220 = vsub.f32 %v5204, %v5214
        %v5221 = vsub.f32 %v5205, %v5217
        %v5222 = vmul.f32 %v5218, 1.442695
        %v5223 = vpow.pop %v5222
        %v5224 = vmul.f32 %v5219, 1.442695
        %v5225 = vpow.pop %v5224
        %v5226 = vmul.f32 %v5220, 1.442695
        %v5227 = vpow.pop %v5226
        %v5228 = vmul.f32 %v5221, 1.442695
        %v5229 = vpow.pop %v5228
        %v5230 = vsel %vm3635, %v5223, 0.0
        %5231 = vadd.xlane.f32.xlu0 %v5230
        %v5232 = vpop.xlane.xlu0 %5231
        %v5233 = vsel %vm3635, %v5225, 0.0
        %5234 = vadd.xlane.f32.xlu0 %v5233
        %v5235 = vpop.xlane.xlu0 %5234
        %v5236 = vsel %vm3635, %v5227, 0.0
        %5237 = vadd.xlane.f32.xlu0 %v5236
        %v5238 = vpop.xlane.xlu0 %5237
        %v5239 = vsel %vm3635, %v5229, 0.0
        %5240 = vadd.xlane.f32.xlu0 %v5239
        %v5241 = vpop.xlane.xlu0 %5240
        %v5242 = vrcp.pop %v5232
        %v5243 = vmul.f32 %v5232, %v5242
        %v5244 = vsub.f32 1.0, %v5243
        %v5245 = vmul.f32 %v5242, %v5244
        %v5246 = vadd.f32 %v5242, %v5245
        %vm5247 = vweird.f32 %v5232
        %vm5248 = vweird.f32 %v5242
        %vm5249 = vmor %vm5247, %vm5248
        %v5250 = vsel %vm5249, %v5242, %v5246
        %v5251 = vand.u32 2147483647, %v5232
        %vm5252 = vcmp.eq.f32.partialorder %v5251, 8.507059e+37
        %v5253 = vand.u32 %v5232, 2147483648
        %v5254 = vor.u32 1.1754944e-38, %v5253
        %v5255 = vsel %vm5252, %v5254, %v5250
        %v5256 = vmul.f32 %v5223, %v5255
        %v5257 = vrcp.pop %v5235
        %v5258 = vmul.f32 %v5235, %v5257
        %v5259 = vsub.f32 1.0, %v5258
        %v5260 = vmul.f32 %v5257, %v5259
        %v5261 = vadd.f32 %v5257, %v5260
        %vm5262 = vweird.f32 %v5235
        %vm5263 = vweird.f32 %v5257
        %vm5264 = vmor %vm5262, %vm5263
        %v5265 = vsel %vm5264, %v5257, %v5261
        %v5266 = vand.u32 2147483647, %v5235
        %vm5267 = vcmp.eq.f32.partialorder %v5266, 8.507059e+37
        %v5268 = vand.u32 %v5235, 2147483648
        %v5269 = vor.u32 1.1754944e-38, %v5268
        %v5270 = vsel %vm5267, %v5269, %v5265
        %v5271 = vmul.f32 %v5225, %v5270
        %v5272 = vrcp.pop %v5238
        %v5273 = vmul.f32 %v5238, %v5272
        %v5274 = vsub.f32 1.0, %v5273
        %v5275 = vmul.f32 %v5272, %v5274
        %v5276 = vadd.f32 %v5272, %v5275
        %vm5277 = vweird.f32 %v5238
        %vm5278 = vweird.f32 %v5272
        %vm5279 = vmor %vm5277, %vm5278
        %v5280 = vsel %vm5279, %v5272, %v5276
        %v5281 = vand.u32 2147483647, %v5238
        %vm5282 = vcmp.eq.f32.partialorder %v5281, 8.507059e+37
        %v5283 = vand.u32 %v5238, 2147483648
        %v5284 = vor.u32 1.1754944e-38, %v5283
        %v5285 = vsel %vm5282, %v5284, %v5280
        %v5286 = vmul.f32 %v5227, %v5285
        %v5287 = vrcp.pop %v5241
        %v5288 = vmul.f32 %v5241, %v5287
        %v5289 = vsub.f32 1.0, %v5288
        %v5290 = vmul.f32 %v5287, %v5289
        %v5291 = vadd.f32 %v5287, %v5290
        %vm5292 = vweird.f32 %v5241
        %vm5293 = vweird.f32 %v5287
        %vm5294 = vmor %vm5292, %vm5293
        %v5295 = vsel %vm5294, %v5287, %v5291
        %v5296 = vand.u32 2147483647, %v5241
        %vm5297 = vcmp.eq.f32.partialorder %v5296, 8.507059e+37
        %v5298 = vand.u32 %v5241, 2147483648
        %v5299 = vor.u32 1.1754944e-38, %v5298
        %v5300 = vsel %vm5297, %v5299, %v5295
        %v5301 = vmul.f32 %v5229, %v5300
        %5302 = vrot.lane.b32.xlu0 %v5149, 96
        %v5303 = vpop.permute.xlu0 %5302
        %v5306 = vsel %vm3635, %v5256, 0
        %v5309 = vsel %vm3635, %v5271, 0
        %v5312 = vsel %vm3635, %v5286, 0
        %v5315 = vsel %vm3635, %v5301, 0
        %5317 = vmatpush.msra.mxu0 0.0
        %5318 = vmatpush.msra.mxu0 0.0
        %5319 = vmatpush.msra.mxu0 0.0
        %5320 = vmatpush.msra.mxu0 0.0
        %5321 = vmatpush.msra.mxu0 0.0
        %5322 = vmatpush.msra.mxu0 0.0
        %5323 = vmatpush.msra.mxu0 0.0
        %5324 = vmatpush.msra.mxu0 0.0
        %5325 = vmatpush.msra.mxu0 0.0
        %5326 = vmatpush.msra.mxu0 0.0
        %5327 = vmatpush.msra.mxu0 0.0
        %5328 = vmatpush.msra.mxu0 0.0
        %5329 = vmatpush.msra.mxu0 0.0
        %5330 = vmatpush.msra.mxu0 0.0
        %5331 = vmatpush.msra.mxu0 0.0
        %5332 = vmatpush.msra.mxu0 %v5303
        %5333 = vmatmul.f32.gmra.mxu0 %v5306
        %v5334 = vpop.f32.mrf.mxu0
        %v5335 = vadd.f32 0.0, %v5334
        %5336 = vmatmul.f32.gmra.mxu0 %v5309
        %v5337 = vpop.f32.mrf.mxu0
        %v5338 = vadd.f32 0.0, %v5337
        %5339 = vmatmul.f32.gmra.mxu0 %v5312
        %v5340 = vpop.f32.mrf.mxu0
        %v5341 = vadd.f32 0.0, %v5340
        %5342 = vmatmul.f32.gmra.mxu0 %v5315
        %v5343 = vpop.f32.mrf.mxu0
        %v5344 = vadd.f32 0.0, %v5343
        %5345 = vdwg.mxu0
        %v5346 = vsel %vm1449, %v5335, 0.0
        %v5347 = vsel %vm1452, %v5338, 0.0
        %v5348 = vadd.f32 %v5346, %v5347
        %v5349 = vsel %vm1455, %v5341, 0.0
        %v5350 = vadd.f32 %v5348, %v5349
        %v5351 = vsel %vm1458, %v5344, 0.0
        %v5352 = vadd.f32 %v5350, %v5351
        %s5353 = scalar_lea.vmem %s39, 32
        %v5354 = vld [vmem:[%s5353] sm:$0xff]
        %v5355 = vld [vmem:[%s5353 + $0x8] sm:$0xff]
        %v5357 = vsel %vm1352, %v5352, 0
        %5359 = vmatpush.msra.mxu0 0.0
        %5360 = vmatpush.msra.mxu0 0.0
        %5361 = vmatpush.msra.mxu0 0.0
        %5362 = vmatpush.msra.mxu0 0.0
        %5363 = vmatpush.msra.mxu0 0.0
        %5364 = vmatpush.msra.mxu0 0.0
        %5365 = vmatpush.msra.mxu0 0.0
        %5366 = vmatpush.msra.mxu0 0.0
        %5367 = vmatpush.msra.mxu0 0.0
        %5368 = vmatpush.msra.mxu0 0.0
        %5369 = vmatpush.msra.mxu0 0.0
        %5370 = vmatpush.msra.mxu0 0.0
        %5371 = vmatpush.msra.mxu0 0.0
        %5372 = vmatpush.msra.mxu0 0.0
        %5373 = vmatpush.msra.mxu0 %v5355
        %5374 = vmatpush.msra.mxu0 %v5354
        %5375 = vmatmul.f32.gmra.mxu0 %v5357
        %v5376 = vpop.f32.mrf.mxu0
        %v5377 = vadd.f32 0.0, %v5376
        %5378 = vdwg.mxu0
        %v5379 = vadd.f32 %v5090, %v5377
        %s5380 = scalar_lea.vmem [#allocation11], 2
        %v5381 = vld [vmem:[%s5380] sm:$0x1]
        %v5383 = vperm.slane %v5381, 0
        %v5385 = vadd.f32 %v5379, %v5383
        %s5386 = scalar_lea.vmem [#allocation13], 2
        %v5387 = vld [vmem:[%s5386] sm:$0x1]
        %s5388 = scalar_lea.vmem [#allocation14], 2
        %v5389 = vld [vmem:[%s5388] sm:$0x1]
        %v5390 = vsel %vm1352, %v5385, 0.0
        %5391 = vadd.xlane.f32.xlu0 %v5390
        %v5392 = vpop.xlane.xlu0 %5391
        %v5393 = vmul.f32 %v5392, %v1365
        %v5394 = vsub.f32 %v5385, %v5393
        %v5395 = vmul.f32 %v5394, %v5394
        %v5396 = vsel %vm1352, %v5395, 0.0
        %5397 = vadd.xlane.f32.xlu0 %v5396
        %v5398 = vpop.xlane.xlu0 %5397
        %v5399 = vmul.f32 %v5398, %v1365
        %v5400 = vadd.f32 %v5399, 1e-05
        %v5401 = vrsqrt.pop %v5400
        %v5402 = vmul.f32 %v5401, %v5400
        %v5403 = vmul.f32 %v5402, %v5401
        %v5404 = vmul.f32 0.5, %v5403
        %v5405 = vsub.f32 1.5, %v5404
        %v5406 = vmul.f32 %v5401, %v5405
        %vm5407 = vweird.f32 %v5400
        %vm5408 = vweird.f32 %v5401
        %vm5409 = vmor %vm5407, %vm5408
        %v5410 = vsel %vm5409, %v5401, %v5406
        %v5411 = vmul.f32 %v5394, %v5410
        %v5413 = vperm.slane %v5387, 0
        %v5415 = vmul.f32 %v5411, %v5413
        %v5417 = vperm.slane %v5389, 0
        %v5419 = vadd.f32 %v5415, %v5417
        %v5420 = vmul.f32 %v3888, %v3342
        %v5421 = vmul.f32 %v3889, %v3342
        %v5422 = vadd.f32 %v5420, %v3347
        %v5423 = vadd.f32 %v5421, %v3347
        %s5424 = scalar_lea.vmem %s47, 32
        %v5425 = vld [vmem:[%s5424] sm:$0xff]
        %v5426 = vld [vmem:[%s5424 + $0x8] sm:$0xff]
        %v5428 = vsel %vm1352, %v5419, 0
        %5430 = vmatpush.msra.mxu0 0.0
        %5431 = vmatpush.msra.mxu0 0.0
        %5432 = vmatpush.msra.mxu0 0.0
        %5433 = vmatpush.msra.mxu0 0.0
        %5434 = vmatpush.msra.mxu0 0.0
        %5435 = vmatpush.msra.mxu0 0.0
        %5436 = vmatpush.msra.mxu0 0.0
        %5437 = vmatpush.msra.mxu0 0.0
        %5438 = vmatpush.msra.mxu0 0.0
        %5439 = vmatpush.msra.mxu0 0.0
        %5440 = vmatpush.msra.mxu0 0.0
        %5441 = vmatpush.msra.mxu0 0.0
        %5442 = vmatpush.msra.mxu0 0.0
        %5443 = vmatpush.msra.mxu0 0.0
        %5444 = vmatpush.msra.mxu0 %v5426
        %5445 = vmatpush.msra.mxu0 %v5425
        %5446 = vmatmul.f32.gmra.mxu0 %v5428
        %v5447 = vpop.f32.mrf.mxu0
        %v5448 = vadd.f32 0.0, %v5447
        %5449 = vdwg.mxu0
        %s5450 = scalar_lea.vmem %s49, 32
        %v5451 = vld [vmem:[%s5450] sm:$0xff]
        %v5452 = vld [vmem:[%s5450 + $0x8] sm:$0xff]
        %v5454 = vsel %vm1352, %v5422, 0
        %v5457 = vsel %vm1352, %v5423, 0
        %5459 = vmatpush.msra.mxu0 0.0
        %5460 = vmatpush.msra.mxu0 0.0
        %5461 = vmatpush.msra.mxu0 0.0
        %5462 = vmatpush.msra.mxu0 0.0
        %5463 = vmatpush.msra.mxu0 0.0
        %5464 = vmatpush.msra.mxu0 0.0
        %5465 = vmatpush.msra.mxu0 0.0
        %5466 = vmatpush.msra.mxu0 0.0
        %5467 = vmatpush.msra.mxu0 0.0
        %5468 = vmatpush.msra.mxu0 0.0
        %5469 = vmatpush.msra.mxu0 0.0
        %5470 = vmatpush.msra.mxu0 0.0
        %5471 = vmatpush.msra.mxu0 0.0
        %5472 = vmatpush.msra.mxu0 0.0
        %5473 = vmatpush.msra.mxu0 %v5452
        %5474 = vmatpush.msra.mxu0 %v5451
        %5475 = vmatmul.f32.gmra.mxu0 %v5454
        %v5476 = vpop.f32.mrf.mxu0
        %v5477 = vadd.f32 0.0, %v5476
        %5478 = vmatmul.f32.gmra.mxu0 %v5457
        %v5479 = vpop.f32.mrf.mxu0
        %v5480 = vadd.f32 0.0, %v5479
        %5481 = vdwg.mxu0
        %v5482 = vmul.f32 %v5448, 0.33333334
        %v5483 = vsel %vm1449, %v5482, 0.0
        %v5484 = vsel %vm1452, %v5482, 0.0
        %v5485 = vsel %vm1455, %v5482, 0.0
        %v5486 = vsel %vm1458, %v5482, 0.0
        %v5488 = vsel %vm1352, %v5483, 0
        %v5491 = vsel %vm1352, %v5484, 0
        %v5494 = vsel %vm1352, %v5485, 0
        %v5497 = vsel %vm1352, %v5486, 0
        %v5500 = vsel %vm1352, %v5477, 0
        %v5503 = vsel %vm1352, %v5480, 0
        %5505 = vmatpush.xpose.msra.mxu0 0.0
        %5506 = vmatpush.xpose.msra.mxu0 0.0
        %5507 = vmatpush.xpose.msra.mxu0 0.0
        %5508 = vmatpush.xpose.msra.mxu0 0.0
        %5509 = vmatpush.xpose.msra.mxu0 0.0
        %5510 = vmatpush.xpose.msra.mxu0 0.0
        %5511 = vmatpush.xpose.msra.mxu0 0.0
        %5512 = vmatpush.xpose.msra.mxu0 0.0
        %5513 = vmatpush.xpose.msra.mxu0 0.0
        %5514 = vmatpush.xpose.msra.mxu0 0.0
        %5515 = vmatpush.xpose.msra.mxu0 0.0
        %5516 = vmatpush.xpose.msra.mxu0 0.0
        %5517 = vmatpush.xpose.msra.mxu0 0.0
        %5518 = vmatpush.xpose.msra.mxu0 0.0
        %5519 = vmatpush.xpose.msra.mxu0 %v5503
        %5520 = vmatpush.xpose.msra.mxu0 %v5500
        %5521 = vmatmul.f32.gmra.mxu0 %v5488
        %v5522 = vpop.f32.mrf.mxu0
        %v5523 = vadd.f32 0.0, %v5522
        %5524 = vmatmul.f32.gmra.mxu0 %v5491
        %v5525 = vpop.f32.mrf.mxu0
        %v5526 = vadd.f32 0.0, %v5525
        %5527 = vmatmul.f32.gmra.mxu0 %v5494
        %v5528 = vpop.f32.mrf.mxu0
        %v5529 = vadd.f32 0.0, %v5528
        %5530 = vmatmul.f32.gmra.mxu0 %v5497
        %v5531 = vpop.f32.mrf.mxu0
        %v5532 = vadd.f32 0.0, %v5531
        %5533 = vdwg.mxu0
        %v5534 = vsel %vm1352, %v5523, -inf
        %5535 = vmax.xlane.f32.xlu0 %v5534
        %v5536 = vpop.xlane.xlu0 %5535
        %v5537 = vsel %vm1352, %v5526, -inf
        %5538 = vmax.xlane.f32.xlu0 %v5537
        %v5539 = vpop.xlane.xlu0 %5538
        %v5540 = vsel %vm1352, %v5529, -inf
        %5541 = vmax.xlane.f32.xlu0 %v5540
        %v5542 = vpop.xlane.xlu0 %5541
        %v5543 = vsel %vm1352, %v5532, -inf
        %5544 = vmax.xlane.f32.xlu0 %v5543
        %v5545 = vpop.xlane.xlu0 %5544
        %v5546 = vsub.f32 %v5523, %v5536
        %v5547 = vsub.f32 %v5526, %v5539
        %v5548 = vsub.f32 %v5529, %v5542
        %v5549 = vsub.f32 %v5532, %v5545
        %v5550 = vmul.f32 %v5546, 1.442695
        %v5551 = vpow.pop %v5550
        %v5552 = vmul.f32 %v5547, 1.442695
        %v5553 = vpow.pop %v5552
        %v5554 = vmul.f32 %v5548, 1.442695
        %v5555 = vpow.pop %v5554
        %v5556 = vmul.f32 %v5549, 1.442695
        %v5557 = vpow.pop %v5556
        %v5558 = vsel %vm1352, %v5551, 0.0
        %5559 = vadd.xlane.f32.xlu0 %v5558
        %v5560 = vpop.xlane.xlu0 %5559
        %v5561 = vsel %vm1352, %v5553, 0.0
        %5562 = vadd.xlane.f32.xlu0 %v5561
        %v5563 = vpop.xlane.xlu0 %5562
        %v5564 = vsel %vm1352, %v5555, 0.0
        %5565 = vadd.xlane.f32.xlu0 %v5564
        %v5566 = vpop.xlane.xlu0 %5565
        %v5567 = vsel %vm1352, %v5557, 0.0
        %5568 = vadd.xlane.f32.xlu0 %v5567
        %v5569 = vpop.xlane.xlu0 %5568
        %v5570 = vrcp.pop %v5560
        %v5571 = vmul.f32 %v5560, %v5570
        %v5572 = vsub.f32 1.0, %v5571
        %v5573 = vmul.f32 %v5570, %v5572
        %v5574 = vadd.f32 %v5570, %v5573
        %vm5575 = vweird.f32 %v5560
        %vm5576 = vweird.f32 %v5570
        %vm5577 = vmor %vm5575, %vm5576
        %v5578 = vsel %vm5577, %v5570, %v5574
        %v5579 = vand.u32 2147483647, %v5560
        %vm5580 = vcmp.eq.f32.partialorder %v5579, 8.507059e+37
        %v5581 = vand.u32 %v5560, 2147483648
        %v5582 = vor.u32 1.1754944e-38, %v5581
        %v5583 = vsel %vm5580, %v5582, %v5578
        %v5584 = vmul.f32 %v5551, %v5583
        %v5585 = vrcp.pop %v5563
        %v5586 = vmul.f32 %v5563, %v5585
        %v5587 = vsub.f32 1.0, %v5586
        %v5588 = vmul.f32 %v5585, %v5587
        %v5589 = vadd.f32 %v5585, %v5588
        %vm5590 = vweird.f32 %v5563
        %vm5591 = vweird.f32 %v5585
        %vm5592 = vmor %vm5590, %vm5591
        %v5593 = vsel %vm5592, %v5585, %v5589
        %v5594 = vand.u32 2147483647, %v5563
        %vm5595 = vcmp.eq.f32.partialorder %v5594, 8.507059e+37
        %v5596 = vand.u32 %v5563, 2147483648
        %v5597 = vor.u32 1.1754944e-38, %v5596
        %v5598 = vsel %vm5595, %v5597, %v5593
        %v5599 = vmul.f32 %v5553, %v5598
        %v5600 = vrcp.pop %v5566
        %v5601 = vmul.f32 %v5566, %v5600
        %v5602 = vsub.f32 1.0, %v5601
        %v5603 = vmul.f32 %v5600, %v5602
        %v5604 = vadd.f32 %v5600, %v5603
        %vm5605 = vweird.f32 %v5566
        %vm5606 = vweird.f32 %v5600
        %vm5607 = vmor %vm5605, %vm5606
        %v5608 = vsel %vm5607, %v5600, %v5604
        %v5609 = vand.u32 2147483647, %v5566
        %vm5610 = vcmp.eq.f32.partialorder %v5609, 8.507059e+37
        %v5611 = vand.u32 %v5566, 2147483648
        %v5612 = vor.u32 1.1754944e-38, %v5611
        %v5613 = vsel %vm5610, %v5612, %v5608
        %v5614 = vmul.f32 %v5555, %v5613
        %v5615 = vrcp.pop %v5569
        %v5616 = vmul.f32 %v5569, %v5615
        %v5617 = vsub.f32 1.0, %v5616
        %v5618 = vmul.f32 %v5615, %v5617
        %v5619 = vadd.f32 %v5615, %v5618
        %vm5620 = vweird.f32 %v5569
        %vm5621 = vweird.f32 %v5615
        %vm5622 = vmor %vm5620, %vm5621
        %v5623 = vsel %vm5622, %v5615, %v5619
        %v5624 = vand.u32 2147483647, %v5569
        %vm5625 = vcmp.eq.f32.partialorder %v5624, 8.507059e+37
        %v5626 = vand.u32 %v5569, 2147483648
        %v5627 = vor.u32 1.1754944e-38, %v5626
        %v5628 = vsel %vm5625, %v5627, %v5623
        %v5629 = vmul.f32 %v5557, %v5628
        %5630 = vrot.lane.b32.xlu0 %v5477, 112
        %v5631 = vpop.permute.xlu0 %5630
        %5632 = vrot.lane.b32.xlu0 %v5480, 112
        %v5633 = vpop.permute.xlu0 %5632
        %v5637 = vsel %vm1352, %v5584, 0
        %v5640 = vsel %vm1352, %v5599, 0
        %v5643 = vsel %vm1352, %v5614, 0
        %v5646 = vsel %vm1352, %v5629, 0
        %5648 = vmatpush.msra.mxu0 0.0
        %5649 = vmatpush.msra.mxu0 0.0
        %5650 = vmatpush.msra.mxu0 0.0
        %5651 = vmatpush.msra.mxu0 0.0
        %5652 = vmatpush.msra.mxu0 0.0
        %5653 = vmatpush.msra.mxu0 0.0
        %5654 = vmatpush.msra.mxu0 0.0
        %5655 = vmatpush.msra.mxu0 0.0
        %5656 = vmatpush.msra.mxu0 0.0
        %5657 = vmatpush.msra.mxu0 0.0
        %5658 = vmatpush.msra.mxu0 0.0
        %5659 = vmatpush.msra.mxu0 0.0
        %5660 = vmatpush.msra.mxu0 0.0
        %5661 = vmatpush.msra.mxu0 0.0
        %5662 = vmatpush.msra.mxu0 %v5633
        %5663 = vmatpush.msra.mxu0 %v5631
        %5664 = vmatmul.f32.gmra.mxu0 %v5637
        %v5665 = vpop.f32.mrf.mxu0
        %v5666 = vadd.f32 0.0, %v5665
        %5667 = vmatmul.f32.gmra.mxu0 %v5640
        %v5668 = vpop.f32.mrf.mxu0
        %v5669 = vadd.f32 0.0, %v5668
        %5670 = vmatmul.f32.gmra.mxu0 %v5643
        %v5671 = vpop.f32.mrf.mxu0
        %v5672 = vadd.f32 0.0, %v5671
        %5673 = vmatmul.f32.gmra.mxu0 %v5646
        %v5674 = vpop.f32.mrf.mxu0
        %v5675 = vadd.f32 0.0, %v5674
        %5676 = vdwg.mxu0
        %v5677 = vsel %vm1449, %v5666, 0.0
        %v5678 = vsel %vm1452, %v5669, 0.0
        %v5679 = vadd.f32 %v5677, %v5678
        %v5680 = vsel %vm1455, %v5672, 0.0
        %v5681 = vadd.f32 %v5679, %v5680
        %v5682 = vsel %vm1458, %v5675, 0.0
        %v5683 = vadd.f32 %v5681, %v5682
        %s5684 = scalar_lea.vmem %s51, 32
        %v5685 = vld [vmem:[%s5684] sm:$0xff]
        %v5686 = vld [vmem:[%s5684 + $0x8] sm:$0xff]
        %v5688 = vsel %vm1352, %v5683, 0
        %5690 = vmatpush.msra.mxu0 0.0
        %5691 = vmatpush.msra.mxu0 0.0
        %5692 = vmatpush.msra.mxu0 0.0
        %5693 = vmatpush.msra.mxu0 0.0
        %5694 = vmatpush.msra.mxu0 0.0
        %5695 = vmatpush.msra.mxu0 0.0
        %5696 = vmatpush.msra.mxu0 0.0
        %5697 = vmatpush.msra.mxu0 0.0
        %5698 = vmatpush.msra.mxu0 0.0
        %5699 = vmatpush.msra.mxu0 0.0
        %5700 = vmatpush.msra.mxu0 0.0
        %5701 = vmatpush.msra.mxu0 0.0
        %5702 = vmatpush.msra.mxu0 0.0
        %5703 = vmatpush.msra.mxu0 0.0
        %5704 = vmatpush.msra.mxu0 %v5686
        %5705 = vmatpush.msra.mxu0 %v5685
        %5706 = vmatmul.f32.gmra.mxu0 %v5688
        %v5707 = vpop.f32.mrf.mxu0
        %v5708 = vadd.f32 0.0, %v5707
        %5709 = vdwg.mxu0
        %v5710 = vadd.f32 %v5385, %v5708
        %s5711 = scalar_lea.vmem [#allocation16], 2
        %v5712 = vld [vmem:[%s5711] sm:$0x1]
        %v5714 = vperm.slane %v5712, 0
        %v5716 = vadd.f32 %v5710, %v5714
        %s5717 = scalar_lea.vmem [#allocation17], 2
        %v5718 = vld [vmem:[%s5717] sm:$0x1]
        %s5719 = scalar_lea.vmem [#allocation19], 2
        %v5720 = vld [vmem:[%s5719] sm:$0x1]
        %v5721 = vsel %vm1352, %v5716, 0.0
        %5722 = vadd.xlane.f32.xlu0 %v5721
        %v5723 = vpop.xlane.xlu0 %5722
        %v5724 = vmul.f32 %v5723, %v1365
        %v5725 = vsub.f32 %v5716, %v5724
        %v5726 = vmul.f32 %v5725, %v5725
        %v5727 = vsel %vm1352, %v5726, 0.0
        %5728 = vadd.xlane.f32.xlu0 %v5727
        %v5729 = vpop.xlane.xlu0 %5728
        %v5730 = vmul.f32 %v5729, %v1365
        %v5731 = vadd.f32 %v5730, 1e-05
        %v5732 = vrsqrt.pop %v5731
        %v5733 = vmul.f32 %v5732, %v5731
        %v5734 = vmul.f32 %v5733, %v5732
        %v5735 = vmul.f32 0.5, %v5734
        %v5736 = vsub.f32 1.5, %v5735
        %v5737 = vmul.f32 %v5732, %v5736
        %vm5738 = vweird.f32 %v5731
        %vm5739 = vweird.f32 %v5732
        %vm5740 = vmor %vm5738, %vm5739
        %v5741 = vsel %vm5740, %v5732, %v5737
        %v5742 = vmul.f32 %v5725, %v5741
        %v5744 = vperm.slane %v5718, 0
        %v5746 = vmul.f32 %v5742, %v5744
        %v5748 = vperm.slane %v5720, 0
        %v5750 = vadd.f32 %v5746, %v5748
        %s5751 = scalar_lea.vmem %s59, 32
        %v5752 = vld [vmem:[%s5751] sm:$0xff]
        %v5753 = vld [vmem:[%s5751 + $0x8] sm:$0xff]
        %s5754 = scalar_lea.vmem [#allocation20], 2
        %v5755 = vld [vmem:[%s5754] sm:$0x1]
        %v5757 = vperm.slane %v5755, 0
        %v5760 = vsel %vm1352, %v5750, 0
        %5762 = vmatpush.msra.mxu0 0.0
        %5763 = vmatpush.msra.mxu0 0.0
        %5764 = vmatpush.msra.mxu0 0.0
        %5765 = vmatpush.msra.mxu0 0.0
        %5766 = vmatpush.msra.mxu0 0.0
        %5767 = vmatpush.msra.mxu0 0.0
        %5768 = vmatpush.msra.mxu0 0.0
        %5769 = vmatpush.msra.mxu0 0.0
        %5770 = vmatpush.msra.mxu0 0.0
        %5771 = vmatpush.msra.mxu0 0.0
        %5772 = vmatpush.msra.mxu0 0.0
        %5773 = vmatpush.msra.mxu0 0.0
        %5774 = vmatpush.msra.mxu0 0.0
        %5775 = vmatpush.msra.mxu0 0.0
        %5776 = vmatpush.msra.mxu0 %v5753
        %5777 = vmatpush.msra.mxu0 %v5752
        %5778 = vmatmul.f32.gmra.mxu0 %v5760
        %v5779 = vpop.f32.mrf.mxu0
        %v5780 = vadd.f32 %v5757, %v5779
        %5781 = vdwg.mxu0
        %v5782 = vmul.f32 %v5780, 0.5
        %v5783 = vmul.f32 %v5780, 0.70710677
        %v5784 = vmul.f32 %v5783, %v5783
        %v5785 = vmin.f32 16.0, %v5784
        %v5786 = vmul.f32 %v5785, 2.1237322e-06
        %v5787 = vadd.f32 %v5786, 0.00028619796
        %v5788 = vmul.f32 %v5785, %v5787
        %v5789 = vadd.f32 %v5788, 0.0036580483
        %v5790 = vmul.f32 %v5785, %v5789
        %v5791 = vadd.f32 %v5790, 0.05243302
        %v5792 = vmul.f32 %v5785, %v5791
        %v5793 = vadd.f32 %v5792, 0.18741608
        %v5794 = vmul.f32 %v5785, %v5793
        %v5795 = vadd.f32 %v5794, 1.1283791
        %v5796 = vmul.f32 %v5783, %v5795
        %v5797 = vmul.f32 %v5785, 3.8918573e-05
        %v5798 = vadd.f32 %v5797, 0.001143296
        %v5799 = vmul.f32 %v5785, %v5798
        %v5800 = vadd.f32 %v5799, 0.014752088
        %v5801 = vmul.f32 %v5785, %v5800
        %v5802 = vadd.f32 %v5801, 0.112945676
        %v5803 = vmul.f32 %v5785, %v5802
        %v5804 = vadd.f32 %v5803, 0.4994258
        %v5805 = vmul.f32 %v5785, %v5804
        %v5806 = vadd.f32 %v5805, 1.0
        %v5807 = vrcp.pop %v5806
        %v5808 = vmul.f32 %v5806, %v5807
        %v5809 = vsub.f32 1.0, %v5808
        %v5810 = vmul.f32 %v5807, %v5809
        %v5811 = vadd.f32 %v5807, %v5810
        %vm5812 = vweird.f32 %v5806
        %vm5813 = vweird.f32 %v5807
        %vm5814 = vmor %vm5812, %vm5813
        %v5815 = vsel %vm5814, %v5807, %v5811
        %v5816 = vand.u32 2147483647, %v5806
        %vm5817 = vcmp.eq.f32.partialorder %v5816, 8.507059e+37
        %v5818 = vand.u32 %v5806, 2147483648
        %v5819 = vor.u32 1.1754944e-38, %v5818
        %v5820 = vsel %vm5817, %v5819, %v5815
        %v5821 = vmul.f32 %v5796, %v5820
        %v5822 = vmin.f32 %v5821, 1.0
        %v5823 = vmax.f32 %v5822, -1.0
        %v5824 = vadd.f32 %v5823, 1.0
        %v5825 = vmul.f32 %v5782, %v5824
        %s5826 = scalar_lea.vmem %s63, 64
        %v5827 = vld [vmem:[%s5826] sm:$0xff]
        %v5828 = vld [vmem:[%s5826 + $0x8] sm:$0xff]
        %v5829 = vld [vmem:[%s5826 + $0x10] sm:$0xff]
        %v5830 = vld [vmem:[%s5826 + $0x18] sm:$0xff]
        %v5832 = vsel %vm2043, %v5825, 0
        %5834 = vmatpush.msra.mxu0 0.0
        %5835 = vmatpush.msra.mxu0 0.0
        %5836 = vmatpush.msra.mxu0 0.0
        %5837 = vmatpush.msra.mxu0 0.0
        %5838 = vmatpush.msra.mxu0 0.0
        %5839 = vmatpush.msra.mxu0 0.0
        %5840 = vmatpush.msra.mxu0 0.0
        %5841 = vmatpush.msra.mxu0 0.0
        %5842 = vmatpush.msra.mxu0 0.0
        %5843 = vmatpush.msra.mxu0 0.0
        %5844 = vmatpush.msra.mxu0 0.0
        %5845 = vmatpush.msra.mxu0 0.0
        %5846 = vmatpush.msra.mxu0 %v5830
        %5847 = vmatpush.msra.mxu0 %v5829
        %5848 = vmatpush.msra.mxu0 %v5828
        %5849 = vmatpush.msra.mxu0 %v5827
        %5850 = vmatmul.f32.gmra.mxu0 %v5832
        %v5851 = vpop.f32.mrf.mxu0
        %v5852 = vadd.f32 0.0, %v5851
        %5853 = vdwg.mxu0
        %v5854 = vadd.f32 %v5716, %v5852
        %s5855 = scalar_lea.vmem [#allocation22], 2
        %v5856 = vld [vmem:[%s5855] sm:$0x1]
        %v5858 = vperm.slane %v5856, 0
        %v5860 = vadd.f32 %v5854, %v5858
        %v5861 = vld [vmem:[%s67] sm:$0xff]
        %v5862 = vld [vmem:[%s67 + $0x8] sm:$0xff]
        %v5863 = vld [vmem:[%s69] sm:$0x1]
        %v5865 = vperm.slane %v5863, 0
        %v5868 = vsel %vm1352, %v5860, 0
        %5870 = vmatpush.msra.mxu0 0.0
        %5871 = vmatpush.msra.mxu0 0.0
        %5872 = vmatpush.msra.mxu0 0.0
        %5873 = vmatpush.msra.mxu0 0.0
        %5874 = vmatpush.msra.mxu0 0.0
        %5875 = vmatpush.msra.mxu0 0.0
        %5876 = vmatpush.msra.mxu0 0.0
        %5877 = vmatpush.msra.mxu0 0.0
        %5878 = vmatpush.msra.mxu0 0.0
        %5879 = vmatpush.msra.mxu0 0.0
        %5880 = vmatpush.msra.mxu0 0.0
        %5881 = vmatpush.msra.mxu0 0.0
        %5882 = vmatpush.msra.mxu0 0.0
        %5883 = vmatpush.msra.mxu0 0.0
        %5884 = vmatpush.msra.mxu0 %v5862
        %5885 = vmatpush.msra.mxu0 %v5861
        %5886 = vmatmul.f32.gmra.mxu0 %v5868
        %v5887 = vpop.f32.mrf.mxu0
        %v5888 = vadd.f32 %v5865, %v5887
        %5889 = vdwg.mxu0
        %5890 = vst [vmem:[%s1291] sm:$0xff] %v5888
        %s5891 = sand.u32 %s845, 1
        %s5892 = scalar_lea.sflag [#allocation4], %s5891
        %s5893 = sand.u32 %s845, 1
        %s5894 = smul.addr %s5893, 8
        %s5895 = scalar_lea.vmem [#allocation23], %s5894
        // Predicated region
        $region213: #{vit_forward.1} parent=159 // pred_check
          %p5896 = pneg %p855
        $region214: #{vit_forward.1} parent=159 // pred_check_branch
          %5898 = sbr.rel (%p5896) target = $region216
        $region215: #{vit_forward.1} parent=159 // pred_region
          %5900 = vsyncadd %s5892, 0
          %s5901 = smul.addr %s92, 8
          %s5902 = scalar_lea.hbm %s71, %s5901
          %s5904 = sshll.u32 %s5895, 4
          %s5905 = int_to_ptr.vmem [resolvable:$true] %s5904
          %s5906 = sshll.u32 %s5902, 4
          %s5907 = int_to_ptr.hbm [resolvable:$true] %s5906
          %5909 = dma.vmem_to_hbm [thread:$0]  %s5905, 128, %s5907, %s5892
        $region216: #{vit_forward.1} parent=159 // pred_fallthru
          _
      $region160: #{vit_forward.1} parent=5 // pred_fallthru
        _
      %p5910 = scmp.le.s32.totalorder 2, %s87
      // Predicated region
      $region217: #{vit_forward.1} parent=5 // pred_check
        %p5911 = pneg %p5910
      $region218: #{vit_forward.1} parent=5 // pred_check_branch
        %5913 = sbr.rel (%p5911) target = $region220
      $region219: #{vit_forward.1} parent=5 // pred_region
        %s5914 = ssub.s32 %s87, 2
        // Predicated region
        $region221: #{vit_forward.1} parent=219 // pred_check
          %p5915 = pneg %p861
        $region222: #{vit_forward.1} parent=219 // pred_check_branch
          %5917 = sbr.rel (%p5915) target = $region224
        $region223: #{vit_forward.1} parent=219 // pred_region
          %s5918 = sand.u32 %s846, 1
          %s5919 = scalar_lea.sflag [#allocation4], %s5918
          %s5920 = sand.u32 %s846, 1
          %s5921 = smul.addr %s5920, 8
          %s5922 = scalar_lea.vmem [#allocation23], %s5921
          %5924 = dma.done %s5919, 128
        $region224: #{vit_forward.1} parent=219 // pred_fallthru
          _
      $region220: #{vit_forward.1} parent=5 // pred_fallthru
        _
    $region6: #{vit_forward.1} parent=1 // loop_footer
      %s91 = sadd.s32 1, %s87
    $region7: #{vit_forward.1} parent=1 // loop_footer_branch
      %86 = sbr.rel target = $region3
    $region8: #{vit_forward.1} parent=1 // loop_exit
      _
    %5925 = vsyncpa [#allocation3], 1
    %s5926 = scalar_lea.sflag [#allocation3], 1
    %5927 = vsyncpa %s5926, 1
    %5928 = vsyncpa [#allocation6], 1
    %5929 = vsyncpa [#allocation9], 1
    %5930 = vsyncpa [#allocation12], 1
    %5931 = vsyncpa [#allocation15], 1
    %5932 = vsyncpa [#allocation18], 1
    %5933 = vsyncpa [#allocation21], 1
    %5934 = vsyncpa [#allocation4], 1
    %s5935 = scalar_lea.sflag [#allocation4], 1
    %5936 = vsyncpa %s5935, 1

</llo_original>
